<compile_context>
chip_gen: v5e
topology: v5e:2x2
jax: 0.10.0
libtpu: 0.0.40
codegen_flags: <defaults>
</compile_context>

<pallas_src>
import jax
import jax.numpy as jnp
from jax.experimental import pallas as pl
from jax.experimental.pallas import tpu as pltpu


# ---------------------------------------------------------------------------
# Fused Inception-block kernel (one batch image per grid step)
# ---------------------------------------------------------------------------
def _inception_kernel(x_ref, w123_ref, t123_ref, w2b_ref, t2b_ref,
                      w3b_ref, t3b_ref, w3c_ref, t3c_ref, w4_ref, t4_ref,
                      o_ref, pad_ref):
    _, H, W, cin = x_ref.shape
    M = H * W
    cm2 = w2b_ref.shape[1]            # floor_2 entry channels
    cm3 = w3b_ref.shape[1]            # floor_3 entry channels
    c_top = w123_ref.shape[1] - cm2 - cm3
    c_mid = w2b_ref.shape[2]
    c_btm = w3c_ref.shape[2]

    x_bf = x_ref[0]                                   # (H, W, cin) bf16
    x2d = x_bf.reshape(M, cin)

    # ---- merged 1x1 convs: [floor_1 | floor_2 entry | floor_3 entry] ------
    y = jnp.dot(x2d, w123_ref[...], preferred_element_type=jnp.float32)
    y = jnp.maximum(y + t123_ref[...], 0.0)           # (M, c_top+cm2+cm3) f32
    b1 = y[:, :c_top]
    a2 = y[:, c_top:c_top + cm2]
    a3 = y[:, c_top + cm2:]

    # ---- 3x3 conv (padding=1) as 9 shifted-slice matmuls ------------------
    def conv3x3_relu(a2d, w_ref, t_ref):
        k = w_ref.shape[1]
        cout = w_ref.shape[2]
        pad_ref[...] = jnp.zeros(pad_ref.shape, pad_ref.dtype)
        pad_ref[1:H + 1, 1:W + 1, :k] = a2d.reshape(H, W, k)
        acc = jnp.zeros((M, cout), jnp.float32)
        for tap in range(9):
            di, dj = tap // 3, tap % 3
            patch = pad_ref[di:di + H, dj:dj + W, :k].reshape(M, k)
            acc = acc + jnp.dot(patch.astype(jnp.bfloat16), w_ref[tap],
                                preferred_element_type=jnp.float32)
        return jnp.maximum(acc + t_ref[...], 0.0)      # (M, cout) f32

    # floor_2: 1x1 (above) -> 3x3
    b2 = conv3x3_relu(a2, w2b_ref, t2b_ref)
    # floor_3: 1x1 (above) -> 3x3 -> 3x3
    h3 = conv3x3_relu(a3, w3b_ref, t3b_ref)
    b3 = conv3x3_relu(h3, w3c_ref, t3c_ref)

    # floor_4: MaxPool2d(3, stride=1, padding=1) -> 1x1 ---------------------
    pad_ref[...] = jnp.full(pad_ref.shape, -jnp.inf, pad_ref.dtype)
    pad_ref[1:H + 1, 1:W + 1, :cin] = x_bf.astype(jnp.float32)
    pooled = pad_ref[0:H, 0:W, :cin]
    for tap in range(1, 9):
        di, dj = tap // 3, tap % 3
        pooled = jnp.maximum(pooled, pad_ref[di:di + H, dj:dj + W, :cin])
    b4 = jnp.dot(pooled.reshape(M, cin).astype(jnp.bfloat16), w4_ref[...],
                 preferred_element_type=jnp.float32)
    b4 = jnp.maximum(b4 + t4_ref[...], 0.0)

    # ---- single concatenated output slab (channel order = torch.cat) ------
    o_ref[0, :, 0:c_top] = b1
    o_ref[0, :, c_top:c_top + c_mid] = b2
    o_ref[0, :, c_top + c_mid:c_top + c_mid + c_btm] = b3
    o_ref[0, :, c_top + c_mid + c_btm:] = b4


# ---------------------------------------------------------------------------
# Wrapper
# ---------------------------------------------------------------------------
@jax.jit
def construction_forward(x_nchw, params):
    N, cin, H, W = x_nchw.shape
    M = H * W

    # NCHW -> NHWC + bf16 cast (single small XLA pass on the input).
    x_nhwc = jnp.transpose(x_nchw, (0, 2, 3, 1)).astype(jnp.bfloat16)

    bf = jnp.bfloat16
    w123 = params["w123"].astype(bf)
    w2b = params["w2b"].astype(bf)
    w3b = params["w3b"].astype(bf)
    w3c = params["w3c"].astype(bf)
    w4 = params["w4"].astype(bf)
    t123, t2b, t3b, t3c, t4 = (params["t123"], params["t2b"], params["t3b"],
                               params["t3c"], params["t4"])

    c_top = w123.shape[1] - w2b.shape[1] - w3b.shape[1]
    c_total = c_top + w2b.shape[2] + w3c.shape[2] + w4.shape[1]
    c_pad = max(cin, w2b.shape[1], w3b.shape[1], w3c.shape[1])

    out = pl.pallas_call(
        _inception_kernel,
        out_shape=jax.ShapeDtypeStruct((N, M, c_total), jnp.float32),
        grid=(N,),
        in_specs=[
            pl.BlockSpec((1, H, W, cin), lambda n: (n, 0, 0, 0)),
            pl.BlockSpec(w123.shape, lambda n: (0, 0)),
            pl.BlockSpec(t123.shape, lambda n: (0, 0)),
            pl.BlockSpec(w2b.shape, lambda n: (0, 0, 0)),
            pl.BlockSpec(t2b.shape, lambda n: (0, 0)),
            pl.BlockSpec(w3b.shape, lambda n: (0, 0, 0)),
            pl.BlockSpec(t3b.shape, lambda n: (0, 0)),
            pl.BlockSpec(w3c.shape, lambda n: (0, 0, 0)),
            pl.BlockSpec(t3c.shape, lambda n: (0, 0)),
            pl.BlockSpec(w4.shape, lambda n: (0, 0)),
            pl.BlockSpec(t4.shape, lambda n: (0, 0)),
        ],
        out_specs=pl.BlockSpec((1, M, c_total), lambda n: (n, 0, 0)),
        scratch_shapes=[pltpu.VMEM((H + 2, W + 2, c_pad), jnp.float32)],
        compiler_params=pltpu.CompilerParams(
            dimension_semantics=("parallel",)),
    )(x_nhwc, w123, t123, w2b, t2b, w3b, t3b, w3c, t3c, w4, t4)

    # (N, H*W, C) is the NHWC slab; reshape is free, then one transpose to NCHW.
    out = out.reshape(N, H, W, c_total)
    return jnp.transpose(out, (0, 3, 1, 2))


# ---------------------------------------------------------------------------
# Parameters: Conv2d(+bias) + BatchNorm2d folded into (weight, bias)
# ---------------------------------------------------------------------------
def make_conv_bn_params(key, cin, cout, ksize):
    k1, k2, k3, k4, k5, k6 = jax.random.split(key, 6)
    fan_in = cin * ksize * ksize
    w = jax.random.normal(k1, (ksize, ksize, cin, cout), jnp.float32) / jnp.sqrt(
        jnp.float32(fan_in))
    b = 0.05 * jax.random.normal(k2, (cout,), jnp.float32)
    gamma = 1.0 + 0.1 * jax.random.normal(k3, (cout,), jnp.float32)
    beta = 0.1 * jax.random.normal(k4, (cout,), jnp.float32)
    mean = 0.1 * jax.random.normal(k5, (cout,), jnp.float32)
    var = jnp.abs(jax.random.normal(k6, (cout,), jnp.float32)) + 0.5
    eps = 1e-5
    s = gamma / jnp.sqrt(var + eps)
    w_folded = w * s                       # fold BN scale into weight columns
    t = (b - mean) * s + beta              # folded bias
    return w_folded, t


def init_construction_params(key, ord_floor, block_top, block_mid_etr,
                             block_mid, block_btm_etr, block_btm, pool_floor):
    keys = jax.random.split(key, 7)
    w1, t1 = make_conv_bn_params(keys[0], ord_floor, block_top, 1)
    w2a, t2a = make_conv_bn_params(keys[1], ord_floor, block_mid_etr, 1)
    w2b, t2b = make_conv_bn_params(keys[2], block_mid_etr, block_mid, 3)
    w3a, t3a = make_conv_bn_params(keys[3], ord_floor, block_btm_etr, 1)
    w3b, t3b = make_conv_bn_params(keys[4], block_btm_etr, block_btm, 3)
    w3c, t3c = make_conv_bn_params(keys[5], block_btm, block_btm, 3)
    w4, t4 = make_conv_bn_params(keys[6], ord_floor, pool_floor, 1)

    def mat1x1(w):   # (1,1,cin,cout) -> (cin, cout)
        return w.reshape(w.shape[2], w.shape[3])

    def mat3x3(w):   # (3,3,cin,cout) -> (9, cin, cout), tap = kh*3 + kw
        return w.reshape(9, w.shape[2], w.shape[3])

    # Merge the three 1x1 branches that all read x: [f1 | f2a | f3a].
    w123 = jnp.concatenate([mat1x1(w1), mat1x1(w2a), mat1x1(w3a)], axis=1)
    t123 = jnp.concatenate([t1, t2a, t3a], axis=0)

    return {
        "w123": w123, "t123": t123.reshape(1, -1),
        "w2b": mat3x3(w2b), "t2b": t2b.reshape(1, -1),
        "w3b": mat3x3(w3b), "t3b": t3b.reshape(1, -1),
        "w3c": mat3x3(w3c), "t3c": t3c.reshape(1, -1),
        "w4": mat1x1(w4), "t4": t4.reshape(1, -1),
    }


# ---------------------------------------------------------------------------
# Pure-JAX f32 reference (same folded params, same branch wiring)
# ---------------------------------------------------------------------------
def construction_reference(x_nchw, params):
    hp = jax.lax.Precision.HIGHEST
    x = jnp.transpose(x_nchw, (0, 2, 3, 1)).astype(jnp.float32)   # NHWC

    def conv1x1(a, w, t):
        return jax.nn.relu(jnp.einsum("nhwc,cd->nhwd", a, w, precision=hp) + t)

    def conv3x3(a, w9, t):
        N, H, W, _ = a.shape
        ap = jnp.pad(a, ((0, 0), (1, 1), (1, 1), (0, 0)))
        acc = jnp.zeros((N, H, W, w9.shape[2]), jnp.float32)
        for tap in range(9):
            di, dj = tap // 3, tap % 3
            acc = acc + jnp.einsum("nhwc,cd->nhwd",
                                   ap[:, di:di + H, dj:dj + W, :], w9[tap],
                                   precision=hp)
        return jax.nn.relu(acc + t)

    def maxpool(a):
        N, H, W, _ = a.shape
        ap = jnp.pad(a, ((0, 0), (1, 1), (1, 1), (0, 0)),
                     constant_values=-jnp.inf)
        m = ap[:, 0:H, 0:W, :]
        for tap in range(1, 9):
            di, dj = tap // 3, tap % 3
            m = jnp.maximum(m, ap[:, di:di + H, dj:dj + W, :])
        return m

    cm2 = params["w2b"].shape[1]
    cm3 = params["w3b"].shape[1]
    c_top = params["w123"].shape[1] - cm2 - cm3

    y = conv1x1(x, params["w123"], params["t123"][0])
    b1 = y[..., :c_top]
    a2 = y[..., c_top:c_top + cm2]
    a3 = y[..., c_top + cm2:]
    b2 = conv3x3(a2, params["w2b"], params["t2b"][0])
    b3 = conv3x3(conv3x3(a3, params["w3b"], params["t3b"][0]),
                 params["w3c"], params["t3c"][0])
    b4 = conv1x1(maxpool(x), params["w4"], params["t4"][0])
    out = jnp.concatenate([b1, b2, b3, b4], axis=-1)
    return jnp.transpose(out, (0, 3, 1, 2))


if __name__ == "__main__":
    key = jax.random.PRNGKey(0)
    k_x, k_p = jax.random.split(key)

    # Small inception-block config.
    batch, ord_floor, spatial = 2, 8, 16
    block_top, block_mid_etr, block_mid = 8, 8, 16
    block_btm_etr, block_btm, pool_floor = 4, 8, 8

    x = jax.random.normal(k_x, (batch, ord_floor, spatial, spatial), jnp.float32)
    params = init_construction_params(
        k_p, ord_floor, block_top, block_mid_etr, block_mid,
        block_btm_etr, block_btm, pool_floor)

    out = construction_forward(x, params)
    out = jax.block_until_ready(out)

    expected_channels = block_top + block_mid + block_btm + pool_floor
    assert out.shape == (batch, expected_channels, spatial, spatial), out.shape
    assert jnp.all(jnp.isfinite(out))

    # Correctness vs. f32 reference (bf16 MXU inputs -> loose tolerance).
    ref = construction_reference(x, params)
    max_err = float(jnp.max(jnp.abs(out - ref)))
    assert max_err < 0.2, f"max abs error vs f32 reference: {max_err}"

    print("KERNEL_OK")
</pallas_src>

<mosaic_0001>
module attributes {stable_mosaic.version = 11 : i64} {
  func.func @_inception_kernel(%arg0: i32, %arg1: memref<1x16x16x8xbf16, #tpu.memory_space<vmem>>, %arg2: memref<8x20xbf16, #tpu.memory_space<vmem>>, %arg3: memref<1x20xf32, #tpu.memory_space<vmem>>, %arg4: memref<9x8x16xbf16, #tpu.memory_space<vmem>>, %arg5: memref<1x16xf32, #tpu.memory_space<vmem>>, %arg6: memref<9x4x8xbf16, #tpu.memory_space<vmem>>, %arg7: memref<1x8xf32, #tpu.memory_space<vmem>>, %arg8: memref<9x8x8xbf16, #tpu.memory_space<vmem>>, %arg9: memref<1x8xf32, #tpu.memory_space<vmem>>, %arg10: memref<8x8xbf16, #tpu.memory_space<vmem>>, %arg11: memref<1x8xf32, #tpu.memory_space<vmem>>, %arg12: memref<1x256x40xf32, #tpu.memory_space<vmem>>, %arg13: memref<18x18x8xf32, #tpu.memory_space<vmem>>) attributes {dimension_semantics = [#tpu.dimension_semantics<parallel>], iteration_bounds = array<i64: 2>, scalar_prefetch = 0 : i64, scratch_operands = 1 : i64, tpu.core_type = #tpu.core_type<tc>, window_params = [{transform_indices = @transform_0, window_bounds = array<i64: 1, 16, 16, 8>}, {pipeline_mode = #tpu.pipeline_mode<synchronous>, transform_indices = @transform_1, window_bounds = array<i64: 8, 20>}, {pipeline_mode = #tpu.pipeline_mode<synchronous>, transform_indices = @transform_2, window_bounds = array<i64: 1, 20>}, {pipeline_mode = #tpu.pipeline_mode<synchronous>, transform_indices = @transform_3, window_bounds = array<i64: 9, 8, 16>}, {pipeline_mode = #tpu.pipeline_mode<synchronous>, transform_indices = @transform_4, window_bounds = array<i64: 1, 16>}, {pipeline_mode = #tpu.pipeline_mode<synchronous>, transform_indices = @transform_5, window_bounds = array<i64: 9, 4, 8>}, {pipeline_mode = #tpu.pipeline_mode<synchronous>, transform_indices = @transform_6, window_bounds = array<i64: 1, 8>}, {pipeline_mode = #tpu.pipeline_mode<synchronous>, transform_indices = @transform_7, window_bounds = array<i64: 9, 8, 8>}, {pipeline_mode = #tpu.pipeline_mode<synchronous>, transform_indices = @transform_8, window_bounds = array<i64: 1, 8>}, {pipeline_mode = #tpu.pipeline_mode<synchronous>, transform_indices = @transform_9, window_bounds = array<i64: 8, 8>}, {pipeline_mode = #tpu.pipeline_mode<synchronous>, transform_indices = @transform_10, window_bounds = array<i64: 1, 8>}, {transform_indices = @transform_11, window_bounds = array<i64: 1, 256, 40>}]} {
    %c0 = arith.constant 0 : index
    %c0_0 = arith.constant 0 : index
    %c0_1 = arith.constant 0 : index
    %c0_2 = arith.constant 0 : index
    %0 = vector.load %arg1[%c0, %c0_0, %c0_1, %c0_2] : memref<1x16x16x8xbf16, #tpu.memory_space<vmem>>, vector<1x16x16x8xbf16>
    %1 = vector.shape_cast %0 : vector<1x16x16x8xbf16> to vector<16x16x8xbf16>
    %2 = vector.shape_cast %1 : vector<16x16x8xbf16> to vector<256x8xbf16>
    %c0_3 = arith.constant 0 : index
    %c0_4 = arith.constant 0 : index
    %3 = vector.load %arg2[%c0_3, %c0_4] : memref<8x20xbf16, #tpu.memory_space<vmem>>, vector<8x20xbf16>
    %cst = arith.constant dense<0.000000e+00> : vector<256x20xf32>
    %4 = tpu.matmul %2, %3, %cst {dimension_numbers = #tpu.dot_dimension_numbers<[1], [0], [0], [1], [0, 0, 1, 1], [], []>} : vector<256x8xbf16>, vector<8x20xbf16>, vector<256x20xf32> -> vector<256x20xf32>
    %c0_5 = arith.constant 0 : index
    %c0_6 = arith.constant 0 : index
    %5 = vector.load %arg3[%c0_5, %c0_6] : memref<1x20xf32, #tpu.memory_space<vmem>>, vector<1x20xf32>
    %6 = vector.broadcast %5 : vector<1x20xf32> to vector<256x20xf32>
    %7 = arith.addf %4, %6 : vector<256x20xf32>
    %cst_7 = arith.constant 0.000000e+00 : f32
    %8 = vector.broadcast %cst_7 : f32 to vector<256x20xf32>
    %9 = arith.maximumf %7, %8 : vector<256x20xf32>
    %10 = vector.extract_strided_slice %9 {offsets = [0, 0], sizes = [256, 8], strides = [1, 1]} : vector<256x20xf32> to vector<256x8xf32>
    %11 = vector.extract_strided_slice %9 {offsets = [0, 8], sizes = [256, 8], strides = [1, 1]} : vector<256x20xf32> to vector<256x8xf32>
    %12 = vector.extract_strided_slice %9 {offsets = [0, 16], sizes = [256, 4], strides = [1, 1]} : vector<256x20xf32> to vector<256x4xf32>
    %cst_8 = arith.constant 0.000000e+00 : f32
    %13 = vector.broadcast %cst_8 : f32 to vector<18x18x8xf32>
    %c0_9 = arith.constant 0 : index
    %c0_10 = arith.constant 0 : index
    %c0_11 = arith.constant 0 : index
    %14 = vector.load %arg13[%c0_9, %c0_10, %c0_11] : memref<18x18x8xf32, #tpu.memory_space<vmem>>, vector<18x18x8xf32>
    tpu.vector_store %arg13[%c0_9, %c0_10, %c0_11], %13 {strides = array<i32>} : memref<18x18x8xf32, #tpu.memory_space<vmem>>, vector<18x18x8xf32>,
    %15 = vector.shape_cast %11 : vector<256x8xf32> to vector<16x16x8xf32>
    %c1 = arith.constant 1 : index
    %c1_12 = arith.constant 1 : index
    %c0_13 = arith.constant 0 : index
    %16 = vector.load %arg13[%c1, %c1_12, %c0_13] : memref<18x18x8xf32, #tpu.memory_space<vmem>>, vector<16x16x8xf32>
    tpu.vector_store %arg13[%c1, %c1_12, %c0_13], %15 {strides = array<i32>} : memref<18x18x8xf32, #tpu.memory_space<vmem>>, vector<16x16x8xf32>,
    %cst_14 = arith.constant 0.000000e+00 : f32
    %17 = vector.broadcast %cst_14 : f32 to vector<256x16xf32>
    %c0_15 = arith.constant 0 : index
    %c0_16 = arith.constant 0 : index
    %c0_17 = arith.constant 0 : index
    %18 = vector.load %arg13[%c0_15, %c0_16, %c0_17] : memref<18x18x8xf32, #tpu.memory_space<vmem>>, vector<16x16x8xf32>
    %19 = vector.shape_cast %18 : vector<16x16x8xf32> to vector<256x8xf32>
    %20 = arith.truncf %19 : vector<256x8xf32> to vector<256x8xbf16>
    %c0_18 = arith.constant 0 : index
    %c0_19 = arith.constant 0 : index
    %c0_20 = arith.constant 0 : index
    %21 = vector.load %arg4[%c0_18, %c0_19, %c0_20] : memref<9x8x16xbf16, #tpu.memory_space<vmem>>, vector<1x8x16xbf16>
    %22 = vector.shape_cast %21 : vector<1x8x16xbf16> to vector<8x16xbf16>
    %cst_21 = arith.constant dense<0.000000e+00> : vector<256x16xf32>
    %23 = tpu.matmul %20, %22, %cst_21 {dimension_numbers = #tpu.dot_dimension_numbers<[1], [0], [0], [1], [0, 0, 1, 1], [], []>} : vector<256x8xbf16>, vector<8x16xbf16>, vector<256x16xf32> -> vector<256x16xf32>
    %24 = arith.addf %17, %23 : vector<256x16xf32>
    %c0_22 = arith.constant 0 : index
    %c1_23 = arith.constant 1 : index
    %c0_24 = arith.constant 0 : index
    %25 = vector.load %arg13[%c0_22, %c1_23, %c0_24] : memref<18x18x8xf32, #tpu.memory_space<vmem>>, vector<16x16x8xf32>
    %26 = vector.shape_cast %25 : vector<16x16x8xf32> to vector<256x8xf32>
    %27 = arith.truncf %26 : vector<256x8xf32> to vector<256x8xbf16>
    %c1_25 = arith.constant 1 : index
    %c0_26 = arith.constant 0 : index
    %c0_27 = arith.constant 0 : index
    %28 = vector.load %arg4[%c1_25, %c0_26, %c0_27] : memref<9x8x16xbf16, #tpu.memory_space<vmem>>, vector<1x8x16xbf16>
    %29 = vector.shape_cast %28 : vector<1x8x16xbf16> to vector<8x16xbf16>
    %cst_28 = arith.constant dense<0.000000e+00> : vector<256x16xf32>
    %30 = tpu.matmul %27, %29, %cst_28 {dimension_numbers = #tpu.dot_dimension_numbers<[1], [0], [0], [1], [0, 0, 1, 1], [], []>} : vector<256x8xbf16>, vector<8x16xbf16>, vector<256x16xf32> -> vector<256x16xf32>
    %31 = arith.addf %24, %30 : vector<256x16xf32>
    %c0_29 = arith.constant 0 : index
    %c2 = arith.constant 2 : index
    %c0_30 = arith.constant 0 : index
    %32 = vector.load %arg13[%c0_29, %c2, %c0_30] : memref<18x18x8xf32, #tpu.memory_space<vmem>>, vector<16x16x8xf32>
    %33 = vector.shape_cast %32 : vector<16x16x8xf32> to vector<256x8xf32>
    %34 = arith.truncf %33 : vector<256x8xf32> to vector<256x8xbf16>
    %c2_31 = arith.constant 2 : index
    %c0_32 = arith.constant 0 : index
    %c0_33 = arith.constant 0 : index
    %35 = vector.load %arg4[%c2_31, %c0_32, %c0_33] : memref<9x8x16xbf16, #tpu.memory_space<vmem>>, vector<1x8x16xbf16>
    %36 = vector.shape_cast %35 : vector<1x8x16xbf16> to vector<8x16xbf16>
    %cst_34 = arith.constant dense<0.000000e+00> : vector<256x16xf32>
    %37 = tpu.matmul %34, %36, %cst_34 {dimension_numbers = #tpu.dot_dimension_numbers<[1], [0], [0], [1], [0, 0, 1, 1], [], []>} : vector<256x8xbf16>, vector<8x16xbf16>, vector<256x16xf32> -> vector<256x16xf32>
    %38 = arith.addf %31, %37 : vector<256x16xf32>
    %c1_35 = arith.constant 1 : index
    %c0_36 = arith.constant 0 : index
    %c0_37 = arith.constant 0 : index
    %39 = vector.load %arg13[%c1_35, %c0_36, %c0_37] : memref<18x18x8xf32, #tpu.memory_space<vmem>>, vector<16x16x8xf32>
    %40 = vector.shape_cast %39 : vector<16x16x8xf32> to vector<256x8xf32>
    %41 = arith.truncf %40 : vector<256x8xf32> to vector<256x8xbf16>
    %c3 = arith.constant 3 : index
    %c0_38 = arith.constant 0 : index
    %c0_39 = arith.constant 0 : index
    %42 = vector.load %arg4[%c3, %c0_38, %c0_39] : memref<9x8x16xbf16, #tpu.memory_space<vmem>>, vector<1x8x16xbf16>
    %43 = vector.shape_cast %42 : vector<1x8x16xbf16> to vector<8x16xbf16>
    %cst_40 = arith.constant dense<0.000000e+00> : vector<256x16xf32>
    %44 = tpu.matmul %41, %43, %cst_40 {dimension_numbers = #tpu.dot_dimension_numbers<[1], [0], [0], [1], [0, 0, 1, 1], [], []>} : vector<256x8xbf16>, vector<8x16xbf16>, vector<256x16xf32> -> vector<256x16xf32>
    %45 = arith.addf %38, %44 : vector<256x16xf32>
    %c1_41 = arith.constant 1 : index
    %c1_42 = arith.constant 1 : index
    %c0_43 = arith.constant 0 : index
    %46 = vector.load %arg13[%c1_41, %c1_42, %c0_43] : memref<18x18x8xf32, #tpu.memory_space<vmem>>, vector<16x16x8xf32>
    %47 = vector.shape_cast %46 : vector<16x16x8xf32> to vector<256x8xf32>
    %48 = arith.truncf %47 : vector<256x8xf32> to vector<256x8xbf16>
    %c4 = arith.constant 4 : index
    %c0_44 = arith.constant 0 : index
    %c0_45 = arith.constant 0 : index
    %49 = vector.load %arg4[%c4, %c0_44, %c0_45] : memref<9x8x16xbf16, #tpu.memory_space<vmem>>, vector<1x8x16xbf16>
    %50 = vector.shape_cast %49 : vector<1x8x16xbf16> to vector<8x16xbf16>
    %cst_46 = arith.constant dense<0.000000e+00> : vector<256x16xf32>
    %51 = tpu.matmul %48, %50, %cst_46 {dimension_numbers = #tpu.dot_dimension_numbers<[1], [0], [0], [1], [0, 0, 1, 1], [], []>} : vector<256x8xbf16>, vector<8x16xbf16>, vector<256x16xf32> -> vector<256x16xf32>
    %52 = arith.addf %45, %51 : vector<256x16xf32>
    %c1_47 = arith.constant 1 : index
    %c2_48 = arith.constant 2 : index
    %c0_49 = arith.constant 0 : index
    %53 = vector.load %arg13[%c1_47, %c2_48, %c0_49] : memref<18x18x8xf32, #tpu.memory_space<vmem>>, vector<16x16x8xf32>
    %54 = vector.shape_cast %53 : vector<16x16x8xf32> to vector<256x8xf32>
    %55 = arith.truncf %54 : vector<256x8xf32> to vector<256x8xbf16>
    %c5 = arith.constant 5 : index
    %c0_50 = arith.constant 0 : index
    %c0_51 = arith.constant 0 : index
    %56 = vector.load %arg4[%c5, %c0_50, %c0_51] : memref<9x8x16xbf16, #tpu.memory_space<vmem>>, vector<1x8x16xbf16>
    %57 = vector.shape_cast %56 : vector<1x8x16xbf16> to vector<8x16xbf16>
    %cst_52 = arith.constant dense<0.000000e+00> : vector<256x16xf32>
    %58 = tpu.matmul %55, %57, %cst_52 {dimension_numbers = #tpu.dot_dimension_numbers<[1], [0], [0], [1], [0, 0, 1, 1], [], []>} : vector<256x8xbf16>, vector<8x16xbf16>, vector<256x16xf32> -> vector<256x16xf32>
    %59 = arith.addf %52, %58 : vector<256x16xf32>
    %c2_53 = arith.constant 2 : index
    %c0_54 = arith.constant 0 : index
    %c0_55 = arith.constant 0 : index
    %60 = vector.load %arg13[%c2_53, %c0_54, %c0_55] : memref<18x18x8xf32, #tpu.memory_space<vmem>>, vector<16x16x8xf32>
    %61 = vector.shape_cast %60 : vector<16x16x8xf32> to vector<256x8xf32>
    %62 = arith.truncf %61 : vector<256x8xf32> to vector<256x8xbf16>
    %c6 = arith.constant 6 : index
    %c0_56 = arith.constant 0 : index
    %c0_57 = arith.constant 0 : index
    %63 = vector.load %arg4[%c6, %c0_56, %c0_57] : memref<9x8x16xbf16, #tpu.memory_space<vmem>>, vector<1x8x16xbf16>
    %64 = vector.shape_cast %63 : vector<1x8x16xbf16> to vector<8x16xbf16>
    %cst_58 = arith.constant dense<0.000000e+00> : vector<256x16xf32>
    %65 = tpu.matmul %62, %64, %cst_58 {dimension_numbers = #tpu.dot_dimension_numbers<[1], [0], [0], [1], [0, 0, 1, 1], [], []>} : vector<256x8xbf16>, vector<8x16xbf16>, vector<256x16xf32> -> vector<256x16xf32>
    %66 = arith.addf %59, %65 : vector<256x16xf32>
    %c2_59 = arith.constant 2 : index
    %c1_60 = arith.constant 1 : index
    %c0_61 = arith.constant 0 : index
    %67 = vector.load %arg13[%c2_59, %c1_60, %c0_61] : memref<18x18x8xf32, #tpu.memory_space<vmem>>, vector<16x16x8xf32>
    %68 = vector.shape_cast %67 : vector<16x16x8xf32> to vector<256x8xf32>
    %69 = arith.truncf %68 : vector<256x8xf32> to vector<256x8xbf16>
    %c7 = arith.constant 7 : index
    %c0_62 = arith.constant 0 : index
    %c0_63 = arith.constant 0 : index
    %70 = vector.load %arg4[%c7, %c0_62, %c0_63] : memref<9x8x16xbf16, #tpu.memory_space<vmem>>, vector<1x8x16xbf16>
    %71 = vector.shape_cast %70 : vector<1x8x16xbf16> to vector<8x16xbf16>
    %cst_64 = arith.constant dense<0.000000e+00> : vector<256x16xf32>
    %72 = tpu.matmul %69, %71, %cst_64 {dimension_numbers = #tpu.dot_dimension_numbers<[1], [0], [0], [1], [0, 0, 1, 1], [], []>} : vector<256x8xbf16>, vector<8x16xbf16>, vector<256x16xf32> -> vector<256x16xf32>
    %73 = arith.addf %66, %72 : vector<256x16xf32>
    %c2_65 = arith.constant 2 : index
    %c2_66 = arith.constant 2 : index
    %c0_67 = arith.constant 0 : index
    %74 = vector.load %arg13[%c2_65, %c2_66, %c0_67] : memref<18x18x8xf32, #tpu.memory_space<vmem>>, vector<16x16x8xf32>
    %75 = vector.shape_cast %74 : vector<16x16x8xf32> to vector<256x8xf32>
    %76 = arith.truncf %75 : vector<256x8xf32> to vector<256x8xbf16>
    %c8 = arith.constant 8 : index
    %c0_68 = arith.constant 0 : index
    %c0_69 = arith.constant 0 : index
    %77 = vector.load %arg4[%c8, %c0_68, %c0_69] : memref<9x8x16xbf16, #tpu.memory_space<vmem>>, vector<1x8x16xbf16>
    %78 = vector.shape_cast %77 : vector<1x8x16xbf16> to vector<8x16xbf16>
    %cst_70 = arith.constant dense<0.000000e+00> : vector<256x16xf32>
    %79 = tpu.matmul %76, %78, %cst_70 {dimension_numbers = #tpu.dot_dimension_numbers<[1], [0], [0], [1], [0, 0, 1, 1], [], []>} : vector<256x8xbf16>, vector<8x16xbf16>, vector<256x16xf32> -> vector<256x16xf32>
    %80 = arith.addf %73, %79 : vector<256x16xf32>
    %c0_71 = arith.constant 0 : index
    %c0_72 = arith.constant 0 : index
    %81 = vector.load %arg5[%c0_71, %c0_72] : memref<1x16xf32, #tpu.memory_space<vmem>>, vector<1x16xf32>
    %82 = vector.broadcast %81 : vector<1x16xf32> to vector<256x16xf32>
    %83 = arith.addf %80, %82 : vector<256x16xf32>
    %cst_73 = arith.constant 0.000000e+00 : f32
    %84 = vector.broadcast %cst_73 : f32 to vector<256x16xf32>
    %85 = arith.maximumf %83, %84 : vector<256x16xf32>
    %cst_74 = arith.constant 0.000000e+00 : f32
    %86 = vector.broadcast %cst_74 : f32 to vector<18x18x8xf32>
    %c0_75 = arith.constant 0 : index
    %c0_76 = arith.constant 0 : index
    %c0_77 = arith.constant 0 : index
    %87 = vector.load %arg13[%c0_75, %c0_76, %c0_77] : memref<18x18x8xf32, #tpu.memory_space<vmem>>, vector<18x18x8xf32>
    tpu.vector_store %arg13[%c0_75, %c0_76, %c0_77], %86 {strides = array<i32>} : memref<18x18x8xf32, #tpu.memory_space<vmem>>, vector<18x18x8xf32>,
    %88 = vector.shape_cast %12 : vector<256x4xf32> to vector<16x16x4xf32>
    %c1_78 = arith.constant 1 : index
    %c1_79 = arith.constant 1 : index
    %c0_80 = arith.constant 0 : index
    %89 = vector.load %arg13[%c1_78, %c1_79, %c0_80] : memref<18x18x8xf32, #tpu.memory_space<vmem>>, vector<16x16x4xf32>
    tpu.vector_store %arg13[%c1_78, %c1_79, %c0_80], %88 {strides = array<i32>} : memref<18x18x8xf32, #tpu.memory_space<vmem>>, vector<16x16x4xf32>,
    %cst_81 = arith.constant 0.000000e+00 : f32
    %90 = vector.broadcast %cst_81 : f32 to vector<256x8xf32>
    %c0_82 = arith.constant 0 : index
    %c0_83 = arith.constant 0 : index
    %c0_84 = arith.constant 0 : index
    %91 = vector.load %arg13[%c0_82, %c0_83, %c0_84] : memref<18x18x8xf32, #tpu.memory_space<vmem>>, vector<16x16x4xf32>
    %92 = vector.shape_cast %91 : vector<16x16x4xf32> to vector<256x4xf32>
    %93 = arith.truncf %92 : vector<256x4xf32> to vector<256x4xbf16>
    %c0_85 = arith.constant 0 : index
    %c0_86 = arith.constant 0 : index
    %c0_87 = arith.constant 0 : index
    %94 = vector.load %arg6[%c0_85, %c0_86, %c0_87] : memref<9x4x8xbf16, #tpu.memory_space<vmem>>, vector<1x4x8xbf16>
    %95 = vector.shape_cast %94 : vector<1x4x8xbf16> to vector<4x8xbf16>
    %cst_88 = arith.constant dense<0.000000e+00> : vector<256x8xf32>
    %96 = tpu.matmul %93, %95, %cst_88 {dimension_numbers = #tpu.dot_dimension_numbers<[1], [0], [0], [1], [0, 0, 1, 1], [], []>} : vector<256x4xbf16>, vector<4x8xbf16>, vector<256x8xf32> -> vector<256x8xf32>
    %97 = arith.addf %90, %96 : vector<256x8xf32>
    %c0_89 = arith.constant 0 : index
    %c1_90 = arith.constant 1 : index
    %c0_91 = arith.constant 0 : index
    %98 = vector.load %arg13[%c0_89, %c1_90, %c0_91] : memref<18x18x8xf32, #tpu.memory_space<vmem>>, vector<16x16x4xf32>
    %99 = vector.shape_cast %98 : vector<16x16x4xf32> to vector<256x4xf32>
    %100 = arith.truncf %99 : vector<256x4xf32> to vector<256x4xbf16>
    %c1_92 = arith.constant 1 : index
    %c0_93 = arith.constant 0 : index
    %c0_94 = arith.constant 0 : index
    %101 = vector.load %arg6[%c1_92, %c0_93, %c0_94] : memref<9x4x8xbf16, #tpu.memory_space<vmem>>, vector<1x4x8xbf16>
    %102 = vector.shape_cast %101 : vector<1x4x8xbf16> to vector<4x8xbf16>
    %cst_95 = arith.constant dense<0.000000e+00> : vector<256x8xf32>
    %103 = tpu.matmul %100, %102, %cst_95 {dimension_numbers = #tpu.dot_dimension_numbers<[1], [0], [0], [1], [0, 0, 1, 1], [], []>} : vector<256x4xbf16>, vector<4x8xbf16>, vector<256x8xf32> -> vector<256x8xf32>
    %104 = arith.addf %97, %103 : vector<256x8xf32>
    %c0_96 = arith.constant 0 : index
    %c2_97 = arith.constant 2 : index
    %c0_98 = arith.constant 0 : index
    %105 = vector.load %arg13[%c0_96, %c2_97, %c0_98] : memref<18x18x8xf32, #tpu.memory_space<vmem>>, vector<16x16x4xf32>
    %106 = vector.shape_cast %105 : vector<16x16x4xf32> to vector<256x4xf32>
    %107 = arith.truncf %106 : vector<256x4xf32> to vector<256x4xbf16>
    %c2_99 = arith.constant 2 : index
    %c0_100 = arith.constant 0 : index
    %c0_101 = arith.constant 0 : index
    %108 = vector.load %arg6[%c2_99, %c0_100, %c0_101] : memref<9x4x8xbf16, #tpu.memory_space<vmem>>, vector<1x4x8xbf16>
    %109 = vector.shape_cast %108 : vector<1x4x8xbf16> to vector<4x8xbf16>
    %cst_102 = arith.constant dense<0.000000e+00> : vector<256x8xf32>
    %110 = tpu.matmul %107, %109, %cst_102 {dimension_numbers = #tpu.dot_dimension_numbers<[1], [0], [0], [1], [0, 0, 1, 1], [], []>} : vector<256x4xbf16>, vector<4x8xbf16>, vector<256x8xf32> -> vector<256x8xf32>
    %111 = arith.addf %104, %110 : vector<256x8xf32>
    %c1_103 = arith.constant 1 : index
    %c0_104 = arith.constant 0 : index
    %c0_105 = arith.constant 0 : index
    %112 = vector.load %arg13[%c1_103, %c0_104, %c0_105] : memref<18x18x8xf32, #tpu.memory_space<vmem>>, vector<16x16x4xf32>
    %113 = vector.shape_cast %112 : vector<16x16x4xf32> to vector<256x4xf32>
    %114 = arith.truncf %113 : vector<256x4xf32> to vector<256x4xbf16>
    %c3_106 = arith.constant 3 : index
    %c0_107 = arith.constant 0 : index
    %c0_108 = arith.constant 0 : index
    %115 = vector.load %arg6[%c3_106, %c0_107, %c0_108] : memref<9x4x8xbf16, #tpu.memory_space<vmem>>, vector<1x4x8xbf16>
    %116 = vector.shape_cast %115 : vector<1x4x8xbf16> to vector<4x8xbf16>
    %cst_109 = arith.constant dense<0.000000e+00> : vector<256x8xf32>
    %117 = tpu.matmul %114, %116, %cst_109 {dimension_numbers = #tpu.dot_dimension_numbers<[1], [0], [0], [1], [0, 0, 1, 1], [], []>} : vector<256x4xbf16>, vector<4x8xbf16>, vector<256x8xf32> -> vector<256x8xf32>
    %118 = arith.addf %111, %117 : vector<256x8xf32>
    %c1_110 = arith.constant 1 : index
    %c1_111 = arith.constant 1 : index
    %c0_112 = arith.constant 0 : index
    %119 = vector.load %arg13[%c1_110, %c1_111, %c0_112] : memref<18x18x8xf32, #tpu.memory_space<vmem>>, vector<16x16x4xf32>
    %120 = vector.shape_cast %119 : vector<16x16x4xf32> to vector<256x4xf32>
    %121 = arith.truncf %120 : vector<256x4xf32> to vector<256x4xbf16>
    %c4_113 = arith.constant 4 : index
    %c0_114 = arith.constant 0 : index
    %c0_115 = arith.constant 0 : index
    %122 = vector.load %arg6[%c4_113, %c0_114, %c0_115] : memref<9x4x8xbf16, #tpu.memory_space<vmem>>, vector<1x4x8xbf16>
    %123 = vector.shape_cast %122 : vector<1x4x8xbf16> to vector<4x8xbf16>
    %cst_116 = arith.constant dense<0.000000e+00> : vector<256x8xf32>
    %124 = tpu.matmul %121, %123, %cst_116 {dimension_numbers = #tpu.dot_dimension_numbers<[1], [0], [0], [1], [0, 0, 1, 1], [], []>} : vector<256x4xbf16>, vector<4x8xbf16>, vector<256x8xf32> -> vector<256x8xf32>
    %125 = arith.addf %118, %124 : vector<256x8xf32>
    %c1_117 = arith.constant 1 : index
    %c2_118 = arith.constant 2 : index
    %c0_119 = arith.constant 0 : index
    %126 = vector.load %arg13[%c1_117, %c2_118, %c0_119] : memref<18x18x8xf32, #tpu.memory_space<vmem>>, vector<16x16x4xf32>
    %127 = vector.shape_cast %126 : vector<16x16x4xf32> to vector<256x4xf32>
    %128 = arith.truncf %127 : vector<256x4xf32> to vector<256x4xbf16>
    %c5_120 = arith.constant 5 : index
    %c0_121 = arith.constant 0 : index
    %c0_122 = arith.constant 0 : index
    %129 = vector.load %arg6[%c5_120, %c0_121, %c0_122] : memref<9x4x8xbf16, #tpu.memory_space<vmem>>, vector<1x4x8xbf16>
    %130 = vector.shape_cast %129 : vector<1x4x8xbf16> to vector<4x8xbf16>
    %cst_123 = arith.constant dense<0.000000e+00> : vector<256x8xf32>
    %131 = tpu.matmul %128, %130, %cst_123 {dimension_numbers = #tpu.dot_dimension_numbers<[1], [0], [0], [1], [0, 0, 1, 1], [], []>} : vector<256x4xbf16>, vector<4x8xbf16>, vector<256x8xf32> -> vector<256x8xf32>
    %132 = arith.addf %125, %131 : vector<256x8xf32>
    %c2_124 = arith.constant 2 : index
    %c0_125 = arith.constant 0 : index
    %c0_126 = arith.constant 0 : index
    %133 = vector.load %arg13[%c2_124, %c0_125, %c0_126] : memref<18x18x8xf32, #tpu.memory_space<vmem>>, vector<16x16x4xf32>
    %134 = vector.shape_cast %133 : vector<16x16x4xf32> to vector<256x4xf32>
    %135 = arith.truncf %134 : vector<256x4xf32> to vector<256x4xbf16>
    %c6_127 = arith.constant 6 : index
    %c0_128 = arith.constant 0 : index
    %c0_129 = arith.constant 0 : index
    %136 = vector.load %arg6[%c6_127, %c0_128, %c0_129] : memref<9x4x8xbf16, #tpu.memory_space<vmem>>, vector<1x4x8xbf16>
    %137 = vector.shape_cast %136 : vector<1x4x8xbf16> to vector<4x8xbf16>
    %cst_130 = arith.constant dense<0.000000e+00> : vector<256x8xf32>
    %138 = tpu.matmul %135, %137, %cst_130 {dimension_numbers = #tpu.dot_dimension_numbers<[1], [0], [0], [1], [0, 0, 1, 1], [], []>} : vector<256x4xbf16>, vector<4x8xbf16>, vector<256x8xf32> -> vector<256x8xf32>
    %139 = arith.addf %132, %138 : vector<256x8xf32>
    %c2_131 = arith.constant 2 : index
    %c1_132 = arith.constant 1 : index
    %c0_133 = arith.constant 0 : index
    %140 = vector.load %arg13[%c2_131, %c1_132, %c0_133] : memref<18x18x8xf32, #tpu.memory_space<vmem>>, vector<16x16x4xf32>
    %141 = vector.shape_cast %140 : vector<16x16x4xf32> to vector<256x4xf32>
    %142 = arith.truncf %141 : vector<256x4xf32> to vector<256x4xbf16>
    %c7_134 = arith.constant 7 : index
    %c0_135 = arith.constant 0 : index
    %c0_136 = arith.constant 0 : index
    %143 = vector.load %arg6[%c7_134, %c0_135, %c0_136] : memref<9x4x8xbf16, #tpu.memory_space<vmem>>, vector<1x4x8xbf16>
    %144 = vector.shape_cast %143 : vector<1x4x8xbf16> to vector<4x8xbf16>
    %cst_137 = arith.constant dense<0.000000e+00> : vector<256x8xf32>
    %145 = tpu.matmul %142, %144, %cst_137 {dimension_numbers = #tpu.dot_dimension_numbers<[1], [0], [0], [1], [0, 0, 1, 1], [], []>} : vector<256x4xbf16>, vector<4x8xbf16>, vector<256x8xf32> -> vector<256x8xf32>
    %146 = arith.addf %139, %145 : vector<256x8xf32>
    %c2_138 = arith.constant 2 : index
    %c2_139 = arith.constant 2 : index
    %c0_140 = arith.constant 0 : index
    %147 = vector.load %arg13[%c2_138, %c2_139, %c0_140] : memref<18x18x8xf32, #tpu.memory_space<vmem>>, vector<16x16x4xf32>
    %148 = vector.shape_cast %147 : vector<16x16x4xf32> to vector<256x4xf32>
    %149 = arith.truncf %148 : vector<256x4xf32> to vector<256x4xbf16>
    %c8_141 = arith.constant 8 : index
    %c0_142 = arith.constant 0 : index
    %c0_143 = arith.constant 0 : index
    %150 = vector.load %arg6[%c8_141, %c0_142, %c0_143] : memref<9x4x8xbf16, #tpu.memory_space<vmem>>, vector<1x4x8xbf16>
    %151 = vector.shape_cast %150 : vector<1x4x8xbf16> to vector<4x8xbf16>
    %cst_144 = arith.constant dense<0.000000e+00> : vector<256x8xf32>
    %152 = tpu.matmul %149, %151, %cst_144 {dimension_numbers = #tpu.dot_dimension_numbers<[1], [0], [0], [1], [0, 0, 1, 1], [], []>} : vector<256x4xbf16>, vector<4x8xbf16>, vector<256x8xf32> -> vector<256x8xf32>
    %153 = arith.addf %146, %152 : vector<256x8xf32>
    %c0_145 = arith.constant 0 : index
    %c0_146 = arith.constant 0 : index
    %154 = vector.load %arg7[%c0_145, %c0_146] : memref<1x8xf32, #tpu.memory_space<vmem>>, vector<1x8xf32>
    %155 = vector.broadcast %154 : vector<1x8xf32> to vector<256x8xf32>
    %156 = arith.addf %153, %155 : vector<256x8xf32>
    %cst_147 = arith.constant 0.000000e+00 : f32
    %157 = vector.broadcast %cst_147 : f32 to vector<256x8xf32>
    %158 = arith.maximumf %156, %157 : vector<256x8xf32>
    %cst_148 = arith.constant 0.000000e+00 : f32
    %159 = vector.broadcast %cst_148 : f32 to vector<18x18x8xf32>
    %c0_149 = arith.constant 0 : index
    %c0_150 = arith.constant 0 : index
    %c0_151 = arith.constant 0 : index
    %160 = vector.load %arg13[%c0_149, %c0_150, %c0_151] : memref<18x18x8xf32, #tpu.memory_space<vmem>>, vector<18x18x8xf32>
    tpu.vector_store %arg13[%c0_149, %c0_150, %c0_151], %159 {strides = array<i32>} : memref<18x18x8xf32, #tpu.memory_space<vmem>>, vector<18x18x8xf32>,
    %161 = vector.shape_cast %158 : vector<256x8xf32> to vector<16x16x8xf32>
    %c1_152 = arith.constant 1 : index
    %c1_153 = arith.constant 1 : index
    %c0_154 = arith.constant 0 : index
    %162 = vector.load %arg13[%c1_152, %c1_153, %c0_154] : memref<18x18x8xf32, #tpu.memory_space<vmem>>, vector<16x16x8xf32>
    tpu.vector_store %arg13[%c1_152, %c1_153, %c0_154], %161 {strides = array<i32>} : memref<18x18x8xf32, #tpu.memory_space<vmem>>, vector<16x16x8xf32>,
    %cst_155 = arith.constant 0.000000e+00 : f32
    %163 = vector.broadcast %cst_155 : f32 to vector<256x8xf32>
    %c0_156 = arith.constant 0 : index
    %c0_157 = arith.constant 0 : index
    %c0_158 = arith.constant 0 : index
    %164 = vector.load %arg13[%c0_156, %c0_157, %c0_158] : memref<18x18x8xf32, #tpu.memory_space<vmem>>, vector<16x16x8xf32>
    %165 = vector.shape_cast %164 : vector<16x16x8xf32> to vector<256x8xf32>
    %166 = arith.truncf %165 : vector<256x8xf32> to vector<256x8xbf16>
    %c0_159 = arith.constant 0 : index
    %c0_160 = arith.constant 0 : index
    %c0_161 = arith.constant 0 : index
    %167 = vector.load %arg8[%c0_159, %c0_160, %c0_161] : memref<9x8x8xbf16, #tpu.memory_space<vmem>>, vector<1x8x8xbf16>
    %168 = vector.shape_cast %167 : vector<1x8x8xbf16> to vector<8x8xbf16>
    %cst_162 = arith.constant dense<0.000000e+00> : vector<256x8xf32>
    %169 = tpu.matmul %166, %168, %cst_162 {dimension_numbers = #tpu.dot_dimension_numbers<[1], [0], [0], [1], [0, 0, 1, 1], [], []>} : vector<256x8xbf16>, vector<8x8xbf16>, vector<256x8xf32> -> vector<256x8xf32>
    %170 = arith.addf %163, %169 : vector<256x8xf32>
    %c0_163 = arith.constant 0 : index
    %c1_164 = arith.constant 1 : index
    %c0_165 = arith.constant 0 : index
    %171 = vector.load %arg13[%c0_163, %c1_164, %c0_165] : memref<18x18x8xf32, #tpu.memory_space<vmem>>, vector<16x16x8xf32>
    %172 = vector.shape_cast %171 : vector<16x16x8xf32> to vector<256x8xf32>
    %173 = arith.truncf %172 : vector<256x8xf32> to vector<256x8xbf16>
    %c1_166 = arith.constant 1 : index
    %c0_167 = arith.constant 0 : index
    %c0_168 = arith.constant 0 : index
    %174 = vector.load %arg8[%c1_166, %c0_167, %c0_168] : memref<9x8x8xbf16, #tpu.memory_space<vmem>>, vector<1x8x8xbf16>
    %175 = vector.shape_cast %174 : vector<1x8x8xbf16> to vector<8x8xbf16>
    %cst_169 = arith.constant dense<0.000000e+00> : vector<256x8xf32>
    %176 = tpu.matmul %173, %175, %cst_169 {dimension_numbers = #tpu.dot_dimension_numbers<[1], [0], [0], [1], [0, 0, 1, 1], [], []>} : vector<256x8xbf16>, vector<8x8xbf16>, vector<256x8xf32> -> vector<256x8xf32>
    %177 = arith.addf %170, %176 : vector<256x8xf32>
    %c0_170 = arith.constant 0 : index
    %c2_171 = arith.constant 2 : index
    %c0_172 = arith.constant 0 : index
    %178 = vector.load %arg13[%c0_170, %c2_171, %c0_172] : memref<18x18x8xf32, #tpu.memory_space<vmem>>, vector<16x16x8xf32>
    %179 = vector.shape_cast %178 : vector<16x16x8xf32> to vector<256x8xf32>
    %180 = arith.truncf %179 : vector<256x8xf32> to vector<256x8xbf16>
    %c2_173 = arith.constant 2 : index
    %c0_174 = arith.constant 0 : index
    %c0_175 = arith.constant 0 : index
    %181 = vector.load %arg8[%c2_173, %c0_174, %c0_175] : memref<9x8x8xbf16, #tpu.memory_space<vmem>>, vector<1x8x8xbf16>
    %182 = vector.shape_cast %181 : vector<1x8x8xbf16> to vector<8x8xbf16>
    %cst_176 = arith.constant dense<0.000000e+00> : vector<256x8xf32>
    %183 = tpu.matmul %180, %182, %cst_176 {dimension_numbers = #tpu.dot_dimension_numbers<[1], [0], [0], [1], [0, 0, 1, 1], [], []>} : vector<256x8xbf16>, vector<8x8xbf16>, vector<256x8xf32> -> vector<256x8xf32>
    %184 = arith.addf %177, %183 : vector<256x8xf32>
    %c1_177 = arith.constant 1 : index
    %c0_178 = arith.constant 0 : index
    %c0_179 = arith.constant 0 : index
    %185 = vector.load %arg13[%c1_177, %c0_178, %c0_179] : memref<18x18x8xf32, #tpu.memory_space<vmem>>, vector<16x16x8xf32>
    %186 = vector.shape_cast %185 : vector<16x16x8xf32> to vector<256x8xf32>
    %187 = arith.truncf %186 : vector<256x8xf32> to vector<256x8xbf16>
    %c3_180 = arith.constant 3 : index
    %c0_181 = arith.constant 0 : index
    %c0_182 = arith.constant 0 : index
    %188 = vector.load %arg8[%c3_180, %c0_181, %c0_182] : memref<9x8x8xbf16, #tpu.memory_space<vmem>>, vector<1x8x8xbf16>
    %189 = vector.shape_cast %188 : vector<1x8x8xbf16> to vector<8x8xbf16>
    %cst_183 = arith.constant dense<0.000000e+00> : vector<256x8xf32>
    %190 = tpu.matmul %187, %189, %cst_183 {dimension_numbers = #tpu.dot_dimension_numbers<[1], [0], [0], [1], [0, 0, 1, 1], [], []>} : vector<256x8xbf16>, vector<8x8xbf16>, vector<256x8xf32> -> vector<256x8xf32>
    %191 = arith.addf %184, %190 : vector<256x8xf32>
    %c1_184 = arith.constant 1 : index
    %c1_185 = arith.constant 1 : index
    %c0_186 = arith.constant 0 : index
    %192 = vector.load %arg13[%c1_184, %c1_185, %c0_186] : memref<18x18x8xf32, #tpu.memory_space<vmem>>, vector<16x16x8xf32>
    %193 = vector.shape_cast %192 : vector<16x16x8xf32> to vector<256x8xf32>
    %194 = arith.truncf %193 : vector<256x8xf32> to vector<256x8xbf16>
    %c4_187 = arith.constant 4 : index
    %c0_188 = arith.constant 0 : index
    %c0_189 = arith.constant 0 : index
    %195 = vector.load %arg8[%c4_187, %c0_188, %c0_189] : memref<9x8x8xbf16, #tpu.memory_space<vmem>>, vector<1x8x8xbf16>
    %196 = vector.shape_cast %195 : vector<1x8x8xbf16> to vector<8x8xbf16>
    %cst_190 = arith.constant dense<0.000000e+00> : vector<256x8xf32>
    %197 = tpu.matmul %194, %196, %cst_190 {dimension_numbers = #tpu.dot_dimension_numbers<[1], [0], [0], [1], [0, 0, 1, 1], [], []>} : vector<256x8xbf16>, vector<8x8xbf16>, vector<256x8xf32> -> vector<256x8xf32>
    %198 = arith.addf %191, %197 : vector<256x8xf32>
    %c1_191 = arith.constant 1 : index
    %c2_192 = arith.constant 2 : index
    %c0_193 = arith.constant 0 : index
    %199 = vector.load %arg13[%c1_191, %c2_192, %c0_193] : memref<18x18x8xf32, #tpu.memory_space<vmem>>, vector<16x16x8xf32>
    %200 = vector.shape_cast %199 : vector<16x16x8xf32> to vector<256x8xf32>
    %201 = arith.truncf %200 : vector<256x8xf32> to vector<256x8xbf16>
    %c5_194 = arith.constant 5 : index
    %c0_195 = arith.constant 0 : index
    %c0_196 = arith.constant 0 : index
    %202 = vector.load %arg8[%c5_194, %c0_195, %c0_196] : memref<9x8x8xbf16, #tpu.memory_space<vmem>>, vector<1x8x8xbf16>
    %203 = vector.shape_cast %202 : vector<1x8x8xbf16> to vector<8x8xbf16>
    %cst_197 = arith.constant dense<0.000000e+00> : vector<256x8xf32>
    %204 = tpu.matmul %201, %203, %cst_197 {dimension_numbers = #tpu.dot_dimension_numbers<[1], [0], [0], [1], [0, 0, 1, 1], [], []>} : vector<256x8xbf16>, vector<8x8xbf16>, vector<256x8xf32> -> vector<256x8xf32>
    %205 = arith.addf %198, %204 : vector<256x8xf32>
    %c2_198 = arith.constant 2 : index
    %c0_199 = arith.constant 0 : index
    %c0_200 = arith.constant 0 : index
    %206 = vector.load %arg13[%c2_198, %c0_199, %c0_200] : memref<18x18x8xf32, #tpu.memory_space<vmem>>, vector<16x16x8xf32>
    %207 = vector.shape_cast %206 : vector<16x16x8xf32> to vector<256x8xf32>
    %208 = arith.truncf %207 : vector<256x8xf32> to vector<256x8xbf16>
    %c6_201 = arith.constant 6 : index
    %c0_202 = arith.constant 0 : index
    %c0_203 = arith.constant 0 : index
    %209 = vector.load %arg8[%c6_201, %c0_202, %c0_203] : memref<9x8x8xbf16, #tpu.memory_space<vmem>>, vector<1x8x8xbf16>
    %210 = vector.shape_cast %209 : vector<1x8x8xbf16> to vector<8x8xbf16>
    %cst_204 = arith.constant dense<0.000000e+00> : vector<256x8xf32>
    %211 = tpu.matmul %208, %210, %cst_204 {dimension_numbers = #tpu.dot_dimension_numbers<[1], [0], [0], [1], [0, 0, 1, 1], [], []>} : vector<256x8xbf16>, vector<8x8xbf16>, vector<256x8xf32> -> vector<256x8xf32>
    %212 = arith.addf %205, %211 : vector<256x8xf32>
    %c2_205 = arith.constant 2 : index
    %c1_206 = arith.constant 1 : index
    %c0_207 = arith.constant 0 : index
    %213 = vector.load %arg13[%c2_205, %c1_206, %c0_207] : memref<18x18x8xf32, #tpu.memory_space<vmem>>, vector<16x16x8xf32>
    %214 = vector.shape_cast %213 : vector<16x16x8xf32> to vector<256x8xf32>
    %215 = arith.truncf %214 : vector<256x8xf32> to vector<256x8xbf16>
    %c7_208 = arith.constant 7 : index
    %c0_209 = arith.constant 0 : index
    %c0_210 = arith.constant 0 : index
    %216 = vector.load %arg8[%c7_208, %c0_209, %c0_210] : memref<9x8x8xbf16, #tpu.memory_space<vmem>>, vector<1x8x8xbf16>
    %217 = vector.shape_cast %216 : vector<1x8x8xbf16> to vector<8x8xbf16>
    %cst_211 = arith.constant dense<0.000000e+00> : vector<256x8xf32>
    %218 = tpu.matmul %215, %217, %cst_211 {dimension_numbers = #tpu.dot_dimension_numbers<[1], [0], [0], [1], [0, 0, 1, 1], [], []>} : vector<256x8xbf16>, vector<8x8xbf16>, vector<256x8xf32> -> vector<256x8xf32>
    %219 = arith.addf %212, %218 : vector<256x8xf32>
    %c2_212 = arith.constant 2 : index
    %c2_213 = arith.constant 2 : index
    %c0_214 = arith.constant 0 : index
    %220 = vector.load %arg13[%c2_212, %c2_213, %c0_214] : memref<18x18x8xf32, #tpu.memory_space<vmem>>, vector<16x16x8xf32>
    %221 = vector.shape_cast %220 : vector<16x16x8xf32> to vector<256x8xf32>
    %222 = arith.truncf %221 : vector<256x8xf32> to vector<256x8xbf16>
    %c8_215 = arith.constant 8 : index
    %c0_216 = arith.constant 0 : index
    %c0_217 = arith.constant 0 : index
    %223 = vector.load %arg8[%c8_215, %c0_216, %c0_217] : memref<9x8x8xbf16, #tpu.memory_space<vmem>>, vector<1x8x8xbf16>
    %224 = vector.shape_cast %223 : vector<1x8x8xbf16> to vector<8x8xbf16>
    %cst_218 = arith.constant dense<0.000000e+00> : vector<256x8xf32>
    %225 = tpu.matmul %222, %224, %cst_218 {dimension_numbers = #tpu.dot_dimension_numbers<[1], [0], [0], [1], [0, 0, 1, 1], [], []>} : vector<256x8xbf16>, vector<8x8xbf16>, vector<256x8xf32> -> vector<256x8xf32>
    %226 = arith.addf %219, %225 : vector<256x8xf32>
    %c0_219 = arith.constant 0 : index
    %c0_220 = arith.constant 0 : index
    %227 = vector.load %arg9[%c0_219, %c0_220] : memref<1x8xf32, #tpu.memory_space<vmem>>, vector<1x8xf32>
    %228 = vector.broadcast %227 : vector<1x8xf32> to vector<256x8xf32>
    %229 = arith.addf %226, %228 : vector<256x8xf32>
    %cst_221 = arith.constant 0.000000e+00 : f32
    %230 = vector.broadcast %cst_221 : f32 to vector<256x8xf32>
    %231 = arith.maximumf %229, %230 : vector<256x8xf32>
    %cst_222 = arith.constant 0xFF800000 : f32
    %232 = vector.broadcast %cst_222 : f32 to vector<18x18x8xf32>
    %c0_223 = arith.constant 0 : index
    %c0_224 = arith.constant 0 : index
    %c0_225 = arith.constant 0 : index
    %233 = vector.load %arg13[%c0_223, %c0_224, %c0_225] : memref<18x18x8xf32, #tpu.memory_space<vmem>>, vector<18x18x8xf32>
    tpu.vector_store %arg13[%c0_223, %c0_224, %c0_225], %232 {strides = array<i32>} : memref<18x18x8xf32, #tpu.memory_space<vmem>>, vector<18x18x8xf32>,
    %234 = arith.extf %1 : vector<16x16x8xbf16> to vector<16x16x8xf32>
    %c1_226 = arith.constant 1 : index
    %c1_227 = arith.constant 1 : index
    %c0_228 = arith.constant 0 : index
    %235 = vector.load %arg13[%c1_226, %c1_227, %c0_228] : memref<18x18x8xf32, #tpu.memory_space<vmem>>, vector<16x16x8xf32>
    tpu.vector_store %arg13[%c1_226, %c1_227, %c0_228], %234 {strides = array<i32>} : memref<18x18x8xf32, #tpu.memory_space<vmem>>, vector<16x16x8xf32>,
    %c0_229 = arith.constant 0 : index
    %c0_230 = arith.constant 0 : index
    %c0_231 = arith.constant 0 : index
    %236 = vector.load %arg13[%c0_229, %c0_230, %c0_231] : memref<18x18x8xf32, #tpu.memory_space<vmem>>, vector<16x16x8xf32>
    %c0_232 = arith.constant 0 : index
    %c1_233 = arith.constant 1 : index
    %c0_234 = arith.constant 0 : index
    %237 = vector.load %arg13[%c0_232, %c1_233, %c0_234] : memref<18x18x8xf32, #tpu.memory_space<vmem>>, vector<16x16x8xf32>
    %238 = arith.maximumf %236, %237 : vector<16x16x8xf32>
    %c0_235 = arith.constant 0 : index
    %c2_236 = arith.constant 2 : index
    %c0_237 = arith.constant 0 : index
    %239 = vector.load %arg13[%c0_235, %c2_236, %c0_237] : memref<18x18x8xf32, #tpu.memory_space<vmem>>, vector<16x16x8xf32>
    %240 = arith.maximumf %238, %239 : vector<16x16x8xf32>
    %c1_238 = arith.constant 1 : index
    %c0_239 = arith.constant 0 : index
    %c0_240 = arith.constant 0 : index
    %241 = vector.load %arg13[%c1_238, %c0_239, %c0_240] : memref<18x18x8xf32, #tpu.memory_space<vmem>>, vector<16x16x8xf32>
    %242 = arith.maximumf %240, %241 : vector<16x16x8xf32>
    %c1_241 = arith.constant 1 : index
    %c1_242 = arith.constant 1 : index
    %c0_243 = arith.constant 0 : index
    %243 = vector.load %arg13[%c1_241, %c1_242, %c0_243] : memref<18x18x8xf32, #tpu.memory_space<vmem>>, vector<16x16x8xf32>
    %244 = arith.maximumf %242, %243 : vector<16x16x8xf32>
    %c1_244 = arith.constant 1 : index
    %c2_245 = arith.constant 2 : index
    %c0_246 = arith.constant 0 : index
    %245 = vector.load %arg13[%c1_244, %c2_245, %c0_246] : memref<18x18x8xf32, #tpu.memory_space<vmem>>, vector<16x16x8xf32>
    %246 = arith.maximumf %244, %245 : vector<16x16x8xf32>
    %c2_247 = arith.constant 2 : index
    %c0_248 = arith.constant 0 : index
    %c0_249 = arith.constant 0 : index
    %247 = vector.load %arg13[%c2_247, %c0_248, %c0_249] : memref<18x18x8xf32, #tpu.memory_space<vmem>>, vector<16x16x8xf32>
    %248 = arith.maximumf %246, %247 : vector<16x16x8xf32>
    %c2_250 = arith.constant 2 : index
    %c1_251 = arith.constant 1 : index
    %c0_252 = arith.constant 0 : index
    %249 = vector.load %arg13[%c2_250, %c1_251, %c0_252] : memref<18x18x8xf32, #tpu.memory_space<vmem>>, vector<16x16x8xf32>
    %250 = arith.maximumf %248, %249 : vector<16x16x8xf32>
    %c2_253 = arith.constant 2 : index
    %c2_254 = arith.constant 2 : index
    %c0_255 = arith.constant 0 : index
    %251 = vector.load %arg13[%c2_253, %c2_254, %c0_255] : memref<18x18x8xf32, #tpu.memory_space<vmem>>, vector<16x16x8xf32>
    %252 = arith.maximumf %250, %251 : vector<16x16x8xf32>
    %253 = vector.shape_cast %252 : vector<16x16x8xf32> to vector<256x8xf32>
    %254 = arith.truncf %253 : vector<256x8xf32> to vector<256x8xbf16>
    %c0_256 = arith.constant 0 : index
    %c0_257 = arith.constant 0 : index
    %255 = vector.load %arg10[%c0_256, %c0_257] : memref<8x8xbf16, #tpu.memory_space<vmem>>, vector<8x8xbf16>
    %cst_258 = arith.constant dense<0.000000e+00> : vector<256x8xf32>
    %256 = tpu.matmul %254, %255, %cst_258 {dimension_numbers = #tpu.dot_dimension_numbers<[1], [0], [0], [1], [0, 0, 1, 1], [], []>} : vector<256x8xbf16>, vector<8x8xbf16>, vector<256x8xf32> -> vector<256x8xf32>
    %c0_259 = arith.constant 0 : index
    %c0_260 = arith.constant 0 : index
    %257 = vector.load %arg11[%c0_259, %c0_260] : memref<1x8xf32, #tpu.memory_space<vmem>>, vector<1x8xf32>
    %258 = vector.broadcast %257 : vector<1x8xf32> to vector<256x8xf32>
    %259 = arith.addf %256, %258 : vector<256x8xf32>
    %cst_261 = arith.constant 0.000000e+00 : f32
    %260 = vector.broadcast %cst_261 : f32 to vector<256x8xf32>
    %261 = arith.maximumf %259, %260 : vector<256x8xf32>
    %c0_262 = arith.constant 0 : index
    %c0_263 = arith.constant 0 : index
    %c0_264 = arith.constant 0 : index
    %262 = vector.load %arg12[%c0_262, %c0_263, %c0_264] : memref<1x256x40xf32, #tpu.memory_space<vmem>>, vector<1x256x8xf32>
    %263 = vector.shape_cast %262 : vector<1x256x8xf32> to vector<256x8xf32>
    %264 = vector.shape_cast %10 : vector<256x8xf32> to vector<1x256x8xf32>
    tpu.vector_store %arg12[%c0_262, %c0_263, %c0_264], %264 {strides = array<i32>} : memref<1x256x40xf32, #tpu.memory_space<vmem>>, vector<1x256x8xf32>,
    %c0_265 = arith.constant 0 : index
    %c0_266 = arith.constant 0 : index
    %c8_267 = arith.constant 8 : index
    %265 = vector.load %arg12[%c0_265, %c0_266, %c8_267] : memref<1x256x40xf32, #tpu.memory_space<vmem>>, vector<1x256x16xf32>
    %266 = vector.shape_cast %265 : vector<1x256x16xf32> to vector<256x16xf32>
    %267 = vector.shape_cast %85 : vector<256x16xf32> to vector<1x256x16xf32>
    tpu.vector_store %arg12[%c0_265, %c0_266, %c8_267], %267 {strides = array<i32>} : memref<1x256x40xf32, #tpu.memory_space<vmem>>, vector<1x256x16xf32>,
    %c0_268 = arith.constant 0 : index
    %c0_269 = arith.constant 0 : index
    %c24 = arith.constant 24 : index
    %268 = vector.load %arg12[%c0_268, %c0_269, %c24] : memref<1x256x40xf32, #tpu.memory_space<vmem>>, vector<1x256x8xf32>
    %269 = vector.shape_cast %268 : vector<1x256x8xf32> to vector<256x8xf32>
    %270 = vector.shape_cast %231 : vector<256x8xf32> to vector<1x256x8xf32>
    tpu.vector_store %arg12[%c0_268, %c0_269, %c24], %270 {strides = array<i32>} : memref<1x256x40xf32, #tpu.memory_space<vmem>>, vector<1x256x8xf32>,
    %c0_270 = arith.constant 0 : index
    %c0_271 = arith.constant 0 : index
    %c32 = arith.constant 32 : index
    %271 = vector.load %arg12[%c0_270, %c0_271, %c32] : memref<1x256x40xf32, #tpu.memory_space<vmem>>, vector<1x256x8xf32>
    %272 = vector.shape_cast %271 : vector<1x256x8xf32> to vector<256x8xf32>
    %273 = vector.shape_cast %261 : vector<256x8xf32> to vector<1x256x8xf32>
    tpu.vector_store %arg12[%c0_270, %c0_271, %c32], %273 {strides = array<i32>} : memref<1x256x40xf32, #tpu.memory_space<vmem>>, vector<1x256x8xf32>,
    return
  }
  func.func @transform_0(%arg0: i32) -> (i32, i32, i32, i32) {
    %c0_i32 = arith.constant 0 : i32
    %c0_i32_0 = arith.constant 0 : i32
    %c0_i32_1 = arith.constant 0 : i32
    %c0_i32_2 = arith.constant 0 : i32
    return %arg0, %c0_i32, %c0_i32_0, %c0_i32_1 : i32, i32, i32, i32
  }
  func.func @transform_1(%arg0: i32) -> (i32, i32) {
    %c0_i32 = arith.constant 0 : i32
    %c0_i32_0 = arith.constant 0 : i32
    %c0_i32_1 = arith.constant 0 : i32
    return %c0_i32, %c0_i32_0 : i32, i32
  }
  func.func @transform_2(%arg0: i32) -> (i32, i32) {
    %c0_i32 = arith.constant 0 : i32
    %c0_i32_0 = arith.constant 0 : i32
    %c0_i32_1 = arith.constant 0 : i32
    return %c0_i32, %c0_i32_0 : i32, i32
  }
  func.func @transform_3(%arg0: i32) -> (i32, i32, i32) {
    %c0_i32 = arith.constant 0 : i32
    %c0_i32_0 = arith.constant 0 : i32
    %c0_i32_1 = arith.constant 0 : i32
    %c0_i32_2 = arith.constant 0 : i32
    return %c0_i32, %c0_i32_0, %c0_i32_1 : i32, i32, i32
  }
  func.func @transform_4(%arg0: i32) -> (i32, i32) {
    %c0_i32 = arith.constant 0 : i32
    %c0_i32_0 = arith.constant 0 : i32
    %c0_i32_1 = arith.constant 0 : i32
    return %c0_i32, %c0_i32_0 : i32, i32
  }
  func.func @transform_5(%arg0: i32) -> (i32, i32, i32) {
    %c0_i32 = arith.constant 0 : i32
    %c0_i32_0 = arith.constant 0 : i32
    %c0_i32_1 = arith.constant 0 : i32
    %c0_i32_2 = arith.constant 0 : i32
    return %c0_i32, %c0_i32_0, %c0_i32_1 : i32, i32, i32
  }
  func.func @transform_6(%arg0: i32) -> (i32, i32) {
    %c0_i32 = arith.constant 0 : i32
    %c0_i32_0 = arith.constant 0 : i32
    %c0_i32_1 = arith.constant 0 : i32
    return %c0_i32, %c0_i32_0 : i32, i32
  }
  func.func @transform_7(%arg0: i32) -> (i32, i32, i32) {
    %c0_i32 = arith.constant 0 : i32
    %c0_i32_0 = arith.constant 0 : i32
    %c0_i32_1 = arith.constant 0 : i32
    %c0_i32_2 = arith.constant 0 : i32
    return %c0_i32, %c0_i32_0, %c0_i32_1 : i32, i32, i32
  }
  func.func @transform_8(%arg0: i32) -> (i32, i32) {
    %c0_i32 = arith.constant 0 : i32
    %c0_i32_0 = arith.constant 0 : i32
    %c0_i32_1 = arith.constant 0 : i32
    return %c0_i32, %c0_i32_0 : i32, i32
  }
  func.func @transform_9(%arg0: i32) -> (i32, i32) {
    %c0_i32 = arith.constant 0 : i32
    %c0_i32_0 = arith.constant 0 : i32
    %c0_i32_1 = arith.constant 0 : i32
    return %c0_i32, %c0_i32_0 : i32, i32
  }
  func.func @transform_10(%arg0: i32) -> (i32, i32) {
    %c0_i32 = arith.constant 0 : i32
    %c0_i32_0 = arith.constant 0 : i32
    %c0_i32_1 = arith.constant 0 : i32
    return %c0_i32, %c0_i32_0 : i32, i32
  }
  func.func @transform_11(%arg0: i32) -> (i32, i32, i32) {
    %c0_i32 = arith.constant 0 : i32
    %c0_i32_0 = arith.constant 0 : i32
    %c0_i32_1 = arith.constant 0 : i32
    return %arg0, %c0_i32, %c0_i32_0 : i32, i32, i32
  }
}

</mosaic_0001>

<llo_original>
// kernel: construction_forward.1
$region0: #{construction_forward.1}
  #allocation0 [shape = 'u32[]', space=smem, size = 0x4, offset = 0x4, fixed_abs, tag = 'smem constant byte address 0x4 - core index']
  #allocation1 [shape = 'u32[72,128]{1,0:T(1,128)}', space=vmem, size = 0x9000, scoped, tag = 'internal scratch']
  #allocation2 [shape = 'f32[18,18,8]{2,1,0:T(8,128)}', space=vmem, size = 0x36000, scoped, tag = 'scratch operand']
  %s0 = inlined_call_operand.vmem [shape: bf16[2,16,16,8], index: 0, kind: input, shape index: {}]
  %s1 = inlined_call_operand.vmem [shape: bf16[8,20], index: 1, kind: input, shape index: {}]
  %s2 = inlined_call_operand.vmem [shape: f32[1,20], index: 2, kind: input, shape index: {}]
  %s3 = inlined_call_operand.vmem [shape: bf16[9,8,16], index: 3, kind: input, shape index: {}]
  %s4 = inlined_call_operand.vmem [shape: f32[1,16], index: 4, kind: input, shape index: {}]
  %s5 = inlined_call_operand.vmem [shape: bf16[9,4,8], index: 5, kind: input, shape index: {}]
  %s6 = inlined_call_operand.vmem [shape: f32[1,8], index: 6, kind: input, shape index: {}]
  %s7 = inlined_call_operand.vmem [shape: bf16[9,8,8], index: 7, kind: input, shape index: {}]
  %s8 = inlined_call_operand.vmem [shape: f32[1,8], index: 8, kind: input, shape index: {}]
  %s9 = inlined_call_operand.vmem [shape: bf16[8,8], index: 9, kind: input, shape index: {}]
  %s10 = inlined_call_operand.vmem [shape: f32[1,8], index: 10, kind: input, shape index: {}]
  %s11 = inlined_call_operand.hbm [shape: f32[2,256,40], index: 11, kind: output, shape index: {}]
  %s12 = sld [smem:[#allocation0]]
  $region77: #{construction_forward.1} parent=0
    _
  %s14 = ssub.s32 1, %s12
  %s15 = scalar_select 0, %s14, %s12
  $region1: #{construction_forward.1} parent=0
    #allocation3 [shape = 'u8[262144]{0}', space=vmem, size = 0x40000, scoped, tag = 'output window, operand 0']
    #allocation4 [shape = 's32[2]{0}', space=sflag, size = 0x8, scoped, tag = 'scoped memory for construction_forward.1']
    %16 = vsyncpa [#allocation4], 0
    %s17 = scalar_lea.sflag [#allocation4], 1
    %18 = vsyncpa %s17, 0
    loop: start=0, step=1, limit=4
    $region2: #{construction_forward.1} parent=1 // loop_pre_header
      _
    $region3: #{construction_forward.1} parent=1 // loop_header
      %s20 = sphi 0, %s24
      %p21 = scmp.ge.s32.totalorder %s20, 4
      %s30 = sphi 0, %s32
      %s33 = sphi 0, %s30
      %s34 = sphi 0, %s33
      %s50 = sphi 0, %s34
      %s54 = sphi 0, %s54
      %s56 = sphi 0, %s54
      %s57 = sphi 0, %s56
      %s71 = sphi 0, %s57
      %s75 = sphi 0, %s75
      %s77 = sphi 0, %s75
      %s78 = sphi 0, %s77
      %s92 = sphi 0, %s78
      %s96 = sphi 0, %s96
      %s98 = sphi 0, %s96
      %s99 = sphi 0, %s98
      %s113 = sphi 0, %s99
      %s117 = sphi 0, %s117
      %s119 = sphi 0, %s117
      %s120 = sphi 0, %s119
      %s134 = sphi 0, %s120
      %s138 = sphi 0, %s138
      %s140 = sphi 0, %s138
      %s141 = sphi 0, %s140
      %s155 = sphi 0, %s141
      %s159 = sphi 0, %s159
      %s161 = sphi 0, %s159
      %s162 = sphi 0, %s161
      %s176 = sphi 0, %s162
      %s180 = sphi 0, %s180
      %s182 = sphi 0, %s180
      %s183 = sphi 0, %s182
      %s197 = sphi 0, %s183
      %s201 = sphi 0, %s201
      %s203 = sphi 0, %s201
      %s204 = sphi 0, %s203
      %s218 = sphi 0, %s204
      %s222 = sphi 0, %s222
      %s224 = sphi 0, %s222
      %s225 = sphi 0, %s224
      %s239 = sphi 0, %s225
      %s243 = sphi 0, %s243
      %s245 = sphi 0, %s243
      %s246 = sphi 0, %s245
      %s260 = sphi 0, %s246
      %s266 = sphi 0, %s268
      %s269 = sphi 0, %s266
      %s270 = sphi 0, %s269
      %s286 = sphi 0, %s270
    $region4: #{construction_forward.1} parent=1 // loop_header_branch
      %23 = sbr.rel (%p21) target = $region8
    $region5: #{construction_forward.1} parent=1 // loop_body
      %s25 = ssub.s32 %s20, 1
      %s26 = ssub.s32 %s20, 2
      %s27 = sadd.s32 %s20, 1
      %s28 = ssub.s32 %s20, %s27
      %p29 = scmp.eq.s32.totalorder %s28, 0
      %s31 = sadd.s32 %s30, 1
      %s32 = scalar_select %p29, %s30, %s31
      %p35 = pneg %p29
      %p36 = scmp.eq.s32.totalorder %s20, 1
      %p37 = por %p35, %p36
      %p38 = scmp.ne.s32.totalorder %s30, %s33
      %p39 = scmp.eq.s32.totalorder %s20, 0
      %p40 = por %p38, %p39
      %p41 = scmp.ne.s32.totalorder %s30, %s33
      %p42 = scmp.eq.s32.totalorder %s25, 1
      %p43 = por %p41, %p42
      %p44 = scmp.ne.s32.totalorder %s33, %s34
      %p45 = scmp.eq.s32.totalorder %s25, 0
      %p46 = por %p44, %p45
      %p47 = scmp.ne.s32.totalorder %s33, %s34
      %p48 = scmp.eq.s32.totalorder %s26, 1
      %p49 = por %p47, %p48
      %p51 = scmp.ne.s32.totalorder %s34, %s50
      %p52 = scmp.eq.s32.totalorder %s26, 0
      %p53 = por %p51, %p52
      %s55 = sadd.s32 %s54, 1
      %p58 = scmp.eq.s32.totalorder %s20, 1
      %p59 = scmp.ne.s32.totalorder %s54, %s56
      %p60 = scmp.eq.s32.totalorder %s20, 0
      %p61 = por %p59, %p60
      %p62 = scmp.ne.s32.totalorder %s54, %s56
      %p63 = scmp.eq.s32.totalorder %s25, 1
      %p64 = por %p62, %p63
      %p65 = scmp.ne.s32.totalorder %s56, %s57
      %p66 = scmp.eq.s32.totalorder %s25, 0
      %p67 = por %p65, %p66
      %p68 = scmp.ne.s32.totalorder %s56, %s57
      %p69 = scmp.eq.s32.totalorder %s26, 1
      %p70 = por %p68, %p69
      %p72 = scmp.ne.s32.totalorder %s57, %s71
      %p73 = scmp.eq.s32.totalorder %s26, 0
      %p74 = por %p72, %p73
      %s76 = sadd.s32 %s75, 1
      %p79 = scmp.eq.s32.totalorder %s20, 1
      %p80 = scmp.ne.s32.totalorder %s75, %s77
      %p81 = scmp.eq.s32.totalorder %s20, 0
      %p82 = por %p80, %p81
      %p83 = scmp.ne.s32.totalorder %s75, %s77
      %p84 = scmp.eq.s32.totalorder %s25, 1
      %p85 = por %p83, %p84
      %p86 = scmp.ne.s32.totalorder %s77, %s78
      %p87 = scmp.eq.s32.totalorder %s25, 0
      %p88 = por %p86, %p87
      %p89 = scmp.ne.s32.totalorder %s77, %s78
      %p90 = scmp.eq.s32.totalorder %s26, 1
      %p91 = por %p89, %p90
      %p93 = scmp.ne.s32.totalorder %s78, %s92
      %p94 = scmp.eq.s32.totalorder %s26, 0
      %p95 = por %p93, %p94
      %s97 = sadd.s32 %s96, 1
      %p100 = scmp.eq.s32.totalorder %s20, 1
      %p101 = scmp.ne.s32.totalorder %s96, %s98
      %p102 = scmp.eq.s32.totalorder %s20, 0
      %p103 = por %p101, %p102
      %p104 = scmp.ne.s32.totalorder %s96, %s98
      %p105 = scmp.eq.s32.totalorder %s25, 1
      %p106 = por %p104, %p105
      %p107 = scmp.ne.s32.totalorder %s98, %s99
      %p108 = scmp.eq.s32.totalorder %s25, 0
      %p109 = por %p107, %p108
      %p110 = scmp.ne.s32.totalorder %s98, %s99
      %p111 = scmp.eq.s32.totalorder %s26, 1
      %p112 = por %p110, %p111
      %p114 = scmp.ne.s32.totalorder %s99, %s113
      %p115 = scmp.eq.s32.totalorder %s26, 0
      %p116 = por %p114, %p115
      %s118 = sadd.s32 %s117, 1
      %p121 = scmp.eq.s32.totalorder %s20, 1
      %p122 = scmp.ne.s32.totalorder %s117, %s119
      %p123 = scmp.eq.s32.totalorder %s20, 0
      %p124 = por %p122, %p123
      %p125 = scmp.ne.s32.totalorder %s117, %s119
      %p126 = scmp.eq.s32.totalorder %s25, 1
      %p127 = por %p125, %p126
      %p128 = scmp.ne.s32.totalorder %s119, %s120
      %p129 = scmp.eq.s32.totalorder %s25, 0
      %p130 = por %p128, %p129
      %p131 = scmp.ne.s32.totalorder %s119, %s120
      %p132 = scmp.eq.s32.totalorder %s26, 1
      %p133 = por %p131, %p132
      %p135 = scmp.ne.s32.totalorder %s120, %s134
      %p136 = scmp.eq.s32.totalorder %s26, 0
      %p137 = por %p135, %p136
      %s139 = sadd.s32 %s138, 1
      %p142 = scmp.eq.s32.totalorder %s20, 1
      %p143 = scmp.ne.s32.totalorder %s138, %s140
      %p144 = scmp.eq.s32.totalorder %s20, 0
      %p145 = por %p143, %p144
      %p146 = scmp.ne.s32.totalorder %s138, %s140
      %p147 = scmp.eq.s32.totalorder %s25, 1
      %p148 = por %p146, %p147
      %p149 = scmp.ne.s32.totalorder %s140, %s141
      %p150 = scmp.eq.s32.totalorder %s25, 0
      %p151 = por %p149, %p150
      %p152 = scmp.ne.s32.totalorder %s140, %s141
      %p153 = scmp.eq.s32.totalorder %s26, 1
      %p154 = por %p152, %p153
      %p156 = scmp.ne.s32.totalorder %s141, %s155
      %p157 = scmp.eq.s32.totalorder %s26, 0
      %p158 = por %p156, %p157
      %s160 = sadd.s32 %s159, 1
      %p163 = scmp.eq.s32.totalorder %s20, 1
      %p164 = scmp.ne.s32.totalorder %s159, %s161
      %p165 = scmp.eq.s32.totalorder %s20, 0
      %p166 = por %p164, %p165
      %p167 = scmp.ne.s32.totalorder %s159, %s161
      %p168 = scmp.eq.s32.totalorder %s25, 1
      %p169 = por %p167, %p168
      %p170 = scmp.ne.s32.totalorder %s161, %s162
      %p171 = scmp.eq.s32.totalorder %s25, 0
      %p172 = por %p170, %p171
      %p173 = scmp.ne.s32.totalorder %s161, %s162
      %p174 = scmp.eq.s32.totalorder %s26, 1
      %p175 = por %p173, %p174
      %p177 = scmp.ne.s32.totalorder %s162, %s176
      %p178 = scmp.eq.s32.totalorder %s26, 0
      %p179 = por %p177, %p178
      %s181 = sadd.s32 %s180, 1
      %p184 = scmp.eq.s32.totalorder %s20, 1
      %p185 = scmp.ne.s32.totalorder %s180, %s182
      %p186 = scmp.eq.s32.totalorder %s20, 0
      %p187 = por %p185, %p186
      %p188 = scmp.ne.s32.totalorder %s180, %s182
      %p189 = scmp.eq.s32.totalorder %s25, 1
      %p190 = por %p188, %p189
      %p191 = scmp.ne.s32.totalorder %s182, %s183
      %p192 = scmp.eq.s32.totalorder %s25, 0
      %p193 = por %p191, %p192
      %p194 = scmp.ne.s32.totalorder %s182, %s183
      %p195 = scmp.eq.s32.totalorder %s26, 1
      %p196 = por %p194, %p195
      %p198 = scmp.ne.s32.totalorder %s183, %s197
      %p199 = scmp.eq.s32.totalorder %s26, 0
      %p200 = por %p198, %p199
      %s202 = sadd.s32 %s201, 1
      %p205 = scmp.eq.s32.totalorder %s20, 1
      %p206 = scmp.ne.s32.totalorder %s201, %s203
      %p207 = scmp.eq.s32.totalorder %s20, 0
      %p208 = por %p206, %p207
      %p209 = scmp.ne.s32.totalorder %s201, %s203
      %p210 = scmp.eq.s32.totalorder %s25, 1
      %p211 = por %p209, %p210
      %p212 = scmp.ne.s32.totalorder %s203, %s204
      %p213 = scmp.eq.s32.totalorder %s25, 0
      %p214 = por %p212, %p213
      %p215 = scmp.ne.s32.totalorder %s203, %s204
      %p216 = scmp.eq.s32.totalorder %s26, 1
      %p217 = por %p215, %p216
      %p219 = scmp.ne.s32.totalorder %s204, %s218
      %p220 = scmp.eq.s32.totalorder %s26, 0
      %p221 = por %p219, %p220
      %s223 = sadd.s32 %s222, 1
      %p226 = scmp.eq.s32.totalorder %s20, 1
      %p227 = scmp.ne.s32.totalorder %s222, %s224
      %p228 = scmp.eq.s32.totalorder %s20, 0
      %p229 = por %p227, %p228
      %p230 = scmp.ne.s32.totalorder %s222, %s224
      %p231 = scmp.eq.s32.totalorder %s25, 1
      %p232 = por %p230, %p231
      %p233 = scmp.ne.s32.totalorder %s224, %s225
      %p234 = scmp.eq.s32.totalorder %s25, 0
      %p235 = por %p233, %p234
      %p236 = scmp.ne.s32.totalorder %s224, %s225
      %p237 = scmp.eq.s32.totalorder %s26, 1
      %p238 = por %p236, %p237
      %p240 = scmp.ne.s32.totalorder %s225, %s239
      %p241 = scmp.eq.s32.totalorder %s26, 0
      %p242 = por %p240, %p241
      %s244 = sadd.s32 %s243, 1
      %p247 = scmp.eq.s32.totalorder %s20, 1
      %p248 = scmp.ne.s32.totalorder %s243, %s245
      %p249 = scmp.eq.s32.totalorder %s20, 0
      %p250 = por %p248, %p249
      %p251 = scmp.ne.s32.totalorder %s243, %s245
      %p252 = scmp.eq.s32.totalorder %s25, 1
      %p253 = por %p251, %p252
      %p254 = scmp.ne.s32.totalorder %s245, %s246
      %p255 = scmp.eq.s32.totalorder %s25, 0
      %p256 = por %p254, %p255
      %p257 = scmp.ne.s32.totalorder %s245, %s246
      %p258 = scmp.eq.s32.totalorder %s26, 1
      %p259 = por %p257, %p258
      %p261 = scmp.ne.s32.totalorder %s246, %s260
      %p262 = scmp.eq.s32.totalorder %s26, 0
      %p263 = por %p261, %p262
      %s264 = ssub.s32 %s20, %s27
      %p265 = scmp.eq.s32.totalorder %s264, 0
      %s267 = sadd.s32 %s266, 1
      %s268 = scalar_select %p265, %s266, %s267
      %p271 = pneg %p265
      %p272 = scmp.eq.s32.totalorder %s20, 1
      %p273 = por %p271, %p272
      %p274 = scmp.ne.s32.totalorder %s266, %s269
      %p275 = scmp.eq.s32.totalorder %s20, 0
      %p276 = por %p274, %p275
      %p277 = scmp.ne.s32.totalorder %s266, %s269
      %p278 = scmp.eq.s32.totalorder %s25, 1
      %p279 = por %p277, %p278
      %p280 = scmp.ne.s32.totalorder %s269, %s270
      %p281 = scmp.eq.s32.totalorder %s25, 0
      %p282 = por %p280, %p281
      %p283 = scmp.ne.s32.totalorder %s269, %s270
      %p284 = scmp.eq.s32.totalorder %s26, 1
      %p285 = por %p283, %p284
      %p287 = scmp.ne.s32.totalorder %s270, %s286
      %p288 = scmp.eq.s32.totalorder %s26, 0
      %p289 = por %p287, %p288
      %p290 = scmp.le.s32.totalorder 1, %s20
      %p291 = scmp.lt.s32.totalorder %s20, 3
      %p292 = pnand %p290, %p291
      %p293 = pneg %p292
      // Predicated region
      $region9: #{construction_forward.1} parent=5 // pred_check
        _
      $region10: #{construction_forward.1} parent=5 // pred_check_branch
        %295 = sbr.rel (%p292) target = $region12
      $region11: #{construction_forward.1} parent=5 // pred_region
        %s296 = ssub.s32 %s20, 1
        // Predicated region
        $region13: #{construction_forward.1} parent=11 // pred_check
          %p297 = pneg %p67
        $region14: #{construction_forward.1} parent=11 // pred_check_branch
          %299 = sbr.rel (%p297) target = $region16
        $region15: #{construction_forward.1} parent=11 // pred_region
          _
        $region16: #{construction_forward.1} parent=11 // pred_fallthru
          _
        // Predicated region
        $region17: #{construction_forward.1} parent=11 // pred_check
          %p300 = pneg %p88
        $region18: #{construction_forward.1} parent=11 // pred_check_branch
          %302 = sbr.rel (%p300) target = $region20
        $region19: #{construction_forward.1} parent=11 // pred_region
          _
        $region20: #{construction_forward.1} parent=11 // pred_fallthru
          _
        // Predicated region
        $region21: #{construction_forward.1} parent=11 // pred_check
          %p303 = pneg %p109
        $region22: #{construction_forward.1} parent=11 // pred_check_branch
          %305 = sbr.rel (%p303) target = $region24
        $region23: #{construction_forward.1} parent=11 // pred_region
          _
        $region24: #{construction_forward.1} parent=11 // pred_fallthru
          _
        // Predicated region
        $region25: #{construction_forward.1} parent=11 // pred_check
          %p306 = pneg %p130
        $region26: #{construction_forward.1} parent=11 // pred_check_branch
          %308 = sbr.rel (%p306) target = $region28
        $region27: #{construction_forward.1} parent=11 // pred_region
          _
        $region28: #{construction_forward.1} parent=11 // pred_fallthru
          _
        // Predicated region
        $region29: #{construction_forward.1} parent=11 // pred_check
          %p309 = pneg %p151
        $region30: #{construction_forward.1} parent=11 // pred_check_branch
          %311 = sbr.rel (%p309) target = $region32
        $region31: #{construction_forward.1} parent=11 // pred_region
          _
        $region32: #{construction_forward.1} parent=11 // pred_fallthru
          _
        // Predicated region
        $region33: #{construction_forward.1} parent=11 // pred_check
          %p312 = pneg %p172
        $region34: #{construction_forward.1} parent=11 // pred_check_branch
          %314 = sbr.rel (%p312) target = $region36
        $region35: #{construction_forward.1} parent=11 // pred_region
          _
        $region36: #{construction_forward.1} parent=11 // pred_fallthru
          _
        // Predicated region
        $region37: #{construction_forward.1} parent=11 // pred_check
          %p315 = pneg %p193
        $region38: #{construction_forward.1} parent=11 // pred_check_branch
          %317 = sbr.rel (%p315) target = $region40
        $region39: #{construction_forward.1} parent=11 // pred_region
          _
        $region40: #{construction_forward.1} parent=11 // pred_fallthru
          _
        // Predicated region
        $region41: #{construction_forward.1} parent=11 // pred_check
          %p318 = pneg %p214
        $region42: #{construction_forward.1} parent=11 // pred_check_branch
          %320 = sbr.rel (%p318) target = $region44
        $region43: #{construction_forward.1} parent=11 // pred_region
          _
        $region44: #{construction_forward.1} parent=11 // pred_fallthru
          _
        // Predicated region
        $region45: #{construction_forward.1} parent=11 // pred_check
          %p321 = pneg %p235
        $region46: #{construction_forward.1} parent=11 // pred_check_branch
          %323 = sbr.rel (%p321) target = $region48
        $region47: #{construction_forward.1} parent=11 // pred_region
          _
        $region48: #{construction_forward.1} parent=11 // pred_fallthru
          _
        // Predicated region
        $region49: #{construction_forward.1} parent=11 // pred_check
          %p324 = pneg %p256
        $region50: #{construction_forward.1} parent=11 // pred_check_branch
          %326 = sbr.rel (%p324) target = $region52
        $region51: #{construction_forward.1} parent=11 // pred_region
          _
        $region52: #{construction_forward.1} parent=11 // pred_fallthru
          _
      $region12: #{construction_forward.1} parent=5 // pred_fallthru
        _
      %p327 = scmp.lt.s32.totalorder %s20, 2
      // Predicated region
      $region53: #{construction_forward.1} parent=5 // pred_check
        %p328 = pneg %p327
      $region54: #{construction_forward.1} parent=5 // pred_check_branch
        %330 = sbr.rel (%p328) target = $region56
      $region55: #{construction_forward.1} parent=5 // pred_region
        // Predicated region
        $region57: #{construction_forward.1} parent=55 // pred_check
          %p331 = pneg %p40
        $region58: #{construction_forward.1} parent=55 // pred_check_branch
          %333 = sbr.rel (%p331) target = $region60
        $region59: #{construction_forward.1} parent=55 // pred_region
          %p334 = scmp.lt.s32.totalorder %s20, 1
          %s335 = scalar_select %p334, %s20, 1
          %s336 = smul.addr %s335, 32
          %s337 = smul.addr %s336, 4
          %s338 = scalar_lea.vmem %s0, %s337
        $region60: #{construction_forward.1} parent=55 // pred_fallthru
          _
      $region56: #{construction_forward.1} parent=5 // pred_fallthru
        _
      %p339 = scmp.le.s32.totalorder 1, %s20
      %p340 = scmp.lt.s32.totalorder %s20, 3
      %p341 = pnand %p339, %p340
      %p342 = pneg %p341
      // Predicated region
      $region61: #{construction_forward.1} parent=5 // pred_check
        _
      $region62: #{construction_forward.1} parent=5 // pred_check_branch
        %344 = sbr.rel (%p341) target = $region64
      $region63: #{construction_forward.1} parent=5 // pred_region
        %s345 = ssub.s32 %s20, 1
        %p346 = scmp.lt.s32.totalorder %s25, 1
        %s347 = scalar_select %p346, %s25, 1
        %s348 = smul.addr %s347, 32
        %s349 = smul.addr %s348, 4
        %s350 = scalar_lea.vmem %s0, %s349
        %p351 = pneg %p46
        %p352 = pneg %p43
        %p353 = pneg %p67
        %p354 = pneg %p64
        %p355 = pneg %p88
        %p356 = pneg %p85
        %p357 = pneg %p109
        %p358 = pneg %p106
        %p359 = pneg %p130
        %p360 = pneg %p127
        %p361 = pneg %p151
        %p362 = pneg %p148
        %p363 = pneg %p172
        %p364 = pneg %p169
        %p365 = pneg %p193
        %p366 = pneg %p190
        %p367 = pneg %p214
        %p368 = pneg %p211
        %p369 = pneg %p235
        %p370 = pneg %p232
        %p371 = pneg %p256
        %p372 = pneg %p253
        %p373 = pneg %p282
        %p374 = pneg %p279
        %s375 = sand.u32 %s269, 1
        %s376 = scalar_lea.sflag [#allocation4], %s375
        %s377 = sand.u32 %s269, 1
        %s378 = smul.addr %s377, 256
        %s379 = scalar_lea.vmem [#allocation3], %s378
        %p380 = scmp.lt.s32.totalorder %s25, 1
        %s381 = scalar_select %p380, %s25, 1
        %s382 = smul.addr %s381, 32
        %s383 = smul.addr %s382, 4
        %s384 = scalar_lea.vmem %s0, %s383
        %v386 = vld [vmem:[%s384] sm:$0xf]
        %v387 = vld [vmem:[%s384 + $0x4] sm:$0xf]
        %v388 = vld [vmem:[%s384 + $0x8] sm:$0xf]
        %v389 = vld [vmem:[%s384 + $0xc] sm:$0xf]
        %v390 = vld [vmem:[%s384 + $0x10] sm:$0xf]
        %v391 = vld [vmem:[%s384 + $0x14] sm:$0xf]
        %v392 = vld [vmem:[%s384 + $0x18] sm:$0xf]
        %v393 = vld [vmem:[%s384 + $0x1c] sm:$0xf]
        %v394 = vld [vmem:[%s384 + $0x20] sm:$0xf]
        %v395 = vld [vmem:[%s384 + $0x24] sm:$0xf]
        %v396 = vld [vmem:[%s384 + $0x28] sm:$0xf]
        %v397 = vld [vmem:[%s384 + $0x2c] sm:$0xf]
        %v398 = vld [vmem:[%s384 + $0x30] sm:$0xf]
        %v399 = vld [vmem:[%s384 + $0x34] sm:$0xf]
        %v400 = vld [vmem:[%s384 + $0x38] sm:$0xf]
        %v401 = vld [vmem:[%s384 + $0x3c] sm:$0xf]
        %v402 = vld [vmem:[%s384 + $0x40] sm:$0xf]
        %v403 = vld [vmem:[%s384 + $0x44] sm:$0xf]
        %v404 = vld [vmem:[%s384 + $0x48] sm:$0xf]
        %v405 = vld [vmem:[%s384 + $0x4c] sm:$0xf]
        %v406 = vld [vmem:[%s384 + $0x50] sm:$0xf]
        %v407 = vld [vmem:[%s384 + $0x54] sm:$0xf]
        %v408 = vld [vmem:[%s384 + $0x58] sm:$0xf]
        %v409 = vld [vmem:[%s384 + $0x5c] sm:$0xf]
        %v410 = vld [vmem:[%s384 + $0x60] sm:$0xf]
        %v411 = vld [vmem:[%s384 + $0x64] sm:$0xf]
        %v412 = vld [vmem:[%s384 + $0x68] sm:$0xf]
        %v413 = vld [vmem:[%s384 + $0x6c] sm:$0xf]
        %v414 = vld [vmem:[%s384 + $0x70] sm:$0xf]
        %v415 = vld [vmem:[%s384 + $0x74] sm:$0xf]
        %v416 = vld [vmem:[%s384 + $0x78] sm:$0xf]
        %v417 = vld [vmem:[%s384 + $0x7c] sm:$0xf]
        %v418 = vld [vmem:[%s1] sm:$0xf]
        %v419 = vld [vmem:[%s2] sm:$0x1]
        %v421 = vperm.slane %v419, 0
        %v455 = vunpack.c.l.b16 %v386
        %v456 = vunpack.c.l.b16 %v387
        %v457 = vunpack.c.l.b16 %v388
        %v458 = vunpack.c.l.b16 %v389
        %v459 = vunpack.c.l.b16 %v390
        %v460 = vunpack.c.l.b16 %v391
        %v461 = vunpack.c.l.b16 %v392
        %v462 = vunpack.c.l.b16 %v393
        %v463 = vunpack.c.l.b16 %v394
        %v464 = vunpack.c.l.b16 %v395
        %v465 = vunpack.c.l.b16 %v396
        %v466 = vunpack.c.l.b16 %v397
        %v467 = vunpack.c.l.b16 %v398
        %v468 = vunpack.c.l.b16 %v399
        %v469 = vunpack.c.l.b16 %v400
        %v470 = vunpack.c.l.b16 %v401
        %v471 = vunpack.c.l.b16 %v402
        %v472 = vunpack.c.l.b16 %v403
        %v473 = vunpack.c.l.b16 %v404
        %v474 = vunpack.c.l.b16 %v405
        %v475 = vunpack.c.l.b16 %v406
        %v476 = vunpack.c.l.b16 %v407
        %v477 = vunpack.c.l.b16 %v408
        %v478 = vunpack.c.l.b16 %v409
        %v479 = vunpack.c.l.b16 %v410
        %v480 = vunpack.c.l.b16 %v411
        %v481 = vunpack.c.l.b16 %v412
        %v482 = vunpack.c.l.b16 %v413
        %v483 = vunpack.c.l.b16 %v414
        %v484 = vunpack.c.l.b16 %v415
        %v485 = vunpack.c.l.b16 %v416
        %v486 = vunpack.c.l.b16 %v417
        %v487 = vpack.c.b16 %v456, %v455
        %v488 = vpack.c.b16 %v458, %v457
        %v489 = vpack.c.b16 %v460, %v459
        %v490 = vpack.c.b16 %v462, %v461
        %v491 = vpack.c.b16 %v464, %v463
        %v492 = vpack.c.b16 %v466, %v465
        %v493 = vpack.c.b16 %v468, %v467
        %v494 = vpack.c.b16 %v470, %v469
        %v495 = vpack.c.b16 %v472, %v471
        %v496 = vpack.c.b16 %v474, %v473
        %v497 = vpack.c.b16 %v476, %v475
        %v498 = vpack.c.b16 %v478, %v477
        %v499 = vpack.c.b16 %v480, %v479
        %v500 = vpack.c.b16 %v482, %v481
        %v501 = vpack.c.b16 %v484, %v483
        %v502 = vpack.c.b16 %v486, %v485
        %vm503 = vcmask 64512
        %v505 = vsel %vm503, %v487, 0
        %v508 = vsel %vm503, %v488, 0
        %v511 = vsel %vm503, %v489, 0
        %v514 = vsel %vm503, %v490, 0
        %v517 = vsel %vm503, %v491, 0
        %v520 = vsel %vm503, %v492, 0
        %v523 = vsel %vm503, %v493, 0
        %v526 = vsel %vm503, %v494, 0
        %v529 = vsel %vm503, %v495, 0
        %v532 = vsel %vm503, %v496, 0
        %v535 = vsel %vm503, %v497, 0
        %v538 = vsel %vm503, %v498, 0
        %v541 = vsel %vm503, %v499, 0
        %v544 = vsel %vm503, %v500, 0
        %v547 = vsel %vm503, %v501, 0
        %v550 = vsel %vm503, %v502, 0
        %vm552 = vcmask 1043456
        %v554 = vsel %vm552, %v418, 0
        %556 = vmatpush.bf16.msra.mxu0 0
        %557 = vmatpush.bf16.msra.mxu0 0
        %558 = vmatpush.bf16.msra.mxu0 0
        %559 = vmatpush.bf16.msra.mxu0 0
        %560 = vmatpush.bf16.msra.mxu0 0
        %561 = vmatpush.bf16.msra.mxu0 0
        %562 = vmatpush.bf16.msra.mxu0 0
        %563 = vmatpush.bf16.msra.mxu0 %v554
        %564 = vmatmul.bf16.gmra.mxu0 %v505
        %v565 = vpop.f32.mrf.mxu0
        %v566 = vadd.f32 %v421, %v565
        %v567 = vpop.f32.mrf.mxu0
        %v568 = vadd.f32 %v421, %v567
        %569 = vmatmul.bf16.gmra.mxu0 %v508
        %v570 = vpop.f32.mrf.mxu0
        %v571 = vadd.f32 %v421, %v570
        %v572 = vpop.f32.mrf.mxu0
        %v573 = vadd.f32 %v421, %v572
        %574 = vmatmul.bf16.gmra.mxu0 %v511
        %v575 = vpop.f32.mrf.mxu0
        %v576 = vadd.f32 %v421, %v575
        %v577 = vpop.f32.mrf.mxu0
        %v578 = vadd.f32 %v421, %v577
        %579 = vmatmul.bf16.gmra.mxu0 %v514
        %v580 = vpop.f32.mrf.mxu0
        %v581 = vadd.f32 %v421, %v580
        %v582 = vpop.f32.mrf.mxu0
        %v583 = vadd.f32 %v421, %v582
        %584 = vmatmul.bf16.gmra.mxu0 %v517
        %v585 = vpop.f32.mrf.mxu0
        %v586 = vadd.f32 %v421, %v585
        %v587 = vpop.f32.mrf.mxu0
        %v588 = vadd.f32 %v421, %v587
        %589 = vmatmul.bf16.gmra.mxu0 %v520
        %v590 = vpop.f32.mrf.mxu0
        %v591 = vadd.f32 %v421, %v590
        %v592 = vpop.f32.mrf.mxu0
        %v593 = vadd.f32 %v421, %v592
        %594 = vmatmul.bf16.gmra.mxu0 %v523
        %v595 = vpop.f32.mrf.mxu0
        %v596 = vadd.f32 %v421, %v595
        %v597 = vpop.f32.mrf.mxu0
        %v598 = vadd.f32 %v421, %v597
        %599 = vmatmul.bf16.gmra.mxu0 %v526
        %v600 = vpop.f32.mrf.mxu0
        %v601 = vadd.f32 %v421, %v600
        %v602 = vpop.f32.mrf.mxu0
        %v603 = vadd.f32 %v421, %v602
        %604 = vmatmul.bf16.gmra.mxu0 %v529
        %v605 = vpop.f32.mrf.mxu0
        %v606 = vadd.f32 %v421, %v605
        %v607 = vpop.f32.mrf.mxu0
        %v608 = vadd.f32 %v421, %v607
        %609 = vmatmul.bf16.gmra.mxu0 %v532
        %v610 = vpop.f32.mrf.mxu0
        %v611 = vadd.f32 %v421, %v610
        %v612 = vpop.f32.mrf.mxu0
        %v613 = vadd.f32 %v421, %v612
        %614 = vmatmul.bf16.gmra.mxu0 %v535
        %v615 = vpop.f32.mrf.mxu0
        %v616 = vadd.f32 %v421, %v615
        %v617 = vpop.f32.mrf.mxu0
        %v618 = vadd.f32 %v421, %v617
        %619 = vmatmul.bf16.gmra.mxu0 %v538
        %v620 = vpop.f32.mrf.mxu0
        %v621 = vadd.f32 %v421, %v620
        %v622 = vpop.f32.mrf.mxu0
        %v623 = vadd.f32 %v421, %v622
        %624 = vmatmul.bf16.gmra.mxu0 %v541
        %v625 = vpop.f32.mrf.mxu0
        %v626 = vadd.f32 %v421, %v625
        %v627 = vpop.f32.mrf.mxu0
        %v628 = vadd.f32 %v421, %v627
        %629 = vmatmul.bf16.gmra.mxu0 %v544
        %v630 = vpop.f32.mrf.mxu0
        %v631 = vadd.f32 %v421, %v630
        %v632 = vpop.f32.mrf.mxu0
        %v633 = vadd.f32 %v421, %v632
        %634 = vmatmul.bf16.gmra.mxu0 %v547
        %v635 = vpop.f32.mrf.mxu0
        %v636 = vadd.f32 %v421, %v635
        %v637 = vpop.f32.mrf.mxu0
        %v638 = vadd.f32 %v421, %v637
        %639 = vmatmul.bf16.gmra.mxu0 %v550
        %v640 = vpop.f32.mrf.mxu0
        %v641 = vadd.f32 %v421, %v640
        %v642 = vpop.f32.mrf.mxu0
        %v643 = vadd.f32 %v421, %v642
        %644 = vdwg.mxu0
        %v645 = vmax.f32 %v566, 0.0
        %v646 = vmax.f32 %v568, 0.0
        %v647 = vmax.f32 %v571, 0.0
        %v648 = vmax.f32 %v573, 0.0
        %v649 = vmax.f32 %v576, 0.0
        %v650 = vmax.f32 %v578, 0.0
        %v651 = vmax.f32 %v581, 0.0
        %v652 = vmax.f32 %v583, 0.0
        %v653 = vmax.f32 %v586, 0.0
        %v654 = vmax.f32 %v588, 0.0
        %v655 = vmax.f32 %v591, 0.0
        %v656 = vmax.f32 %v593, 0.0
        %v657 = vmax.f32 %v596, 0.0
        %v658 = vmax.f32 %v598, 0.0
        %v659 = vmax.f32 %v601, 0.0
        %v660 = vmax.f32 %v603, 0.0
        %v661 = vmax.f32 %v606, 0.0
        %v662 = vmax.f32 %v608, 0.0
        %v663 = vmax.f32 %v611, 0.0
        %v664 = vmax.f32 %v613, 0.0
        %v665 = vmax.f32 %v616, 0.0
        %v666 = vmax.f32 %v618, 0.0
        %v667 = vmax.f32 %v621, 0.0
        %v668 = vmax.f32 %v623, 0.0
        %v669 = vmax.f32 %v626, 0.0
        %v670 = vmax.f32 %v628, 0.0
        %v671 = vmax.f32 %v631, 0.0
        %v672 = vmax.f32 %v633, 0.0
        %v673 = vmax.f32 %v636, 0.0
        %v674 = vmax.f32 %v638, 0.0
        %v675 = vmax.f32 %v641, 0.0
        %v676 = vmax.f32 %v643, 0.0
        %677 = vst.msk [vmem:[#allocation2] sm:$0xff] %vm503, 0.0
        %678 = vst.msk [vmem:[#allocation2 + $0x8] sm:$0xff] %vm503, 0.0
        %vm679 = vcmask 58368
        %680 = vst.msk [vmem:[#allocation2 + $0x10] sm:$0x3] %vm679, 0.0
        %681 = vst.msk [vmem:[#allocation2 + $0x18] sm:$0xff] %vm503, 0.0
        %682 = vst.msk [vmem:[#allocation2 + $0x20] sm:$0xff] %vm503, 0.0
        %683 = vst.msk [vmem:[#allocation2 + $0x28] sm:$0x3] %vm679, 0.0
        %684 = vst.msk [vmem:[#allocation2 + $0x30] sm:$0xff] %vm503, 0.0
        %685 = vst.msk [vmem:[#allocation2 + $0x38] sm:$0xff] %vm503, 0.0
        %686 = vst.msk [vmem:[#allocation2 + $0x40] sm:$0x3] %vm679, 0.0
        %687 = vst.msk [vmem:[#allocation2 + $0x48] sm:$0xff] %vm503, 0.0
        %688 = vst.msk [vmem:[#allocation2 + $0x50] sm:$0xff] %vm503, 0.0
        %689 = vst.msk [vmem:[#allocation2 + $0x58] sm:$0x3] %vm679, 0.0
        %690 = vst.msk [vmem:[#allocation2 + $0x60] sm:$0xff] %vm503, 0.0
        %691 = vst.msk [vmem:[#allocation2 + $0x68] sm:$0xff] %vm503, 0.0
        %692 = vst.msk [vmem:[#allocation2 + $0x70] sm:$0x3] %vm679, 0.0
        %693 = vst.msk [vmem:[#allocation2 + $0x78] sm:$0xff] %vm503, 0.0
        %694 = vst.msk [vmem:[#allocation2 + $0x80] sm:$0xff] %vm503, 0.0
        %695 = vst.msk [vmem:[#allocation2 + $0x88] sm:$0x3] %vm679, 0.0
        %696 = vst.msk [vmem:[#allocation2 + $0x90] sm:$0xff] %vm503, 0.0
        %697 = vst.msk [vmem:[#allocation2 + $0x98] sm:$0xff] %vm503, 0.0
        %698 = vst.msk [vmem:[#allocation2 + $0xa0] sm:$0x3] %vm679, 0.0
        %699 = vst.msk [vmem:[#allocation2 + $0xa8] sm:$0xff] %vm503, 0.0
        %700 = vst.msk [vmem:[#allocation2 + $0xb0] sm:$0xff] %vm503, 0.0
        %701 = vst.msk [vmem:[#allocation2 + $0xb8] sm:$0x3] %vm679, 0.0
        %702 = vst.msk [vmem:[#allocation2 + $0xc0] sm:$0xff] %vm503, 0.0
        %703 = vst.msk [vmem:[#allocation2 + $0xc8] sm:$0xff] %vm503, 0.0
        %704 = vst.msk [vmem:[#allocation2 + $0xd0] sm:$0x3] %vm679, 0.0
        %705 = vst.msk [vmem:[#allocation2 + $0xd8] sm:$0xff] %vm503, 0.0
        %706 = vst.msk [vmem:[#allocation2 + $0xe0] sm:$0xff] %vm503, 0.0
        %707 = vst.msk [vmem:[#allocation2 + $0xe8] sm:$0x3] %vm679, 0.0
        %708 = vst.msk [vmem:[#allocation2 + $0xf0] sm:$0xff] %vm503, 0.0
        %709 = vst.msk [vmem:[#allocation2 + $0xf8] sm:$0xff] %vm503, 0.0
        %710 = vst.msk [vmem:[#allocation2 + $0x100] sm:$0x3] %vm679, 0.0
        %711 = vst.msk [vmem:[#allocation2 + $0x108] sm:$0xff] %vm503, 0.0
        %712 = vst.msk [vmem:[#allocation2 + $0x110] sm:$0xff] %vm503, 0.0
        %713 = vst.msk [vmem:[#allocation2 + $0x118] sm:$0x3] %vm679, 0.0
        %714 = vst.msk [vmem:[#allocation2 + $0x120] sm:$0xff] %vm503, 0.0
        %715 = vst.msk [vmem:[#allocation2 + $0x128] sm:$0xff] %vm503, 0.0
        %716 = vst.msk [vmem:[#allocation2 + $0x130] sm:$0x3] %vm679, 0.0
        %717 = vst.msk [vmem:[#allocation2 + $0x138] sm:$0xff] %vm503, 0.0
        %718 = vst.msk [vmem:[#allocation2 + $0x140] sm:$0xff] %vm503, 0.0
        %719 = vst.msk [vmem:[#allocation2 + $0x148] sm:$0x3] %vm679, 0.0
        %720 = vst.msk [vmem:[#allocation2 + $0x150] sm:$0xff] %vm503, 0.0
        %721 = vst.msk [vmem:[#allocation2 + $0x158] sm:$0xff] %vm503, 0.0
        %722 = vst.msk [vmem:[#allocation2 + $0x160] sm:$0x3] %vm679, 0.0
        %723 = vst.msk [vmem:[#allocation2 + $0x168] sm:$0xff] %vm503, 0.0
        %724 = vst.msk [vmem:[#allocation2 + $0x170] sm:$0xff] %vm503, 0.0
        %725 = vst.msk [vmem:[#allocation2 + $0x178] sm:$0x3] %vm679, 0.0
        %726 = vst.msk [vmem:[#allocation2 + $0x180] sm:$0xff] %vm503, 0.0
        %727 = vst.msk [vmem:[#allocation2 + $0x188] sm:$0xff] %vm503, 0.0
        %728 = vst.msk [vmem:[#allocation2 + $0x190] sm:$0x3] %vm679, 0.0
        %729 = vst.msk [vmem:[#allocation2 + $0x198] sm:$0xff] %vm503, 0.0
        %730 = vst.msk [vmem:[#allocation2 + $0x1a0] sm:$0xff] %vm503, 0.0
        %731 = vst.msk [vmem:[#allocation2 + $0x1a8] sm:$0x3] %vm679, 0.0
        %764 = vrot.lane.b32.xlu0 %v645, 120
        %v765 = vpop.permute.xlu0 %764
        %766 = vrot.lane.b32.xlu0 %v646, 120
        %v767 = vpop.permute.xlu0 %766
        %768 = vrot.lane.b32.xlu0 %v647, 120
        %v769 = vpop.permute.xlu0 %768
        %770 = vrot.lane.b32.xlu0 %v648, 120
        %v771 = vpop.permute.xlu0 %770
        %772 = vrot.lane.b32.xlu0 %v649, 120
        %v773 = vpop.permute.xlu0 %772
        %774 = vrot.lane.b32.xlu0 %v650, 120
        %v775 = vpop.permute.xlu0 %774
        %776 = vrot.lane.b32.xlu0 %v651, 120
        %v777 = vpop.permute.xlu0 %776
        %778 = vrot.lane.b32.xlu0 %v652, 120
        %v779 = vpop.permute.xlu0 %778
        %780 = vrot.lane.b32.xlu0 %v653, 120
        %v781 = vpop.permute.xlu0 %780
        %782 = vrot.lane.b32.xlu0 %v654, 120
        %v783 = vpop.permute.xlu0 %782
        %784 = vrot.lane.b32.xlu0 %v655, 120
        %v785 = vpop.permute.xlu0 %784
        %786 = vrot.lane.b32.xlu0 %v656, 120
        %v787 = vpop.permute.xlu0 %786
        %788 = vrot.lane.b32.xlu0 %v657, 120
        %v789 = vpop.permute.xlu0 %788
        %790 = vrot.lane.b32.xlu0 %v658, 120
        %v791 = vpop.permute.xlu0 %790
        %792 = vrot.lane.b32.xlu0 %v659, 120
        %v793 = vpop.permute.xlu0 %792
        %794 = vrot.lane.b32.xlu0 %v660, 120
        %v795 = vpop.permute.xlu0 %794
        %796 = vrot.lane.b32.xlu0 %v661, 120
        %v797 = vpop.permute.xlu0 %796
        %798 = vrot.lane.b32.xlu0 %v662, 120
        %v799 = vpop.permute.xlu0 %798
        %800 = vrot.lane.b32.xlu0 %v663, 120
        %v801 = vpop.permute.xlu0 %800
        %802 = vrot.lane.b32.xlu0 %v664, 120
        %v803 = vpop.permute.xlu0 %802
        %804 = vrot.lane.b32.xlu0 %v665, 120
        %v805 = vpop.permute.xlu0 %804
        %806 = vrot.lane.b32.xlu0 %v666, 120
        %v807 = vpop.permute.xlu0 %806
        %808 = vrot.lane.b32.xlu0 %v667, 120
        %v809 = vpop.permute.xlu0 %808
        %810 = vrot.lane.b32.xlu0 %v668, 120
        %v811 = vpop.permute.xlu0 %810
        %812 = vrot.lane.b32.xlu0 %v669, 120
        %v813 = vpop.permute.xlu0 %812
        %814 = vrot.lane.b32.xlu0 %v670, 120
        %v815 = vpop.permute.xlu0 %814
        %816 = vrot.lane.b32.xlu0 %v671, 120
        %v817 = vpop.permute.xlu0 %816
        %818 = vrot.lane.b32.xlu0 %v672, 120
        %v819 = vpop.permute.xlu0 %818
        %820 = vrot.lane.b32.xlu0 %v673, 120
        %v821 = vpop.permute.xlu0 %820
        %822 = vrot.lane.b32.xlu0 %v674, 120
        %v823 = vpop.permute.xlu0 %822
        %824 = vrot.lane.b32.xlu0 %v675, 120
        %v825 = vpop.permute.xlu0 %824
        %826 = vrot.lane.b32.xlu0 %v676, 120
        %v827 = vpop.permute.xlu0 %826
        %s860 = scalar_lea.vmem [#allocation2], 24
        %861 = vst.msk [vmem:[%s860 + $0x1] sm:$0xff] %vm503, %v765
        %862 = vst.msk [vmem:[%s860 + $0x9] sm:$0xff] %vm503, %v767
        %863 = vst.msk [vmem:[%s860 + $0x19] sm:$0xff] %vm503, %v769
        %864 = vst.msk [vmem:[%s860 + $0x21] sm:$0xff] %vm503, %v771
        %865 = vst.msk [vmem:[%s860 + $0x31] sm:$0xff] %vm503, %v773
        %866 = vst.msk [vmem:[%s860 + $0x39] sm:$0xff] %vm503, %v775
        %867 = vst.msk [vmem:[%s860 + $0x49] sm:$0xff] %vm503, %v777
        %868 = vst.msk [vmem:[%s860 + $0x51] sm:$0xff] %vm503, %v779
        %869 = vst.msk [vmem:[%s860 + $0x61] sm:$0xff] %vm503, %v781
        %870 = vst.msk [vmem:[%s860 + $0x69] sm:$0xff] %vm503, %v783
        %871 = vst.msk [vmem:[%s860 + $0x79] sm:$0xff] %vm503, %v785
        %872 = vst.msk [vmem:[%s860 + $0x81] sm:$0xff] %vm503, %v787
        %873 = vst.msk [vmem:[%s860 + $0x91] sm:$0xff] %vm503, %v789
        %874 = vst.msk [vmem:[%s860 + $0x99] sm:$0xff] %vm503, %v791
        %875 = vst.msk [vmem:[%s860 + $0xa9] sm:$0xff] %vm503, %v793
        %876 = vst.msk [vmem:[%s860 + $0xb1] sm:$0xff] %vm503, %v795
        %877 = vst.msk [vmem:[%s860 + $0xc1] sm:$0xff] %vm503, %v797
        %878 = vst.msk [vmem:[%s860 + $0xc9] sm:$0xff] %vm503, %v799
        %879 = vst.msk [vmem:[%s860 + $0xd9] sm:$0xff] %vm503, %v801
        %880 = vst.msk [vmem:[%s860 + $0xe1] sm:$0xff] %vm503, %v803
        %881 = vst.msk [vmem:[%s860 + $0xf1] sm:$0xff] %vm503, %v805
        %882 = vst.msk [vmem:[%s860 + $0xf9] sm:$0xff] %vm503, %v807
        %883 = vst.msk [vmem:[%s860 + $0x109] sm:$0xff] %vm503, %v809
        %884 = vst.msk [vmem:[%s860 + $0x111] sm:$0xff] %vm503, %v811
        %885 = vst.msk [vmem:[%s860 + $0x121] sm:$0xff] %vm503, %v813
        %886 = vst.msk [vmem:[%s860 + $0x129] sm:$0xff] %vm503, %v815
        %887 = vst.msk [vmem:[%s860 + $0x139] sm:$0xff] %vm503, %v817
        %888 = vst.msk [vmem:[%s860 + $0x141] sm:$0xff] %vm503, %v819
        %889 = vst.msk [vmem:[%s860 + $0x151] sm:$0xff] %vm503, %v821
        %890 = vst.msk [vmem:[%s860 + $0x159] sm:$0xff] %vm503, %v823
        %891 = vst.msk [vmem:[%s860 + $0x169] sm:$0xff] %vm503, %v825
        %892 = vst.msk [vmem:[%s860 + $0x171] sm:$0xff] %vm503, %v827
        %v893 = vld [vmem:[#allocation2] sm:$0xff]
        %v894 = vld [vmem:[#allocation2 + $0x8] sm:$0xff]
        %v895 = vld [vmem:[#allocation2 + $0x18] sm:$0xff]
        %v896 = vld [vmem:[#allocation2 + $0x20] sm:$0xff]
        %v897 = vld [vmem:[#allocation2 + $0x30] sm:$0xff]
        %v898 = vld [vmem:[#allocation2 + $0x38] sm:$0xff]
        %v899 = vld [vmem:[#allocation2 + $0x48] sm:$0xff]
        %v900 = vld [vmem:[#allocation2 + $0x50] sm:$0xff]
        %v901 = vld [vmem:[#allocation2 + $0x60] sm:$0xff]
        %v902 = vld [vmem:[#allocation2 + $0x68] sm:$0xff]
        %v903 = vld [vmem:[#allocation2 + $0x78] sm:$0xff]
        %v904 = vld [vmem:[#allocation2 + $0x80] sm:$0xff]
        %v905 = vld [vmem:[#allocation2 + $0x90] sm:$0xff]
        %v906 = vld [vmem:[#allocation2 + $0x98] sm:$0xff]
        %v907 = vld [vmem:[#allocation2 + $0xa8] sm:$0xff]
        %v908 = vld [vmem:[#allocation2 + $0xb0] sm:$0xff]
        %v909 = vld [vmem:[#allocation2 + $0xc0] sm:$0xff]
        %v910 = vld [vmem:[#allocation2 + $0xc8] sm:$0xff]
        %v911 = vld [vmem:[#allocation2 + $0xd8] sm:$0xff]
        %v912 = vld [vmem:[#allocation2 + $0xe0] sm:$0xff]
        %v913 = vld [vmem:[#allocation2 + $0xf0] sm:$0xff]
        %v914 = vld [vmem:[#allocation2 + $0xf8] sm:$0xff]
        %v915 = vld [vmem:[#allocation2 + $0x108] sm:$0xff]
        %v916 = vld [vmem:[#allocation2 + $0x110] sm:$0xff]
        %v917 = vld [vmem:[#allocation2 + $0x120] sm:$0xff]
        %v918 = vld [vmem:[#allocation2 + $0x128] sm:$0xff]
        %v919 = vld [vmem:[#allocation2 + $0x138] sm:$0xff]
        %v920 = vld [vmem:[#allocation2 + $0x140] sm:$0xff]
        %v921 = vld [vmem:[#allocation2 + $0x150] sm:$0xff]
        %v922 = vld [vmem:[#allocation2 + $0x158] sm:$0xff]
        %v923 = vld [vmem:[#allocation2 + $0x168] sm:$0xff]
        %v924 = vld [vmem:[#allocation2 + $0x170] sm:$0xff]
        %v925 = vpack.c.bf16 %v894, %v893
        %v926 = vpack.c.bf16 %v896, %v895
        %v927 = vpack.c.bf16 %v898, %v897
        %v928 = vpack.c.bf16 %v900, %v899
        %v929 = vpack.c.bf16 %v902, %v901
        %v930 = vpack.c.bf16 %v904, %v903
        %v931 = vpack.c.bf16 %v906, %v905
        %v932 = vpack.c.bf16 %v908, %v907
        %v933 = vpack.c.bf16 %v910, %v909
        %v934 = vpack.c.bf16 %v912, %v911
        %v935 = vpack.c.bf16 %v914, %v913
        %v936 = vpack.c.bf16 %v916, %v915
        %v937 = vpack.c.bf16 %v918, %v917
        %v938 = vpack.c.bf16 %v920, %v919
        %v939 = vpack.c.bf16 %v922, %v921
        %v940 = vpack.c.bf16 %v924, %v923
        %v941 = vld [vmem:[%s3] sm:$0xf]
        %v942 = vld [vmem:[#allocation2 + $0x1] sm:$0xff]
        %v943 = vld [vmem:[#allocation2 + $0x9] sm:$0xff]
        %v944 = vld [vmem:[#allocation2 + $0x19] sm:$0xff]
        %v945 = vld [vmem:[#allocation2 + $0x21] sm:$0xff]
        %v946 = vld [vmem:[#allocation2 + $0x31] sm:$0xff]
        %v947 = vld [vmem:[#allocation2 + $0x39] sm:$0xff]
        %v948 = vld [vmem:[#allocation2 + $0x49] sm:$0xff]
        %v949 = vld [vmem:[#allocation2 + $0x51] sm:$0xff]
        %v950 = vld [vmem:[#allocation2 + $0x61] sm:$0xff]
        %v951 = vld [vmem:[#allocation2 + $0x69] sm:$0xff]
        %v952 = vld [vmem:[#allocation2 + $0x79] sm:$0xff]
        %v953 = vld [vmem:[#allocation2 + $0x81] sm:$0xff]
        %v954 = vld [vmem:[#allocation2 + $0x91] sm:$0xff]
        %v955 = vld [vmem:[#allocation2 + $0x99] sm:$0xff]
        %v956 = vld [vmem:[#allocation2 + $0xa9] sm:$0xff]
        %v957 = vld [vmem:[#allocation2 + $0xb1] sm:$0xff]
        %v958 = vld [vmem:[#allocation2 + $0xc1] sm:$0xff]
        %v959 = vld [vmem:[#allocation2 + $0xc9] sm:$0xff]
        %v960 = vld [vmem:[#allocation2 + $0xd9] sm:$0xff]
        %v961 = vld [vmem:[#allocation2 + $0xe1] sm:$0xff]
        %v962 = vld [vmem:[#allocation2 + $0xf1] sm:$0xff]
        %v963 = vld [vmem:[#allocation2 + $0xf9] sm:$0xff]
        %v964 = vld [vmem:[#allocation2 + $0x109] sm:$0xff]
        %v965 = vld [vmem:[#allocation2 + $0x111] sm:$0xff]
        %v966 = vld [vmem:[#allocation2 + $0x121] sm:$0xff]
        %v967 = vld [vmem:[#allocation2 + $0x129] sm:$0xff]
        %v968 = vld [vmem:[#allocation2 + $0x139] sm:$0xff]
        %v969 = vld [vmem:[#allocation2 + $0x141] sm:$0xff]
        %v970 = vld [vmem:[#allocation2 + $0x151] sm:$0xff]
        %v971 = vld [vmem:[#allocation2 + $0x159] sm:$0xff]
        %v972 = vld [vmem:[#allocation2 + $0x169] sm:$0xff]
        %v973 = vld [vmem:[#allocation2 + $0x171] sm:$0xff]
        %v974 = vpack.c.bf16 %v943, %v942
        %v975 = vpack.c.bf16 %v945, %v944
        %v976 = vpack.c.bf16 %v947, %v946
        %v977 = vpack.c.bf16 %v949, %v948
        %v978 = vpack.c.bf16 %v951, %v950
        %v979 = vpack.c.bf16 %v953, %v952
        %v980 = vpack.c.bf16 %v955, %v954
        %v981 = vpack.c.bf16 %v957, %v956
        %v982 = vpack.c.bf16 %v959, %v958
        %v983 = vpack.c.bf16 %v961, %v960
        %v984 = vpack.c.bf16 %v963, %v962
        %v985 = vpack.c.bf16 %v965, %v964
        %v986 = vpack.c.bf16 %v967, %v966
        %v987 = vpack.c.bf16 %v969, %v968
        %v988 = vpack.c.bf16 %v971, %v970
        %v989 = vpack.c.bf16 %v973, %v972
        %s990 = scalar_lea.vmem %s3, 4
        %v991 = vld [vmem:[%s990] sm:$0xf]
        %v993 = vsel %vm503, %v974, 0
        %v996 = vsel %vm503, %v975, 0
        %v999 = vsel %vm503, %v976, 0
        %v1002 = vsel %vm503, %v977, 0
        %v1005 = vsel %vm503, %v978, 0
        %v1008 = vsel %vm503, %v979, 0
        %v1011 = vsel %vm503, %v980, 0
        %v1014 = vsel %vm503, %v981, 0
        %v1017 = vsel %vm503, %v982, 0
        %v1020 = vsel %vm503, %v983, 0
        %v1023 = vsel %vm503, %v984, 0
        %v1026 = vsel %vm503, %v985, 0
        %v1029 = vsel %vm503, %v986, 0
        %v1032 = vsel %vm503, %v987, 0
        %v1035 = vsel %vm503, %v988, 0
        %v1038 = vsel %vm503, %v989, 0
        %v1041 = vsel %vm552, %v991, 0
        %1043 = vmatpush.bf16.msra.mxu0 0
        %1044 = vmatpush.bf16.msra.mxu0 0
        %1045 = vmatpush.bf16.msra.mxu0 0
        %1046 = vmatpush.bf16.msra.mxu0 0
        %1047 = vmatpush.bf16.msra.mxu0 0
        %1048 = vmatpush.bf16.msra.mxu0 0
        %1049 = vmatpush.bf16.msra.mxu0 0
        %1050 = vmatpush.bf16.msra.mxu0 %v1041
        %1051 = vmatmul.bf16.gmra.mxu0 %v993
        %v1052 = vpop.f32.mrf.mxu0
        %v1053 = vadd.f32 0.0, %v1052
        %v1054 = vpop.f32.mrf.mxu0
        %v1055 = vadd.f32 0.0, %v1054
        %1056 = vmatmul.bf16.gmra.mxu0 %v996
        %v1057 = vpop.f32.mrf.mxu0
        %v1058 = vadd.f32 0.0, %v1057
        %v1059 = vpop.f32.mrf.mxu0
        %v1060 = vadd.f32 0.0, %v1059
        %1061 = vmatmul.bf16.gmra.mxu0 %v999
        %v1062 = vpop.f32.mrf.mxu0
        %v1063 = vadd.f32 0.0, %v1062
        %v1064 = vpop.f32.mrf.mxu0
        %v1065 = vadd.f32 0.0, %v1064
        %1066 = vmatmul.bf16.gmra.mxu0 %v1002
        %v1067 = vpop.f32.mrf.mxu0
        %v1068 = vadd.f32 0.0, %v1067
        %v1069 = vpop.f32.mrf.mxu0
        %v1070 = vadd.f32 0.0, %v1069
        %1071 = vmatmul.bf16.gmra.mxu0 %v1005
        %v1072 = vpop.f32.mrf.mxu0
        %v1073 = vadd.f32 0.0, %v1072
        %v1074 = vpop.f32.mrf.mxu0
        %v1075 = vadd.f32 0.0, %v1074
        %1076 = vmatmul.bf16.gmra.mxu0 %v1008
        %v1077 = vpop.f32.mrf.mxu0
        %v1078 = vadd.f32 0.0, %v1077
        %v1079 = vpop.f32.mrf.mxu0
        %v1080 = vadd.f32 0.0, %v1079
        %1081 = vmatmul.bf16.gmra.mxu0 %v1011
        %v1082 = vpop.f32.mrf.mxu0
        %v1083 = vadd.f32 0.0, %v1082
        %v1084 = vpop.f32.mrf.mxu0
        %v1085 = vadd.f32 0.0, %v1084
        %1086 = vmatmul.bf16.gmra.mxu0 %v1014
        %v1087 = vpop.f32.mrf.mxu0
        %v1088 = vadd.f32 0.0, %v1087
        %v1089 = vpop.f32.mrf.mxu0
        %v1090 = vadd.f32 0.0, %v1089
        %1091 = vmatmul.bf16.gmra.mxu0 %v1017
        %v1092 = vpop.f32.mrf.mxu0
        %v1093 = vadd.f32 0.0, %v1092
        %v1094 = vpop.f32.mrf.mxu0
        %v1095 = vadd.f32 0.0, %v1094
        %1096 = vmatmul.bf16.gmra.mxu0 %v1020
        %v1097 = vpop.f32.mrf.mxu0
        %v1098 = vadd.f32 0.0, %v1097
        %v1099 = vpop.f32.mrf.mxu0
        %v1100 = vadd.f32 0.0, %v1099
        %1101 = vmatmul.bf16.gmra.mxu0 %v1023
        %v1102 = vpop.f32.mrf.mxu0
        %v1103 = vadd.f32 0.0, %v1102
        %v1104 = vpop.f32.mrf.mxu0
        %v1105 = vadd.f32 0.0, %v1104
        %1106 = vmatmul.bf16.gmra.mxu0 %v1026
        %v1107 = vpop.f32.mrf.mxu0
        %v1108 = vadd.f32 0.0, %v1107
        %v1109 = vpop.f32.mrf.mxu0
        %v1110 = vadd.f32 0.0, %v1109
        %1111 = vmatmul.bf16.gmra.mxu0 %v1029
        %v1112 = vpop.f32.mrf.mxu0
        %v1113 = vadd.f32 0.0, %v1112
        %v1114 = vpop.f32.mrf.mxu0
        %v1115 = vadd.f32 0.0, %v1114
        %1116 = vmatmul.bf16.gmra.mxu0 %v1032
        %v1117 = vpop.f32.mrf.mxu0
        %v1118 = vadd.f32 0.0, %v1117
        %v1119 = vpop.f32.mrf.mxu0
        %v1120 = vadd.f32 0.0, %v1119
        %1121 = vmatmul.bf16.gmra.mxu0 %v1035
        %v1122 = vpop.f32.mrf.mxu0
        %v1123 = vadd.f32 0.0, %v1122
        %v1124 = vpop.f32.mrf.mxu0
        %v1125 = vadd.f32 0.0, %v1124
        %1126 = vmatmul.bf16.gmra.mxu0 %v1038
        %v1127 = vpop.f32.mrf.mxu0
        %v1128 = vadd.f32 0.0, %v1127
        %v1129 = vpop.f32.mrf.mxu0
        %v1130 = vadd.f32 0.0, %v1129
        %1131 = vdwg.mxu0
        %v1133 = vsel %vm503, %v925, 0
        %v1136 = vsel %vm503, %v926, 0
        %v1139 = vsel %vm503, %v927, 0
        %v1142 = vsel %vm503, %v928, 0
        %v1145 = vsel %vm503, %v929, 0
        %v1148 = vsel %vm503, %v930, 0
        %v1151 = vsel %vm503, %v931, 0
        %v1154 = vsel %vm503, %v932, 0
        %v1157 = vsel %vm503, %v933, 0
        %v1160 = vsel %vm503, %v934, 0
        %v1163 = vsel %vm503, %v935, 0
        %v1166 = vsel %vm503, %v936, 0
        %v1169 = vsel %vm503, %v937, 0
        %v1172 = vsel %vm503, %v938, 0
        %v1175 = vsel %vm503, %v939, 0
        %v1178 = vsel %vm503, %v940, 0
        %v1181 = vsel %vm552, %v941, 0
        %1183 = vmatpush.bf16.msra.mxu0 0
        %1184 = vmatpush.bf16.msra.mxu0 0
        %1185 = vmatpush.bf16.msra.mxu0 0
        %1186 = vmatpush.bf16.msra.mxu0 0
        %1187 = vmatpush.bf16.msra.mxu0 0
        %1188 = vmatpush.bf16.msra.mxu0 0
        %1189 = vmatpush.bf16.msra.mxu0 0
        %1190 = vmatpush.bf16.msra.mxu0 %v1181
        %1191 = vmatmul.bf16.gmra.mxu0 %v1133
        %v1192 = vpop.f32.mrf.mxu0
        %v1193 = vadd.f32 %v1053, %v1192
        %v1194 = vpop.f32.mrf.mxu0
        %v1195 = vadd.f32 %v1055, %v1194
        %1196 = vmatmul.bf16.gmra.mxu0 %v1136
        %v1197 = vpop.f32.mrf.mxu0
        %v1198 = vadd.f32 %v1058, %v1197
        %v1199 = vpop.f32.mrf.mxu0
        %v1200 = vadd.f32 %v1060, %v1199
        %1201 = vmatmul.bf16.gmra.mxu0 %v1139
        %v1202 = vpop.f32.mrf.mxu0
        %v1203 = vadd.f32 %v1063, %v1202
        %v1204 = vpop.f32.mrf.mxu0
        %v1205 = vadd.f32 %v1065, %v1204
        %1206 = vmatmul.bf16.gmra.mxu0 %v1142
        %v1207 = vpop.f32.mrf.mxu0
        %v1208 = vadd.f32 %v1068, %v1207
        %v1209 = vpop.f32.mrf.mxu0
        %v1210 = vadd.f32 %v1070, %v1209
        %1211 = vmatmul.bf16.gmra.mxu0 %v1145
        %v1212 = vpop.f32.mrf.mxu0
        %v1213 = vadd.f32 %v1073, %v1212
        %v1214 = vpop.f32.mrf.mxu0
        %v1215 = vadd.f32 %v1075, %v1214
        %1216 = vmatmul.bf16.gmra.mxu0 %v1148
        %v1217 = vpop.f32.mrf.mxu0
        %v1218 = vadd.f32 %v1078, %v1217
        %v1219 = vpop.f32.mrf.mxu0
        %v1220 = vadd.f32 %v1080, %v1219
        %1221 = vmatmul.bf16.gmra.mxu0 %v1151
        %v1222 = vpop.f32.mrf.mxu0
        %v1223 = vadd.f32 %v1083, %v1222
        %v1224 = vpop.f32.mrf.mxu0
        %v1225 = vadd.f32 %v1085, %v1224
        %1226 = vmatmul.bf16.gmra.mxu0 %v1154
        %v1227 = vpop.f32.mrf.mxu0
        %v1228 = vadd.f32 %v1088, %v1227
        %v1229 = vpop.f32.mrf.mxu0
        %v1230 = vadd.f32 %v1090, %v1229
        %1231 = vmatmul.bf16.gmra.mxu0 %v1157
        %v1232 = vpop.f32.mrf.mxu0
        %v1233 = vadd.f32 %v1093, %v1232
        %v1234 = vpop.f32.mrf.mxu0
        %v1235 = vadd.f32 %v1095, %v1234
        %1236 = vmatmul.bf16.gmra.mxu0 %v1160
        %v1237 = vpop.f32.mrf.mxu0
        %v1238 = vadd.f32 %v1098, %v1237
        %v1239 = vpop.f32.mrf.mxu0
        %v1240 = vadd.f32 %v1100, %v1239
        %1241 = vmatmul.bf16.gmra.mxu0 %v1163
        %v1242 = vpop.f32.mrf.mxu0
        %v1243 = vadd.f32 %v1103, %v1242
        %v1244 = vpop.f32.mrf.mxu0
        %v1245 = vadd.f32 %v1105, %v1244
        %1246 = vmatmul.bf16.gmra.mxu0 %v1166
        %v1247 = vpop.f32.mrf.mxu0
        %v1248 = vadd.f32 %v1108, %v1247
        %v1249 = vpop.f32.mrf.mxu0
        %v1250 = vadd.f32 %v1110, %v1249
        %1251 = vmatmul.bf16.gmra.mxu0 %v1169
        %v1252 = vpop.f32.mrf.mxu0
        %v1253 = vadd.f32 %v1113, %v1252
        %v1254 = vpop.f32.mrf.mxu0
        %v1255 = vadd.f32 %v1115, %v1254
        %1256 = vmatmul.bf16.gmra.mxu0 %v1172
        %v1257 = vpop.f32.mrf.mxu0
        %v1258 = vadd.f32 %v1118, %v1257
        %v1259 = vpop.f32.mrf.mxu0
        %v1260 = vadd.f32 %v1120, %v1259
        %1261 = vmatmul.bf16.gmra.mxu0 %v1175
        %v1262 = vpop.f32.mrf.mxu0
        %v1263 = vadd.f32 %v1123, %v1262
        %v1264 = vpop.f32.mrf.mxu0
        %v1265 = vadd.f32 %v1125, %v1264
        %1266 = vmatmul.bf16.gmra.mxu0 %v1178
        %v1267 = vpop.f32.mrf.mxu0
        %v1268 = vadd.f32 %v1128, %v1267
        %v1269 = vpop.f32.mrf.mxu0
        %v1270 = vadd.f32 %v1130, %v1269
        %1271 = vdwg.mxu0
        %v1272 = vld [vmem:[#allocation2 + $0x2] sm:$0xff]
        %v1273 = vld [vmem:[#allocation2 + $0xa] sm:$0xff]
        %v1274 = vld [vmem:[#allocation2 + $0x1a] sm:$0xff]
        %v1275 = vld [vmem:[#allocation2 + $0x22] sm:$0xff]
        %v1276 = vld [vmem:[#allocation2 + $0x32] sm:$0xff]
        %v1277 = vld [vmem:[#allocation2 + $0x3a] sm:$0xff]
        %v1278 = vld [vmem:[#allocation2 + $0x4a] sm:$0xff]
        %v1279 = vld [vmem:[#allocation2 + $0x52] sm:$0xff]
        %v1280 = vld [vmem:[#allocation2 + $0x62] sm:$0xff]
        %v1281 = vld [vmem:[#allocation2 + $0x6a] sm:$0xff]
        %v1282 = vld [vmem:[#allocation2 + $0x7a] sm:$0xff]
        %v1283 = vld [vmem:[#allocation2 + $0x82] sm:$0xff]
        %v1284 = vld [vmem:[#allocation2 + $0x92] sm:$0xff]
        %v1285 = vld [vmem:[#allocation2 + $0x9a] sm:$0xff]
        %v1286 = vld [vmem:[#allocation2 + $0xaa] sm:$0xff]
        %v1287 = vld [vmem:[#allocation2 + $0xb2] sm:$0xff]
        %v1288 = vld [vmem:[#allocation2 + $0xc2] sm:$0xff]
        %v1289 = vld [vmem:[#allocation2 + $0xca] sm:$0xff]
        %v1290 = vld [vmem:[#allocation2 + $0xda] sm:$0xff]
        %v1291 = vld [vmem:[#allocation2 + $0xe2] sm:$0xff]
        %v1292 = vld [vmem:[#allocation2 + $0xf2] sm:$0xff]
        %v1293 = vld [vmem:[#allocation2 + $0xfa] sm:$0xff]
        %v1294 = vld [vmem:[#allocation2 + $0x10a] sm:$0xff]
        %v1295 = vld [vmem:[#allocation2 + $0x112] sm:$0xff]
        %v1296 = vld [vmem:[#allocation2 + $0x122] sm:$0xff]
        %v1297 = vld [vmem:[#allocation2 + $0x12a] sm:$0xff]
        %v1298 = vld [vmem:[#allocation2 + $0x13a] sm:$0xff]
        %v1299 = vld [vmem:[#allocation2 + $0x142] sm:$0xff]
        %v1300 = vld [vmem:[#allocation2 + $0x152] sm:$0xff]
        %v1301 = vld [vmem:[#allocation2 + $0x15a] sm:$0xff]
        %v1302 = vld [vmem:[#allocation2 + $0x16a] sm:$0xff]
        %v1303 = vld [vmem:[#allocation2 + $0x172] sm:$0xff]
        %v1304 = vpack.c.bf16 %v1273, %v1272
        %v1305 = vpack.c.bf16 %v1275, %v1274
        %v1306 = vpack.c.bf16 %v1277, %v1276
        %v1307 = vpack.c.bf16 %v1279, %v1278
        %v1308 = vpack.c.bf16 %v1281, %v1280
        %v1309 = vpack.c.bf16 %v1283, %v1282
        %v1310 = vpack.c.bf16 %v1285, %v1284
        %v1311 = vpack.c.bf16 %v1287, %v1286
        %v1312 = vpack.c.bf16 %v1289, %v1288
        %v1313 = vpack.c.bf16 %v1291, %v1290
        %v1314 = vpack.c.bf16 %v1293, %v1292
        %v1315 = vpack.c.bf16 %v1295, %v1294
        %v1316 = vpack.c.bf16 %v1297, %v1296
        %v1317 = vpack.c.bf16 %v1299, %v1298
        %v1318 = vpack.c.bf16 %v1301, %v1300
        %v1319 = vpack.c.bf16 %v1303, %v1302
        %s1320 = scalar_lea.vmem %s3, 8
        %v1321 = vld [vmem:[%s1320] sm:$0xf]
        %v1323 = vsel %vm503, %v1304, 0
        %v1326 = vsel %vm503, %v1305, 0
        %v1329 = vsel %vm503, %v1306, 0
        %v1332 = vsel %vm503, %v1307, 0
        %v1335 = vsel %vm503, %v1308, 0
        %v1338 = vsel %vm503, %v1309, 0
        %v1341 = vsel %vm503, %v1310, 0
        %v1344 = vsel %vm503, %v1311, 0
        %v1347 = vsel %vm503, %v1312, 0
        %v1350 = vsel %vm503, %v1313, 0
        %v1353 = vsel %vm503, %v1314, 0
        %v1356 = vsel %vm503, %v1315, 0
        %v1359 = vsel %vm503, %v1316, 0
        %v1362 = vsel %vm503, %v1317, 0
        %v1365 = vsel %vm503, %v1318, 0
        %v1368 = vsel %vm503, %v1319, 0
        %v1371 = vsel %vm552, %v1321, 0
        %1373 = vmatpush.bf16.msra.mxu0 0
        %1374 = vmatpush.bf16.msra.mxu0 0
        %1375 = vmatpush.bf16.msra.mxu0 0
        %1376 = vmatpush.bf16.msra.mxu0 0
        %1377 = vmatpush.bf16.msra.mxu0 0
        %1378 = vmatpush.bf16.msra.mxu0 0
        %1379 = vmatpush.bf16.msra.mxu0 0
        %1380 = vmatpush.bf16.msra.mxu0 %v1371
        %1381 = vmatmul.bf16.gmra.mxu0 %v1323
        %v1382 = vpop.f32.mrf.mxu0
        %v1383 = vadd.f32 0.0, %v1382
        %v1384 = vpop.f32.mrf.mxu0
        %v1385 = vadd.f32 0.0, %v1384
        %1386 = vmatmul.bf16.gmra.mxu0 %v1326
        %v1387 = vpop.f32.mrf.mxu0
        %v1388 = vadd.f32 0.0, %v1387
        %v1389 = vpop.f32.mrf.mxu0
        %v1390 = vadd.f32 0.0, %v1389
        %1391 = vmatmul.bf16.gmra.mxu0 %v1329
        %v1392 = vpop.f32.mrf.mxu0
        %v1393 = vadd.f32 0.0, %v1392
        %v1394 = vpop.f32.mrf.mxu0
        %v1395 = vadd.f32 0.0, %v1394
        %1396 = vmatmul.bf16.gmra.mxu0 %v1332
        %v1397 = vpop.f32.mrf.mxu0
        %v1398 = vadd.f32 0.0, %v1397
        %v1399 = vpop.f32.mrf.mxu0
        %v1400 = vadd.f32 0.0, %v1399
        %1401 = vmatmul.bf16.gmra.mxu0 %v1335
        %v1402 = vpop.f32.mrf.mxu0
        %v1403 = vadd.f32 0.0, %v1402
        %v1404 = vpop.f32.mrf.mxu0
        %v1405 = vadd.f32 0.0, %v1404
        %1406 = vmatmul.bf16.gmra.mxu0 %v1338
        %v1407 = vpop.f32.mrf.mxu0
        %v1408 = vadd.f32 0.0, %v1407
        %v1409 = vpop.f32.mrf.mxu0
        %v1410 = vadd.f32 0.0, %v1409
        %1411 = vmatmul.bf16.gmra.mxu0 %v1341
        %v1412 = vpop.f32.mrf.mxu0
        %v1413 = vadd.f32 0.0, %v1412
        %v1414 = vpop.f32.mrf.mxu0
        %v1415 = vadd.f32 0.0, %v1414
        %1416 = vmatmul.bf16.gmra.mxu0 %v1344
        %v1417 = vpop.f32.mrf.mxu0
        %v1418 = vadd.f32 0.0, %v1417
        %v1419 = vpop.f32.mrf.mxu0
        %v1420 = vadd.f32 0.0, %v1419
        %1421 = vmatmul.bf16.gmra.mxu0 %v1347
        %v1422 = vpop.f32.mrf.mxu0
        %v1423 = vadd.f32 0.0, %v1422
        %v1424 = vpop.f32.mrf.mxu0
        %v1425 = vadd.f32 0.0, %v1424
        %1426 = vmatmul.bf16.gmra.mxu0 %v1350
        %v1427 = vpop.f32.mrf.mxu0
        %v1428 = vadd.f32 0.0, %v1427
        %v1429 = vpop.f32.mrf.mxu0
        %v1430 = vadd.f32 0.0, %v1429
        %1431 = vmatmul.bf16.gmra.mxu0 %v1353
        %v1432 = vpop.f32.mrf.mxu0
        %v1433 = vadd.f32 0.0, %v1432
        %v1434 = vpop.f32.mrf.mxu0
        %v1435 = vadd.f32 0.0, %v1434
        %1436 = vmatmul.bf16.gmra.mxu0 %v1356
        %v1437 = vpop.f32.mrf.mxu0
        %v1438 = vadd.f32 0.0, %v1437
        %v1439 = vpop.f32.mrf.mxu0
        %v1440 = vadd.f32 0.0, %v1439
        %1441 = vmatmul.bf16.gmra.mxu0 %v1359
        %v1442 = vpop.f32.mrf.mxu0
        %v1443 = vadd.f32 0.0, %v1442
        %v1444 = vpop.f32.mrf.mxu0
        %v1445 = vadd.f32 0.0, %v1444
        %1446 = vmatmul.bf16.gmra.mxu0 %v1362
        %v1447 = vpop.f32.mrf.mxu0
        %v1448 = vadd.f32 0.0, %v1447
        %v1449 = vpop.f32.mrf.mxu0
        %v1450 = vadd.f32 0.0, %v1449
        %1451 = vmatmul.bf16.gmra.mxu0 %v1365
        %v1452 = vpop.f32.mrf.mxu0
        %v1453 = vadd.f32 0.0, %v1452
        %v1454 = vpop.f32.mrf.mxu0
        %v1455 = vadd.f32 0.0, %v1454
        %1456 = vmatmul.bf16.gmra.mxu0 %v1368
        %v1457 = vpop.f32.mrf.mxu0
        %v1458 = vadd.f32 0.0, %v1457
        %v1459 = vpop.f32.mrf.mxu0
        %v1460 = vadd.f32 0.0, %v1459
        %1461 = vdwg.mxu0
        %v1462 = vadd.f32 %v1193, %v1383
        %v1463 = vadd.f32 %v1195, %v1385
        %v1464 = vadd.f32 %v1198, %v1388
        %v1465 = vadd.f32 %v1200, %v1390
        %v1466 = vadd.f32 %v1203, %v1393
        %v1467 = vadd.f32 %v1205, %v1395
        %v1468 = vadd.f32 %v1208, %v1398
        %v1469 = vadd.f32 %v1210, %v1400
        %v1470 = vadd.f32 %v1213, %v1403
        %v1471 = vadd.f32 %v1215, %v1405
        %v1472 = vadd.f32 %v1218, %v1408
        %v1473 = vadd.f32 %v1220, %v1410
        %v1474 = vadd.f32 %v1223, %v1413
        %v1475 = vadd.f32 %v1225, %v1415
        %v1476 = vadd.f32 %v1228, %v1418
        %v1477 = vadd.f32 %v1230, %v1420
        %v1478 = vadd.f32 %v1233, %v1423
        %v1479 = vadd.f32 %v1235, %v1425
        %v1480 = vadd.f32 %v1238, %v1428
        %v1481 = vadd.f32 %v1240, %v1430
        %v1482 = vadd.f32 %v1243, %v1433
        %v1483 = vadd.f32 %v1245, %v1435
        %v1484 = vadd.f32 %v1248, %v1438
        %v1485 = vadd.f32 %v1250, %v1440
        %v1486 = vadd.f32 %v1253, %v1443
        %v1487 = vadd.f32 %v1255, %v1445
        %v1488 = vadd.f32 %v1258, %v1448
        %v1489 = vadd.f32 %v1260, %v1450
        %v1490 = vadd.f32 %v1263, %v1453
        %v1491 = vadd.f32 %v1265, %v1455
        %v1492 = vadd.f32 %v1268, %v1458
        %v1493 = vadd.f32 %v1270, %v1460
        %v1494 = vld [vmem:[%s860] sm:$0xff]
        %v1495 = vld [vmem:[%s860 + $0x8] sm:$0xff]
        %v1496 = vld [vmem:[%s860 + $0x18] sm:$0xff]
        %v1497 = vld [vmem:[%s860 + $0x20] sm:$0xff]
        %v1498 = vld [vmem:[%s860 + $0x30] sm:$0xff]
        %v1499 = vld [vmem:[%s860 + $0x38] sm:$0xff]
        %v1500 = vld [vmem:[%s860 + $0x48] sm:$0xff]
        %v1501 = vld [vmem:[%s860 + $0x50] sm:$0xff]
        %v1502 = vld [vmem:[%s860 + $0x60] sm:$0xff]
        %v1503 = vld [vmem:[%s860 + $0x68] sm:$0xff]
        %v1504 = vld [vmem:[%s860 + $0x78] sm:$0xff]
        %v1505 = vld [vmem:[%s860 + $0x80] sm:$0xff]
        %v1506 = vld [vmem:[%s860 + $0x90] sm:$0xff]
        %v1507 = vld [vmem:[%s860 + $0x98] sm:$0xff]
        %v1508 = vld [vmem:[%s860 + $0xa8] sm:$0xff]
        %v1509 = vld [vmem:[%s860 + $0xb0] sm:$0xff]
        %v1510 = vld [vmem:[%s860 + $0xc0] sm:$0xff]
        %v1511 = vld [vmem:[%s860 + $0xc8] sm:$0xff]
        %v1512 = vld [vmem:[%s860 + $0xd8] sm:$0xff]
        %v1513 = vld [vmem:[%s860 + $0xe0] sm:$0xff]
        %v1514 = vld [vmem:[%s860 + $0xf0] sm:$0xff]
        %v1515 = vld [vmem:[%s860 + $0xf8] sm:$0xff]
        %v1516 = vld [vmem:[%s860 + $0x108] sm:$0xff]
        %v1517 = vld [vmem:[%s860 + $0x110] sm:$0xff]
        %v1518 = vld [vmem:[%s860 + $0x120] sm:$0xff]
        %v1519 = vld [vmem:[%s860 + $0x128] sm:$0xff]
        %v1520 = vld [vmem:[%s860 + $0x138] sm:$0xff]
        %v1521 = vld [vmem:[%s860 + $0x140] sm:$0xff]
        %v1522 = vld [vmem:[%s860 + $0x150] sm:$0xff]
        %v1523 = vld [vmem:[%s860 + $0x158] sm:$0xff]
        %v1524 = vld [vmem:[%s860 + $0x168] sm:$0xff]
        %v1525 = vld [vmem:[%s860 + $0x170] sm:$0xff]
        %v1526 = vpack.c.bf16 %v1495, %v1494
        %v1527 = vpack.c.bf16 %v1497, %v1496
        %v1528 = vpack.c.bf16 %v1499, %v1498
        %v1529 = vpack.c.bf16 %v1501, %v1500
        %v1530 = vpack.c.bf16 %v1503, %v1502
        %v1531 = vpack.c.bf16 %v1505, %v1504
        %v1532 = vpack.c.bf16 %v1507, %v1506
        %v1533 = vpack.c.bf16 %v1509, %v1508
        %v1534 = vpack.c.bf16 %v1511, %v1510
        %v1535 = vpack.c.bf16 %v1513, %v1512
        %v1536 = vpack.c.bf16 %v1515, %v1514
        %v1537 = vpack.c.bf16 %v1517, %v1516
        %v1538 = vpack.c.bf16 %v1519, %v1518
        %v1539 = vpack.c.bf16 %v1521, %v1520
        %v1540 = vpack.c.bf16 %v1523, %v1522
        %v1541 = vpack.c.bf16 %v1525, %v1524
        %s1542 = scalar_lea.vmem %s3, 12
        %v1543 = vld [vmem:[%s1542] sm:$0xf]
        %v1545 = vsel %vm503, %v1526, 0
        %v1548 = vsel %vm503, %v1527, 0
        %v1551 = vsel %vm503, %v1528, 0
        %v1554 = vsel %vm503, %v1529, 0
        %v1557 = vsel %vm503, %v1530, 0
        %v1560 = vsel %vm503, %v1531, 0
        %v1563 = vsel %vm503, %v1532, 0
        %v1566 = vsel %vm503, %v1533, 0
        %v1569 = vsel %vm503, %v1534, 0
        %v1572 = vsel %vm503, %v1535, 0
        %v1575 = vsel %vm503, %v1536, 0
        %v1578 = vsel %vm503, %v1537, 0
        %v1581 = vsel %vm503, %v1538, 0
        %v1584 = vsel %vm503, %v1539, 0
        %v1587 = vsel %vm503, %v1540, 0
        %v1590 = vsel %vm503, %v1541, 0
        %v1593 = vsel %vm552, %v1543, 0
        %1595 = vmatpush.bf16.msra.mxu0 0
        %1596 = vmatpush.bf16.msra.mxu0 0
        %1597 = vmatpush.bf16.msra.mxu0 0
        %1598 = vmatpush.bf16.msra.mxu0 0
        %1599 = vmatpush.bf16.msra.mxu0 0
        %1600 = vmatpush.bf16.msra.mxu0 0
        %1601 = vmatpush.bf16.msra.mxu0 0
        %1602 = vmatpush.bf16.msra.mxu0 %v1593
        %1603 = vmatmul.bf16.gmra.mxu0 %v1545
        %v1604 = vpop.f32.mrf.mxu0
        %v1605 = vadd.f32 0.0, %v1604
        %v1606 = vpop.f32.mrf.mxu0
        %v1607 = vadd.f32 0.0, %v1606
        %1608 = vmatmul.bf16.gmra.mxu0 %v1548
        %v1609 = vpop.f32.mrf.mxu0
        %v1610 = vadd.f32 0.0, %v1609
        %v1611 = vpop.f32.mrf.mxu0
        %v1612 = vadd.f32 0.0, %v1611
        %1613 = vmatmul.bf16.gmra.mxu0 %v1551
        %v1614 = vpop.f32.mrf.mxu0
        %v1615 = vadd.f32 0.0, %v1614
        %v1616 = vpop.f32.mrf.mxu0
        %v1617 = vadd.f32 0.0, %v1616
        %1618 = vmatmul.bf16.gmra.mxu0 %v1554
        %v1619 = vpop.f32.mrf.mxu0
        %v1620 = vadd.f32 0.0, %v1619
        %v1621 = vpop.f32.mrf.mxu0
        %v1622 = vadd.f32 0.0, %v1621
        %1623 = vmatmul.bf16.gmra.mxu0 %v1557
        %v1624 = vpop.f32.mrf.mxu0
        %v1625 = vadd.f32 0.0, %v1624
        %v1626 = vpop.f32.mrf.mxu0
        %v1627 = vadd.f32 0.0, %v1626
        %1628 = vmatmul.bf16.gmra.mxu0 %v1560
        %v1629 = vpop.f32.mrf.mxu0
        %v1630 = vadd.f32 0.0, %v1629
        %v1631 = vpop.f32.mrf.mxu0
        %v1632 = vadd.f32 0.0, %v1631
        %1633 = vmatmul.bf16.gmra.mxu0 %v1563
        %v1634 = vpop.f32.mrf.mxu0
        %v1635 = vadd.f32 0.0, %v1634
        %v1636 = vpop.f32.mrf.mxu0
        %v1637 = vadd.f32 0.0, %v1636
        %1638 = vmatmul.bf16.gmra.mxu0 %v1566
        %v1639 = vpop.f32.mrf.mxu0
        %v1640 = vadd.f32 0.0, %v1639
        %v1641 = vpop.f32.mrf.mxu0
        %v1642 = vadd.f32 0.0, %v1641
        %1643 = vmatmul.bf16.gmra.mxu0 %v1569
        %v1644 = vpop.f32.mrf.mxu0
        %v1645 = vadd.f32 0.0, %v1644
        %v1646 = vpop.f32.mrf.mxu0
        %v1647 = vadd.f32 0.0, %v1646
        %1648 = vmatmul.bf16.gmra.mxu0 %v1572
        %v1649 = vpop.f32.mrf.mxu0
        %v1650 = vadd.f32 0.0, %v1649
        %v1651 = vpop.f32.mrf.mxu0
        %v1652 = vadd.f32 0.0, %v1651
        %1653 = vmatmul.bf16.gmra.mxu0 %v1575
        %v1654 = vpop.f32.mrf.mxu0
        %v1655 = vadd.f32 0.0, %v1654
        %v1656 = vpop.f32.mrf.mxu0
        %v1657 = vadd.f32 0.0, %v1656
        %1658 = vmatmul.bf16.gmra.mxu0 %v1578
        %v1659 = vpop.f32.mrf.mxu0
        %v1660 = vadd.f32 0.0, %v1659
        %v1661 = vpop.f32.mrf.mxu0
        %v1662 = vadd.f32 0.0, %v1661
        %1663 = vmatmul.bf16.gmra.mxu0 %v1581
        %v1664 = vpop.f32.mrf.mxu0
        %v1665 = vadd.f32 0.0, %v1664
        %v1666 = vpop.f32.mrf.mxu0
        %v1667 = vadd.f32 0.0, %v1666
        %1668 = vmatmul.bf16.gmra.mxu0 %v1584
        %v1669 = vpop.f32.mrf.mxu0
        %v1670 = vadd.f32 0.0, %v1669
        %v1671 = vpop.f32.mrf.mxu0
        %v1672 = vadd.f32 0.0, %v1671
        %1673 = vmatmul.bf16.gmra.mxu0 %v1587
        %v1674 = vpop.f32.mrf.mxu0
        %v1675 = vadd.f32 0.0, %v1674
        %v1676 = vpop.f32.mrf.mxu0
        %v1677 = vadd.f32 0.0, %v1676
        %1678 = vmatmul.bf16.gmra.mxu0 %v1590
        %v1679 = vpop.f32.mrf.mxu0
        %v1680 = vadd.f32 0.0, %v1679
        %v1681 = vpop.f32.mrf.mxu0
        %v1682 = vadd.f32 0.0, %v1681
        %1683 = vdwg.mxu0
        %v1684 = vadd.f32 %v1462, %v1605
        %v1685 = vadd.f32 %v1463, %v1607
        %v1686 = vadd.f32 %v1464, %v1610
        %v1687 = vadd.f32 %v1465, %v1612
        %v1688 = vadd.f32 %v1466, %v1615
        %v1689 = vadd.f32 %v1467, %v1617
        %v1690 = vadd.f32 %v1468, %v1620
        %v1691 = vadd.f32 %v1469, %v1622
        %v1692 = vadd.f32 %v1470, %v1625
        %v1693 = vadd.f32 %v1471, %v1627
        %v1694 = vadd.f32 %v1472, %v1630
        %v1695 = vadd.f32 %v1473, %v1632
        %v1696 = vadd.f32 %v1474, %v1635
        %v1697 = vadd.f32 %v1475, %v1637
        %v1698 = vadd.f32 %v1476, %v1640
        %v1699 = vadd.f32 %v1477, %v1642
        %v1700 = vadd.f32 %v1478, %v1645
        %v1701 = vadd.f32 %v1479, %v1647
        %v1702 = vadd.f32 %v1480, %v1650
        %v1703 = vadd.f32 %v1481, %v1652
        %v1704 = vadd.f32 %v1482, %v1655
        %v1705 = vadd.f32 %v1483, %v1657
        %v1706 = vadd.f32 %v1484, %v1660
        %v1707 = vadd.f32 %v1485, %v1662
        %v1708 = vadd.f32 %v1486, %v1665
        %v1709 = vadd.f32 %v1487, %v1667
        %v1710 = vadd.f32 %v1488, %v1670
        %v1711 = vadd.f32 %v1489, %v1672
        %v1712 = vadd.f32 %v1490, %v1675
        %v1713 = vadd.f32 %v1491, %v1677
        %v1714 = vadd.f32 %v1492, %v1680
        %v1715 = vadd.f32 %v1493, %v1682
        %v1716 = vld [vmem:[%s860 + $0x1] sm:$0xff]
        %v1717 = vld [vmem:[%s860 + $0x9] sm:$0xff]
        %v1718 = vld [vmem:[%s860 + $0x19] sm:$0xff]
        %v1719 = vld [vmem:[%s860 + $0x21] sm:$0xff]
        %v1720 = vld [vmem:[%s860 + $0x31] sm:$0xff]
        %v1721 = vld [vmem:[%s860 + $0x39] sm:$0xff]
        %v1722 = vld [vmem:[%s860 + $0x49] sm:$0xff]
        %v1723 = vld [vmem:[%s860 + $0x51] sm:$0xff]
        %v1724 = vld [vmem:[%s860 + $0x61] sm:$0xff]
        %v1725 = vld [vmem:[%s860 + $0x69] sm:$0xff]
        %v1726 = vld [vmem:[%s860 + $0x79] sm:$0xff]
        %v1727 = vld [vmem:[%s860 + $0x81] sm:$0xff]
        %v1728 = vld [vmem:[%s860 + $0x91] sm:$0xff]
        %v1729 = vld [vmem:[%s860 + $0x99] sm:$0xff]
        %v1730 = vld [vmem:[%s860 + $0xa9] sm:$0xff]
        %v1731 = vld [vmem:[%s860 + $0xb1] sm:$0xff]
        %v1732 = vld [vmem:[%s860 + $0xc1] sm:$0xff]
        %v1733 = vld [vmem:[%s860 + $0xc9] sm:$0xff]
        %v1734 = vld [vmem:[%s860 + $0xd9] sm:$0xff]
        %v1735 = vld [vmem:[%s860 + $0xe1] sm:$0xff]
        %v1736 = vld [vmem:[%s860 + $0xf1] sm:$0xff]
        %v1737 = vld [vmem:[%s860 + $0xf9] sm:$0xff]
        %v1738 = vld [vmem:[%s860 + $0x109] sm:$0xff]
        %v1739 = vld [vmem:[%s860 + $0x111] sm:$0xff]
        %v1740 = vld [vmem:[%s860 + $0x121] sm:$0xff]
        %v1741 = vld [vmem:[%s860 + $0x129] sm:$0xff]
        %v1742 = vld [vmem:[%s860 + $0x139] sm:$0xff]
        %v1743 = vld [vmem:[%s860 + $0x141] sm:$0xff]
        %v1744 = vld [vmem:[%s860 + $0x151] sm:$0xff]
        %v1745 = vld [vmem:[%s860 + $0x159] sm:$0xff]
        %v1746 = vld [vmem:[%s860 + $0x169] sm:$0xff]
        %v1747 = vld [vmem:[%s860 + $0x171] sm:$0xff]
        %v1748 = vpack.c.bf16 %v1717, %v1716
        %v1749 = vpack.c.bf16 %v1719, %v1718
        %v1750 = vpack.c.bf16 %v1721, %v1720
        %v1751 = vpack.c.bf16 %v1723, %v1722
        %v1752 = vpack.c.bf16 %v1725, %v1724
        %v1753 = vpack.c.bf16 %v1727, %v1726
        %v1754 = vpack.c.bf16 %v1729, %v1728
        %v1755 = vpack.c.bf16 %v1731, %v1730
        %v1756 = vpack.c.bf16 %v1733, %v1732
        %v1757 = vpack.c.bf16 %v1735, %v1734
        %v1758 = vpack.c.bf16 %v1737, %v1736
        %v1759 = vpack.c.bf16 %v1739, %v1738
        %v1760 = vpack.c.bf16 %v1741, %v1740
        %v1761 = vpack.c.bf16 %v1743, %v1742
        %v1762 = vpack.c.bf16 %v1745, %v1744
        %v1763 = vpack.c.bf16 %v1747, %v1746
        %s1764 = scalar_lea.vmem %s3, 16
        %v1765 = vld [vmem:[%s1764] sm:$0xf]
        %v1767 = vsel %vm503, %v1748, 0
        %v1770 = vsel %vm503, %v1749, 0
        %v1773 = vsel %vm503, %v1750, 0
        %v1776 = vsel %vm503, %v1751, 0
        %v1779 = vsel %vm503, %v1752, 0
        %v1782 = vsel %vm503, %v1753, 0
        %v1785 = vsel %vm503, %v1754, 0
        %v1788 = vsel %vm503, %v1755, 0
        %v1791 = vsel %vm503, %v1756, 0
        %v1794 = vsel %vm503, %v1757, 0
        %v1797 = vsel %vm503, %v1758, 0
        %v1800 = vsel %vm503, %v1759, 0
        %v1803 = vsel %vm503, %v1760, 0
        %v1806 = vsel %vm503, %v1761, 0
        %v1809 = vsel %vm503, %v1762, 0
        %v1812 = vsel %vm503, %v1763, 0
        %v1815 = vsel %vm552, %v1765, 0
        %1817 = vmatpush.bf16.msra.mxu0 0
        %1818 = vmatpush.bf16.msra.mxu0 0
        %1819 = vmatpush.bf16.msra.mxu0 0
        %1820 = vmatpush.bf16.msra.mxu0 0
        %1821 = vmatpush.bf16.msra.mxu0 0
        %1822 = vmatpush.bf16.msra.mxu0 0
        %1823 = vmatpush.bf16.msra.mxu0 0
        %1824 = vmatpush.bf16.msra.mxu0 %v1815
        %1825 = vmatmul.bf16.gmra.mxu0 %v1767
        %v1826 = vpop.f32.mrf.mxu0
        %v1827 = vadd.f32 0.0, %v1826
        %v1828 = vpop.f32.mrf.mxu0
        %v1829 = vadd.f32 0.0, %v1828
        %1830 = vmatmul.bf16.gmra.mxu0 %v1770
        %v1831 = vpop.f32.mrf.mxu0
        %v1832 = vadd.f32 0.0, %v1831
        %v1833 = vpop.f32.mrf.mxu0
        %v1834 = vadd.f32 0.0, %v1833
        %1835 = vmatmul.bf16.gmra.mxu0 %v1773
        %v1836 = vpop.f32.mrf.mxu0
        %v1837 = vadd.f32 0.0, %v1836
        %v1838 = vpop.f32.mrf.mxu0
        %v1839 = vadd.f32 0.0, %v1838
        %1840 = vmatmul.bf16.gmra.mxu0 %v1776
        %v1841 = vpop.f32.mrf.mxu0
        %v1842 = vadd.f32 0.0, %v1841
        %v1843 = vpop.f32.mrf.mxu0
        %v1844 = vadd.f32 0.0, %v1843
        %1845 = vmatmul.bf16.gmra.mxu0 %v1779
        %v1846 = vpop.f32.mrf.mxu0
        %v1847 = vadd.f32 0.0, %v1846
        %v1848 = vpop.f32.mrf.mxu0
        %v1849 = vadd.f32 0.0, %v1848
        %1850 = vmatmul.bf16.gmra.mxu0 %v1782
        %v1851 = vpop.f32.mrf.mxu0
        %v1852 = vadd.f32 0.0, %v1851
        %v1853 = vpop.f32.mrf.mxu0
        %v1854 = vadd.f32 0.0, %v1853
        %1855 = vmatmul.bf16.gmra.mxu0 %v1785
        %v1856 = vpop.f32.mrf.mxu0
        %v1857 = vadd.f32 0.0, %v1856
        %v1858 = vpop.f32.mrf.mxu0
        %v1859 = vadd.f32 0.0, %v1858
        %1860 = vmatmul.bf16.gmra.mxu0 %v1788
        %v1861 = vpop.f32.mrf.mxu0
        %v1862 = vadd.f32 0.0, %v1861
        %v1863 = vpop.f32.mrf.mxu0
        %v1864 = vadd.f32 0.0, %v1863
        %1865 = vmatmul.bf16.gmra.mxu0 %v1791
        %v1866 = vpop.f32.mrf.mxu0
        %v1867 = vadd.f32 0.0, %v1866
        %v1868 = vpop.f32.mrf.mxu0
        %v1869 = vadd.f32 0.0, %v1868
        %1870 = vmatmul.bf16.gmra.mxu0 %v1794
        %v1871 = vpop.f32.mrf.mxu0
        %v1872 = vadd.f32 0.0, %v1871
        %v1873 = vpop.f32.mrf.mxu0
        %v1874 = vadd.f32 0.0, %v1873
        %1875 = vmatmul.bf16.gmra.mxu0 %v1797
        %v1876 = vpop.f32.mrf.mxu0
        %v1877 = vadd.f32 0.0, %v1876
        %v1878 = vpop.f32.mrf.mxu0
        %v1879 = vadd.f32 0.0, %v1878
        %1880 = vmatmul.bf16.gmra.mxu0 %v1800
        %v1881 = vpop.f32.mrf.mxu0
        %v1882 = vadd.f32 0.0, %v1881
        %v1883 = vpop.f32.mrf.mxu0
        %v1884 = vadd.f32 0.0, %v1883
        %1885 = vmatmul.bf16.gmra.mxu0 %v1803
        %v1886 = vpop.f32.mrf.mxu0
        %v1887 = vadd.f32 0.0, %v1886
        %v1888 = vpop.f32.mrf.mxu0
        %v1889 = vadd.f32 0.0, %v1888
        %1890 = vmatmul.bf16.gmra.mxu0 %v1806
        %v1891 = vpop.f32.mrf.mxu0
        %v1892 = vadd.f32 0.0, %v1891
        %v1893 = vpop.f32.mrf.mxu0
        %v1894 = vadd.f32 0.0, %v1893
        %1895 = vmatmul.bf16.gmra.mxu0 %v1809
        %v1896 = vpop.f32.mrf.mxu0
        %v1897 = vadd.f32 0.0, %v1896
        %v1898 = vpop.f32.mrf.mxu0
        %v1899 = vadd.f32 0.0, %v1898
        %1900 = vmatmul.bf16.gmra.mxu0 %v1812
        %v1901 = vpop.f32.mrf.mxu0
        %v1902 = vadd.f32 0.0, %v1901
        %v1903 = vpop.f32.mrf.mxu0
        %v1904 = vadd.f32 0.0, %v1903
        %1905 = vdwg.mxu0
        %v1906 = vadd.f32 %v1684, %v1827
        %v1907 = vadd.f32 %v1685, %v1829
        %v1908 = vadd.f32 %v1686, %v1832
        %v1909 = vadd.f32 %v1687, %v1834
        %v1910 = vadd.f32 %v1688, %v1837
        %v1911 = vadd.f32 %v1689, %v1839
        %v1912 = vadd.f32 %v1690, %v1842
        %v1913 = vadd.f32 %v1691, %v1844
        %v1914 = vadd.f32 %v1692, %v1847
        %v1915 = vadd.f32 %v1693, %v1849
        %v1916 = vadd.f32 %v1694, %v1852
        %v1917 = vadd.f32 %v1695, %v1854
        %v1918 = vadd.f32 %v1696, %v1857
        %v1919 = vadd.f32 %v1697, %v1859
        %v1920 = vadd.f32 %v1698, %v1862
        %v1921 = vadd.f32 %v1699, %v1864
        %v1922 = vadd.f32 %v1700, %v1867
        %v1923 = vadd.f32 %v1701, %v1869
        %v1924 = vadd.f32 %v1702, %v1872
        %v1925 = vadd.f32 %v1703, %v1874
        %v1926 = vadd.f32 %v1704, %v1877
        %v1927 = vadd.f32 %v1705, %v1879
        %v1928 = vadd.f32 %v1706, %v1882
        %v1929 = vadd.f32 %v1707, %v1884
        %v1930 = vadd.f32 %v1708, %v1887
        %v1931 = vadd.f32 %v1709, %v1889
        %v1932 = vadd.f32 %v1710, %v1892
        %v1933 = vadd.f32 %v1711, %v1894
        %v1934 = vadd.f32 %v1712, %v1897
        %v1935 = vadd.f32 %v1713, %v1899
        %v1936 = vadd.f32 %v1714, %v1902
        %v1937 = vadd.f32 %v1715, %v1904
        %v1938 = vld [vmem:[%s860 + $0x2] sm:$0xff]
        %v1939 = vld [vmem:[%s860 + $0xa] sm:$0xff]
        %v1940 = vld [vmem:[%s860 + $0x1a] sm:$0xff]
        %v1941 = vld [vmem:[%s860 + $0x22] sm:$0xff]
        %v1942 = vld [vmem:[%s860 + $0x32] sm:$0xff]
        %v1943 = vld [vmem:[%s860 + $0x3a] sm:$0xff]
        %v1944 = vld [vmem:[%s860 + $0x4a] sm:$0xff]
        %v1945 = vld [vmem:[%s860 + $0x52] sm:$0xff]
        %v1946 = vld [vmem:[%s860 + $0x62] sm:$0xff]
        %v1947 = vld [vmem:[%s860 + $0x6a] sm:$0xff]
        %v1948 = vld [vmem:[%s860 + $0x7a] sm:$0xff]
        %v1949 = vld [vmem:[%s860 + $0x82] sm:$0xff]
        %v1950 = vld [vmem:[%s860 + $0x92] sm:$0xff]
        %v1951 = vld [vmem:[%s860 + $0x9a] sm:$0xff]
        %v1952 = vld [vmem:[%s860 + $0xaa] sm:$0xff]
        %v1953 = vld [vmem:[%s860 + $0xb2] sm:$0xff]
        %v1954 = vld [vmem:[%s860 + $0xc2] sm:$0xff]
        %v1955 = vld [vmem:[%s860 + $0xca] sm:$0xff]
        %v1956 = vld [vmem:[%s860 + $0xda] sm:$0xff]
        %v1957 = vld [vmem:[%s860 + $0xe2] sm:$0xff]
        %v1958 = vld [vmem:[%s860 + $0xf2] sm:$0xff]
        %v1959 = vld [vmem:[%s860 + $0xfa] sm:$0xff]
        %v1960 = vld [vmem:[%s860 + $0x10a] sm:$0xff]
        %v1961 = vld [vmem:[%s860 + $0x112] sm:$0xff]
        %v1962 = vld [vmem:[%s860 + $0x122] sm:$0xff]
        %v1963 = vld [vmem:[%s860 + $0x12a] sm:$0xff]
        %v1964 = vld [vmem:[%s860 + $0x13a] sm:$0xff]
        %v1965 = vld [vmem:[%s860 + $0x142] sm:$0xff]
        %v1966 = vld [vmem:[%s860 + $0x152] sm:$0xff]
        %v1967 = vld [vmem:[%s860 + $0x15a] sm:$0xff]
        %v1968 = vld [vmem:[%s860 + $0x16a] sm:$0xff]
        %v1969 = vld [vmem:[%s860 + $0x172] sm:$0xff]
        %v1970 = vpack.c.bf16 %v1939, %v1938
        %v1971 = vpack.c.bf16 %v1941, %v1940
        %v1972 = vpack.c.bf16 %v1943, %v1942
        %v1973 = vpack.c.bf16 %v1945, %v1944
        %v1974 = vpack.c.bf16 %v1947, %v1946
        %v1975 = vpack.c.bf16 %v1949, %v1948
        %v1976 = vpack.c.bf16 %v1951, %v1950
        %v1977 = vpack.c.bf16 %v1953, %v1952
        %v1978 = vpack.c.bf16 %v1955, %v1954
        %v1979 = vpack.c.bf16 %v1957, %v1956
        %v1980 = vpack.c.bf16 %v1959, %v1958
        %v1981 = vpack.c.bf16 %v1961, %v1960
        %v1982 = vpack.c.bf16 %v1963, %v1962
        %v1983 = vpack.c.bf16 %v1965, %v1964
        %v1984 = vpack.c.bf16 %v1967, %v1966
        %v1985 = vpack.c.bf16 %v1969, %v1968
        %s1986 = scalar_lea.vmem %s3, 20
        %v1987 = vld [vmem:[%s1986] sm:$0xf]
        %v1989 = vsel %vm503, %v1970, 0
        %v1992 = vsel %vm503, %v1971, 0
        %v1995 = vsel %vm503, %v1972, 0
        %v1998 = vsel %vm503, %v1973, 0
        %v2001 = vsel %vm503, %v1974, 0
        %v2004 = vsel %vm503, %v1975, 0
        %v2007 = vsel %vm503, %v1976, 0
        %v2010 = vsel %vm503, %v1977, 0
        %v2013 = vsel %vm503, %v1978, 0
        %v2016 = vsel %vm503, %v1979, 0
        %v2019 = vsel %vm503, %v1980, 0
        %v2022 = vsel %vm503, %v1981, 0
        %v2025 = vsel %vm503, %v1982, 0
        %v2028 = vsel %vm503, %v1983, 0
        %v2031 = vsel %vm503, %v1984, 0
        %v2034 = vsel %vm503, %v1985, 0
        %v2037 = vsel %vm552, %v1987, 0
        %2039 = vmatpush.bf16.msra.mxu0 0
        %2040 = vmatpush.bf16.msra.mxu0 0
        %2041 = vmatpush.bf16.msra.mxu0 0
        %2042 = vmatpush.bf16.msra.mxu0 0
        %2043 = vmatpush.bf16.msra.mxu0 0
        %2044 = vmatpush.bf16.msra.mxu0 0
        %2045 = vmatpush.bf16.msra.mxu0 0
        %2046 = vmatpush.bf16.msra.mxu0 %v2037
        %2047 = vmatmul.bf16.gmra.mxu0 %v1989
        %v2048 = vpop.f32.mrf.mxu0
        %v2049 = vadd.f32 0.0, %v2048
        %v2050 = vpop.f32.mrf.mxu0
        %v2051 = vadd.f32 0.0, %v2050
        %2052 = vmatmul.bf16.gmra.mxu0 %v1992
        %v2053 = vpop.f32.mrf.mxu0
        %v2054 = vadd.f32 0.0, %v2053
        %v2055 = vpop.f32.mrf.mxu0
        %v2056 = vadd.f32 0.0, %v2055
        %2057 = vmatmul.bf16.gmra.mxu0 %v1995
        %v2058 = vpop.f32.mrf.mxu0
        %v2059 = vadd.f32 0.0, %v2058
        %v2060 = vpop.f32.mrf.mxu0
        %v2061 = vadd.f32 0.0, %v2060
        %2062 = vmatmul.bf16.gmra.mxu0 %v1998
        %v2063 = vpop.f32.mrf.mxu0
        %v2064 = vadd.f32 0.0, %v2063
        %v2065 = vpop.f32.mrf.mxu0
        %v2066 = vadd.f32 0.0, %v2065
        %2067 = vmatmul.bf16.gmra.mxu0 %v2001
        %v2068 = vpop.f32.mrf.mxu0
        %v2069 = vadd.f32 0.0, %v2068
        %v2070 = vpop.f32.mrf.mxu0
        %v2071 = vadd.f32 0.0, %v2070
        %2072 = vmatmul.bf16.gmra.mxu0 %v2004
        %v2073 = vpop.f32.mrf.mxu0
        %v2074 = vadd.f32 0.0, %v2073
        %v2075 = vpop.f32.mrf.mxu0
        %v2076 = vadd.f32 0.0, %v2075
        %2077 = vmatmul.bf16.gmra.mxu0 %v2007
        %v2078 = vpop.f32.mrf.mxu0
        %v2079 = vadd.f32 0.0, %v2078
        %v2080 = vpop.f32.mrf.mxu0
        %v2081 = vadd.f32 0.0, %v2080
        %2082 = vmatmul.bf16.gmra.mxu0 %v2010
        %v2083 = vpop.f32.mrf.mxu0
        %v2084 = vadd.f32 0.0, %v2083
        %v2085 = vpop.f32.mrf.mxu0
        %v2086 = vadd.f32 0.0, %v2085
        %2087 = vmatmul.bf16.gmra.mxu0 %v2013
        %v2088 = vpop.f32.mrf.mxu0
        %v2089 = vadd.f32 0.0, %v2088
        %v2090 = vpop.f32.mrf.mxu0
        %v2091 = vadd.f32 0.0, %v2090
        %2092 = vmatmul.bf16.gmra.mxu0 %v2016
        %v2093 = vpop.f32.mrf.mxu0
        %v2094 = vadd.f32 0.0, %v2093
        %v2095 = vpop.f32.mrf.mxu0
        %v2096 = vadd.f32 0.0, %v2095
        %2097 = vmatmul.bf16.gmra.mxu0 %v2019
        %v2098 = vpop.f32.mrf.mxu0
        %v2099 = vadd.f32 0.0, %v2098
        %v2100 = vpop.f32.mrf.mxu0
        %v2101 = vadd.f32 0.0, %v2100
        %2102 = vmatmul.bf16.gmra.mxu0 %v2022
        %v2103 = vpop.f32.mrf.mxu0
        %v2104 = vadd.f32 0.0, %v2103
        %v2105 = vpop.f32.mrf.mxu0
        %v2106 = vadd.f32 0.0, %v2105
        %2107 = vmatmul.bf16.gmra.mxu0 %v2025
        %v2108 = vpop.f32.mrf.mxu0
        %v2109 = vadd.f32 0.0, %v2108
        %v2110 = vpop.f32.mrf.mxu0
        %v2111 = vadd.f32 0.0, %v2110
        %2112 = vmatmul.bf16.gmra.mxu0 %v2028
        %v2113 = vpop.f32.mrf.mxu0
        %v2114 = vadd.f32 0.0, %v2113
        %v2115 = vpop.f32.mrf.mxu0
        %v2116 = vadd.f32 0.0, %v2115
        %2117 = vmatmul.bf16.gmra.mxu0 %v2031
        %v2118 = vpop.f32.mrf.mxu0
        %v2119 = vadd.f32 0.0, %v2118
        %v2120 = vpop.f32.mrf.mxu0
        %v2121 = vadd.f32 0.0, %v2120
        %2122 = vmatmul.bf16.gmra.mxu0 %v2034
        %v2123 = vpop.f32.mrf.mxu0
        %v2124 = vadd.f32 0.0, %v2123
        %v2125 = vpop.f32.mrf.mxu0
        %v2126 = vadd.f32 0.0, %v2125
        %2127 = vdwg.mxu0
        %v2128 = vadd.f32 %v1906, %v2049
        %v2129 = vadd.f32 %v1907, %v2051
        %v2130 = vadd.f32 %v1908, %v2054
        %v2131 = vadd.f32 %v1909, %v2056
        %v2132 = vadd.f32 %v1910, %v2059
        %v2133 = vadd.f32 %v1911, %v2061
        %v2134 = vadd.f32 %v1912, %v2064
        %v2135 = vadd.f32 %v1913, %v2066
        %v2136 = vadd.f32 %v1914, %v2069
        %v2137 = vadd.f32 %v1915, %v2071
        %v2138 = vadd.f32 %v1916, %v2074
        %v2139 = vadd.f32 %v1917, %v2076
        %v2140 = vadd.f32 %v1918, %v2079
        %v2141 = vadd.f32 %v1919, %v2081
        %v2142 = vadd.f32 %v1920, %v2084
        %v2143 = vadd.f32 %v1921, %v2086
        %v2144 = vadd.f32 %v1922, %v2089
        %v2145 = vadd.f32 %v1923, %v2091
        %v2146 = vadd.f32 %v1924, %v2094
        %v2147 = vadd.f32 %v1925, %v2096
        %v2148 = vadd.f32 %v1926, %v2099
        %v2149 = vadd.f32 %v1927, %v2101
        %v2150 = vadd.f32 %v1928, %v2104
        %v2151 = vadd.f32 %v1929, %v2106
        %v2152 = vadd.f32 %v1930, %v2109
        %v2153 = vadd.f32 %v1931, %v2111
        %v2154 = vadd.f32 %v1932, %v2114
        %v2155 = vadd.f32 %v1933, %v2116
        %v2156 = vadd.f32 %v1934, %v2119
        %v2157 = vadd.f32 %v1935, %v2121
        %v2158 = vadd.f32 %v1936, %v2124
        %v2159 = vadd.f32 %v1937, %v2126
        %s2160 = scalar_lea.vmem [#allocation2], 48
        %v2161 = vld [vmem:[%s2160] sm:$0xff]
        %v2162 = vld [vmem:[%s2160 + $0x8] sm:$0xff]
        %v2163 = vld [vmem:[%s2160 + $0x18] sm:$0xff]
        %v2164 = vld [vmem:[%s2160 + $0x20] sm:$0xff]
        %v2165 = vld [vmem:[%s2160 + $0x30] sm:$0xff]
        %v2166 = vld [vmem:[%s2160 + $0x38] sm:$0xff]
        %v2167 = vld [vmem:[%s2160 + $0x48] sm:$0xff]
        %v2168 = vld [vmem:[%s2160 + $0x50] sm:$0xff]
        %v2169 = vld [vmem:[%s2160 + $0x60] sm:$0xff]
        %v2170 = vld [vmem:[%s2160 + $0x68] sm:$0xff]
        %v2171 = vld [vmem:[%s2160 + $0x78] sm:$0xff]
        %v2172 = vld [vmem:[%s2160 + $0x80] sm:$0xff]
        %v2173 = vld [vmem:[%s2160 + $0x90] sm:$0xff]
        %v2174 = vld [vmem:[%s2160 + $0x98] sm:$0xff]
        %v2175 = vld [vmem:[%s2160 + $0xa8] sm:$0xff]
        %v2176 = vld [vmem:[%s2160 + $0xb0] sm:$0xff]
        %v2177 = vld [vmem:[%s2160 + $0xc0] sm:$0xff]
        %v2178 = vld [vmem:[%s2160 + $0xc8] sm:$0xff]
        %v2179 = vld [vmem:[%s2160 + $0xd8] sm:$0xff]
        %v2180 = vld [vmem:[%s2160 + $0xe0] sm:$0xff]
        %v2181 = vld [vmem:[%s2160 + $0xf0] sm:$0xff]
        %v2182 = vld [vmem:[%s2160 + $0xf8] sm:$0xff]
        %v2183 = vld [vmem:[%s2160 + $0x108] sm:$0xff]
        %v2184 = vld [vmem:[%s2160 + $0x110] sm:$0xff]
        %v2185 = vld [vmem:[%s2160 + $0x120] sm:$0xff]
        %v2186 = vld [vmem:[%s2160 + $0x128] sm:$0xff]
        %v2187 = vld [vmem:[%s2160 + $0x138] sm:$0xff]
        %v2188 = vld [vmem:[%s2160 + $0x140] sm:$0xff]
        %v2189 = vld [vmem:[%s2160 + $0x150] sm:$0xff]
        %v2190 = vld [vmem:[%s2160 + $0x158] sm:$0xff]
        %v2191 = vld [vmem:[%s2160 + $0x168] sm:$0xff]
        %v2192 = vld [vmem:[%s2160 + $0x170] sm:$0xff]
        %v2193 = vpack.c.bf16 %v2162, %v2161
        %v2194 = vpack.c.bf16 %v2164, %v2163
        %v2195 = vpack.c.bf16 %v2166, %v2165
        %v2196 = vpack.c.bf16 %v2168, %v2167
        %v2197 = vpack.c.bf16 %v2170, %v2169
        %v2198 = vpack.c.bf16 %v2172, %v2171
        %v2199 = vpack.c.bf16 %v2174, %v2173
        %v2200 = vpack.c.bf16 %v2176, %v2175
        %v2201 = vpack.c.bf16 %v2178, %v2177
        %v2202 = vpack.c.bf16 %v2180, %v2179
        %v2203 = vpack.c.bf16 %v2182, %v2181
        %v2204 = vpack.c.bf16 %v2184, %v2183
        %v2205 = vpack.c.bf16 %v2186, %v2185
        %v2206 = vpack.c.bf16 %v2188, %v2187
        %v2207 = vpack.c.bf16 %v2190, %v2189
        %v2208 = vpack.c.bf16 %v2192, %v2191
        %s2209 = scalar_lea.vmem %s3, 24
        %v2210 = vld [vmem:[%s2209] sm:$0xf]
        %v2212 = vsel %vm503, %v2193, 0
        %v2215 = vsel %vm503, %v2194, 0
        %v2218 = vsel %vm503, %v2195, 0
        %v2221 = vsel %vm503, %v2196, 0
        %v2224 = vsel %vm503, %v2197, 0
        %v2227 = vsel %vm503, %v2198, 0
        %v2230 = vsel %vm503, %v2199, 0
        %v2233 = vsel %vm503, %v2200, 0
        %v2236 = vsel %vm503, %v2201, 0
        %v2239 = vsel %vm503, %v2202, 0
        %v2242 = vsel %vm503, %v2203, 0
        %v2245 = vsel %vm503, %v2204, 0
        %v2248 = vsel %vm503, %v2205, 0
        %v2251 = vsel %vm503, %v2206, 0
        %v2254 = vsel %vm503, %v2207, 0
        %v2257 = vsel %vm503, %v2208, 0
        %v2260 = vsel %vm552, %v2210, 0
        %2262 = vmatpush.bf16.msra.mxu0 0
        %2263 = vmatpush.bf16.msra.mxu0 0
        %2264 = vmatpush.bf16.msra.mxu0 0
        %2265 = vmatpush.bf16.msra.mxu0 0
        %2266 = vmatpush.bf16.msra.mxu0 0
        %2267 = vmatpush.bf16.msra.mxu0 0
        %2268 = vmatpush.bf16.msra.mxu0 0
        %2269 = vmatpush.bf16.msra.mxu0 %v2260
        %2270 = vmatmul.bf16.gmra.mxu0 %v2212
        %v2271 = vpop.f32.mrf.mxu0
        %v2272 = vadd.f32 0.0, %v2271
        %v2273 = vpop.f32.mrf.mxu0
        %v2274 = vadd.f32 0.0, %v2273
        %2275 = vmatmul.bf16.gmra.mxu0 %v2215
        %v2276 = vpop.f32.mrf.mxu0
        %v2277 = vadd.f32 0.0, %v2276
        %v2278 = vpop.f32.mrf.mxu0
        %v2279 = vadd.f32 0.0, %v2278
        %2280 = vmatmul.bf16.gmra.mxu0 %v2218
        %v2281 = vpop.f32.mrf.mxu0
        %v2282 = vadd.f32 0.0, %v2281
        %v2283 = vpop.f32.mrf.mxu0
        %v2284 = vadd.f32 0.0, %v2283
        %2285 = vmatmul.bf16.gmra.mxu0 %v2221
        %v2286 = vpop.f32.mrf.mxu0
        %v2287 = vadd.f32 0.0, %v2286
        %v2288 = vpop.f32.mrf.mxu0
        %v2289 = vadd.f32 0.0, %v2288
        %2290 = vmatmul.bf16.gmra.mxu0 %v2224
        %v2291 = vpop.f32.mrf.mxu0
        %v2292 = vadd.f32 0.0, %v2291
        %v2293 = vpop.f32.mrf.mxu0
        %v2294 = vadd.f32 0.0, %v2293
        %2295 = vmatmul.bf16.gmra.mxu0 %v2227
        %v2296 = vpop.f32.mrf.mxu0
        %v2297 = vadd.f32 0.0, %v2296
        %v2298 = vpop.f32.mrf.mxu0
        %v2299 = vadd.f32 0.0, %v2298
        %2300 = vmatmul.bf16.gmra.mxu0 %v2230
        %v2301 = vpop.f32.mrf.mxu0
        %v2302 = vadd.f32 0.0, %v2301
        %v2303 = vpop.f32.mrf.mxu0
        %v2304 = vadd.f32 0.0, %v2303
        %2305 = vmatmul.bf16.gmra.mxu0 %v2233
        %v2306 = vpop.f32.mrf.mxu0
        %v2307 = vadd.f32 0.0, %v2306
        %v2308 = vpop.f32.mrf.mxu0
        %v2309 = vadd.f32 0.0, %v2308
        %2310 = vmatmul.bf16.gmra.mxu0 %v2236
        %v2311 = vpop.f32.mrf.mxu0
        %v2312 = vadd.f32 0.0, %v2311
        %v2313 = vpop.f32.mrf.mxu0
        %v2314 = vadd.f32 0.0, %v2313
        %2315 = vmatmul.bf16.gmra.mxu0 %v2239
        %v2316 = vpop.f32.mrf.mxu0
        %v2317 = vadd.f32 0.0, %v2316
        %v2318 = vpop.f32.mrf.mxu0
        %v2319 = vadd.f32 0.0, %v2318
        %2320 = vmatmul.bf16.gmra.mxu0 %v2242
        %v2321 = vpop.f32.mrf.mxu0
        %v2322 = vadd.f32 0.0, %v2321
        %v2323 = vpop.f32.mrf.mxu0
        %v2324 = vadd.f32 0.0, %v2323
        %2325 = vmatmul.bf16.gmra.mxu0 %v2245
        %v2326 = vpop.f32.mrf.mxu0
        %v2327 = vadd.f32 0.0, %v2326
        %v2328 = vpop.f32.mrf.mxu0
        %v2329 = vadd.f32 0.0, %v2328
        %2330 = vmatmul.bf16.gmra.mxu0 %v2248
        %v2331 = vpop.f32.mrf.mxu0
        %v2332 = vadd.f32 0.0, %v2331
        %v2333 = vpop.f32.mrf.mxu0
        %v2334 = vadd.f32 0.0, %v2333
        %2335 = vmatmul.bf16.gmra.mxu0 %v2251
        %v2336 = vpop.f32.mrf.mxu0
        %v2337 = vadd.f32 0.0, %v2336
        %v2338 = vpop.f32.mrf.mxu0
        %v2339 = vadd.f32 0.0, %v2338
        %2340 = vmatmul.bf16.gmra.mxu0 %v2254
        %v2341 = vpop.f32.mrf.mxu0
        %v2342 = vadd.f32 0.0, %v2341
        %v2343 = vpop.f32.mrf.mxu0
        %v2344 = vadd.f32 0.0, %v2343
        %2345 = vmatmul.bf16.gmra.mxu0 %v2257
        %v2346 = vpop.f32.mrf.mxu0
        %v2347 = vadd.f32 0.0, %v2346
        %v2348 = vpop.f32.mrf.mxu0
        %v2349 = vadd.f32 0.0, %v2348
        %2350 = vdwg.mxu0
        %v2351 = vadd.f32 %v2128, %v2272
        %v2352 = vadd.f32 %v2129, %v2274
        %v2353 = vadd.f32 %v2130, %v2277
        %v2354 = vadd.f32 %v2131, %v2279
        %v2355 = vadd.f32 %v2132, %v2282
        %v2356 = vadd.f32 %v2133, %v2284
        %v2357 = vadd.f32 %v2134, %v2287
        %v2358 = vadd.f32 %v2135, %v2289
        %v2359 = vadd.f32 %v2136, %v2292
        %v2360 = vadd.f32 %v2137, %v2294
        %v2361 = vadd.f32 %v2138, %v2297
        %v2362 = vadd.f32 %v2139, %v2299
        %v2363 = vadd.f32 %v2140, %v2302
        %v2364 = vadd.f32 %v2141, %v2304
        %v2365 = vadd.f32 %v2142, %v2307
        %v2366 = vadd.f32 %v2143, %v2309
        %v2367 = vadd.f32 %v2144, %v2312
        %v2368 = vadd.f32 %v2145, %v2314
        %v2369 = vadd.f32 %v2146, %v2317
        %v2370 = vadd.f32 %v2147, %v2319
        %v2371 = vadd.f32 %v2148, %v2322
        %v2372 = vadd.f32 %v2149, %v2324
        %v2373 = vadd.f32 %v2150, %v2327
        %v2374 = vadd.f32 %v2151, %v2329
        %v2375 = vadd.f32 %v2152, %v2332
        %v2376 = vadd.f32 %v2153, %v2334
        %v2377 = vadd.f32 %v2154, %v2337
        %v2378 = vadd.f32 %v2155, %v2339
        %v2379 = vadd.f32 %v2156, %v2342
        %v2380 = vadd.f32 %v2157, %v2344
        %v2381 = vadd.f32 %v2158, %v2347
        %v2382 = vadd.f32 %v2159, %v2349
        %v2383 = vld [vmem:[%s2160 + $0x1] sm:$0xff]
        %v2384 = vld [vmem:[%s2160 + $0x9] sm:$0xff]
        %v2385 = vld [vmem:[%s2160 + $0x19] sm:$0xff]
        %v2386 = vld [vmem:[%s2160 + $0x21] sm:$0xff]
        %v2387 = vld [vmem:[%s2160 + $0x31] sm:$0xff]
        %v2388 = vld [vmem:[%s2160 + $0x39] sm:$0xff]
        %v2389 = vld [vmem:[%s2160 + $0x49] sm:$0xff]
        %v2390 = vld [vmem:[%s2160 + $0x51] sm:$0xff]
        %v2391 = vld [vmem:[%s2160 + $0x61] sm:$0xff]
        %v2392 = vld [vmem:[%s2160 + $0x69] sm:$0xff]
        %v2393 = vld [vmem:[%s2160 + $0x79] sm:$0xff]
        %v2394 = vld [vmem:[%s2160 + $0x81] sm:$0xff]
        %v2395 = vld [vmem:[%s2160 + $0x91] sm:$0xff]
        %v2396 = vld [vmem:[%s2160 + $0x99] sm:$0xff]
        %v2397 = vld [vmem:[%s2160 + $0xa9] sm:$0xff]
        %v2398 = vld [vmem:[%s2160 + $0xb1] sm:$0xff]
        %v2399 = vld [vmem:[%s2160 + $0xc1] sm:$0xff]
        %v2400 = vld [vmem:[%s2160 + $0xc9] sm:$0xff]
        %v2401 = vld [vmem:[%s2160 + $0xd9] sm:$0xff]
        %v2402 = vld [vmem:[%s2160 + $0xe1] sm:$0xff]
        %v2403 = vld [vmem:[%s2160 + $0xf1] sm:$0xff]
        %v2404 = vld [vmem:[%s2160 + $0xf9] sm:$0xff]
        %v2405 = vld [vmem:[%s2160 + $0x109] sm:$0xff]
        %v2406 = vld [vmem:[%s2160 + $0x111] sm:$0xff]
        %v2407 = vld [vmem:[%s2160 + $0x121] sm:$0xff]
        %v2408 = vld [vmem:[%s2160 + $0x129] sm:$0xff]
        %v2409 = vld [vmem:[%s2160 + $0x139] sm:$0xff]
        %v2410 = vld [vmem:[%s2160 + $0x141] sm:$0xff]
        %v2411 = vld [vmem:[%s2160 + $0x151] sm:$0xff]
        %v2412 = vld [vmem:[%s2160 + $0x159] sm:$0xff]
        %v2413 = vld [vmem:[%s2160 + $0x169] sm:$0xff]
        %v2414 = vld [vmem:[%s2160 + $0x171] sm:$0xff]
        %v2415 = vpack.c.bf16 %v2384, %v2383
        %v2416 = vpack.c.bf16 %v2386, %v2385
        %v2417 = vpack.c.bf16 %v2388, %v2387
        %v2418 = vpack.c.bf16 %v2390, %v2389
        %v2419 = vpack.c.bf16 %v2392, %v2391
        %v2420 = vpack.c.bf16 %v2394, %v2393
        %v2421 = vpack.c.bf16 %v2396, %v2395
        %v2422 = vpack.c.bf16 %v2398, %v2397
        %v2423 = vpack.c.bf16 %v2400, %v2399
        %v2424 = vpack.c.bf16 %v2402, %v2401
        %v2425 = vpack.c.bf16 %v2404, %v2403
        %v2426 = vpack.c.bf16 %v2406, %v2405
        %v2427 = vpack.c.bf16 %v2408, %v2407
        %v2428 = vpack.c.bf16 %v2410, %v2409
        %v2429 = vpack.c.bf16 %v2412, %v2411
        %v2430 = vpack.c.bf16 %v2414, %v2413
        %s2431 = scalar_lea.vmem %s3, 28
        %v2432 = vld [vmem:[%s2431] sm:$0xf]
        %v2434 = vsel %vm503, %v2415, 0
        %v2437 = vsel %vm503, %v2416, 0
        %v2440 = vsel %vm503, %v2417, 0
        %v2443 = vsel %vm503, %v2418, 0
        %v2446 = vsel %vm503, %v2419, 0
        %v2449 = vsel %vm503, %v2420, 0
        %v2452 = vsel %vm503, %v2421, 0
        %v2455 = vsel %vm503, %v2422, 0
        %v2458 = vsel %vm503, %v2423, 0
        %v2461 = vsel %vm503, %v2424, 0
        %v2464 = vsel %vm503, %v2425, 0
        %v2467 = vsel %vm503, %v2426, 0
        %v2470 = vsel %vm503, %v2427, 0
        %v2473 = vsel %vm503, %v2428, 0
        %v2476 = vsel %vm503, %v2429, 0
        %v2479 = vsel %vm503, %v2430, 0
        %v2482 = vsel %vm552, %v2432, 0
        %2484 = vmatpush.bf16.msra.mxu0 0
        %2485 = vmatpush.bf16.msra.mxu0 0
        %2486 = vmatpush.bf16.msra.mxu0 0
        %2487 = vmatpush.bf16.msra.mxu0 0
        %2488 = vmatpush.bf16.msra.mxu0 0
        %2489 = vmatpush.bf16.msra.mxu0 0
        %2490 = vmatpush.bf16.msra.mxu0 0
        %2491 = vmatpush.bf16.msra.mxu0 %v2482
        %2492 = vmatmul.bf16.gmra.mxu0 %v2434
        %v2493 = vpop.f32.mrf.mxu0
        %v2494 = vadd.f32 0.0, %v2493
        %v2495 = vpop.f32.mrf.mxu0
        %v2496 = vadd.f32 0.0, %v2495
        %2497 = vmatmul.bf16.gmra.mxu0 %v2437
        %v2498 = vpop.f32.mrf.mxu0
        %v2499 = vadd.f32 0.0, %v2498
        %v2500 = vpop.f32.mrf.mxu0
        %v2501 = vadd.f32 0.0, %v2500
        %2502 = vmatmul.bf16.gmra.mxu0 %v2440
        %v2503 = vpop.f32.mrf.mxu0
        %v2504 = vadd.f32 0.0, %v2503
        %v2505 = vpop.f32.mrf.mxu0
        %v2506 = vadd.f32 0.0, %v2505
        %2507 = vmatmul.bf16.gmra.mxu0 %v2443
        %v2508 = vpop.f32.mrf.mxu0
        %v2509 = vadd.f32 0.0, %v2508
        %v2510 = vpop.f32.mrf.mxu0
        %v2511 = vadd.f32 0.0, %v2510
        %2512 = vmatmul.bf16.gmra.mxu0 %v2446
        %v2513 = vpop.f32.mrf.mxu0
        %v2514 = vadd.f32 0.0, %v2513
        %v2515 = vpop.f32.mrf.mxu0
        %v2516 = vadd.f32 0.0, %v2515
        %2517 = vmatmul.bf16.gmra.mxu0 %v2449
        %v2518 = vpop.f32.mrf.mxu0
        %v2519 = vadd.f32 0.0, %v2518
        %v2520 = vpop.f32.mrf.mxu0
        %v2521 = vadd.f32 0.0, %v2520
        %2522 = vmatmul.bf16.gmra.mxu0 %v2452
        %v2523 = vpop.f32.mrf.mxu0
        %v2524 = vadd.f32 0.0, %v2523
        %v2525 = vpop.f32.mrf.mxu0
        %v2526 = vadd.f32 0.0, %v2525
        %2527 = vmatmul.bf16.gmra.mxu0 %v2455
        %v2528 = vpop.f32.mrf.mxu0
        %v2529 = vadd.f32 0.0, %v2528
        %v2530 = vpop.f32.mrf.mxu0
        %v2531 = vadd.f32 0.0, %v2530
        %2532 = vmatmul.bf16.gmra.mxu0 %v2458
        %v2533 = vpop.f32.mrf.mxu0
        %v2534 = vadd.f32 0.0, %v2533
        %v2535 = vpop.f32.mrf.mxu0
        %v2536 = vadd.f32 0.0, %v2535
        %2537 = vmatmul.bf16.gmra.mxu0 %v2461
        %v2538 = vpop.f32.mrf.mxu0
        %v2539 = vadd.f32 0.0, %v2538
        %v2540 = vpop.f32.mrf.mxu0
        %v2541 = vadd.f32 0.0, %v2540
        %2542 = vmatmul.bf16.gmra.mxu0 %v2464
        %v2543 = vpop.f32.mrf.mxu0
        %v2544 = vadd.f32 0.0, %v2543
        %v2545 = vpop.f32.mrf.mxu0
        %v2546 = vadd.f32 0.0, %v2545
        %2547 = vmatmul.bf16.gmra.mxu0 %v2467
        %v2548 = vpop.f32.mrf.mxu0
        %v2549 = vadd.f32 0.0, %v2548
        %v2550 = vpop.f32.mrf.mxu0
        %v2551 = vadd.f32 0.0, %v2550
        %2552 = vmatmul.bf16.gmra.mxu0 %v2470
        %v2553 = vpop.f32.mrf.mxu0
        %v2554 = vadd.f32 0.0, %v2553
        %v2555 = vpop.f32.mrf.mxu0
        %v2556 = vadd.f32 0.0, %v2555
        %2557 = vmatmul.bf16.gmra.mxu0 %v2473
        %v2558 = vpop.f32.mrf.mxu0
        %v2559 = vadd.f32 0.0, %v2558
        %v2560 = vpop.f32.mrf.mxu0
        %v2561 = vadd.f32 0.0, %v2560
        %2562 = vmatmul.bf16.gmra.mxu0 %v2476
        %v2563 = vpop.f32.mrf.mxu0
        %v2564 = vadd.f32 0.0, %v2563
        %v2565 = vpop.f32.mrf.mxu0
        %v2566 = vadd.f32 0.0, %v2565
        %2567 = vmatmul.bf16.gmra.mxu0 %v2479
        %v2568 = vpop.f32.mrf.mxu0
        %v2569 = vadd.f32 0.0, %v2568
        %v2570 = vpop.f32.mrf.mxu0
        %v2571 = vadd.f32 0.0, %v2570
        %2572 = vdwg.mxu0
        %v2573 = vadd.f32 %v2351, %v2494
        %v2574 = vadd.f32 %v2352, %v2496
        %v2575 = vadd.f32 %v2353, %v2499
        %v2576 = vadd.f32 %v2354, %v2501
        %v2577 = vadd.f32 %v2355, %v2504
        %v2578 = vadd.f32 %v2356, %v2506
        %v2579 = vadd.f32 %v2357, %v2509
        %v2580 = vadd.f32 %v2358, %v2511
        %v2581 = vadd.f32 %v2359, %v2514
        %v2582 = vadd.f32 %v2360, %v2516
        %v2583 = vadd.f32 %v2361, %v2519
        %v2584 = vadd.f32 %v2362, %v2521
        %v2585 = vadd.f32 %v2363, %v2524
        %v2586 = vadd.f32 %v2364, %v2526
        %v2587 = vadd.f32 %v2365, %v2529
        %v2588 = vadd.f32 %v2366, %v2531
        %v2589 = vadd.f32 %v2367, %v2534
        %v2590 = vadd.f32 %v2368, %v2536
        %v2591 = vadd.f32 %v2369, %v2539
        %v2592 = vadd.f32 %v2370, %v2541
        %v2593 = vadd.f32 %v2371, %v2544
        %v2594 = vadd.f32 %v2372, %v2546
        %v2595 = vadd.f32 %v2373, %v2549
        %v2596 = vadd.f32 %v2374, %v2551
        %v2597 = vadd.f32 %v2375, %v2554
        %v2598 = vadd.f32 %v2376, %v2556
        %v2599 = vadd.f32 %v2377, %v2559
        %v2600 = vadd.f32 %v2378, %v2561
        %v2601 = vadd.f32 %v2379, %v2564
        %v2602 = vadd.f32 %v2380, %v2566
        %v2603 = vadd.f32 %v2381, %v2569
        %v2604 = vadd.f32 %v2382, %v2571
        %v2605 = vld [vmem:[%s2160 + $0x2] sm:$0xff]
        %v2606 = vld [vmem:[%s2160 + $0xa] sm:$0xff]
        %v2607 = vld [vmem:[%s2160 + $0x1a] sm:$0xff]
        %v2608 = vld [vmem:[%s2160 + $0x22] sm:$0xff]
        %v2609 = vld [vmem:[%s2160 + $0x32] sm:$0xff]
        %v2610 = vld [vmem:[%s2160 + $0x3a] sm:$0xff]
        %v2611 = vld [vmem:[%s2160 + $0x4a] sm:$0xff]
        %v2612 = vld [vmem:[%s2160 + $0x52] sm:$0xff]
        %v2613 = vld [vmem:[%s2160 + $0x62] sm:$0xff]
        %v2614 = vld [vmem:[%s2160 + $0x6a] sm:$0xff]
        %v2615 = vld [vmem:[%s2160 + $0x7a] sm:$0xff]
        %v2616 = vld [vmem:[%s2160 + $0x82] sm:$0xff]
        %v2617 = vld [vmem:[%s2160 + $0x92] sm:$0xff]
        %v2618 = vld [vmem:[%s2160 + $0x9a] sm:$0xff]
        %v2619 = vld [vmem:[%s2160 + $0xaa] sm:$0xff]
        %v2620 = vld [vmem:[%s2160 + $0xb2] sm:$0xff]
        %v2621 = vld [vmem:[%s2160 + $0xc2] sm:$0xff]
        %v2622 = vld [vmem:[%s2160 + $0xca] sm:$0xff]
        %v2623 = vld [vmem:[%s2160 + $0xda] sm:$0xff]
        %v2624 = vld [vmem:[%s2160 + $0xe2] sm:$0xff]
        %v2625 = vld [vmem:[%s2160 + $0xf2] sm:$0xff]
        %v2626 = vld [vmem:[%s2160 + $0xfa] sm:$0xff]
        %v2627 = vld [vmem:[%s2160 + $0x10a] sm:$0xff]
        %v2628 = vld [vmem:[%s2160 + $0x112] sm:$0xff]
        %v2629 = vld [vmem:[%s2160 + $0x122] sm:$0xff]
        %v2630 = vld [vmem:[%s2160 + $0x12a] sm:$0xff]
        %v2631 = vld [vmem:[%s2160 + $0x13a] sm:$0xff]
        %v2632 = vld [vmem:[%s2160 + $0x142] sm:$0xff]
        %v2633 = vld [vmem:[%s2160 + $0x152] sm:$0xff]
        %v2634 = vld [vmem:[%s2160 + $0x15a] sm:$0xff]
        %v2635 = vld [vmem:[%s2160 + $0x16a] sm:$0xff]
        %v2636 = vld [vmem:[%s2160 + $0x172] sm:$0xff]
        %v2637 = vpack.c.bf16 %v2606, %v2605
        %v2638 = vpack.c.bf16 %v2608, %v2607
        %v2639 = vpack.c.bf16 %v2610, %v2609
        %v2640 = vpack.c.bf16 %v2612, %v2611
        %v2641 = vpack.c.bf16 %v2614, %v2613
        %v2642 = vpack.c.bf16 %v2616, %v2615
        %v2643 = vpack.c.bf16 %v2618, %v2617
        %v2644 = vpack.c.bf16 %v2620, %v2619
        %v2645 = vpack.c.bf16 %v2622, %v2621
        %v2646 = vpack.c.bf16 %v2624, %v2623
        %v2647 = vpack.c.bf16 %v2626, %v2625
        %v2648 = vpack.c.bf16 %v2628, %v2627
        %v2649 = vpack.c.bf16 %v2630, %v2629
        %v2650 = vpack.c.bf16 %v2632, %v2631
        %v2651 = vpack.c.bf16 %v2634, %v2633
        %v2652 = vpack.c.bf16 %v2636, %v2635
        %s2653 = scalar_lea.vmem %s3, 32
        %v2654 = vld [vmem:[%s2653] sm:$0xf]
        %v2656 = vsel %vm503, %v2637, 0
        %v2659 = vsel %vm503, %v2638, 0
        %v2662 = vsel %vm503, %v2639, 0
        %v2665 = vsel %vm503, %v2640, 0
        %v2668 = vsel %vm503, %v2641, 0
        %v2671 = vsel %vm503, %v2642, 0
        %v2674 = vsel %vm503, %v2643, 0
        %v2677 = vsel %vm503, %v2644, 0
        %v2680 = vsel %vm503, %v2645, 0
        %v2683 = vsel %vm503, %v2646, 0
        %v2686 = vsel %vm503, %v2647, 0
        %v2689 = vsel %vm503, %v2648, 0
        %v2692 = vsel %vm503, %v2649, 0
        %v2695 = vsel %vm503, %v2650, 0
        %v2698 = vsel %vm503, %v2651, 0
        %v2701 = vsel %vm503, %v2652, 0
        %v2704 = vsel %vm552, %v2654, 0
        %2706 = vmatpush.bf16.msra.mxu0 0
        %2707 = vmatpush.bf16.msra.mxu0 0
        %2708 = vmatpush.bf16.msra.mxu0 0
        %2709 = vmatpush.bf16.msra.mxu0 0
        %2710 = vmatpush.bf16.msra.mxu0 0
        %2711 = vmatpush.bf16.msra.mxu0 0
        %2712 = vmatpush.bf16.msra.mxu0 0
        %2713 = vmatpush.bf16.msra.mxu0 %v2704
        %2714 = vmatmul.bf16.gmra.mxu0 %v2656
        %v2715 = vpop.f32.mrf.mxu0
        %v2716 = vadd.f32 0.0, %v2715
        %v2717 = vpop.f32.mrf.mxu0
        %v2718 = vadd.f32 0.0, %v2717
        %2719 = vmatmul.bf16.gmra.mxu0 %v2659
        %v2720 = vpop.f32.mrf.mxu0
        %v2721 = vadd.f32 0.0, %v2720
        %v2722 = vpop.f32.mrf.mxu0
        %v2723 = vadd.f32 0.0, %v2722
        %2724 = vmatmul.bf16.gmra.mxu0 %v2662
        %v2725 = vpop.f32.mrf.mxu0
        %v2726 = vadd.f32 0.0, %v2725
        %v2727 = vpop.f32.mrf.mxu0
        %v2728 = vadd.f32 0.0, %v2727
        %2729 = vmatmul.bf16.gmra.mxu0 %v2665
        %v2730 = vpop.f32.mrf.mxu0
        %v2731 = vadd.f32 0.0, %v2730
        %v2732 = vpop.f32.mrf.mxu0
        %v2733 = vadd.f32 0.0, %v2732
        %2734 = vmatmul.bf16.gmra.mxu0 %v2668
        %v2735 = vpop.f32.mrf.mxu0
        %v2736 = vadd.f32 0.0, %v2735
        %v2737 = vpop.f32.mrf.mxu0
        %v2738 = vadd.f32 0.0, %v2737
        %2739 = vmatmul.bf16.gmra.mxu0 %v2671
        %v2740 = vpop.f32.mrf.mxu0
        %v2741 = vadd.f32 0.0, %v2740
        %v2742 = vpop.f32.mrf.mxu0
        %v2743 = vadd.f32 0.0, %v2742
        %2744 = vmatmul.bf16.gmra.mxu0 %v2674
        %v2745 = vpop.f32.mrf.mxu0
        %v2746 = vadd.f32 0.0, %v2745
        %v2747 = vpop.f32.mrf.mxu0
        %v2748 = vadd.f32 0.0, %v2747
        %2749 = vmatmul.bf16.gmra.mxu0 %v2677
        %v2750 = vpop.f32.mrf.mxu0
        %v2751 = vadd.f32 0.0, %v2750
        %v2752 = vpop.f32.mrf.mxu0
        %v2753 = vadd.f32 0.0, %v2752
        %2754 = vmatmul.bf16.gmra.mxu0 %v2680
        %v2755 = vpop.f32.mrf.mxu0
        %v2756 = vadd.f32 0.0, %v2755
        %v2757 = vpop.f32.mrf.mxu0
        %v2758 = vadd.f32 0.0, %v2757
        %2759 = vmatmul.bf16.gmra.mxu0 %v2683
        %v2760 = vpop.f32.mrf.mxu0
        %v2761 = vadd.f32 0.0, %v2760
        %v2762 = vpop.f32.mrf.mxu0
        %v2763 = vadd.f32 0.0, %v2762
        %2764 = vmatmul.bf16.gmra.mxu0 %v2686
        %v2765 = vpop.f32.mrf.mxu0
        %v2766 = vadd.f32 0.0, %v2765
        %v2767 = vpop.f32.mrf.mxu0
        %v2768 = vadd.f32 0.0, %v2767
        %2769 = vmatmul.bf16.gmra.mxu0 %v2689
        %v2770 = vpop.f32.mrf.mxu0
        %v2771 = vadd.f32 0.0, %v2770
        %v2772 = vpop.f32.mrf.mxu0
        %v2773 = vadd.f32 0.0, %v2772
        %2774 = vmatmul.bf16.gmra.mxu0 %v2692
        %v2775 = vpop.f32.mrf.mxu0
        %v2776 = vadd.f32 0.0, %v2775
        %v2777 = vpop.f32.mrf.mxu0
        %v2778 = vadd.f32 0.0, %v2777
        %2779 = vmatmul.bf16.gmra.mxu0 %v2695
        %v2780 = vpop.f32.mrf.mxu0
        %v2781 = vadd.f32 0.0, %v2780
        %v2782 = vpop.f32.mrf.mxu0
        %v2783 = vadd.f32 0.0, %v2782
        %2784 = vmatmul.bf16.gmra.mxu0 %v2698
        %v2785 = vpop.f32.mrf.mxu0
        %v2786 = vadd.f32 0.0, %v2785
        %v2787 = vpop.f32.mrf.mxu0
        %v2788 = vadd.f32 0.0, %v2787
        %2789 = vmatmul.bf16.gmra.mxu0 %v2701
        %v2790 = vpop.f32.mrf.mxu0
        %v2791 = vadd.f32 0.0, %v2790
        %v2792 = vpop.f32.mrf.mxu0
        %v2793 = vadd.f32 0.0, %v2792
        %2794 = vdwg.mxu0
        %v2795 = vadd.f32 %v2573, %v2716
        %v2796 = vadd.f32 %v2574, %v2718
        %v2797 = vadd.f32 %v2575, %v2721
        %v2798 = vadd.f32 %v2576, %v2723
        %v2799 = vadd.f32 %v2577, %v2726
        %v2800 = vadd.f32 %v2578, %v2728
        %v2801 = vadd.f32 %v2579, %v2731
        %v2802 = vadd.f32 %v2580, %v2733
        %v2803 = vadd.f32 %v2581, %v2736
        %v2804 = vadd.f32 %v2582, %v2738
        %v2805 = vadd.f32 %v2583, %v2741
        %v2806 = vadd.f32 %v2584, %v2743
        %v2807 = vadd.f32 %v2585, %v2746
        %v2808 = vadd.f32 %v2586, %v2748
        %v2809 = vadd.f32 %v2587, %v2751
        %v2810 = vadd.f32 %v2588, %v2753
        %v2811 = vadd.f32 %v2589, %v2756
        %v2812 = vadd.f32 %v2590, %v2758
        %v2813 = vadd.f32 %v2591, %v2761
        %v2814 = vadd.f32 %v2592, %v2763
        %v2815 = vadd.f32 %v2593, %v2766
        %v2816 = vadd.f32 %v2594, %v2768
        %v2817 = vadd.f32 %v2595, %v2771
        %v2818 = vadd.f32 %v2596, %v2773
        %v2819 = vadd.f32 %v2597, %v2776
        %v2820 = vadd.f32 %v2598, %v2778
        %v2821 = vadd.f32 %v2599, %v2781
        %v2822 = vadd.f32 %v2600, %v2783
        %v2823 = vadd.f32 %v2601, %v2786
        %v2824 = vadd.f32 %v2602, %v2788
        %v2825 = vadd.f32 %v2603, %v2791
        %v2826 = vadd.f32 %v2604, %v2793
        %v2827 = vld [vmem:[%s4] sm:$0x1]
        %v2829 = vperm.slane %v2827, 0
        %v2831 = vadd.f32 %v2795, %v2829
        %v2832 = vadd.f32 %v2796, %v2829
        %v2833 = vadd.f32 %v2797, %v2829
        %v2834 = vadd.f32 %v2798, %v2829
        %v2835 = vadd.f32 %v2799, %v2829
        %v2836 = vadd.f32 %v2800, %v2829
        %v2837 = vadd.f32 %v2801, %v2829
        %v2838 = vadd.f32 %v2802, %v2829
        %v2839 = vadd.f32 %v2803, %v2829
        %v2840 = vadd.f32 %v2804, %v2829
        %v2841 = vadd.f32 %v2805, %v2829
        %v2842 = vadd.f32 %v2806, %v2829
        %v2843 = vadd.f32 %v2807, %v2829
        %v2844 = vadd.f32 %v2808, %v2829
        %v2845 = vadd.f32 %v2809, %v2829
        %v2846 = vadd.f32 %v2810, %v2829
        %v2847 = vadd.f32 %v2811, %v2829
        %v2848 = vadd.f32 %v2812, %v2829
        %v2849 = vadd.f32 %v2813, %v2829
        %v2850 = vadd.f32 %v2814, %v2829
        %v2851 = vadd.f32 %v2815, %v2829
        %v2852 = vadd.f32 %v2816, %v2829
        %v2853 = vadd.f32 %v2817, %v2829
        %v2854 = vadd.f32 %v2818, %v2829
        %v2855 = vadd.f32 %v2819, %v2829
        %v2856 = vadd.f32 %v2820, %v2829
        %v2857 = vadd.f32 %v2821, %v2829
        %v2858 = vadd.f32 %v2822, %v2829
        %v2859 = vadd.f32 %v2823, %v2829
        %v2860 = vadd.f32 %v2824, %v2829
        %v2861 = vadd.f32 %v2825, %v2829
        %v2862 = vadd.f32 %v2826, %v2829
        %v2863 = vmax.f32 %v2831, 0.0
        %v2864 = vmax.f32 %v2832, 0.0
        %v2865 = vmax.f32 %v2833, 0.0
        %v2866 = vmax.f32 %v2834, 0.0
        %v2867 = vmax.f32 %v2835, 0.0
        %v2868 = vmax.f32 %v2836, 0.0
        %v2869 = vmax.f32 %v2837, 0.0
        %v2870 = vmax.f32 %v2838, 0.0
        %v2871 = vmax.f32 %v2839, 0.0
        %v2872 = vmax.f32 %v2840, 0.0
        %v2873 = vmax.f32 %v2841, 0.0
        %v2874 = vmax.f32 %v2842, 0.0
        %v2875 = vmax.f32 %v2843, 0.0
        %v2876 = vmax.f32 %v2844, 0.0
        %v2877 = vmax.f32 %v2845, 0.0
        %v2878 = vmax.f32 %v2846, 0.0
        %v2879 = vmax.f32 %v2847, 0.0
        %v2880 = vmax.f32 %v2848, 0.0
        %v2881 = vmax.f32 %v2849, 0.0
        %v2882 = vmax.f32 %v2850, 0.0
        %v2883 = vmax.f32 %v2851, 0.0
        %v2884 = vmax.f32 %v2852, 0.0
        %v2885 = vmax.f32 %v2853, 0.0
        %v2886 = vmax.f32 %v2854, 0.0
        %v2887 = vmax.f32 %v2855, 0.0
        %v2888 = vmax.f32 %v2856, 0.0
        %v2889 = vmax.f32 %v2857, 0.0
        %v2890 = vmax.f32 %v2858, 0.0
        %v2891 = vmax.f32 %v2859, 0.0
        %v2892 = vmax.f32 %v2860, 0.0
        %v2893 = vmax.f32 %v2861, 0.0
        %v2894 = vmax.f32 %v2862, 0.0
        %2895 = vst.msk [vmem:[#allocation2] sm:$0xff] %vm503, 0.0
        %2896 = vst.msk [vmem:[#allocation2 + $0x8] sm:$0xff] %vm503, 0.0
        %2897 = vst.msk [vmem:[#allocation2 + $0x10] sm:$0x3] %vm679, 0.0
        %2898 = vst.msk [vmem:[#allocation2 + $0x18] sm:$0xff] %vm503, 0.0
        %2899 = vst.msk [vmem:[#allocation2 + $0x20] sm:$0xff] %vm503, 0.0
        %2900 = vst.msk [vmem:[#allocation2 + $0x28] sm:$0x3] %vm679, 0.0
        %2901 = vst.msk [vmem:[#allocation2 + $0x30] sm:$0xff] %vm503, 0.0
        %2902 = vst.msk [vmem:[#allocation2 + $0x38] sm:$0xff] %vm503, 0.0
        %2903 = vst.msk [vmem:[#allocation2 + $0x40] sm:$0x3] %vm679, 0.0
        %2904 = vst.msk [vmem:[#allocation2 + $0x48] sm:$0xff] %vm503, 0.0
        %2905 = vst.msk [vmem:[#allocation2 + $0x50] sm:$0xff] %vm503, 0.0
        %2906 = vst.msk [vmem:[#allocation2 + $0x58] sm:$0x3] %vm679, 0.0
        %2907 = vst.msk [vmem:[#allocation2 + $0x60] sm:$0xff] %vm503, 0.0
        %2908 = vst.msk [vmem:[#allocation2 + $0x68] sm:$0xff] %vm503, 0.0
        %2909 = vst.msk [vmem:[#allocation2 + $0x70] sm:$0x3] %vm679, 0.0
        %2910 = vst.msk [vmem:[#allocation2 + $0x78] sm:$0xff] %vm503, 0.0
        %2911 = vst.msk [vmem:[#allocation2 + $0x80] sm:$0xff] %vm503, 0.0
        %2912 = vst.msk [vmem:[#allocation2 + $0x88] sm:$0x3] %vm679, 0.0
        %2913 = vst.msk [vmem:[#allocation2 + $0x90] sm:$0xff] %vm503, 0.0
        %2914 = vst.msk [vmem:[#allocation2 + $0x98] sm:$0xff] %vm503, 0.0
        %2915 = vst.msk [vmem:[#allocation2 + $0xa0] sm:$0x3] %vm679, 0.0
        %2916 = vst.msk [vmem:[#allocation2 + $0xa8] sm:$0xff] %vm503, 0.0
        %2917 = vst.msk [vmem:[#allocation2 + $0xb0] sm:$0xff] %vm503, 0.0
        %2918 = vst.msk [vmem:[#allocation2 + $0xb8] sm:$0x3] %vm679, 0.0
        %2919 = vst.msk [vmem:[#allocation2 + $0xc0] sm:$0xff] %vm503, 0.0
        %2920 = vst.msk [vmem:[#allocation2 + $0xc8] sm:$0xff] %vm503, 0.0
        %2921 = vst.msk [vmem:[#allocation2 + $0xd0] sm:$0x3] %vm679, 0.0
        %2922 = vst.msk [vmem:[#allocation2 + $0xd8] sm:$0xff] %vm503, 0.0
        %2923 = vst.msk [vmem:[#allocation2 + $0xe0] sm:$0xff] %vm503, 0.0
        %2924 = vst.msk [vmem:[#allocation2 + $0xe8] sm:$0x3] %vm679, 0.0
        %2925 = vst.msk [vmem:[#allocation2 + $0xf0] sm:$0xff] %vm503, 0.0
        %2926 = vst.msk [vmem:[#allocation2 + $0xf8] sm:$0xff] %vm503, 0.0
        %2927 = vst.msk [vmem:[#allocation2 + $0x100] sm:$0x3] %vm679, 0.0
        %2928 = vst.msk [vmem:[#allocation2 + $0x108] sm:$0xff] %vm503, 0.0
        %2929 = vst.msk [vmem:[#allocation2 + $0x110] sm:$0xff] %vm503, 0.0
        %2930 = vst.msk [vmem:[#allocation2 + $0x118] sm:$0x3] %vm679, 0.0
        %2931 = vst.msk [vmem:[#allocation2 + $0x120] sm:$0xff] %vm503, 0.0
        %2932 = vst.msk [vmem:[#allocation2 + $0x128] sm:$0xff] %vm503, 0.0
        %2933 = vst.msk [vmem:[#allocation2 + $0x130] sm:$0x3] %vm679, 0.0
        %2934 = vst.msk [vmem:[#allocation2 + $0x138] sm:$0xff] %vm503, 0.0
        %2935 = vst.msk [vmem:[#allocation2 + $0x140] sm:$0xff] %vm503, 0.0
        %2936 = vst.msk [vmem:[#allocation2 + $0x148] sm:$0x3] %vm679, 0.0
        %2937 = vst.msk [vmem:[#allocation2 + $0x150] sm:$0xff] %vm503, 0.0
        %2938 = vst.msk [vmem:[#allocation2 + $0x158] sm:$0xff] %vm503, 0.0
        %2939 = vst.msk [vmem:[#allocation2 + $0x160] sm:$0x3] %vm679, 0.0
        %2940 = vst.msk [vmem:[#allocation2 + $0x168] sm:$0xff] %vm503, 0.0
        %2941 = vst.msk [vmem:[#allocation2 + $0x170] sm:$0xff] %vm503, 0.0
        %2942 = vst.msk [vmem:[#allocation2 + $0x178] sm:$0x3] %vm679, 0.0
        %2943 = vst.msk [vmem:[#allocation2 + $0x180] sm:$0xff] %vm503, 0.0
        %2944 = vst.msk [vmem:[#allocation2 + $0x188] sm:$0xff] %vm503, 0.0
        %2945 = vst.msk [vmem:[#allocation2 + $0x190] sm:$0x3] %vm679, 0.0
        %2946 = vst.msk [vmem:[#allocation2 + $0x198] sm:$0xff] %vm503, 0.0
        %2947 = vst.msk [vmem:[#allocation2 + $0x1a0] sm:$0xff] %vm503, 0.0
        %2948 = vst.msk [vmem:[#allocation2 + $0x1a8] sm:$0x3] %vm679, 0.0
        %2949 = vrot.lane.b32.xlu0 %v645, 112
        %v2950 = vpop.permute.xlu0 %2949
        %2951 = vrot.lane.b32.xlu0 %v646, 112
        %v2952 = vpop.permute.xlu0 %2951
        %2953 = vrot.lane.b32.xlu0 %v647, 112
        %v2954 = vpop.permute.xlu0 %2953
        %2955 = vrot.lane.b32.xlu0 %v648, 112
        %v2956 = vpop.permute.xlu0 %2955
        %2957 = vrot.lane.b32.xlu0 %v649, 112
        %v2958 = vpop.permute.xlu0 %2957
        %2959 = vrot.lane.b32.xlu0 %v650, 112
        %v2960 = vpop.permute.xlu0 %2959
        %2961 = vrot.lane.b32.xlu0 %v651, 112
        %v2962 = vpop.permute.xlu0 %2961
        %2963 = vrot.lane.b32.xlu0 %v652, 112
        %v2964 = vpop.permute.xlu0 %2963
        %2965 = vrot.lane.b32.xlu0 %v653, 112
        %v2966 = vpop.permute.xlu0 %2965
        %2967 = vrot.lane.b32.xlu0 %v654, 112
        %v2968 = vpop.permute.xlu0 %2967
        %2969 = vrot.lane.b32.xlu0 %v655, 112
        %v2970 = vpop.permute.xlu0 %2969
        %2971 = vrot.lane.b32.xlu0 %v656, 112
        %v2972 = vpop.permute.xlu0 %2971
        %2973 = vrot.lane.b32.xlu0 %v657, 112
        %v2974 = vpop.permute.xlu0 %2973
        %2975 = vrot.lane.b32.xlu0 %v658, 112
        %v2976 = vpop.permute.xlu0 %2975
        %2977 = vrot.lane.b32.xlu0 %v659, 112
        %v2978 = vpop.permute.xlu0 %2977
        %2979 = vrot.lane.b32.xlu0 %v660, 112
        %v2980 = vpop.permute.xlu0 %2979
        %2981 = vrot.lane.b32.xlu0 %v661, 112
        %v2982 = vpop.permute.xlu0 %2981
        %2983 = vrot.lane.b32.xlu0 %v662, 112
        %v2984 = vpop.permute.xlu0 %2983
        %2985 = vrot.lane.b32.xlu0 %v663, 112
        %v2986 = vpop.permute.xlu0 %2985
        %2987 = vrot.lane.b32.xlu0 %v664, 112
        %v2988 = vpop.permute.xlu0 %2987
        %2989 = vrot.lane.b32.xlu0 %v665, 112
        %v2990 = vpop.permute.xlu0 %2989
        %2991 = vrot.lane.b32.xlu0 %v666, 112
        %v2992 = vpop.permute.xlu0 %2991
        %2993 = vrot.lane.b32.xlu0 %v667, 112
        %v2994 = vpop.permute.xlu0 %2993
        %2995 = vrot.lane.b32.xlu0 %v668, 112
        %v2996 = vpop.permute.xlu0 %2995
        %2997 = vrot.lane.b32.xlu0 %v669, 112
        %v2998 = vpop.permute.xlu0 %2997
        %2999 = vrot.lane.b32.xlu0 %v670, 112
        %v3000 = vpop.permute.xlu0 %2999
        %3001 = vrot.lane.b32.xlu0 %v671, 112
        %v3002 = vpop.permute.xlu0 %3001
        %3003 = vrot.lane.b32.xlu0 %v672, 112
        %v3004 = vpop.permute.xlu0 %3003
        %3005 = vrot.lane.b32.xlu0 %v673, 112
        %v3006 = vpop.permute.xlu0 %3005
        %3007 = vrot.lane.b32.xlu0 %v674, 112
        %v3008 = vpop.permute.xlu0 %3007
        %3009 = vrot.lane.b32.xlu0 %v675, 112
        %v3010 = vpop.permute.xlu0 %3009
        %3011 = vrot.lane.b32.xlu0 %v676, 112
        %v3012 = vpop.permute.xlu0 %3011
        %vm3045 = vcmask 31744
        %3046 = vst.msk [vmem:[%s860 + $0x1] sm:$0xff] %vm3045, %v2950
        %3047 = vst.msk [vmem:[%s860 + $0x9] sm:$0xff] %vm3045, %v2952
        %3048 = vst.msk [vmem:[%s860 + $0x19] sm:$0xff] %vm3045, %v2954
        %3049 = vst.msk [vmem:[%s860 + $0x21] sm:$0xff] %vm3045, %v2956
        %3050 = vst.msk [vmem:[%s860 + $0x31] sm:$0xff] %vm3045, %v2958
        %3051 = vst.msk [vmem:[%s860 + $0x39] sm:$0xff] %vm3045, %v2960
        %3052 = vst.msk [vmem:[%s860 + $0x49] sm:$0xff] %vm3045, %v2962
        %3053 = vst.msk [vmem:[%s860 + $0x51] sm:$0xff] %vm3045, %v2964
        %3054 = vst.msk [vmem:[%s860 + $0x61] sm:$0xff] %vm3045, %v2966
        %3055 = vst.msk [vmem:[%s860 + $0x69] sm:$0xff] %vm3045, %v2968
        %3056 = vst.msk [vmem:[%s860 + $0x79] sm:$0xff] %vm3045, %v2970
        %3057 = vst.msk [vmem:[%s860 + $0x81] sm:$0xff] %vm3045, %v2972
        %3058 = vst.msk [vmem:[%s860 + $0x91] sm:$0xff] %vm3045, %v2974
        %3059 = vst.msk [vmem:[%s860 + $0x99] sm:$0xff] %vm3045, %v2976
        %3060 = vst.msk [vmem:[%s860 + $0xa9] sm:$0xff] %vm3045, %v2978
        %3061 = vst.msk [vmem:[%s860 + $0xb1] sm:$0xff] %vm3045, %v2980
        %3062 = vst.msk [vmem:[%s860 + $0xc1] sm:$0xff] %vm3045, %v2982
        %3063 = vst.msk [vmem:[%s860 + $0xc9] sm:$0xff] %vm3045, %v2984
        %3064 = vst.msk [vmem:[%s860 + $0xd9] sm:$0xff] %vm3045, %v2986
        %3065 = vst.msk [vmem:[%s860 + $0xe1] sm:$0xff] %vm3045, %v2988
        %3066 = vst.msk [vmem:[%s860 + $0xf1] sm:$0xff] %vm3045, %v2990
        %3067 = vst.msk [vmem:[%s860 + $0xf9] sm:$0xff] %vm3045, %v2992
        %3068 = vst.msk [vmem:[%s860 + $0x109] sm:$0xff] %vm3045, %v2994
        %3069 = vst.msk [vmem:[%s860 + $0x111] sm:$0xff] %vm3045, %v2996
        %3070 = vst.msk [vmem:[%s860 + $0x121] sm:$0xff] %vm3045, %v2998
        %3071 = vst.msk [vmem:[%s860 + $0x129] sm:$0xff] %vm3045, %v3000
        %3072 = vst.msk [vmem:[%s860 + $0x139] sm:$0xff] %vm3045, %v3002
        %3073 = vst.msk [vmem:[%s860 + $0x141] sm:$0xff] %vm3045, %v3004
        %3074 = vst.msk [vmem:[%s860 + $0x151] sm:$0xff] %vm3045, %v3006
        %3075 = vst.msk [vmem:[%s860 + $0x159] sm:$0xff] %vm3045, %v3008
        %3076 = vst.msk [vmem:[%s860 + $0x169] sm:$0xff] %vm3045, %v3010
        %3077 = vst.msk [vmem:[%s860 + $0x171] sm:$0xff] %vm3045, %v3012
        %v3078 = vld [vmem:[#allocation2] sm:$0xff]
        %v3079 = vld [vmem:[#allocation2 + $0x8] sm:$0xff]
        %v3080 = vld [vmem:[#allocation2 + $0x18] sm:$0xff]
        %v3081 = vld [vmem:[#allocation2 + $0x20] sm:$0xff]
        %v3082 = vld [vmem:[#allocation2 + $0x30] sm:$0xff]
        %v3083 = vld [vmem:[#allocation2 + $0x38] sm:$0xff]
        %v3084 = vld [vmem:[#allocation2 + $0x48] sm:$0xff]
        %v3085 = vld [vmem:[#allocation2 + $0x50] sm:$0xff]
        %v3086 = vld [vmem:[#allocation2 + $0x60] sm:$0xff]
        %v3087 = vld [vmem:[#allocation2 + $0x68] sm:$0xff]
        %v3088 = vld [vmem:[#allocation2 + $0x78] sm:$0xff]
        %v3089 = vld [vmem:[#allocation2 + $0x80] sm:$0xff]
        %v3090 = vld [vmem:[#allocation2 + $0x90] sm:$0xff]
        %v3091 = vld [vmem:[#allocation2 + $0x98] sm:$0xff]
        %v3092 = vld [vmem:[#allocation2 + $0xa8] sm:$0xff]
        %v3093 = vld [vmem:[#allocation2 + $0xb0] sm:$0xff]
        %v3094 = vld [vmem:[#allocation2 + $0xc0] sm:$0xff]
        %v3095 = vld [vmem:[#allocation2 + $0xc8] sm:$0xff]
        %v3096 = vld [vmem:[#allocation2 + $0xd8] sm:$0xff]
        %v3097 = vld [vmem:[#allocation2 + $0xe0] sm:$0xff]
        %v3098 = vld [vmem:[#allocation2 + $0xf0] sm:$0xff]
        %v3099 = vld [vmem:[#allocation2 + $0xf8] sm:$0xff]
        %v3100 = vld [vmem:[#allocation2 + $0x108] sm:$0xff]
        %v3101 = vld [vmem:[#allocation2 + $0x110] sm:$0xff]
        %v3102 = vld [vmem:[#allocation2 + $0x120] sm:$0xff]
        %v3103 = vld [vmem:[#allocation2 + $0x128] sm:$0xff]
        %v3104 = vld [vmem:[#allocation2 + $0x138] sm:$0xff]
        %v3105 = vld [vmem:[#allocation2 + $0x140] sm:$0xff]
        %v3106 = vld [vmem:[#allocation2 + $0x150] sm:$0xff]
        %v3107 = vld [vmem:[#allocation2 + $0x158] sm:$0xff]
        %v3108 = vld [vmem:[#allocation2 + $0x168] sm:$0xff]
        %v3109 = vld [vmem:[#allocation2 + $0x170] sm:$0xff]
        %v3110 = vpack.c.bf16 %v3079, %v3078
        %v3111 = vpack.c.bf16 %v3081, %v3080
        %v3112 = vpack.c.bf16 %v3083, %v3082
        %v3113 = vpack.c.bf16 %v3085, %v3084
        %v3114 = vpack.c.bf16 %v3087, %v3086
        %v3115 = vpack.c.bf16 %v3089, %v3088
        %v3116 = vpack.c.bf16 %v3091, %v3090
        %v3117 = vpack.c.bf16 %v3093, %v3092
        %v3118 = vpack.c.bf16 %v3095, %v3094
        %v3119 = vpack.c.bf16 %v3097, %v3096
        %v3120 = vpack.c.bf16 %v3099, %v3098
        %v3121 = vpack.c.bf16 %v3101, %v3100
        %v3122 = vpack.c.bf16 %v3103, %v3102
        %v3123 = vpack.c.bf16 %v3105, %v3104
        %v3124 = vpack.c.bf16 %v3107, %v3106
        %v3125 = vpack.c.bf16 %v3109, %v3108
        %v3126 = vld [vmem:[%s5] sm:$0x3]
        %v3127 = vld [vmem:[#allocation2 + $0x1] sm:$0xff]
        %v3128 = vld [vmem:[#allocation2 + $0x9] sm:$0xff]
        %v3129 = vld [vmem:[#allocation2 + $0x19] sm:$0xff]
        %v3130 = vld [vmem:[#allocation2 + $0x21] sm:$0xff]
        %v3131 = vld [vmem:[#allocation2 + $0x31] sm:$0xff]
        %v3132 = vld [vmem:[#allocation2 + $0x39] sm:$0xff]
        %v3133 = vld [vmem:[#allocation2 + $0x49] sm:$0xff]
        %v3134 = vld [vmem:[#allocation2 + $0x51] sm:$0xff]
        %v3135 = vld [vmem:[#allocation2 + $0x61] sm:$0xff]
        %v3136 = vld [vmem:[#allocation2 + $0x69] sm:$0xff]
        %v3137 = vld [vmem:[#allocation2 + $0x79] sm:$0xff]
        %v3138 = vld [vmem:[#allocation2 + $0x81] sm:$0xff]
        %v3139 = vld [vmem:[#allocation2 + $0x91] sm:$0xff]
        %v3140 = vld [vmem:[#allocation2 + $0x99] sm:$0xff]
        %v3141 = vld [vmem:[#allocation2 + $0xa9] sm:$0xff]
        %v3142 = vld [vmem:[#allocation2 + $0xb1] sm:$0xff]
        %v3143 = vld [vmem:[#allocation2 + $0xc1] sm:$0xff]
        %v3144 = vld [vmem:[#allocation2 + $0xc9] sm:$0xff]
        %v3145 = vld [vmem:[#allocation2 + $0xd9] sm:$0xff]
        %v3146 = vld [vmem:[#allocation2 + $0xe1] sm:$0xff]
        %v3147 = vld [vmem:[#allocation2 + $0xf1] sm:$0xff]
        %v3148 = vld [vmem:[#allocation2 + $0xf9] sm:$0xff]
        %v3149 = vld [vmem:[#allocation2 + $0x109] sm:$0xff]
        %v3150 = vld [vmem:[#allocation2 + $0x111] sm:$0xff]
        %v3151 = vld [vmem:[#allocation2 + $0x121] sm:$0xff]
        %v3152 = vld [vmem:[#allocation2 + $0x129] sm:$0xff]
        %v3153 = vld [vmem:[#allocation2 + $0x139] sm:$0xff]
        %v3154 = vld [vmem:[#allocation2 + $0x141] sm:$0xff]
        %v3155 = vld [vmem:[#allocation2 + $0x151] sm:$0xff]
        %v3156 = vld [vmem:[#allocation2 + $0x159] sm:$0xff]
        %v3157 = vld [vmem:[#allocation2 + $0x169] sm:$0xff]
        %v3158 = vld [vmem:[#allocation2 + $0x171] sm:$0xff]
        %v3159 = vpack.c.bf16 %v3128, %v3127
        %v3160 = vpack.c.bf16 %v3130, %v3129
        %v3161 = vpack.c.bf16 %v3132, %v3131
        %v3162 = vpack.c.bf16 %v3134, %v3133
        %v3163 = vpack.c.bf16 %v3136, %v3135
        %v3164 = vpack.c.bf16 %v3138, %v3137
        %v3165 = vpack.c.bf16 %v3140, %v3139
        %v3166 = vpack.c.bf16 %v3142, %v3141
        %v3167 = vpack.c.bf16 %v3144, %v3143
        %v3168 = vpack.c.bf16 %v3146, %v3145
        %v3169 = vpack.c.bf16 %v3148, %v3147
        %v3170 = vpack.c.bf16 %v3150, %v3149
        %v3171 = vpack.c.bf16 %v3152, %v3151
        %v3172 = vpack.c.bf16 %v3154, %v3153
        %v3173 = vpack.c.bf16 %v3156, %v3155
        %v3174 = vpack.c.bf16 %v3158, %v3157
        %s3175 = scalar_lea.vmem %s5, 2
        %v3176 = vld [vmem:[%s3175] sm:$0x3]
        %v3178 = vsel %vm3045, %v3159, 0
        %v3181 = vsel %vm3045, %v3160, 0
        %v3184 = vsel %vm3045, %v3161, 0
        %v3187 = vsel %vm3045, %v3162, 0
        %v3190 = vsel %vm3045, %v3163, 0
        %v3193 = vsel %vm3045, %v3164, 0
        %v3196 = vsel %vm3045, %v3165, 0
        %v3199 = vsel %vm3045, %v3166, 0
        %v3202 = vsel %vm3045, %v3167, 0
        %v3205 = vsel %vm3045, %v3168, 0
        %v3208 = vsel %vm3045, %v3169, 0
        %v3211 = vsel %vm3045, %v3170, 0
        %v3214 = vsel %vm3045, %v3171, 0
        %v3217 = vsel %vm3045, %v3172, 0
        %v3220 = vsel %vm3045, %v3173, 0
        %v3223 = vsel %vm3045, %v3174, 0
        %vm3225 = vcmask 1041408
        %v3227 = vsel %vm3225, %v3176, 0
        %3229 = vmatpush.bf16.msra.mxu0 0
        %3230 = vmatpush.bf16.msra.mxu0 0
        %3231 = vmatpush.bf16.msra.mxu0 0
        %3232 = vmatpush.bf16.msra.mxu0 0
        %3233 = vmatpush.bf16.msra.mxu0 0
        %3234 = vmatpush.bf16.msra.mxu0 0
        %3235 = vmatpush.bf16.msra.mxu0 0
        %3236 = vmatpush.bf16.msra.mxu0 %v3227
        %3237 = vmatmul.bf16.gmra.mxu0 %v3178
        %v3238 = vpop.f32.mrf.mxu0
        %v3239 = vadd.f32 0.0, %v3238
        %v3240 = vpop.f32.mrf.mxu0
        %v3241 = vadd.f32 0.0, %v3240
        %3242 = vmatmul.bf16.gmra.mxu0 %v3181
        %v3243 = vpop.f32.mrf.mxu0
        %v3244 = vadd.f32 0.0, %v3243
        %v3245 = vpop.f32.mrf.mxu0
        %v3246 = vadd.f32 0.0, %v3245
        %3247 = vmatmul.bf16.gmra.mxu0 %v3184
        %v3248 = vpop.f32.mrf.mxu0
        %v3249 = vadd.f32 0.0, %v3248
        %v3250 = vpop.f32.mrf.mxu0
        %v3251 = vadd.f32 0.0, %v3250
        %3252 = vmatmul.bf16.gmra.mxu0 %v3187
        %v3253 = vpop.f32.mrf.mxu0
        %v3254 = vadd.f32 0.0, %v3253
        %v3255 = vpop.f32.mrf.mxu0
        %v3256 = vadd.f32 0.0, %v3255
        %3257 = vmatmul.bf16.gmra.mxu0 %v3190
        %v3258 = vpop.f32.mrf.mxu0
        %v3259 = vadd.f32 0.0, %v3258
        %v3260 = vpop.f32.mrf.mxu0
        %v3261 = vadd.f32 0.0, %v3260
        %3262 = vmatmul.bf16.gmra.mxu0 %v3193
        %v3263 = vpop.f32.mrf.mxu0
        %v3264 = vadd.f32 0.0, %v3263
        %v3265 = vpop.f32.mrf.mxu0
        %v3266 = vadd.f32 0.0, %v3265
        %3267 = vmatmul.bf16.gmra.mxu0 %v3196
        %v3268 = vpop.f32.mrf.mxu0
        %v3269 = vadd.f32 0.0, %v3268
        %v3270 = vpop.f32.mrf.mxu0
        %v3271 = vadd.f32 0.0, %v3270
        %3272 = vmatmul.bf16.gmra.mxu0 %v3199
        %v3273 = vpop.f32.mrf.mxu0
        %v3274 = vadd.f32 0.0, %v3273
        %v3275 = vpop.f32.mrf.mxu0
        %v3276 = vadd.f32 0.0, %v3275
        %3277 = vmatmul.bf16.gmra.mxu0 %v3202
        %v3278 = vpop.f32.mrf.mxu0
        %v3279 = vadd.f32 0.0, %v3278
        %v3280 = vpop.f32.mrf.mxu0
        %v3281 = vadd.f32 0.0, %v3280
        %3282 = vmatmul.bf16.gmra.mxu0 %v3205
        %v3283 = vpop.f32.mrf.mxu0
        %v3284 = vadd.f32 0.0, %v3283
        %v3285 = vpop.f32.mrf.mxu0
        %v3286 = vadd.f32 0.0, %v3285
        %3287 = vmatmul.bf16.gmra.mxu0 %v3208
        %v3288 = vpop.f32.mrf.mxu0
        %v3289 = vadd.f32 0.0, %v3288
        %v3290 = vpop.f32.mrf.mxu0
        %v3291 = vadd.f32 0.0, %v3290
        %3292 = vmatmul.bf16.gmra.mxu0 %v3211
        %v3293 = vpop.f32.mrf.mxu0
        %v3294 = vadd.f32 0.0, %v3293
        %v3295 = vpop.f32.mrf.mxu0
        %v3296 = vadd.f32 0.0, %v3295
        %3297 = vmatmul.bf16.gmra.mxu0 %v3214
        %v3298 = vpop.f32.mrf.mxu0
        %v3299 = vadd.f32 0.0, %v3298
        %v3300 = vpop.f32.mrf.mxu0
        %v3301 = vadd.f32 0.0, %v3300
        %3302 = vmatmul.bf16.gmra.mxu0 %v3217
        %v3303 = vpop.f32.mrf.mxu0
        %v3304 = vadd.f32 0.0, %v3303
        %v3305 = vpop.f32.mrf.mxu0
        %v3306 = vadd.f32 0.0, %v3305
        %3307 = vmatmul.bf16.gmra.mxu0 %v3220
        %v3308 = vpop.f32.mrf.mxu0
        %v3309 = vadd.f32 0.0, %v3308
        %v3310 = vpop.f32.mrf.mxu0
        %v3311 = vadd.f32 0.0, %v3310
        %3312 = vmatmul.bf16.gmra.mxu0 %v3223
        %v3313 = vpop.f32.mrf.mxu0
        %v3314 = vadd.f32 0.0, %v3313
        %v3315 = vpop.f32.mrf.mxu0
        %v3316 = vadd.f32 0.0, %v3315
        %3317 = vdwg.mxu0
        %v3319 = vsel %vm3045, %v3110, 0
        %v3322 = vsel %vm3045, %v3111, 0
        %v3325 = vsel %vm3045, %v3112, 0
        %v3328 = vsel %vm3045, %v3113, 0
        %v3331 = vsel %vm3045, %v3114, 0
        %v3334 = vsel %vm3045, %v3115, 0
        %v3337 = vsel %vm3045, %v3116, 0
        %v3340 = vsel %vm3045, %v3117, 0
        %v3343 = vsel %vm3045, %v3118, 0
        %v3346 = vsel %vm3045, %v3119, 0
        %v3349 = vsel %vm3045, %v3120, 0
        %v3352 = vsel %vm3045, %v3121, 0
        %v3355 = vsel %vm3045, %v3122, 0
        %v3358 = vsel %vm3045, %v3123, 0
        %v3361 = vsel %vm3045, %v3124, 0
        %v3364 = vsel %vm3045, %v3125, 0
        %v3367 = vsel %vm3225, %v3126, 0
        %3369 = vmatpush.bf16.msra.mxu0 0
        %3370 = vmatpush.bf16.msra.mxu0 0
        %3371 = vmatpush.bf16.msra.mxu0 0
        %3372 = vmatpush.bf16.msra.mxu0 0
        %3373 = vmatpush.bf16.msra.mxu0 0
        %3374 = vmatpush.bf16.msra.mxu0 0
        %3375 = vmatpush.bf16.msra.mxu0 0
        %3376 = vmatpush.bf16.msra.mxu0 %v3367
        %3377 = vmatmul.bf16.gmra.mxu0 %v3319
        %v3378 = vpop.f32.mrf.mxu0
        %v3379 = vadd.f32 %v3239, %v3378
        %v3380 = vpop.f32.mrf.mxu0
        %v3381 = vadd.f32 %v3241, %v3380
        %3382 = vmatmul.bf16.gmra.mxu0 %v3322
        %v3383 = vpop.f32.mrf.mxu0
        %v3384 = vadd.f32 %v3244, %v3383
        %v3385 = vpop.f32.mrf.mxu0
        %v3386 = vadd.f32 %v3246, %v3385
        %3387 = vmatmul.bf16.gmra.mxu0 %v3325
        %v3388 = vpop.f32.mrf.mxu0
        %v3389 = vadd.f32 %v3249, %v3388
        %v3390 = vpop.f32.mrf.mxu0
        %v3391 = vadd.f32 %v3251, %v3390
        %3392 = vmatmul.bf16.gmra.mxu0 %v3328
        %v3393 = vpop.f32.mrf.mxu0
        %v3394 = vadd.f32 %v3254, %v3393
        %v3395 = vpop.f32.mrf.mxu0
        %v3396 = vadd.f32 %v3256, %v3395
        %3397 = vmatmul.bf16.gmra.mxu0 %v3331
        %v3398 = vpop.f32.mrf.mxu0
        %v3399 = vadd.f32 %v3259, %v3398
        %v3400 = vpop.f32.mrf.mxu0
        %v3401 = vadd.f32 %v3261, %v3400
        %3402 = vmatmul.bf16.gmra.mxu0 %v3334
        %v3403 = vpop.f32.mrf.mxu0
        %v3404 = vadd.f32 %v3264, %v3403
        %v3405 = vpop.f32.mrf.mxu0
        %v3406 = vadd.f32 %v3266, %v3405
        %3407 = vmatmul.bf16.gmra.mxu0 %v3337
        %v3408 = vpop.f32.mrf.mxu0
        %v3409 = vadd.f32 %v3269, %v3408
        %v3410 = vpop.f32.mrf.mxu0
        %v3411 = vadd.f32 %v3271, %v3410
        %3412 = vmatmul.bf16.gmra.mxu0 %v3340
        %v3413 = vpop.f32.mrf.mxu0
        %v3414 = vadd.f32 %v3274, %v3413
        %v3415 = vpop.f32.mrf.mxu0
        %v3416 = vadd.f32 %v3276, %v3415
        %3417 = vmatmul.bf16.gmra.mxu0 %v3343
        %v3418 = vpop.f32.mrf.mxu0
        %v3419 = vadd.f32 %v3279, %v3418
        %v3420 = vpop.f32.mrf.mxu0
        %v3421 = vadd.f32 %v3281, %v3420
        %3422 = vmatmul.bf16.gmra.mxu0 %v3346
        %v3423 = vpop.f32.mrf.mxu0
        %v3424 = vadd.f32 %v3284, %v3423
        %v3425 = vpop.f32.mrf.mxu0
        %v3426 = vadd.f32 %v3286, %v3425
        %3427 = vmatmul.bf16.gmra.mxu0 %v3349
        %v3428 = vpop.f32.mrf.mxu0
        %v3429 = vadd.f32 %v3289, %v3428
        %v3430 = vpop.f32.mrf.mxu0
        %v3431 = vadd.f32 %v3291, %v3430
        %3432 = vmatmul.bf16.gmra.mxu0 %v3352
        %v3433 = vpop.f32.mrf.mxu0
        %v3434 = vadd.f32 %v3294, %v3433
        %v3435 = vpop.f32.mrf.mxu0
        %v3436 = vadd.f32 %v3296, %v3435
        %3437 = vmatmul.bf16.gmra.mxu0 %v3355
        %v3438 = vpop.f32.mrf.mxu0
        %v3439 = vadd.f32 %v3299, %v3438
        %v3440 = vpop.f32.mrf.mxu0
        %v3441 = vadd.f32 %v3301, %v3440
        %3442 = vmatmul.bf16.gmra.mxu0 %v3358
        %v3443 = vpop.f32.mrf.mxu0
        %v3444 = vadd.f32 %v3304, %v3443
        %v3445 = vpop.f32.mrf.mxu0
        %v3446 = vadd.f32 %v3306, %v3445
        %3447 = vmatmul.bf16.gmra.mxu0 %v3361
        %v3448 = vpop.f32.mrf.mxu0
        %v3449 = vadd.f32 %v3309, %v3448
        %v3450 = vpop.f32.mrf.mxu0
        %v3451 = vadd.f32 %v3311, %v3450
        %3452 = vmatmul.bf16.gmra.mxu0 %v3364
        %v3453 = vpop.f32.mrf.mxu0
        %v3454 = vadd.f32 %v3314, %v3453
        %v3455 = vpop.f32.mrf.mxu0
        %v3456 = vadd.f32 %v3316, %v3455
        %3457 = vdwg.mxu0
        %v3458 = vld [vmem:[#allocation2 + $0x2] sm:$0xff]
        %v3459 = vld [vmem:[#allocation2 + $0xa] sm:$0xff]
        %v3460 = vld [vmem:[#allocation2 + $0x1a] sm:$0xff]
        %v3461 = vld [vmem:[#allocation2 + $0x22] sm:$0xff]
        %v3462 = vld [vmem:[#allocation2 + $0x32] sm:$0xff]
        %v3463 = vld [vmem:[#allocation2 + $0x3a] sm:$0xff]
        %v3464 = vld [vmem:[#allocation2 + $0x4a] sm:$0xff]
        %v3465 = vld [vmem:[#allocation2 + $0x52] sm:$0xff]
        %v3466 = vld [vmem:[#allocation2 + $0x62] sm:$0xff]
        %v3467 = vld [vmem:[#allocation2 + $0x6a] sm:$0xff]
        %v3468 = vld [vmem:[#allocation2 + $0x7a] sm:$0xff]
        %v3469 = vld [vmem:[#allocation2 + $0x82] sm:$0xff]
        %v3470 = vld [vmem:[#allocation2 + $0x92] sm:$0xff]
        %v3471 = vld [vmem:[#allocation2 + $0x9a] sm:$0xff]
        %v3472 = vld [vmem:[#allocation2 + $0xaa] sm:$0xff]
        %v3473 = vld [vmem:[#allocation2 + $0xb2] sm:$0xff]
        %v3474 = vld [vmem:[#allocation2 + $0xc2] sm:$0xff]
        %v3475 = vld [vmem:[#allocation2 + $0xca] sm:$0xff]
        %v3476 = vld [vmem:[#allocation2 + $0xda] sm:$0xff]
        %v3477 = vld [vmem:[#allocation2 + $0xe2] sm:$0xff]
        %v3478 = vld [vmem:[#allocation2 + $0xf2] sm:$0xff]
        %v3479 = vld [vmem:[#allocation2 + $0xfa] sm:$0xff]
        %v3480 = vld [vmem:[#allocation2 + $0x10a] sm:$0xff]
        %v3481 = vld [vmem:[#allocation2 + $0x112] sm:$0xff]
        %v3482 = vld [vmem:[#allocation2 + $0x122] sm:$0xff]
        %v3483 = vld [vmem:[#allocation2 + $0x12a] sm:$0xff]
        %v3484 = vld [vmem:[#allocation2 + $0x13a] sm:$0xff]
        %v3485 = vld [vmem:[#allocation2 + $0x142] sm:$0xff]
        %v3486 = vld [vmem:[#allocation2 + $0x152] sm:$0xff]
        %v3487 = vld [vmem:[#allocation2 + $0x15a] sm:$0xff]
        %v3488 = vld [vmem:[#allocation2 + $0x16a] sm:$0xff]
        %v3489 = vld [vmem:[#allocation2 + $0x172] sm:$0xff]
        %v3490 = vpack.c.bf16 %v3459, %v3458
        %v3491 = vpack.c.bf16 %v3461, %v3460
        %v3492 = vpack.c.bf16 %v3463, %v3462
        %v3493 = vpack.c.bf16 %v3465, %v3464
        %v3494 = vpack.c.bf16 %v3467, %v3466
        %v3495 = vpack.c.bf16 %v3469, %v3468
        %v3496 = vpack.c.bf16 %v3471, %v3470
        %v3497 = vpack.c.bf16 %v3473, %v3472
        %v3498 = vpack.c.bf16 %v3475, %v3474
        %v3499 = vpack.c.bf16 %v3477, %v3476
        %v3500 = vpack.c.bf16 %v3479, %v3478
        %v3501 = vpack.c.bf16 %v3481, %v3480
        %v3502 = vpack.c.bf16 %v3483, %v3482
        %v3503 = vpack.c.bf16 %v3485, %v3484
        %v3504 = vpack.c.bf16 %v3487, %v3486
        %v3505 = vpack.c.bf16 %v3489, %v3488
        %s3506 = scalar_lea.vmem %s5, 4
        %v3507 = vld [vmem:[%s3506] sm:$0x3]
        %v3509 = vsel %vm3045, %v3490, 0
        %v3512 = vsel %vm3045, %v3491, 0
        %v3515 = vsel %vm3045, %v3492, 0
        %v3518 = vsel %vm3045, %v3493, 0
        %v3521 = vsel %vm3045, %v3494, 0
        %v3524 = vsel %vm3045, %v3495, 0
        %v3527 = vsel %vm3045, %v3496, 0
        %v3530 = vsel %vm3045, %v3497, 0
        %v3533 = vsel %vm3045, %v3498, 0
        %v3536 = vsel %vm3045, %v3499, 0
        %v3539 = vsel %vm3045, %v3500, 0
        %v3542 = vsel %vm3045, %v3501, 0
        %v3545 = vsel %vm3045, %v3502, 0
        %v3548 = vsel %vm3045, %v3503, 0
        %v3551 = vsel %vm3045, %v3504, 0
        %v3554 = vsel %vm3045, %v3505, 0
        %v3557 = vsel %vm3225, %v3507, 0
        %3559 = vmatpush.bf16.msra.mxu0 0
        %3560 = vmatpush.bf16.msra.mxu0 0
        %3561 = vmatpush.bf16.msra.mxu0 0
        %3562 = vmatpush.bf16.msra.mxu0 0
        %3563 = vmatpush.bf16.msra.mxu0 0
        %3564 = vmatpush.bf16.msra.mxu0 0
        %3565 = vmatpush.bf16.msra.mxu0 0
        %3566 = vmatpush.bf16.msra.mxu0 %v3557
        %3567 = vmatmul.bf16.gmra.mxu0 %v3509
        %v3568 = vpop.f32.mrf.mxu0
        %v3569 = vadd.f32 0.0, %v3568
        %v3570 = vpop.f32.mrf.mxu0
        %v3571 = vadd.f32 0.0, %v3570
        %3572 = vmatmul.bf16.gmra.mxu0 %v3512
        %v3573 = vpop.f32.mrf.mxu0
        %v3574 = vadd.f32 0.0, %v3573
        %v3575 = vpop.f32.mrf.mxu0
        %v3576 = vadd.f32 0.0, %v3575
        %3577 = vmatmul.bf16.gmra.mxu0 %v3515
        %v3578 = vpop.f32.mrf.mxu0
        %v3579 = vadd.f32 0.0, %v3578
        %v3580 = vpop.f32.mrf.mxu0
        %v3581 = vadd.f32 0.0, %v3580
        %3582 = vmatmul.bf16.gmra.mxu0 %v3518
        %v3583 = vpop.f32.mrf.mxu0
        %v3584 = vadd.f32 0.0, %v3583
        %v3585 = vpop.f32.mrf.mxu0
        %v3586 = vadd.f32 0.0, %v3585
        %3587 = vmatmul.bf16.gmra.mxu0 %v3521
        %v3588 = vpop.f32.mrf.mxu0
        %v3589 = vadd.f32 0.0, %v3588
        %v3590 = vpop.f32.mrf.mxu0
        %v3591 = vadd.f32 0.0, %v3590
        %3592 = vmatmul.bf16.gmra.mxu0 %v3524
        %v3593 = vpop.f32.mrf.mxu0
        %v3594 = vadd.f32 0.0, %v3593
        %v3595 = vpop.f32.mrf.mxu0
        %v3596 = vadd.f32 0.0, %v3595
        %3597 = vmatmul.bf16.gmra.mxu0 %v3527
        %v3598 = vpop.f32.mrf.mxu0
        %v3599 = vadd.f32 0.0, %v3598
        %v3600 = vpop.f32.mrf.mxu0
        %v3601 = vadd.f32 0.0, %v3600
        %3602 = vmatmul.bf16.gmra.mxu0 %v3530
        %v3603 = vpop.f32.mrf.mxu0
        %v3604 = vadd.f32 0.0, %v3603
        %v3605 = vpop.f32.mrf.mxu0
        %v3606 = vadd.f32 0.0, %v3605
        %3607 = vmatmul.bf16.gmra.mxu0 %v3533
        %v3608 = vpop.f32.mrf.mxu0
        %v3609 = vadd.f32 0.0, %v3608
        %v3610 = vpop.f32.mrf.mxu0
        %v3611 = vadd.f32 0.0, %v3610
        %3612 = vmatmul.bf16.gmra.mxu0 %v3536
        %v3613 = vpop.f32.mrf.mxu0
        %v3614 = vadd.f32 0.0, %v3613
        %v3615 = vpop.f32.mrf.mxu0
        %v3616 = vadd.f32 0.0, %v3615
        %3617 = vmatmul.bf16.gmra.mxu0 %v3539
        %v3618 = vpop.f32.mrf.mxu0
        %v3619 = vadd.f32 0.0, %v3618
        %v3620 = vpop.f32.mrf.mxu0
        %v3621 = vadd.f32 0.0, %v3620
        %3622 = vmatmul.bf16.gmra.mxu0 %v3542
        %v3623 = vpop.f32.mrf.mxu0
        %v3624 = vadd.f32 0.0, %v3623
        %v3625 = vpop.f32.mrf.mxu0
        %v3626 = vadd.f32 0.0, %v3625
        %3627 = vmatmul.bf16.gmra.mxu0 %v3545
        %v3628 = vpop.f32.mrf.mxu0
        %v3629 = vadd.f32 0.0, %v3628
        %v3630 = vpop.f32.mrf.mxu0
        %v3631 = vadd.f32 0.0, %v3630
        %3632 = vmatmul.bf16.gmra.mxu0 %v3548
        %v3633 = vpop.f32.mrf.mxu0
        %v3634 = vadd.f32 0.0, %v3633
        %v3635 = vpop.f32.mrf.mxu0
        %v3636 = vadd.f32 0.0, %v3635
        %3637 = vmatmul.bf16.gmra.mxu0 %v3551
        %v3638 = vpop.f32.mrf.mxu0
        %v3639 = vadd.f32 0.0, %v3638
        %v3640 = vpop.f32.mrf.mxu0
        %v3641 = vadd.f32 0.0, %v3640
        %3642 = vmatmul.bf16.gmra.mxu0 %v3554
        %v3643 = vpop.f32.mrf.mxu0
        %v3644 = vadd.f32 0.0, %v3643
        %v3645 = vpop.f32.mrf.mxu0
        %v3646 = vadd.f32 0.0, %v3645
        %3647 = vdwg.mxu0
        %v3648 = vadd.f32 %v3379, %v3569
        %v3649 = vadd.f32 %v3381, %v3571
        %v3650 = vadd.f32 %v3384, %v3574
        %v3651 = vadd.f32 %v3386, %v3576
        %v3652 = vadd.f32 %v3389, %v3579
        %v3653 = vadd.f32 %v3391, %v3581
        %v3654 = vadd.f32 %v3394, %v3584
        %v3655 = vadd.f32 %v3396, %v3586
        %v3656 = vadd.f32 %v3399, %v3589
        %v3657 = vadd.f32 %v3401, %v3591
        %v3658 = vadd.f32 %v3404, %v3594
        %v3659 = vadd.f32 %v3406, %v3596
        %v3660 = vadd.f32 %v3409, %v3599
        %v3661 = vadd.f32 %v3411, %v3601
        %v3662 = vadd.f32 %v3414, %v3604
        %v3663 = vadd.f32 %v3416, %v3606
        %v3664 = vadd.f32 %v3419, %v3609
        %v3665 = vadd.f32 %v3421, %v3611
        %v3666 = vadd.f32 %v3424, %v3614
        %v3667 = vadd.f32 %v3426, %v3616
        %v3668 = vadd.f32 %v3429, %v3619
        %v3669 = vadd.f32 %v3431, %v3621
        %v3670 = vadd.f32 %v3434, %v3624
        %v3671 = vadd.f32 %v3436, %v3626
        %v3672 = vadd.f32 %v3439, %v3629
        %v3673 = vadd.f32 %v3441, %v3631
        %v3674 = vadd.f32 %v3444, %v3634
        %v3675 = vadd.f32 %v3446, %v3636
        %v3676 = vadd.f32 %v3449, %v3639
        %v3677 = vadd.f32 %v3451, %v3641
        %v3678 = vadd.f32 %v3454, %v3644
        %v3679 = vadd.f32 %v3456, %v3646
        %v3680 = vld [vmem:[%s860] sm:$0xff]
        %v3681 = vld [vmem:[%s860 + $0x8] sm:$0xff]
        %v3682 = vld [vmem:[%s860 + $0x18] sm:$0xff]
        %v3683 = vld [vmem:[%s860 + $0x20] sm:$0xff]
        %v3684 = vld [vmem:[%s860 + $0x30] sm:$0xff]
        %v3685 = vld [vmem:[%s860 + $0x38] sm:$0xff]
        %v3686 = vld [vmem:[%s860 + $0x48] sm:$0xff]
        %v3687 = vld [vmem:[%s860 + $0x50] sm:$0xff]
        %v3688 = vld [vmem:[%s860 + $0x60] sm:$0xff]
        %v3689 = vld [vmem:[%s860 + $0x68] sm:$0xff]
        %v3690 = vld [vmem:[%s860 + $0x78] sm:$0xff]
        %v3691 = vld [vmem:[%s860 + $0x80] sm:$0xff]
        %v3692 = vld [vmem:[%s860 + $0x90] sm:$0xff]
        %v3693 = vld [vmem:[%s860 + $0x98] sm:$0xff]
        %v3694 = vld [vmem:[%s860 + $0xa8] sm:$0xff]
        %v3695 = vld [vmem:[%s860 + $0xb0] sm:$0xff]
        %v3696 = vld [vmem:[%s860 + $0xc0] sm:$0xff]
        %v3697 = vld [vmem:[%s860 + $0xc8] sm:$0xff]
        %v3698 = vld [vmem:[%s860 + $0xd8] sm:$0xff]
        %v3699 = vld [vmem:[%s860 + $0xe0] sm:$0xff]
        %v3700 = vld [vmem:[%s860 + $0xf0] sm:$0xff]
        %v3701 = vld [vmem:[%s860 + $0xf8] sm:$0xff]
        %v3702 = vld [vmem:[%s860 + $0x108] sm:$0xff]
        %v3703 = vld [vmem:[%s860 + $0x110] sm:$0xff]
        %v3704 = vld [vmem:[%s860 + $0x120] sm:$0xff]
        %v3705 = vld [vmem:[%s860 + $0x128] sm:$0xff]
        %v3706 = vld [vmem:[%s860 + $0x138] sm:$0xff]
        %v3707 = vld [vmem:[%s860 + $0x140] sm:$0xff]
        %v3708 = vld [vmem:[%s860 + $0x150] sm:$0xff]
        %v3709 = vld [vmem:[%s860 + $0x158] sm:$0xff]
        %v3710 = vld [vmem:[%s860 + $0x168] sm:$0xff]
        %v3711 = vld [vmem:[%s860 + $0x170] sm:$0xff]
        %v3712 = vpack.c.bf16 %v3681, %v3680
        %v3713 = vpack.c.bf16 %v3683, %v3682
        %v3714 = vpack.c.bf16 %v3685, %v3684
        %v3715 = vpack.c.bf16 %v3687, %v3686
        %v3716 = vpack.c.bf16 %v3689, %v3688
        %v3717 = vpack.c.bf16 %v3691, %v3690
        %v3718 = vpack.c.bf16 %v3693, %v3692
        %v3719 = vpack.c.bf16 %v3695, %v3694
        %v3720 = vpack.c.bf16 %v3697, %v3696
        %v3721 = vpack.c.bf16 %v3699, %v3698
        %v3722 = vpack.c.bf16 %v3701, %v3700
        %v3723 = vpack.c.bf16 %v3703, %v3702
        %v3724 = vpack.c.bf16 %v3705, %v3704
        %v3725 = vpack.c.bf16 %v3707, %v3706
        %v3726 = vpack.c.bf16 %v3709, %v3708
        %v3727 = vpack.c.bf16 %v3711, %v3710
        %s3728 = scalar_lea.vmem %s5, 6
        %v3729 = vld [vmem:[%s3728] sm:$0x3]
        %v3731 = vsel %vm3045, %v3712, 0
        %v3734 = vsel %vm3045, %v3713, 0
        %v3737 = vsel %vm3045, %v3714, 0
        %v3740 = vsel %vm3045, %v3715, 0
        %v3743 = vsel %vm3045, %v3716, 0
        %v3746 = vsel %vm3045, %v3717, 0
        %v3749 = vsel %vm3045, %v3718, 0
        %v3752 = vsel %vm3045, %v3719, 0
        %v3755 = vsel %vm3045, %v3720, 0
        %v3758 = vsel %vm3045, %v3721, 0
        %v3761 = vsel %vm3045, %v3722, 0
        %v3764 = vsel %vm3045, %v3723, 0
        %v3767 = vsel %vm3045, %v3724, 0
        %v3770 = vsel %vm3045, %v3725, 0
        %v3773 = vsel %vm3045, %v3726, 0
        %v3776 = vsel %vm3045, %v3727, 0
        %v3779 = vsel %vm3225, %v3729, 0
        %3781 = vmatpush.bf16.msra.mxu0 0
        %3782 = vmatpush.bf16.msra.mxu0 0
        %3783 = vmatpush.bf16.msra.mxu0 0
        %3784 = vmatpush.bf16.msra.mxu0 0
        %3785 = vmatpush.bf16.msra.mxu0 0
        %3786 = vmatpush.bf16.msra.mxu0 0
        %3787 = vmatpush.bf16.msra.mxu0 0
        %3788 = vmatpush.bf16.msra.mxu0 %v3779
        %3789 = vmatmul.bf16.gmra.mxu0 %v3731
        %v3790 = vpop.f32.mrf.mxu0
        %v3791 = vadd.f32 0.0, %v3790
        %v3792 = vpop.f32.mrf.mxu0
        %v3793 = vadd.f32 0.0, %v3792
        %3794 = vmatmul.bf16.gmra.mxu0 %v3734
        %v3795 = vpop.f32.mrf.mxu0
        %v3796 = vadd.f32 0.0, %v3795
        %v3797 = vpop.f32.mrf.mxu0
        %v3798 = vadd.f32 0.0, %v3797
        %3799 = vmatmul.bf16.gmra.mxu0 %v3737
        %v3800 = vpop.f32.mrf.mxu0
        %v3801 = vadd.f32 0.0, %v3800
        %v3802 = vpop.f32.mrf.mxu0
        %v3803 = vadd.f32 0.0, %v3802
        %3804 = vmatmul.bf16.gmra.mxu0 %v3740
        %v3805 = vpop.f32.mrf.mxu0
        %v3806 = vadd.f32 0.0, %v3805
        %v3807 = vpop.f32.mrf.mxu0
        %v3808 = vadd.f32 0.0, %v3807
        %3809 = vmatmul.bf16.gmra.mxu0 %v3743
        %v3810 = vpop.f32.mrf.mxu0
        %v3811 = vadd.f32 0.0, %v3810
        %v3812 = vpop.f32.mrf.mxu0
        %v3813 = vadd.f32 0.0, %v3812
        %3814 = vmatmul.bf16.gmra.mxu0 %v3746
        %v3815 = vpop.f32.mrf.mxu0
        %v3816 = vadd.f32 0.0, %v3815
        %v3817 = vpop.f32.mrf.mxu0
        %v3818 = vadd.f32 0.0, %v3817
        %3819 = vmatmul.bf16.gmra.mxu0 %v3749
        %v3820 = vpop.f32.mrf.mxu0
        %v3821 = vadd.f32 0.0, %v3820
        %v3822 = vpop.f32.mrf.mxu0
        %v3823 = vadd.f32 0.0, %v3822
        %3824 = vmatmul.bf16.gmra.mxu0 %v3752
        %v3825 = vpop.f32.mrf.mxu0
        %v3826 = vadd.f32 0.0, %v3825
        %v3827 = vpop.f32.mrf.mxu0
        %v3828 = vadd.f32 0.0, %v3827
        %3829 = vmatmul.bf16.gmra.mxu0 %v3755
        %v3830 = vpop.f32.mrf.mxu0
        %v3831 = vadd.f32 0.0, %v3830
        %v3832 = vpop.f32.mrf.mxu0
        %v3833 = vadd.f32 0.0, %v3832
        %3834 = vmatmul.bf16.gmra.mxu0 %v3758
        %v3835 = vpop.f32.mrf.mxu0
        %v3836 = vadd.f32 0.0, %v3835
        %v3837 = vpop.f32.mrf.mxu0
        %v3838 = vadd.f32 0.0, %v3837
        %3839 = vmatmul.bf16.gmra.mxu0 %v3761
        %v3840 = vpop.f32.mrf.mxu0
        %v3841 = vadd.f32 0.0, %v3840
        %v3842 = vpop.f32.mrf.mxu0
        %v3843 = vadd.f32 0.0, %v3842
        %3844 = vmatmul.bf16.gmra.mxu0 %v3764
        %v3845 = vpop.f32.mrf.mxu0
        %v3846 = vadd.f32 0.0, %v3845
        %v3847 = vpop.f32.mrf.mxu0
        %v3848 = vadd.f32 0.0, %v3847
        %3849 = vmatmul.bf16.gmra.mxu0 %v3767
        %v3850 = vpop.f32.mrf.mxu0
        %v3851 = vadd.f32 0.0, %v3850
        %v3852 = vpop.f32.mrf.mxu0
        %v3853 = vadd.f32 0.0, %v3852
        %3854 = vmatmul.bf16.gmra.mxu0 %v3770
        %v3855 = vpop.f32.mrf.mxu0
        %v3856 = vadd.f32 0.0, %v3855
        %v3857 = vpop.f32.mrf.mxu0
        %v3858 = vadd.f32 0.0, %v3857
        %3859 = vmatmul.bf16.gmra.mxu0 %v3773
        %v3860 = vpop.f32.mrf.mxu0
        %v3861 = vadd.f32 0.0, %v3860
        %v3862 = vpop.f32.mrf.mxu0
        %v3863 = vadd.f32 0.0, %v3862
        %3864 = vmatmul.bf16.gmra.mxu0 %v3776
        %v3865 = vpop.f32.mrf.mxu0
        %v3866 = vadd.f32 0.0, %v3865
        %v3867 = vpop.f32.mrf.mxu0
        %v3868 = vadd.f32 0.0, %v3867
        %3869 = vdwg.mxu0
        %v3870 = vadd.f32 %v3648, %v3791
        %v3871 = vadd.f32 %v3649, %v3793
        %v3872 = vadd.f32 %v3650, %v3796
        %v3873 = vadd.f32 %v3651, %v3798
        %v3874 = vadd.f32 %v3652, %v3801
        %v3875 = vadd.f32 %v3653, %v3803
        %v3876 = vadd.f32 %v3654, %v3806
        %v3877 = vadd.f32 %v3655, %v3808
        %v3878 = vadd.f32 %v3656, %v3811
        %v3879 = vadd.f32 %v3657, %v3813
        %v3880 = vadd.f32 %v3658, %v3816
        %v3881 = vadd.f32 %v3659, %v3818
        %v3882 = vadd.f32 %v3660, %v3821
        %v3883 = vadd.f32 %v3661, %v3823
        %v3884 = vadd.f32 %v3662, %v3826
        %v3885 = vadd.f32 %v3663, %v3828
        %v3886 = vadd.f32 %v3664, %v3831
        %v3887 = vadd.f32 %v3665, %v3833
        %v3888 = vadd.f32 %v3666, %v3836
        %v3889 = vadd.f32 %v3667, %v3838
        %v3890 = vadd.f32 %v3668, %v3841
        %v3891 = vadd.f32 %v3669, %v3843
        %v3892 = vadd.f32 %v3670, %v3846
        %v3893 = vadd.f32 %v3671, %v3848
        %v3894 = vadd.f32 %v3672, %v3851
        %v3895 = vadd.f32 %v3673, %v3853
        %v3896 = vadd.f32 %v3674, %v3856
        %v3897 = vadd.f32 %v3675, %v3858
        %v3898 = vadd.f32 %v3676, %v3861
        %v3899 = vadd.f32 %v3677, %v3863
        %v3900 = vadd.f32 %v3678, %v3866
        %v3901 = vadd.f32 %v3679, %v3868
        %v3902 = vld [vmem:[%s860 + $0x1] sm:$0xff]
        %v3903 = vld [vmem:[%s860 + $0x9] sm:$0xff]
        %v3904 = vld [vmem:[%s860 + $0x19] sm:$0xff]
        %v3905 = vld [vmem:[%s860 + $0x21] sm:$0xff]
        %v3906 = vld [vmem:[%s860 + $0x31] sm:$0xff]
        %v3907 = vld [vmem:[%s860 + $0x39] sm:$0xff]
        %v3908 = vld [vmem:[%s860 + $0x49] sm:$0xff]
        %v3909 = vld [vmem:[%s860 + $0x51] sm:$0xff]
        %v3910 = vld [vmem:[%s860 + $0x61] sm:$0xff]
        %v3911 = vld [vmem:[%s860 + $0x69] sm:$0xff]
        %v3912 = vld [vmem:[%s860 + $0x79] sm:$0xff]
        %v3913 = vld [vmem:[%s860 + $0x81] sm:$0xff]
        %v3914 = vld [vmem:[%s860 + $0x91] sm:$0xff]
        %v3915 = vld [vmem:[%s860 + $0x99] sm:$0xff]
        %v3916 = vld [vmem:[%s860 + $0xa9] sm:$0xff]
        %v3917 = vld [vmem:[%s860 + $0xb1] sm:$0xff]
        %v3918 = vld [vmem:[%s860 + $0xc1] sm:$0xff]
        %v3919 = vld [vmem:[%s860 + $0xc9] sm:$0xff]
        %v3920 = vld [vmem:[%s860 + $0xd9] sm:$0xff]
        %v3921 = vld [vmem:[%s860 + $0xe1] sm:$0xff]
        %v3922 = vld [vmem:[%s860 + $0xf1] sm:$0xff]
        %v3923 = vld [vmem:[%s860 + $0xf9] sm:$0xff]
        %v3924 = vld [vmem:[%s860 + $0x109] sm:$0xff]
        %v3925 = vld [vmem:[%s860 + $0x111] sm:$0xff]
        %v3926 = vld [vmem:[%s860 + $0x121] sm:$0xff]
        %v3927 = vld [vmem:[%s860 + $0x129] sm:$0xff]
        %v3928 = vld [vmem:[%s860 + $0x139] sm:$0xff]
        %v3929 = vld [vmem:[%s860 + $0x141] sm:$0xff]
        %v3930 = vld [vmem:[%s860 + $0x151] sm:$0xff]
        %v3931 = vld [vmem:[%s860 + $0x159] sm:$0xff]
        %v3932 = vld [vmem:[%s860 + $0x169] sm:$0xff]
        %v3933 = vld [vmem:[%s860 + $0x171] sm:$0xff]
        %v3934 = vpack.c.bf16 %v3903, %v3902
        %v3935 = vpack.c.bf16 %v3905, %v3904
        %v3936 = vpack.c.bf16 %v3907, %v3906
        %v3937 = vpack.c.bf16 %v3909, %v3908
        %v3938 = vpack.c.bf16 %v3911, %v3910
        %v3939 = vpack.c.bf16 %v3913, %v3912
        %v3940 = vpack.c.bf16 %v3915, %v3914
        %v3941 = vpack.c.bf16 %v3917, %v3916
        %v3942 = vpack.c.bf16 %v3919, %v3918
        %v3943 = vpack.c.bf16 %v3921, %v3920
        %v3944 = vpack.c.bf16 %v3923, %v3922
        %v3945 = vpack.c.bf16 %v3925, %v3924
        %v3946 = vpack.c.bf16 %v3927, %v3926
        %v3947 = vpack.c.bf16 %v3929, %v3928
        %v3948 = vpack.c.bf16 %v3931, %v3930
        %v3949 = vpack.c.bf16 %v3933, %v3932
        %s3950 = scalar_lea.vmem %s5, 8
        %v3951 = vld [vmem:[%s3950] sm:$0x3]
        %v3953 = vsel %vm3045, %v3934, 0
        %v3956 = vsel %vm3045, %v3935, 0
        %v3959 = vsel %vm3045, %v3936, 0
        %v3962 = vsel %vm3045, %v3937, 0
        %v3965 = vsel %vm3045, %v3938, 0
        %v3968 = vsel %vm3045, %v3939, 0
        %v3971 = vsel %vm3045, %v3940, 0
        %v3974 = vsel %vm3045, %v3941, 0
        %v3977 = vsel %vm3045, %v3942, 0
        %v3980 = vsel %vm3045, %v3943, 0
        %v3983 = vsel %vm3045, %v3944, 0
        %v3986 = vsel %vm3045, %v3945, 0
        %v3989 = vsel %vm3045, %v3946, 0
        %v3992 = vsel %vm3045, %v3947, 0
        %v3995 = vsel %vm3045, %v3948, 0
        %v3998 = vsel %vm3045, %v3949, 0
        %v4001 = vsel %vm3225, %v3951, 0
        %4003 = vmatpush.bf16.msra.mxu0 0
        %4004 = vmatpush.bf16.msra.mxu0 0
        %4005 = vmatpush.bf16.msra.mxu0 0
        %4006 = vmatpush.bf16.msra.mxu0 0
        %4007 = vmatpush.bf16.msra.mxu0 0
        %4008 = vmatpush.bf16.msra.mxu0 0
        %4009 = vmatpush.bf16.msra.mxu0 0
        %4010 = vmatpush.bf16.msra.mxu0 %v4001
        %4011 = vmatmul.bf16.gmra.mxu0 %v3953
        %v4012 = vpop.f32.mrf.mxu0
        %v4013 = vadd.f32 0.0, %v4012
        %v4014 = vpop.f32.mrf.mxu0
        %v4015 = vadd.f32 0.0, %v4014
        %4016 = vmatmul.bf16.gmra.mxu0 %v3956
        %v4017 = vpop.f32.mrf.mxu0
        %v4018 = vadd.f32 0.0, %v4017
        %v4019 = vpop.f32.mrf.mxu0
        %v4020 = vadd.f32 0.0, %v4019
        %4021 = vmatmul.bf16.gmra.mxu0 %v3959
        %v4022 = vpop.f32.mrf.mxu0
        %v4023 = vadd.f32 0.0, %v4022
        %v4024 = vpop.f32.mrf.mxu0
        %v4025 = vadd.f32 0.0, %v4024
        %4026 = vmatmul.bf16.gmra.mxu0 %v3962
        %v4027 = vpop.f32.mrf.mxu0
        %v4028 = vadd.f32 0.0, %v4027
        %v4029 = vpop.f32.mrf.mxu0
        %v4030 = vadd.f32 0.0, %v4029
        %4031 = vmatmul.bf16.gmra.mxu0 %v3965
        %v4032 = vpop.f32.mrf.mxu0
        %v4033 = vadd.f32 0.0, %v4032
        %v4034 = vpop.f32.mrf.mxu0
        %v4035 = vadd.f32 0.0, %v4034
        %4036 = vmatmul.bf16.gmra.mxu0 %v3968
        %v4037 = vpop.f32.mrf.mxu0
        %v4038 = vadd.f32 0.0, %v4037
        %v4039 = vpop.f32.mrf.mxu0
        %v4040 = vadd.f32 0.0, %v4039
        %4041 = vmatmul.bf16.gmra.mxu0 %v3971
        %v4042 = vpop.f32.mrf.mxu0
        %v4043 = vadd.f32 0.0, %v4042
        %v4044 = vpop.f32.mrf.mxu0
        %v4045 = vadd.f32 0.0, %v4044
        %4046 = vmatmul.bf16.gmra.mxu0 %v3974
        %v4047 = vpop.f32.mrf.mxu0
        %v4048 = vadd.f32 0.0, %v4047
        %v4049 = vpop.f32.mrf.mxu0
        %v4050 = vadd.f32 0.0, %v4049
        %4051 = vmatmul.bf16.gmra.mxu0 %v3977
        %v4052 = vpop.f32.mrf.mxu0
        %v4053 = vadd.f32 0.0, %v4052
        %v4054 = vpop.f32.mrf.mxu0
        %v4055 = vadd.f32 0.0, %v4054
        %4056 = vmatmul.bf16.gmra.mxu0 %v3980
        %v4057 = vpop.f32.mrf.mxu0
        %v4058 = vadd.f32 0.0, %v4057
        %v4059 = vpop.f32.mrf.mxu0
        %v4060 = vadd.f32 0.0, %v4059
        %4061 = vmatmul.bf16.gmra.mxu0 %v3983
        %v4062 = vpop.f32.mrf.mxu0
        %v4063 = vadd.f32 0.0, %v4062
        %v4064 = vpop.f32.mrf.mxu0
        %v4065 = vadd.f32 0.0, %v4064
        %4066 = vmatmul.bf16.gmra.mxu0 %v3986
        %v4067 = vpop.f32.mrf.mxu0
        %v4068 = vadd.f32 0.0, %v4067
        %v4069 = vpop.f32.mrf.mxu0
        %v4070 = vadd.f32 0.0, %v4069
        %4071 = vmatmul.bf16.gmra.mxu0 %v3989
        %v4072 = vpop.f32.mrf.mxu0
        %v4073 = vadd.f32 0.0, %v4072
        %v4074 = vpop.f32.mrf.mxu0
        %v4075 = vadd.f32 0.0, %v4074
        %4076 = vmatmul.bf16.gmra.mxu0 %v3992
        %v4077 = vpop.f32.mrf.mxu0
        %v4078 = vadd.f32 0.0, %v4077
        %v4079 = vpop.f32.mrf.mxu0
        %v4080 = vadd.f32 0.0, %v4079
        %4081 = vmatmul.bf16.gmra.mxu0 %v3995
        %v4082 = vpop.f32.mrf.mxu0
        %v4083 = vadd.f32 0.0, %v4082
        %v4084 = vpop.f32.mrf.mxu0
        %v4085 = vadd.f32 0.0, %v4084
        %4086 = vmatmul.bf16.gmra.mxu0 %v3998
        %v4087 = vpop.f32.mrf.mxu0
        %v4088 = vadd.f32 0.0, %v4087
        %v4089 = vpop.f32.mrf.mxu0
        %v4090 = vadd.f32 0.0, %v4089
        %4091 = vdwg.mxu0
        %v4092 = vadd.f32 %v3870, %v4013
        %v4093 = vadd.f32 %v3871, %v4015
        %v4094 = vadd.f32 %v3872, %v4018
        %v4095 = vadd.f32 %v3873, %v4020
        %v4096 = vadd.f32 %v3874, %v4023
        %v4097 = vadd.f32 %v3875, %v4025
        %v4098 = vadd.f32 %v3876, %v4028
        %v4099 = vadd.f32 %v3877, %v4030
        %v4100 = vadd.f32 %v3878, %v4033
        %v4101 = vadd.f32 %v3879, %v4035
        %v4102 = vadd.f32 %v3880, %v4038
        %v4103 = vadd.f32 %v3881, %v4040
        %v4104 = vadd.f32 %v3882, %v4043
        %v4105 = vadd.f32 %v3883, %v4045
        %v4106 = vadd.f32 %v3884, %v4048
        %v4107 = vadd.f32 %v3885, %v4050
        %v4108 = vadd.f32 %v3886, %v4053
        %v4109 = vadd.f32 %v3887, %v4055
        %v4110 = vadd.f32 %v3888, %v4058
        %v4111 = vadd.f32 %v3889, %v4060
        %v4112 = vadd.f32 %v3890, %v4063
        %v4113 = vadd.f32 %v3891, %v4065
        %v4114 = vadd.f32 %v3892, %v4068
        %v4115 = vadd.f32 %v3893, %v4070
        %v4116 = vadd.f32 %v3894, %v4073
        %v4117 = vadd.f32 %v3895, %v4075
        %v4118 = vadd.f32 %v3896, %v4078
        %v4119 = vadd.f32 %v3897, %v4080
        %v4120 = vadd.f32 %v3898, %v4083
        %v4121 = vadd.f32 %v3899, %v4085
        %v4122 = vadd.f32 %v3900, %v4088
        %v4123 = vadd.f32 %v3901, %v4090
        %v4124 = vld [vmem:[%s860 + $0x2] sm:$0xff]
        %v4125 = vld [vmem:[%s860 + $0xa] sm:$0xff]
        %v4126 = vld [vmem:[%s860 + $0x1a] sm:$0xff]
        %v4127 = vld [vmem:[%s860 + $0x22] sm:$0xff]
        %v4128 = vld [vmem:[%s860 + $0x32] sm:$0xff]
        %v4129 = vld [vmem:[%s860 + $0x3a] sm:$0xff]
        %v4130 = vld [vmem:[%s860 + $0x4a] sm:$0xff]
        %v4131 = vld [vmem:[%s860 + $0x52] sm:$0xff]
        %v4132 = vld [vmem:[%s860 + $0x62] sm:$0xff]
        %v4133 = vld [vmem:[%s860 + $0x6a] sm:$0xff]
        %v4134 = vld [vmem:[%s860 + $0x7a] sm:$0xff]
        %v4135 = vld [vmem:[%s860 + $0x82] sm:$0xff]
        %v4136 = vld [vmem:[%s860 + $0x92] sm:$0xff]
        %v4137 = vld [vmem:[%s860 + $0x9a] sm:$0xff]
        %v4138 = vld [vmem:[%s860 + $0xaa] sm:$0xff]
        %v4139 = vld [vmem:[%s860 + $0xb2] sm:$0xff]
        %v4140 = vld [vmem:[%s860 + $0xc2] sm:$0xff]
        %v4141 = vld [vmem:[%s860 + $0xca] sm:$0xff]
        %v4142 = vld [vmem:[%s860 + $0xda] sm:$0xff]
        %v4143 = vld [vmem:[%s860 + $0xe2] sm:$0xff]
        %v4144 = vld [vmem:[%s860 + $0xf2] sm:$0xff]
        %v4145 = vld [vmem:[%s860 + $0xfa] sm:$0xff]
        %v4146 = vld [vmem:[%s860 + $0x10a] sm:$0xff]
        %v4147 = vld [vmem:[%s860 + $0x112] sm:$0xff]
        %v4148 = vld [vmem:[%s860 + $0x122] sm:$0xff]
        %v4149 = vld [vmem:[%s860 + $0x12a] sm:$0xff]
        %v4150 = vld [vmem:[%s860 + $0x13a] sm:$0xff]
        %v4151 = vld [vmem:[%s860 + $0x142] sm:$0xff]
        %v4152 = vld [vmem:[%s860 + $0x152] sm:$0xff]
        %v4153 = vld [vmem:[%s860 + $0x15a] sm:$0xff]
        %v4154 = vld [vmem:[%s860 + $0x16a] sm:$0xff]
        %v4155 = vld [vmem:[%s860 + $0x172] sm:$0xff]
        %v4156 = vpack.c.bf16 %v4125, %v4124
        %v4157 = vpack.c.bf16 %v4127, %v4126
        %v4158 = vpack.c.bf16 %v4129, %v4128
        %v4159 = vpack.c.bf16 %v4131, %v4130
        %v4160 = vpack.c.bf16 %v4133, %v4132
        %v4161 = vpack.c.bf16 %v4135, %v4134
        %v4162 = vpack.c.bf16 %v4137, %v4136
        %v4163 = vpack.c.bf16 %v4139, %v4138
        %v4164 = vpack.c.bf16 %v4141, %v4140
        %v4165 = vpack.c.bf16 %v4143, %v4142
        %v4166 = vpack.c.bf16 %v4145, %v4144
        %v4167 = vpack.c.bf16 %v4147, %v4146
        %v4168 = vpack.c.bf16 %v4149, %v4148
        %v4169 = vpack.c.bf16 %v4151, %v4150
        %v4170 = vpack.c.bf16 %v4153, %v4152
        %v4171 = vpack.c.bf16 %v4155, %v4154
        %s4172 = scalar_lea.vmem %s5, 10
        %v4173 = vld [vmem:[%s4172] sm:$0x3]
        %v4175 = vsel %vm3045, %v4156, 0
        %v4178 = vsel %vm3045, %v4157, 0
        %v4181 = vsel %vm3045, %v4158, 0
        %v4184 = vsel %vm3045, %v4159, 0
        %v4187 = vsel %vm3045, %v4160, 0
        %v4190 = vsel %vm3045, %v4161, 0
        %v4193 = vsel %vm3045, %v4162, 0
        %v4196 = vsel %vm3045, %v4163, 0
        %v4199 = vsel %vm3045, %v4164, 0
        %v4202 = vsel %vm3045, %v4165, 0
        %v4205 = vsel %vm3045, %v4166, 0
        %v4208 = vsel %vm3045, %v4167, 0
        %v4211 = vsel %vm3045, %v4168, 0
        %v4214 = vsel %vm3045, %v4169, 0
        %v4217 = vsel %vm3045, %v4170, 0
        %v4220 = vsel %vm3045, %v4171, 0
        %v4223 = vsel %vm3225, %v4173, 0
        %4225 = vmatpush.bf16.msra.mxu0 0
        %4226 = vmatpush.bf16.msra.mxu0 0
        %4227 = vmatpush.bf16.msra.mxu0 0
        %4228 = vmatpush.bf16.msra.mxu0 0
        %4229 = vmatpush.bf16.msra.mxu0 0
        %4230 = vmatpush.bf16.msra.mxu0 0
        %4231 = vmatpush.bf16.msra.mxu0 0
        %4232 = vmatpush.bf16.msra.mxu0 %v4223
        %4233 = vmatmul.bf16.gmra.mxu0 %v4175
        %v4234 = vpop.f32.mrf.mxu0
        %v4235 = vadd.f32 0.0, %v4234
        %v4236 = vpop.f32.mrf.mxu0
        %v4237 = vadd.f32 0.0, %v4236
        %4238 = vmatmul.bf16.gmra.mxu0 %v4178
        %v4239 = vpop.f32.mrf.mxu0
        %v4240 = vadd.f32 0.0, %v4239
        %v4241 = vpop.f32.mrf.mxu0
        %v4242 = vadd.f32 0.0, %v4241
        %4243 = vmatmul.bf16.gmra.mxu0 %v4181
        %v4244 = vpop.f32.mrf.mxu0
        %v4245 = vadd.f32 0.0, %v4244
        %v4246 = vpop.f32.mrf.mxu0
        %v4247 = vadd.f32 0.0, %v4246
        %4248 = vmatmul.bf16.gmra.mxu0 %v4184
        %v4249 = vpop.f32.mrf.mxu0
        %v4250 = vadd.f32 0.0, %v4249
        %v4251 = vpop.f32.mrf.mxu0
        %v4252 = vadd.f32 0.0, %v4251
        %4253 = vmatmul.bf16.gmra.mxu0 %v4187
        %v4254 = vpop.f32.mrf.mxu0
        %v4255 = vadd.f32 0.0, %v4254
        %v4256 = vpop.f32.mrf.mxu0
        %v4257 = vadd.f32 0.0, %v4256
        %4258 = vmatmul.bf16.gmra.mxu0 %v4190
        %v4259 = vpop.f32.mrf.mxu0
        %v4260 = vadd.f32 0.0, %v4259
        %v4261 = vpop.f32.mrf.mxu0
        %v4262 = vadd.f32 0.0, %v4261
        %4263 = vmatmul.bf16.gmra.mxu0 %v4193
        %v4264 = vpop.f32.mrf.mxu0
        %v4265 = vadd.f32 0.0, %v4264
        %v4266 = vpop.f32.mrf.mxu0
        %v4267 = vadd.f32 0.0, %v4266
        %4268 = vmatmul.bf16.gmra.mxu0 %v4196
        %v4269 = vpop.f32.mrf.mxu0
        %v4270 = vadd.f32 0.0, %v4269
        %v4271 = vpop.f32.mrf.mxu0
        %v4272 = vadd.f32 0.0, %v4271
        %4273 = vmatmul.bf16.gmra.mxu0 %v4199
        %v4274 = vpop.f32.mrf.mxu0
        %v4275 = vadd.f32 0.0, %v4274
        %v4276 = vpop.f32.mrf.mxu0
        %v4277 = vadd.f32 0.0, %v4276
        %4278 = vmatmul.bf16.gmra.mxu0 %v4202
        %v4279 = vpop.f32.mrf.mxu0
        %v4280 = vadd.f32 0.0, %v4279
        %v4281 = vpop.f32.mrf.mxu0
        %v4282 = vadd.f32 0.0, %v4281
        %4283 = vmatmul.bf16.gmra.mxu0 %v4205
        %v4284 = vpop.f32.mrf.mxu0
        %v4285 = vadd.f32 0.0, %v4284
        %v4286 = vpop.f32.mrf.mxu0
        %v4287 = vadd.f32 0.0, %v4286
        %4288 = vmatmul.bf16.gmra.mxu0 %v4208
        %v4289 = vpop.f32.mrf.mxu0
        %v4290 = vadd.f32 0.0, %v4289
        %v4291 = vpop.f32.mrf.mxu0
        %v4292 = vadd.f32 0.0, %v4291
        %4293 = vmatmul.bf16.gmra.mxu0 %v4211
        %v4294 = vpop.f32.mrf.mxu0
        %v4295 = vadd.f32 0.0, %v4294
        %v4296 = vpop.f32.mrf.mxu0
        %v4297 = vadd.f32 0.0, %v4296
        %4298 = vmatmul.bf16.gmra.mxu0 %v4214
        %v4299 = vpop.f32.mrf.mxu0
        %v4300 = vadd.f32 0.0, %v4299
        %v4301 = vpop.f32.mrf.mxu0
        %v4302 = vadd.f32 0.0, %v4301
        %4303 = vmatmul.bf16.gmra.mxu0 %v4217
        %v4304 = vpop.f32.mrf.mxu0
        %v4305 = vadd.f32 0.0, %v4304
        %v4306 = vpop.f32.mrf.mxu0
        %v4307 = vadd.f32 0.0, %v4306
        %4308 = vmatmul.bf16.gmra.mxu0 %v4220
        %v4309 = vpop.f32.mrf.mxu0
        %v4310 = vadd.f32 0.0, %v4309
        %v4311 = vpop.f32.mrf.mxu0
        %v4312 = vadd.f32 0.0, %v4311
        %4313 = vdwg.mxu0
        %v4314 = vadd.f32 %v4092, %v4235
        %v4315 = vadd.f32 %v4093, %v4237
        %v4316 = vadd.f32 %v4094, %v4240
        %v4317 = vadd.f32 %v4095, %v4242
        %v4318 = vadd.f32 %v4096, %v4245
        %v4319 = vadd.f32 %v4097, %v4247
        %v4320 = vadd.f32 %v4098, %v4250
        %v4321 = vadd.f32 %v4099, %v4252
        %v4322 = vadd.f32 %v4100, %v4255
        %v4323 = vadd.f32 %v4101, %v4257
        %v4324 = vadd.f32 %v4102, %v4260
        %v4325 = vadd.f32 %v4103, %v4262
        %v4326 = vadd.f32 %v4104, %v4265
        %v4327 = vadd.f32 %v4105, %v4267
        %v4328 = vadd.f32 %v4106, %v4270
        %v4329 = vadd.f32 %v4107, %v4272
        %v4330 = vadd.f32 %v4108, %v4275
        %v4331 = vadd.f32 %v4109, %v4277
        %v4332 = vadd.f32 %v4110, %v4280
        %v4333 = vadd.f32 %v4111, %v4282
        %v4334 = vadd.f32 %v4112, %v4285
        %v4335 = vadd.f32 %v4113, %v4287
        %v4336 = vadd.f32 %v4114, %v4290
        %v4337 = vadd.f32 %v4115, %v4292
        %v4338 = vadd.f32 %v4116, %v4295
        %v4339 = vadd.f32 %v4117, %v4297
        %v4340 = vadd.f32 %v4118, %v4300
        %v4341 = vadd.f32 %v4119, %v4302
        %v4342 = vadd.f32 %v4120, %v4305
        %v4343 = vadd.f32 %v4121, %v4307
        %v4344 = vadd.f32 %v4122, %v4310
        %v4345 = vadd.f32 %v4123, %v4312
        %v4346 = vld [vmem:[%s2160] sm:$0xff]
        %v4347 = vld [vmem:[%s2160 + $0x8] sm:$0xff]
        %v4348 = vld [vmem:[%s2160 + $0x18] sm:$0xff]
        %v4349 = vld [vmem:[%s2160 + $0x20] sm:$0xff]
        %v4350 = vld [vmem:[%s2160 + $0x30] sm:$0xff]
        %v4351 = vld [vmem:[%s2160 + $0x38] sm:$0xff]
        %v4352 = vld [vmem:[%s2160 + $0x48] sm:$0xff]
        %v4353 = vld [vmem:[%s2160 + $0x50] sm:$0xff]
        %v4354 = vld [vmem:[%s2160 + $0x60] sm:$0xff]
        %v4355 = vld [vmem:[%s2160 + $0x68] sm:$0xff]
        %v4356 = vld [vmem:[%s2160 + $0x78] sm:$0xff]
        %v4357 = vld [vmem:[%s2160 + $0x80] sm:$0xff]
        %v4358 = vld [vmem:[%s2160 + $0x90] sm:$0xff]
        %v4359 = vld [vmem:[%s2160 + $0x98] sm:$0xff]
        %v4360 = vld [vmem:[%s2160 + $0xa8] sm:$0xff]
        %v4361 = vld [vmem:[%s2160 + $0xb0] sm:$0xff]
        %v4362 = vld [vmem:[%s2160 + $0xc0] sm:$0xff]
        %v4363 = vld [vmem:[%s2160 + $0xc8] sm:$0xff]
        %v4364 = vld [vmem:[%s2160 + $0xd8] sm:$0xff]
        %v4365 = vld [vmem:[%s2160 + $0xe0] sm:$0xff]
        %v4366 = vld [vmem:[%s2160 + $0xf0] sm:$0xff]
        %v4367 = vld [vmem:[%s2160 + $0xf8] sm:$0xff]
        %v4368 = vld [vmem:[%s2160 + $0x108] sm:$0xff]
        %v4369 = vld [vmem:[%s2160 + $0x110] sm:$0xff]
        %v4370 = vld [vmem:[%s2160 + $0x120] sm:$0xff]
        %v4371 = vld [vmem:[%s2160 + $0x128] sm:$0xff]
        %v4372 = vld [vmem:[%s2160 + $0x138] sm:$0xff]
        %v4373 = vld [vmem:[%s2160 + $0x140] sm:$0xff]
        %v4374 = vld [vmem:[%s2160 + $0x150] sm:$0xff]
        %v4375 = vld [vmem:[%s2160 + $0x158] sm:$0xff]
        %v4376 = vld [vmem:[%s2160 + $0x168] sm:$0xff]
        %v4377 = vld [vmem:[%s2160 + $0x170] sm:$0xff]
        %v4378 = vpack.c.bf16 %v4347, %v4346
        %v4379 = vpack.c.bf16 %v4349, %v4348
        %v4380 = vpack.c.bf16 %v4351, %v4350
        %v4381 = vpack.c.bf16 %v4353, %v4352
        %v4382 = vpack.c.bf16 %v4355, %v4354
        %v4383 = vpack.c.bf16 %v4357, %v4356
        %v4384 = vpack.c.bf16 %v4359, %v4358
        %v4385 = vpack.c.bf16 %v4361, %v4360
        %v4386 = vpack.c.bf16 %v4363, %v4362
        %v4387 = vpack.c.bf16 %v4365, %v4364
        %v4388 = vpack.c.bf16 %v4367, %v4366
        %v4389 = vpack.c.bf16 %v4369, %v4368
        %v4390 = vpack.c.bf16 %v4371, %v4370
        %v4391 = vpack.c.bf16 %v4373, %v4372
        %v4392 = vpack.c.bf16 %v4375, %v4374
        %v4393 = vpack.c.bf16 %v4377, %v4376
        %s4394 = scalar_lea.vmem %s5, 12
        %v4395 = vld [vmem:[%s4394] sm:$0x3]
        %v4397 = vsel %vm3045, %v4378, 0
        %v4400 = vsel %vm3045, %v4379, 0
        %v4403 = vsel %vm3045, %v4380, 0
        %v4406 = vsel %vm3045, %v4381, 0
        %v4409 = vsel %vm3045, %v4382, 0
        %v4412 = vsel %vm3045, %v4383, 0
        %v4415 = vsel %vm3045, %v4384, 0
        %v4418 = vsel %vm3045, %v4385, 0
        %v4421 = vsel %vm3045, %v4386, 0
        %v4424 = vsel %vm3045, %v4387, 0
        %v4427 = vsel %vm3045, %v4388, 0
        %v4430 = vsel %vm3045, %v4389, 0
        %v4433 = vsel %vm3045, %v4390, 0
        %v4436 = vsel %vm3045, %v4391, 0
        %v4439 = vsel %vm3045, %v4392, 0
        %v4442 = vsel %vm3045, %v4393, 0
        %v4445 = vsel %vm3225, %v4395, 0
        %4447 = vmatpush.bf16.msra.mxu0 0
        %4448 = vmatpush.bf16.msra.mxu0 0
        %4449 = vmatpush.bf16.msra.mxu0 0
        %4450 = vmatpush.bf16.msra.mxu0 0
        %4451 = vmatpush.bf16.msra.mxu0 0
        %4452 = vmatpush.bf16.msra.mxu0 0
        %4453 = vmatpush.bf16.msra.mxu0 0
        %4454 = vmatpush.bf16.msra.mxu0 %v4445
        %4455 = vmatmul.bf16.gmra.mxu0 %v4397
        %v4456 = vpop.f32.mrf.mxu0
        %v4457 = vadd.f32 0.0, %v4456
        %v4458 = vpop.f32.mrf.mxu0
        %v4459 = vadd.f32 0.0, %v4458
        %4460 = vmatmul.bf16.gmra.mxu0 %v4400
        %v4461 = vpop.f32.mrf.mxu0
        %v4462 = vadd.f32 0.0, %v4461
        %v4463 = vpop.f32.mrf.mxu0
        %v4464 = vadd.f32 0.0, %v4463
        %4465 = vmatmul.bf16.gmra.mxu0 %v4403
        %v4466 = vpop.f32.mrf.mxu0
        %v4467 = vadd.f32 0.0, %v4466
        %v4468 = vpop.f32.mrf.mxu0
        %v4469 = vadd.f32 0.0, %v4468
        %4470 = vmatmul.bf16.gmra.mxu0 %v4406
        %v4471 = vpop.f32.mrf.mxu0
        %v4472 = vadd.f32 0.0, %v4471
        %v4473 = vpop.f32.mrf.mxu0
        %v4474 = vadd.f32 0.0, %v4473
        %4475 = vmatmul.bf16.gmra.mxu0 %v4409
        %v4476 = vpop.f32.mrf.mxu0
        %v4477 = vadd.f32 0.0, %v4476
        %v4478 = vpop.f32.mrf.mxu0
        %v4479 = vadd.f32 0.0, %v4478
        %4480 = vmatmul.bf16.gmra.mxu0 %v4412
        %v4481 = vpop.f32.mrf.mxu0
        %v4482 = vadd.f32 0.0, %v4481
        %v4483 = vpop.f32.mrf.mxu0
        %v4484 = vadd.f32 0.0, %v4483
        %4485 = vmatmul.bf16.gmra.mxu0 %v4415
        %v4486 = vpop.f32.mrf.mxu0
        %v4487 = vadd.f32 0.0, %v4486
        %v4488 = vpop.f32.mrf.mxu0
        %v4489 = vadd.f32 0.0, %v4488
        %4490 = vmatmul.bf16.gmra.mxu0 %v4418
        %v4491 = vpop.f32.mrf.mxu0
        %v4492 = vadd.f32 0.0, %v4491
        %v4493 = vpop.f32.mrf.mxu0
        %v4494 = vadd.f32 0.0, %v4493
        %4495 = vmatmul.bf16.gmra.mxu0 %v4421
        %v4496 = vpop.f32.mrf.mxu0
        %v4497 = vadd.f32 0.0, %v4496
        %v4498 = vpop.f32.mrf.mxu0
        %v4499 = vadd.f32 0.0, %v4498
        %4500 = vmatmul.bf16.gmra.mxu0 %v4424
        %v4501 = vpop.f32.mrf.mxu0
        %v4502 = vadd.f32 0.0, %v4501
        %v4503 = vpop.f32.mrf.mxu0
        %v4504 = vadd.f32 0.0, %v4503
        %4505 = vmatmul.bf16.gmra.mxu0 %v4427
        %v4506 = vpop.f32.mrf.mxu0
        %v4507 = vadd.f32 0.0, %v4506
        %v4508 = vpop.f32.mrf.mxu0
        %v4509 = vadd.f32 0.0, %v4508
        %4510 = vmatmul.bf16.gmra.mxu0 %v4430
        %v4511 = vpop.f32.mrf.mxu0
        %v4512 = vadd.f32 0.0, %v4511
        %v4513 = vpop.f32.mrf.mxu0
        %v4514 = vadd.f32 0.0, %v4513
        %4515 = vmatmul.bf16.gmra.mxu0 %v4433
        %v4516 = vpop.f32.mrf.mxu0
        %v4517 = vadd.f32 0.0, %v4516
        %v4518 = vpop.f32.mrf.mxu0
        %v4519 = vadd.f32 0.0, %v4518
        %4520 = vmatmul.bf16.gmra.mxu0 %v4436
        %v4521 = vpop.f32.mrf.mxu0
        %v4522 = vadd.f32 0.0, %v4521
        %v4523 = vpop.f32.mrf.mxu0
        %v4524 = vadd.f32 0.0, %v4523
        %4525 = vmatmul.bf16.gmra.mxu0 %v4439
        %v4526 = vpop.f32.mrf.mxu0
        %v4527 = vadd.f32 0.0, %v4526
        %v4528 = vpop.f32.mrf.mxu0
        %v4529 = vadd.f32 0.0, %v4528
        %4530 = vmatmul.bf16.gmra.mxu0 %v4442
        %v4531 = vpop.f32.mrf.mxu0
        %v4532 = vadd.f32 0.0, %v4531
        %v4533 = vpop.f32.mrf.mxu0
        %v4534 = vadd.f32 0.0, %v4533
        %4535 = vdwg.mxu0
        %v4536 = vadd.f32 %v4314, %v4457
        %v4537 = vadd.f32 %v4315, %v4459
        %v4538 = vadd.f32 %v4316, %v4462
        %v4539 = vadd.f32 %v4317, %v4464
        %v4540 = vadd.f32 %v4318, %v4467
        %v4541 = vadd.f32 %v4319, %v4469
        %v4542 = vadd.f32 %v4320, %v4472
        %v4543 = vadd.f32 %v4321, %v4474
        %v4544 = vadd.f32 %v4322, %v4477
        %v4545 = vadd.f32 %v4323, %v4479
        %v4546 = vadd.f32 %v4324, %v4482
        %v4547 = vadd.f32 %v4325, %v4484
        %v4548 = vadd.f32 %v4326, %v4487
        %v4549 = vadd.f32 %v4327, %v4489
        %v4550 = vadd.f32 %v4328, %v4492
        %v4551 = vadd.f32 %v4329, %v4494
        %v4552 = vadd.f32 %v4330, %v4497
        %v4553 = vadd.f32 %v4331, %v4499
        %v4554 = vadd.f32 %v4332, %v4502
        %v4555 = vadd.f32 %v4333, %v4504
        %v4556 = vadd.f32 %v4334, %v4507
        %v4557 = vadd.f32 %v4335, %v4509
        %v4558 = vadd.f32 %v4336, %v4512
        %v4559 = vadd.f32 %v4337, %v4514
        %v4560 = vadd.f32 %v4338, %v4517
        %v4561 = vadd.f32 %v4339, %v4519
        %v4562 = vadd.f32 %v4340, %v4522
        %v4563 = vadd.f32 %v4341, %v4524
        %v4564 = vadd.f32 %v4342, %v4527
        %v4565 = vadd.f32 %v4343, %v4529
        %v4566 = vadd.f32 %v4344, %v4532
        %v4567 = vadd.f32 %v4345, %v4534
        %v4568 = vld [vmem:[%s2160 + $0x1] sm:$0xff]
        %v4569 = vld [vmem:[%s2160 + $0x9] sm:$0xff]
        %v4570 = vld [vmem:[%s2160 + $0x19] sm:$0xff]
        %v4571 = vld [vmem:[%s2160 + $0x21] sm:$0xff]
        %v4572 = vld [vmem:[%s2160 + $0x31] sm:$0xff]
        %v4573 = vld [vmem:[%s2160 + $0x39] sm:$0xff]
        %v4574 = vld [vmem:[%s2160 + $0x49] sm:$0xff]
        %v4575 = vld [vmem:[%s2160 + $0x51] sm:$0xff]
        %v4576 = vld [vmem:[%s2160 + $0x61] sm:$0xff]
        %v4577 = vld [vmem:[%s2160 + $0x69] sm:$0xff]
        %v4578 = vld [vmem:[%s2160 + $0x79] sm:$0xff]
        %v4579 = vld [vmem:[%s2160 + $0x81] sm:$0xff]
        %v4580 = vld [vmem:[%s2160 + $0x91] sm:$0xff]
        %v4581 = vld [vmem:[%s2160 + $0x99] sm:$0xff]
        %v4582 = vld [vmem:[%s2160 + $0xa9] sm:$0xff]
        %v4583 = vld [vmem:[%s2160 + $0xb1] sm:$0xff]
        %v4584 = vld [vmem:[%s2160 + $0xc1] sm:$0xff]
        %v4585 = vld [vmem:[%s2160 + $0xc9] sm:$0xff]
        %v4586 = vld [vmem:[%s2160 + $0xd9] sm:$0xff]
        %v4587 = vld [vmem:[%s2160 + $0xe1] sm:$0xff]
        %v4588 = vld [vmem:[%s2160 + $0xf1] sm:$0xff]
        %v4589 = vld [vmem:[%s2160 + $0xf9] sm:$0xff]
        %v4590 = vld [vmem:[%s2160 + $0x109] sm:$0xff]
        %v4591 = vld [vmem:[%s2160 + $0x111] sm:$0xff]
        %v4592 = vld [vmem:[%s2160 + $0x121] sm:$0xff]
        %v4593 = vld [vmem:[%s2160 + $0x129] sm:$0xff]
        %v4594 = vld [vmem:[%s2160 + $0x139] sm:$0xff]
        %v4595 = vld [vmem:[%s2160 + $0x141] sm:$0xff]
        %v4596 = vld [vmem:[%s2160 + $0x151] sm:$0xff]
        %v4597 = vld [vmem:[%s2160 + $0x159] sm:$0xff]
        %v4598 = vld [vmem:[%s2160 + $0x169] sm:$0xff]
        %v4599 = vld [vmem:[%s2160 + $0x171] sm:$0xff]
        %v4600 = vpack.c.bf16 %v4569, %v4568
        %v4601 = vpack.c.bf16 %v4571, %v4570
        %v4602 = vpack.c.bf16 %v4573, %v4572
        %v4603 = vpack.c.bf16 %v4575, %v4574
        %v4604 = vpack.c.bf16 %v4577, %v4576
        %v4605 = vpack.c.bf16 %v4579, %v4578
        %v4606 = vpack.c.bf16 %v4581, %v4580
        %v4607 = vpack.c.bf16 %v4583, %v4582
        %v4608 = vpack.c.bf16 %v4585, %v4584
        %v4609 = vpack.c.bf16 %v4587, %v4586
        %v4610 = vpack.c.bf16 %v4589, %v4588
        %v4611 = vpack.c.bf16 %v4591, %v4590
        %v4612 = vpack.c.bf16 %v4593, %v4592
        %v4613 = vpack.c.bf16 %v4595, %v4594
        %v4614 = vpack.c.bf16 %v4597, %v4596
        %v4615 = vpack.c.bf16 %v4599, %v4598
        %s4616 = scalar_lea.vmem %s5, 14
        %v4617 = vld [vmem:[%s4616] sm:$0x3]
        %v4619 = vsel %vm3045, %v4600, 0
        %v4622 = vsel %vm3045, %v4601, 0
        %v4625 = vsel %vm3045, %v4602, 0
        %v4628 = vsel %vm3045, %v4603, 0
        %v4631 = vsel %vm3045, %v4604, 0
        %v4634 = vsel %vm3045, %v4605, 0
        %v4637 = vsel %vm3045, %v4606, 0
        %v4640 = vsel %vm3045, %v4607, 0
        %v4643 = vsel %vm3045, %v4608, 0
        %v4646 = vsel %vm3045, %v4609, 0
        %v4649 = vsel %vm3045, %v4610, 0
        %v4652 = vsel %vm3045, %v4611, 0
        %v4655 = vsel %vm3045, %v4612, 0
        %v4658 = vsel %vm3045, %v4613, 0
        %v4661 = vsel %vm3045, %v4614, 0
        %v4664 = vsel %vm3045, %v4615, 0
        %v4667 = vsel %vm3225, %v4617, 0
        %4669 = vmatpush.bf16.msra.mxu0 0
        %4670 = vmatpush.bf16.msra.mxu0 0
        %4671 = vmatpush.bf16.msra.mxu0 0
        %4672 = vmatpush.bf16.msra.mxu0 0
        %4673 = vmatpush.bf16.msra.mxu0 0
        %4674 = vmatpush.bf16.msra.mxu0 0
        %4675 = vmatpush.bf16.msra.mxu0 0
        %4676 = vmatpush.bf16.msra.mxu0 %v4667
        %4677 = vmatmul.bf16.gmra.mxu0 %v4619
        %v4678 = vpop.f32.mrf.mxu0
        %v4679 = vadd.f32 0.0, %v4678
        %v4680 = vpop.f32.mrf.mxu0
        %v4681 = vadd.f32 0.0, %v4680
        %4682 = vmatmul.bf16.gmra.mxu0 %v4622
        %v4683 = vpop.f32.mrf.mxu0
        %v4684 = vadd.f32 0.0, %v4683
        %v4685 = vpop.f32.mrf.mxu0
        %v4686 = vadd.f32 0.0, %v4685
        %4687 = vmatmul.bf16.gmra.mxu0 %v4625
        %v4688 = vpop.f32.mrf.mxu0
        %v4689 = vadd.f32 0.0, %v4688
        %v4690 = vpop.f32.mrf.mxu0
        %v4691 = vadd.f32 0.0, %v4690
        %4692 = vmatmul.bf16.gmra.mxu0 %v4628
        %v4693 = vpop.f32.mrf.mxu0
        %v4694 = vadd.f32 0.0, %v4693
        %v4695 = vpop.f32.mrf.mxu0
        %v4696 = vadd.f32 0.0, %v4695
        %4697 = vmatmul.bf16.gmra.mxu0 %v4631
        %v4698 = vpop.f32.mrf.mxu0
        %v4699 = vadd.f32 0.0, %v4698
        %v4700 = vpop.f32.mrf.mxu0
        %v4701 = vadd.f32 0.0, %v4700
        %4702 = vmatmul.bf16.gmra.mxu0 %v4634
        %v4703 = vpop.f32.mrf.mxu0
        %v4704 = vadd.f32 0.0, %v4703
        %v4705 = vpop.f32.mrf.mxu0
        %v4706 = vadd.f32 0.0, %v4705
        %4707 = vmatmul.bf16.gmra.mxu0 %v4637
        %v4708 = vpop.f32.mrf.mxu0
        %v4709 = vadd.f32 0.0, %v4708
        %v4710 = vpop.f32.mrf.mxu0
        %v4711 = vadd.f32 0.0, %v4710
        %4712 = vmatmul.bf16.gmra.mxu0 %v4640
        %v4713 = vpop.f32.mrf.mxu0
        %v4714 = vadd.f32 0.0, %v4713
        %v4715 = vpop.f32.mrf.mxu0
        %v4716 = vadd.f32 0.0, %v4715
        %4717 = vmatmul.bf16.gmra.mxu0 %v4643
        %v4718 = vpop.f32.mrf.mxu0
        %v4719 = vadd.f32 0.0, %v4718
        %v4720 = vpop.f32.mrf.mxu0
        %v4721 = vadd.f32 0.0, %v4720
        %4722 = vmatmul.bf16.gmra.mxu0 %v4646
        %v4723 = vpop.f32.mrf.mxu0
        %v4724 = vadd.f32 0.0, %v4723
        %v4725 = vpop.f32.mrf.mxu0
        %v4726 = vadd.f32 0.0, %v4725
        %4727 = vmatmul.bf16.gmra.mxu0 %v4649
        %v4728 = vpop.f32.mrf.mxu0
        %v4729 = vadd.f32 0.0, %v4728
        %v4730 = vpop.f32.mrf.mxu0
        %v4731 = vadd.f32 0.0, %v4730
        %4732 = vmatmul.bf16.gmra.mxu0 %v4652
        %v4733 = vpop.f32.mrf.mxu0
        %v4734 = vadd.f32 0.0, %v4733
        %v4735 = vpop.f32.mrf.mxu0
        %v4736 = vadd.f32 0.0, %v4735
        %4737 = vmatmul.bf16.gmra.mxu0 %v4655
        %v4738 = vpop.f32.mrf.mxu0
        %v4739 = vadd.f32 0.0, %v4738
        %v4740 = vpop.f32.mrf.mxu0
        %v4741 = vadd.f32 0.0, %v4740
        %4742 = vmatmul.bf16.gmra.mxu0 %v4658
        %v4743 = vpop.f32.mrf.mxu0
        %v4744 = vadd.f32 0.0, %v4743
        %v4745 = vpop.f32.mrf.mxu0
        %v4746 = vadd.f32 0.0, %v4745
        %4747 = vmatmul.bf16.gmra.mxu0 %v4661
        %v4748 = vpop.f32.mrf.mxu0
        %v4749 = vadd.f32 0.0, %v4748
        %v4750 = vpop.f32.mrf.mxu0
        %v4751 = vadd.f32 0.0, %v4750
        %4752 = vmatmul.bf16.gmra.mxu0 %v4664
        %v4753 = vpop.f32.mrf.mxu0
        %v4754 = vadd.f32 0.0, %v4753
        %v4755 = vpop.f32.mrf.mxu0
        %v4756 = vadd.f32 0.0, %v4755
        %4757 = vdwg.mxu0
        %v4758 = vadd.f32 %v4536, %v4679
        %v4759 = vadd.f32 %v4537, %v4681
        %v4760 = vadd.f32 %v4538, %v4684
        %v4761 = vadd.f32 %v4539, %v4686
        %v4762 = vadd.f32 %v4540, %v4689
        %v4763 = vadd.f32 %v4541, %v4691
        %v4764 = vadd.f32 %v4542, %v4694
        %v4765 = vadd.f32 %v4543, %v4696
        %v4766 = vadd.f32 %v4544, %v4699
        %v4767 = vadd.f32 %v4545, %v4701
        %v4768 = vadd.f32 %v4546, %v4704
        %v4769 = vadd.f32 %v4547, %v4706
        %v4770 = vadd.f32 %v4548, %v4709
        %v4771 = vadd.f32 %v4549, %v4711
        %v4772 = vadd.f32 %v4550, %v4714
        %v4773 = vadd.f32 %v4551, %v4716
        %v4774 = vadd.f32 %v4552, %v4719
        %v4775 = vadd.f32 %v4553, %v4721
        %v4776 = vadd.f32 %v4554, %v4724
        %v4777 = vadd.f32 %v4555, %v4726
        %v4778 = vadd.f32 %v4556, %v4729
        %v4779 = vadd.f32 %v4557, %v4731
        %v4780 = vadd.f32 %v4558, %v4734
        %v4781 = vadd.f32 %v4559, %v4736
        %v4782 = vadd.f32 %v4560, %v4739
        %v4783 = vadd.f32 %v4561, %v4741
        %v4784 = vadd.f32 %v4562, %v4744
        %v4785 = vadd.f32 %v4563, %v4746
        %v4786 = vadd.f32 %v4564, %v4749
        %v4787 = vadd.f32 %v4565, %v4751
        %v4788 = vadd.f32 %v4566, %v4754
        %v4789 = vadd.f32 %v4567, %v4756
        %v4790 = vld [vmem:[%s2160 + $0x2] sm:$0xff]
        %v4791 = vld [vmem:[%s2160 + $0xa] sm:$0xff]
        %v4792 = vld [vmem:[%s2160 + $0x1a] sm:$0xff]
        %v4793 = vld [vmem:[%s2160 + $0x22] sm:$0xff]
        %v4794 = vld [vmem:[%s2160 + $0x32] sm:$0xff]
        %v4795 = vld [vmem:[%s2160 + $0x3a] sm:$0xff]
        %v4796 = vld [vmem:[%s2160 + $0x4a] sm:$0xff]
        %v4797 = vld [vmem:[%s2160 + $0x52] sm:$0xff]
        %v4798 = vld [vmem:[%s2160 + $0x62] sm:$0xff]
        %v4799 = vld [vmem:[%s2160 + $0x6a] sm:$0xff]
        %v4800 = vld [vmem:[%s2160 + $0x7a] sm:$0xff]
        %v4801 = vld [vmem:[%s2160 + $0x82] sm:$0xff]
        %v4802 = vld [vmem:[%s2160 + $0x92] sm:$0xff]
        %v4803 = vld [vmem:[%s2160 + $0x9a] sm:$0xff]
        %v4804 = vld [vmem:[%s2160 + $0xaa] sm:$0xff]
        %v4805 = vld [vmem:[%s2160 + $0xb2] sm:$0xff]
        %v4806 = vld [vmem:[%s2160 + $0xc2] sm:$0xff]
        %v4807 = vld [vmem:[%s2160 + $0xca] sm:$0xff]
        %v4808 = vld [vmem:[%s2160 + $0xda] sm:$0xff]
        %v4809 = vld [vmem:[%s2160 + $0xe2] sm:$0xff]
        %v4810 = vld [vmem:[%s2160 + $0xf2] sm:$0xff]
        %v4811 = vld [vmem:[%s2160 + $0xfa] sm:$0xff]
        %v4812 = vld [vmem:[%s2160 + $0x10a] sm:$0xff]
        %v4813 = vld [vmem:[%s2160 + $0x112] sm:$0xff]
        %v4814 = vld [vmem:[%s2160 + $0x122] sm:$0xff]
        %v4815 = vld [vmem:[%s2160 + $0x12a] sm:$0xff]
        %v4816 = vld [vmem:[%s2160 + $0x13a] sm:$0xff]
        %v4817 = vld [vmem:[%s2160 + $0x142] sm:$0xff]
        %v4818 = vld [vmem:[%s2160 + $0x152] sm:$0xff]
        %v4819 = vld [vmem:[%s2160 + $0x15a] sm:$0xff]
        %v4820 = vld [vmem:[%s2160 + $0x16a] sm:$0xff]
        %v4821 = vld [vmem:[%s2160 + $0x172] sm:$0xff]
        %v4822 = vpack.c.bf16 %v4791, %v4790
        %v4823 = vpack.c.bf16 %v4793, %v4792
        %v4824 = vpack.c.bf16 %v4795, %v4794
        %v4825 = vpack.c.bf16 %v4797, %v4796
        %v4826 = vpack.c.bf16 %v4799, %v4798
        %v4827 = vpack.c.bf16 %v4801, %v4800
        %v4828 = vpack.c.bf16 %v4803, %v4802
        %v4829 = vpack.c.bf16 %v4805, %v4804
        %v4830 = vpack.c.bf16 %v4807, %v4806
        %v4831 = vpack.c.bf16 %v4809, %v4808
        %v4832 = vpack.c.bf16 %v4811, %v4810
        %v4833 = vpack.c.bf16 %v4813, %v4812
        %v4834 = vpack.c.bf16 %v4815, %v4814
        %v4835 = vpack.c.bf16 %v4817, %v4816
        %v4836 = vpack.c.bf16 %v4819, %v4818
        %v4837 = vpack.c.bf16 %v4821, %v4820
        %s4838 = scalar_lea.vmem %s5, 16
        %v4839 = vld [vmem:[%s4838] sm:$0x3]
        %v4841 = vsel %vm3045, %v4822, 0
        %v4844 = vsel %vm3045, %v4823, 0
        %v4847 = vsel %vm3045, %v4824, 0
        %v4850 = vsel %vm3045, %v4825, 0
        %v4853 = vsel %vm3045, %v4826, 0
        %v4856 = vsel %vm3045, %v4827, 0
        %v4859 = vsel %vm3045, %v4828, 0
        %v4862 = vsel %vm3045, %v4829, 0
        %v4865 = vsel %vm3045, %v4830, 0
        %v4868 = vsel %vm3045, %v4831, 0
        %v4871 = vsel %vm3045, %v4832, 0
        %v4874 = vsel %vm3045, %v4833, 0
        %v4877 = vsel %vm3045, %v4834, 0
        %v4880 = vsel %vm3045, %v4835, 0
        %v4883 = vsel %vm3045, %v4836, 0
        %v4886 = vsel %vm3045, %v4837, 0
        %v4889 = vsel %vm3225, %v4839, 0
        %4891 = vmatpush.bf16.msra.mxu0 0
        %4892 = vmatpush.bf16.msra.mxu0 0
        %4893 = vmatpush.bf16.msra.mxu0 0
        %4894 = vmatpush.bf16.msra.mxu0 0
        %4895 = vmatpush.bf16.msra.mxu0 0
        %4896 = vmatpush.bf16.msra.mxu0 0
        %4897 = vmatpush.bf16.msra.mxu0 0
        %4898 = vmatpush.bf16.msra.mxu0 %v4889
        %4899 = vmatmul.bf16.gmra.mxu0 %v4841
        %v4900 = vpop.f32.mrf.mxu0
        %v4901 = vadd.f32 0.0, %v4900
        %v4902 = vpop.f32.mrf.mxu0
        %v4903 = vadd.f32 0.0, %v4902
        %4904 = vmatmul.bf16.gmra.mxu0 %v4844
        %v4905 = vpop.f32.mrf.mxu0
        %v4906 = vadd.f32 0.0, %v4905
        %v4907 = vpop.f32.mrf.mxu0
        %v4908 = vadd.f32 0.0, %v4907
        %4909 = vmatmul.bf16.gmra.mxu0 %v4847
        %v4910 = vpop.f32.mrf.mxu0
        %v4911 = vadd.f32 0.0, %v4910
        %v4912 = vpop.f32.mrf.mxu0
        %v4913 = vadd.f32 0.0, %v4912
        %4914 = vmatmul.bf16.gmra.mxu0 %v4850
        %v4915 = vpop.f32.mrf.mxu0
        %v4916 = vadd.f32 0.0, %v4915
        %v4917 = vpop.f32.mrf.mxu0
        %v4918 = vadd.f32 0.0, %v4917
        %4919 = vmatmul.bf16.gmra.mxu0 %v4853
        %v4920 = vpop.f32.mrf.mxu0
        %v4921 = vadd.f32 0.0, %v4920
        %v4922 = vpop.f32.mrf.mxu0
        %v4923 = vadd.f32 0.0, %v4922
        %4924 = vmatmul.bf16.gmra.mxu0 %v4856
        %v4925 = vpop.f32.mrf.mxu0
        %v4926 = vadd.f32 0.0, %v4925
        %v4927 = vpop.f32.mrf.mxu0
        %v4928 = vadd.f32 0.0, %v4927
        %4929 = vmatmul.bf16.gmra.mxu0 %v4859
        %v4930 = vpop.f32.mrf.mxu0
        %v4931 = vadd.f32 0.0, %v4930
        %v4932 = vpop.f32.mrf.mxu0
        %v4933 = vadd.f32 0.0, %v4932
        %4934 = vmatmul.bf16.gmra.mxu0 %v4862
        %v4935 = vpop.f32.mrf.mxu0
        %v4936 = vadd.f32 0.0, %v4935
        %v4937 = vpop.f32.mrf.mxu0
        %v4938 = vadd.f32 0.0, %v4937
        %4939 = vmatmul.bf16.gmra.mxu0 %v4865
        %v4940 = vpop.f32.mrf.mxu0
        %v4941 = vadd.f32 0.0, %v4940
        %v4942 = vpop.f32.mrf.mxu0
        %v4943 = vadd.f32 0.0, %v4942
        %4944 = vmatmul.bf16.gmra.mxu0 %v4868
        %v4945 = vpop.f32.mrf.mxu0
        %v4946 = vadd.f32 0.0, %v4945
        %v4947 = vpop.f32.mrf.mxu0
        %v4948 = vadd.f32 0.0, %v4947
        %4949 = vmatmul.bf16.gmra.mxu0 %v4871
        %v4950 = vpop.f32.mrf.mxu0
        %v4951 = vadd.f32 0.0, %v4950
        %v4952 = vpop.f32.mrf.mxu0
        %v4953 = vadd.f32 0.0, %v4952
        %4954 = vmatmul.bf16.gmra.mxu0 %v4874
        %v4955 = vpop.f32.mrf.mxu0
        %v4956 = vadd.f32 0.0, %v4955
        %v4957 = vpop.f32.mrf.mxu0
        %v4958 = vadd.f32 0.0, %v4957
        %4959 = vmatmul.bf16.gmra.mxu0 %v4877
        %v4960 = vpop.f32.mrf.mxu0
        %v4961 = vadd.f32 0.0, %v4960
        %v4962 = vpop.f32.mrf.mxu0
        %v4963 = vadd.f32 0.0, %v4962
        %4964 = vmatmul.bf16.gmra.mxu0 %v4880
        %v4965 = vpop.f32.mrf.mxu0
        %v4966 = vadd.f32 0.0, %v4965
        %v4967 = vpop.f32.mrf.mxu0
        %v4968 = vadd.f32 0.0, %v4967
        %4969 = vmatmul.bf16.gmra.mxu0 %v4883
        %v4970 = vpop.f32.mrf.mxu0
        %v4971 = vadd.f32 0.0, %v4970
        %v4972 = vpop.f32.mrf.mxu0
        %v4973 = vadd.f32 0.0, %v4972
        %4974 = vmatmul.bf16.gmra.mxu0 %v4886
        %v4975 = vpop.f32.mrf.mxu0
        %v4976 = vadd.f32 0.0, %v4975
        %v4977 = vpop.f32.mrf.mxu0
        %v4978 = vadd.f32 0.0, %v4977
        %4979 = vdwg.mxu0
        %v4980 = vadd.f32 %v4758, %v4901
        %v4981 = vadd.f32 %v4759, %v4903
        %v4982 = vadd.f32 %v4760, %v4906
        %v4983 = vadd.f32 %v4761, %v4908
        %v4984 = vadd.f32 %v4762, %v4911
        %v4985 = vadd.f32 %v4763, %v4913
        %v4986 = vadd.f32 %v4764, %v4916
        %v4987 = vadd.f32 %v4765, %v4918
        %v4988 = vadd.f32 %v4766, %v4921
        %v4989 = vadd.f32 %v4767, %v4923
        %v4990 = vadd.f32 %v4768, %v4926
        %v4991 = vadd.f32 %v4769, %v4928
        %v4992 = vadd.f32 %v4770, %v4931
        %v4993 = vadd.f32 %v4771, %v4933
        %v4994 = vadd.f32 %v4772, %v4936
        %v4995 = vadd.f32 %v4773, %v4938
        %v4996 = vadd.f32 %v4774, %v4941
        %v4997 = vadd.f32 %v4775, %v4943
        %v4998 = vadd.f32 %v4776, %v4946
        %v4999 = vadd.f32 %v4777, %v4948
        %v5000 = vadd.f32 %v4778, %v4951
        %v5001 = vadd.f32 %v4779, %v4953
        %v5002 = vadd.f32 %v4780, %v4956
        %v5003 = vadd.f32 %v4781, %v4958
        %v5004 = vadd.f32 %v4782, %v4961
        %v5005 = vadd.f32 %v4783, %v4963
        %v5006 = vadd.f32 %v4784, %v4966
        %v5007 = vadd.f32 %v4785, %v4968
        %v5008 = vadd.f32 %v4786, %v4971
        %v5009 = vadd.f32 %v4787, %v4973
        %v5010 = vadd.f32 %v4788, %v4976
        %v5011 = vadd.f32 %v4789, %v4978
        %v5012 = vld [vmem:[%s6] sm:$0x1]
        %v5014 = vperm.slane %v5012, 0
        %v5016 = vadd.f32 %v4980, %v5014
        %v5017 = vadd.f32 %v4981, %v5014
        %v5018 = vadd.f32 %v4982, %v5014
        %v5019 = vadd.f32 %v4983, %v5014
        %v5020 = vadd.f32 %v4984, %v5014
        %v5021 = vadd.f32 %v4985, %v5014
        %v5022 = vadd.f32 %v4986, %v5014
        %v5023 = vadd.f32 %v4987, %v5014
        %v5024 = vadd.f32 %v4988, %v5014
        %v5025 = vadd.f32 %v4989, %v5014
        %v5026 = vadd.f32 %v4990, %v5014
        %v5027 = vadd.f32 %v4991, %v5014
        %v5028 = vadd.f32 %v4992, %v5014
        %v5029 = vadd.f32 %v4993, %v5014
        %v5030 = vadd.f32 %v4994, %v5014
        %v5031 = vadd.f32 %v4995, %v5014
        %v5032 = vadd.f32 %v4996, %v5014
        %v5033 = vadd.f32 %v4997, %v5014
        %v5034 = vadd.f32 %v4998, %v5014
        %v5035 = vadd.f32 %v4999, %v5014
        %v5036 = vadd.f32 %v5000, %v5014
        %v5037 = vadd.f32 %v5001, %v5014
        %v5038 = vadd.f32 %v5002, %v5014
        %v5039 = vadd.f32 %v5003, %v5014
        %v5040 = vadd.f32 %v5004, %v5014
        %v5041 = vadd.f32 %v5005, %v5014
        %v5042 = vadd.f32 %v5006, %v5014
        %v5043 = vadd.f32 %v5007, %v5014
        %v5044 = vadd.f32 %v5008, %v5014
        %v5045 = vadd.f32 %v5009, %v5014
        %v5046 = vadd.f32 %v5010, %v5014
        %v5047 = vadd.f32 %v5011, %v5014
        %v5048 = vmax.f32 %v5016, 0.0
        %v5049 = vmax.f32 %v5017, 0.0
        %v5050 = vmax.f32 %v5018, 0.0
        %v5051 = vmax.f32 %v5019, 0.0
        %v5052 = vmax.f32 %v5020, 0.0
        %v5053 = vmax.f32 %v5021, 0.0
        %v5054 = vmax.f32 %v5022, 0.0
        %v5055 = vmax.f32 %v5023, 0.0
        %v5056 = vmax.f32 %v5024, 0.0
        %v5057 = vmax.f32 %v5025, 0.0
        %v5058 = vmax.f32 %v5026, 0.0
        %v5059 = vmax.f32 %v5027, 0.0
        %v5060 = vmax.f32 %v5028, 0.0
        %v5061 = vmax.f32 %v5029, 0.0
        %v5062 = vmax.f32 %v5030, 0.0
        %v5063 = vmax.f32 %v5031, 0.0
        %v5064 = vmax.f32 %v5032, 0.0
        %v5065 = vmax.f32 %v5033, 0.0
        %v5066 = vmax.f32 %v5034, 0.0
        %v5067 = vmax.f32 %v5035, 0.0
        %v5068 = vmax.f32 %v5036, 0.0
        %v5069 = vmax.f32 %v5037, 0.0
        %v5070 = vmax.f32 %v5038, 0.0
        %v5071 = vmax.f32 %v5039, 0.0
        %v5072 = vmax.f32 %v5040, 0.0
        %v5073 = vmax.f32 %v5041, 0.0
        %v5074 = vmax.f32 %v5042, 0.0
        %v5075 = vmax.f32 %v5043, 0.0
        %v5076 = vmax.f32 %v5044, 0.0
        %v5077 = vmax.f32 %v5045, 0.0
        %v5078 = vmax.f32 %v5046, 0.0
        %v5079 = vmax.f32 %v5047, 0.0
        %5080 = vst.msk [vmem:[#allocation2] sm:$0xff] %vm503, 0.0
        %5081 = vst.msk [vmem:[#allocation2 + $0x8] sm:$0xff] %vm503, 0.0
        %5082 = vst.msk [vmem:[#allocation2 + $0x10] sm:$0x3] %vm679, 0.0
        %5083 = vst.msk [vmem:[#allocation2 + $0x18] sm:$0xff] %vm503, 0.0
        %5084 = vst.msk [vmem:[#allocation2 + $0x20] sm:$0xff] %vm503, 0.0
        %5085 = vst.msk [vmem:[#allocation2 + $0x28] sm:$0x3] %vm679, 0.0
        %5086 = vst.msk [vmem:[#allocation2 + $0x30] sm:$0xff] %vm503, 0.0
        %5087 = vst.msk [vmem:[#allocation2 + $0x38] sm:$0xff] %vm503, 0.0
        %5088 = vst.msk [vmem:[#allocation2 + $0x40] sm:$0x3] %vm679, 0.0
        %5089 = vst.msk [vmem:[#allocation2 + $0x48] sm:$0xff] %vm503, 0.0
        %5090 = vst.msk [vmem:[#allocation2 + $0x50] sm:$0xff] %vm503, 0.0
        %5091 = vst.msk [vmem:[#allocation2 + $0x58] sm:$0x3] %vm679, 0.0
        %5092 = vst.msk [vmem:[#allocation2 + $0x60] sm:$0xff] %vm503, 0.0
        %5093 = vst.msk [vmem:[#allocation2 + $0x68] sm:$0xff] %vm503, 0.0
        %5094 = vst.msk [vmem:[#allocation2 + $0x70] sm:$0x3] %vm679, 0.0
        %5095 = vst.msk [vmem:[#allocation2 + $0x78] sm:$0xff] %vm503, 0.0
        %5096 = vst.msk [vmem:[#allocation2 + $0x80] sm:$0xff] %vm503, 0.0
        %5097 = vst.msk [vmem:[#allocation2 + $0x88] sm:$0x3] %vm679, 0.0
        %5098 = vst.msk [vmem:[#allocation2 + $0x90] sm:$0xff] %vm503, 0.0
        %5099 = vst.msk [vmem:[#allocation2 + $0x98] sm:$0xff] %vm503, 0.0
        %5100 = vst.msk [vmem:[#allocation2 + $0xa0] sm:$0x3] %vm679, 0.0
        %5101 = vst.msk [vmem:[#allocation2 + $0xa8] sm:$0xff] %vm503, 0.0
        %5102 = vst.msk [vmem:[#allocation2 + $0xb0] sm:$0xff] %vm503, 0.0
        %5103 = vst.msk [vmem:[#allocation2 + $0xb8] sm:$0x3] %vm679, 0.0
        %5104 = vst.msk [vmem:[#allocation2 + $0xc0] sm:$0xff] %vm503, 0.0
        %5105 = vst.msk [vmem:[#allocation2 + $0xc8] sm:$0xff] %vm503, 0.0
        %5106 = vst.msk [vmem:[#allocation2 + $0xd0] sm:$0x3] %vm679, 0.0
        %5107 = vst.msk [vmem:[#allocation2 + $0xd8] sm:$0xff] %vm503, 0.0
        %5108 = vst.msk [vmem:[#allocation2 + $0xe0] sm:$0xff] %vm503, 0.0
        %5109 = vst.msk [vmem:[#allocation2 + $0xe8] sm:$0x3] %vm679, 0.0
        %5110 = vst.msk [vmem:[#allocation2 + $0xf0] sm:$0xff] %vm503, 0.0
        %5111 = vst.msk [vmem:[#allocation2 + $0xf8] sm:$0xff] %vm503, 0.0
        %5112 = vst.msk [vmem:[#allocation2 + $0x100] sm:$0x3] %vm679, 0.0
        %5113 = vst.msk [vmem:[#allocation2 + $0x108] sm:$0xff] %vm503, 0.0
        %5114 = vst.msk [vmem:[#allocation2 + $0x110] sm:$0xff] %vm503, 0.0
        %5115 = vst.msk [vmem:[#allocation2 + $0x118] sm:$0x3] %vm679, 0.0
        %5116 = vst.msk [vmem:[#allocation2 + $0x120] sm:$0xff] %vm503, 0.0
        %5117 = vst.msk [vmem:[#allocation2 + $0x128] sm:$0xff] %vm503, 0.0
        %5118 = vst.msk [vmem:[#allocation2 + $0x130] sm:$0x3] %vm679, 0.0
        %5119 = vst.msk [vmem:[#allocation2 + $0x138] sm:$0xff] %vm503, 0.0
        %5120 = vst.msk [vmem:[#allocation2 + $0x140] sm:$0xff] %vm503, 0.0
        %5121 = vst.msk [vmem:[#allocation2 + $0x148] sm:$0x3] %vm679, 0.0
        %5122 = vst.msk [vmem:[#allocation2 + $0x150] sm:$0xff] %vm503, 0.0
        %5123 = vst.msk [vmem:[#allocation2 + $0x158] sm:$0xff] %vm503, 0.0
        %5124 = vst.msk [vmem:[#allocation2 + $0x160] sm:$0x3] %vm679, 0.0
        %5125 = vst.msk [vmem:[#allocation2 + $0x168] sm:$0xff] %vm503, 0.0
        %5126 = vst.msk [vmem:[#allocation2 + $0x170] sm:$0xff] %vm503, 0.0
        %5127 = vst.msk [vmem:[#allocation2 + $0x178] sm:$0x3] %vm679, 0.0
        %5128 = vst.msk [vmem:[#allocation2 + $0x180] sm:$0xff] %vm503, 0.0
        %5129 = vst.msk [vmem:[#allocation2 + $0x188] sm:$0xff] %vm503, 0.0
        %5130 = vst.msk [vmem:[#allocation2 + $0x190] sm:$0x3] %vm679, 0.0
        %5131 = vst.msk [vmem:[#allocation2 + $0x198] sm:$0xff] %vm503, 0.0
        %5132 = vst.msk [vmem:[#allocation2 + $0x1a0] sm:$0xff] %vm503, 0.0
        %5133 = vst.msk [vmem:[#allocation2 + $0x1a8] sm:$0x3] %vm679, 0.0
        %5134 = vst.msk [vmem:[%s860 + $0x1] sm:$0xff] %vm503, %v5048
        %5135 = vst.msk [vmem:[%s860 + $0x9] sm:$0xff] %vm503, %v5049
        %5136 = vst.msk [vmem:[%s860 + $0x19] sm:$0xff] %vm503, %v5050
        %5137 = vst.msk [vmem:[%s860 + $0x21] sm:$0xff] %vm503, %v5051
        %5138 = vst.msk [vmem:[%s860 + $0x31] sm:$0xff] %vm503, %v5052
        %5139 = vst.msk [vmem:[%s860 + $0x39] sm:$0xff] %vm503, %v5053
        %5140 = vst.msk [vmem:[%s860 + $0x49] sm:$0xff] %vm503, %v5054
        %5141 = vst.msk [vmem:[%s860 + $0x51] sm:$0xff] %vm503, %v5055
        %5142 = vst.msk [vmem:[%s860 + $0x61] sm:$0xff] %vm503, %v5056
        %5143 = vst.msk [vmem:[%s860 + $0x69] sm:$0xff] %vm503, %v5057
        %5144 = vst.msk [vmem:[%s860 + $0x79] sm:$0xff] %vm503, %v5058
        %5145 = vst.msk [vmem:[%s860 + $0x81] sm:$0xff] %vm503, %v5059
        %5146 = vst.msk [vmem:[%s860 + $0x91] sm:$0xff] %vm503, %v5060
        %5147 = vst.msk [vmem:[%s860 + $0x99] sm:$0xff] %vm503, %v5061
        %5148 = vst.msk [vmem:[%s860 + $0xa9] sm:$0xff] %vm503, %v5062
        %5149 = vst.msk [vmem:[%s860 + $0xb1] sm:$0xff] %vm503, %v5063
        %5150 = vst.msk [vmem:[%s860 + $0xc1] sm:$0xff] %vm503, %v5064
        %5151 = vst.msk [vmem:[%s860 + $0xc9] sm:$0xff] %vm503, %v5065
        %5152 = vst.msk [vmem:[%s860 + $0xd9] sm:$0xff] %vm503, %v5066
        %5153 = vst.msk [vmem:[%s860 + $0xe1] sm:$0xff] %vm503, %v5067
        %5154 = vst.msk [vmem:[%s860 + $0xf1] sm:$0xff] %vm503, %v5068
        %5155 = vst.msk [vmem:[%s860 + $0xf9] sm:$0xff] %vm503, %v5069
        %5156 = vst.msk [vmem:[%s860 + $0x109] sm:$0xff] %vm503, %v5070
        %5157 = vst.msk [vmem:[%s860 + $0x111] sm:$0xff] %vm503, %v5071
        %5158 = vst.msk [vmem:[%s860 + $0x121] sm:$0xff] %vm503, %v5072
        %5159 = vst.msk [vmem:[%s860 + $0x129] sm:$0xff] %vm503, %v5073
        %5160 = vst.msk [vmem:[%s860 + $0x139] sm:$0xff] %vm503, %v5074
        %5161 = vst.msk [vmem:[%s860 + $0x141] sm:$0xff] %vm503, %v5075
        %5162 = vst.msk [vmem:[%s860 + $0x151] sm:$0xff] %vm503, %v5076
        %5163 = vst.msk [vmem:[%s860 + $0x159] sm:$0xff] %vm503, %v5077
        %5164 = vst.msk [vmem:[%s860 + $0x169] sm:$0xff] %vm503, %v5078
        %5165 = vst.msk [vmem:[%s860 + $0x171] sm:$0xff] %vm503, %v5079
        %v5166 = vld [vmem:[#allocation2] sm:$0xff]
        %v5167 = vld [vmem:[#allocation2 + $0x8] sm:$0xff]
        %v5168 = vld [vmem:[#allocation2 + $0x18] sm:$0xff]
        %v5169 = vld [vmem:[#allocation2 + $0x20] sm:$0xff]
        %v5170 = vld [vmem:[#allocation2 + $0x30] sm:$0xff]
        %v5171 = vld [vmem:[#allocation2 + $0x38] sm:$0xff]
        %v5172 = vld [vmem:[#allocation2 + $0x48] sm:$0xff]
        %v5173 = vld [vmem:[#allocation2 + $0x50] sm:$0xff]
        %v5174 = vld [vmem:[#allocation2 + $0x60] sm:$0xff]
        %v5175 = vld [vmem:[#allocation2 + $0x68] sm:$0xff]
        %v5176 = vld [vmem:[#allocation2 + $0x78] sm:$0xff]
        %v5177 = vld [vmem:[#allocation2 + $0x80] sm:$0xff]
        %v5178 = vld [vmem:[#allocation2 + $0x90] sm:$0xff]
        %v5179 = vld [vmem:[#allocation2 + $0x98] sm:$0xff]
        %v5180 = vld [vmem:[#allocation2 + $0xa8] sm:$0xff]
        %v5181 = vld [vmem:[#allocation2 + $0xb0] sm:$0xff]
        %v5182 = vld [vmem:[#allocation2 + $0xc0] sm:$0xff]
        %v5183 = vld [vmem:[#allocation2 + $0xc8] sm:$0xff]
        %v5184 = vld [vmem:[#allocation2 + $0xd8] sm:$0xff]
        %v5185 = vld [vmem:[#allocation2 + $0xe0] sm:$0xff]
        %v5186 = vld [vmem:[#allocation2 + $0xf0] sm:$0xff]
        %v5187 = vld [vmem:[#allocation2 + $0xf8] sm:$0xff]
        %v5188 = vld [vmem:[#allocation2 + $0x108] sm:$0xff]
        %v5189 = vld [vmem:[#allocation2 + $0x110] sm:$0xff]
        %v5190 = vld [vmem:[#allocation2 + $0x120] sm:$0xff]
        %v5191 = vld [vmem:[#allocation2 + $0x128] sm:$0xff]
        %v5192 = vld [vmem:[#allocation2 + $0x138] sm:$0xff]
        %v5193 = vld [vmem:[#allocation2 + $0x140] sm:$0xff]
        %v5194 = vld [vmem:[#allocation2 + $0x150] sm:$0xff]
        %v5195 = vld [vmem:[#allocation2 + $0x158] sm:$0xff]
        %v5196 = vld [vmem:[#allocation2 + $0x168] sm:$0xff]
        %v5197 = vld [vmem:[#allocation2 + $0x170] sm:$0xff]
        %v5198 = vpack.c.bf16 %v5167, %v5166
        %v5199 = vpack.c.bf16 %v5169, %v5168
        %v5200 = vpack.c.bf16 %v5171, %v5170
        %v5201 = vpack.c.bf16 %v5173, %v5172
        %v5202 = vpack.c.bf16 %v5175, %v5174
        %v5203 = vpack.c.bf16 %v5177, %v5176
        %v5204 = vpack.c.bf16 %v5179, %v5178
        %v5205 = vpack.c.bf16 %v5181, %v5180
        %v5206 = vpack.c.bf16 %v5183, %v5182
        %v5207 = vpack.c.bf16 %v5185, %v5184
        %v5208 = vpack.c.bf16 %v5187, %v5186
        %v5209 = vpack.c.bf16 %v5189, %v5188
        %v5210 = vpack.c.bf16 %v5191, %v5190
        %v5211 = vpack.c.bf16 %v5193, %v5192
        %v5212 = vpack.c.bf16 %v5195, %v5194
        %v5213 = vpack.c.bf16 %v5197, %v5196
        %v5214 = vld [vmem:[%s7] sm:$0xf]
        %v5215 = vld [vmem:[#allocation2 + $0x1] sm:$0xff]
        %v5216 = vld [vmem:[#allocation2 + $0x9] sm:$0xff]
        %v5217 = vld [vmem:[#allocation2 + $0x19] sm:$0xff]
        %v5218 = vld [vmem:[#allocation2 + $0x21] sm:$0xff]
        %v5219 = vld [vmem:[#allocation2 + $0x31] sm:$0xff]
        %v5220 = vld [vmem:[#allocation2 + $0x39] sm:$0xff]
        %v5221 = vld [vmem:[#allocation2 + $0x49] sm:$0xff]
        %v5222 = vld [vmem:[#allocation2 + $0x51] sm:$0xff]
        %v5223 = vld [vmem:[#allocation2 + $0x61] sm:$0xff]
        %v5224 = vld [vmem:[#allocation2 + $0x69] sm:$0xff]
        %v5225 = vld [vmem:[#allocation2 + $0x79] sm:$0xff]
        %v5226 = vld [vmem:[#allocation2 + $0x81] sm:$0xff]
        %v5227 = vld [vmem:[#allocation2 + $0x91] sm:$0xff]
        %v5228 = vld [vmem:[#allocation2 + $0x99] sm:$0xff]
        %v5229 = vld [vmem:[#allocation2 + $0xa9] sm:$0xff]
        %v5230 = vld [vmem:[#allocation2 + $0xb1] sm:$0xff]
        %v5231 = vld [vmem:[#allocation2 + $0xc1] sm:$0xff]
        %v5232 = vld [vmem:[#allocation2 + $0xc9] sm:$0xff]
        %v5233 = vld [vmem:[#allocation2 + $0xd9] sm:$0xff]
        %v5234 = vld [vmem:[#allocation2 + $0xe1] sm:$0xff]
        %v5235 = vld [vmem:[#allocation2 + $0xf1] sm:$0xff]
        %v5236 = vld [vmem:[#allocation2 + $0xf9] sm:$0xff]
        %v5237 = vld [vmem:[#allocation2 + $0x109] sm:$0xff]
        %v5238 = vld [vmem:[#allocation2 + $0x111] sm:$0xff]
        %v5239 = vld [vmem:[#allocation2 + $0x121] sm:$0xff]
        %v5240 = vld [vmem:[#allocation2 + $0x129] sm:$0xff]
        %v5241 = vld [vmem:[#allocation2 + $0x139] sm:$0xff]
        %v5242 = vld [vmem:[#allocation2 + $0x141] sm:$0xff]
        %v5243 = vld [vmem:[#allocation2 + $0x151] sm:$0xff]
        %v5244 = vld [vmem:[#allocation2 + $0x159] sm:$0xff]
        %v5245 = vld [vmem:[#allocation2 + $0x169] sm:$0xff]
        %v5246 = vld [vmem:[#allocation2 + $0x171] sm:$0xff]
        %v5247 = vpack.c.bf16 %v5216, %v5215
        %v5248 = vpack.c.bf16 %v5218, %v5217
        %v5249 = vpack.c.bf16 %v5220, %v5219
        %v5250 = vpack.c.bf16 %v5222, %v5221
        %v5251 = vpack.c.bf16 %v5224, %v5223
        %v5252 = vpack.c.bf16 %v5226, %v5225
        %v5253 = vpack.c.bf16 %v5228, %v5227
        %v5254 = vpack.c.bf16 %v5230, %v5229
        %v5255 = vpack.c.bf16 %v5232, %v5231
        %v5256 = vpack.c.bf16 %v5234, %v5233
        %v5257 = vpack.c.bf16 %v5236, %v5235
        %v5258 = vpack.c.bf16 %v5238, %v5237
        %v5259 = vpack.c.bf16 %v5240, %v5239
        %v5260 = vpack.c.bf16 %v5242, %v5241
        %v5261 = vpack.c.bf16 %v5244, %v5243
        %v5262 = vpack.c.bf16 %v5246, %v5245
        %s5263 = scalar_lea.vmem %s7, 4
        %v5264 = vld [vmem:[%s5263] sm:$0xf]
        %v5266 = vsel %vm503, %v5247, 0
        %v5269 = vsel %vm503, %v5248, 0
        %v5272 = vsel %vm503, %v5249, 0
        %v5275 = vsel %vm503, %v5250, 0
        %v5278 = vsel %vm503, %v5251, 0
        %v5281 = vsel %vm503, %v5252, 0
        %v5284 = vsel %vm503, %v5253, 0
        %v5287 = vsel %vm503, %v5254, 0
        %v5290 = vsel %vm503, %v5255, 0
        %v5293 = vsel %vm503, %v5256, 0
        %v5296 = vsel %vm503, %v5257, 0
        %v5299 = vsel %vm503, %v5258, 0
        %v5302 = vsel %vm503, %v5259, 0
        %v5305 = vsel %vm503, %v5260, 0
        %v5308 = vsel %vm503, %v5261, 0
        %v5311 = vsel %vm503, %v5262, 0
        %v5314 = vsel %vm552, %v5264, 0
        %5316 = vmatpush.bf16.msra.mxu0 0
        %5317 = vmatpush.bf16.msra.mxu0 0
        %5318 = vmatpush.bf16.msra.mxu0 0
        %5319 = vmatpush.bf16.msra.mxu0 0
        %5320 = vmatpush.bf16.msra.mxu0 0
        %5321 = vmatpush.bf16.msra.mxu0 0
        %5322 = vmatpush.bf16.msra.mxu0 0
        %5323 = vmatpush.bf16.msra.mxu0 %v5314
        %5324 = vmatmul.bf16.gmra.mxu0 %v5266
        %v5325 = vpop.f32.mrf.mxu0
        %v5326 = vadd.f32 0.0, %v5325
        %v5327 = vpop.f32.mrf.mxu0
        %v5328 = vadd.f32 0.0, %v5327
        %5329 = vmatmul.bf16.gmra.mxu0 %v5269
        %v5330 = vpop.f32.mrf.mxu0
        %v5331 = vadd.f32 0.0, %v5330
        %v5332 = vpop.f32.mrf.mxu0
        %v5333 = vadd.f32 0.0, %v5332
        %5334 = vmatmul.bf16.gmra.mxu0 %v5272
        %v5335 = vpop.f32.mrf.mxu0
        %v5336 = vadd.f32 0.0, %v5335
        %v5337 = vpop.f32.mrf.mxu0
        %v5338 = vadd.f32 0.0, %v5337
        %5339 = vmatmul.bf16.gmra.mxu0 %v5275
        %v5340 = vpop.f32.mrf.mxu0
        %v5341 = vadd.f32 0.0, %v5340
        %v5342 = vpop.f32.mrf.mxu0
        %v5343 = vadd.f32 0.0, %v5342
        %5344 = vmatmul.bf16.gmra.mxu0 %v5278
        %v5345 = vpop.f32.mrf.mxu0
        %v5346 = vadd.f32 0.0, %v5345
        %v5347 = vpop.f32.mrf.mxu0
        %v5348 = vadd.f32 0.0, %v5347
        %5349 = vmatmul.bf16.gmra.mxu0 %v5281
        %v5350 = vpop.f32.mrf.mxu0
        %v5351 = vadd.f32 0.0, %v5350
        %v5352 = vpop.f32.mrf.mxu0
        %v5353 = vadd.f32 0.0, %v5352
        %5354 = vmatmul.bf16.gmra.mxu0 %v5284
        %v5355 = vpop.f32.mrf.mxu0
        %v5356 = vadd.f32 0.0, %v5355
        %v5357 = vpop.f32.mrf.mxu0
        %v5358 = vadd.f32 0.0, %v5357
        %5359 = vmatmul.bf16.gmra.mxu0 %v5287
        %v5360 = vpop.f32.mrf.mxu0
        %v5361 = vadd.f32 0.0, %v5360
        %v5362 = vpop.f32.mrf.mxu0
        %v5363 = vadd.f32 0.0, %v5362
        %5364 = vmatmul.bf16.gmra.mxu0 %v5290
        %v5365 = vpop.f32.mrf.mxu0
        %v5366 = vadd.f32 0.0, %v5365
        %v5367 = vpop.f32.mrf.mxu0
        %v5368 = vadd.f32 0.0, %v5367
        %5369 = vmatmul.bf16.gmra.mxu0 %v5293
        %v5370 = vpop.f32.mrf.mxu0
        %v5371 = vadd.f32 0.0, %v5370
        %v5372 = vpop.f32.mrf.mxu0
        %v5373 = vadd.f32 0.0, %v5372
        %5374 = vmatmul.bf16.gmra.mxu0 %v5296
        %v5375 = vpop.f32.mrf.mxu0
        %v5376 = vadd.f32 0.0, %v5375
        %v5377 = vpop.f32.mrf.mxu0
        %v5378 = vadd.f32 0.0, %v5377
        %5379 = vmatmul.bf16.gmra.mxu0 %v5299
        %v5380 = vpop.f32.mrf.mxu0
        %v5381 = vadd.f32 0.0, %v5380
        %v5382 = vpop.f32.mrf.mxu0
        %v5383 = vadd.f32 0.0, %v5382
        %5384 = vmatmul.bf16.gmra.mxu0 %v5302
        %v5385 = vpop.f32.mrf.mxu0
        %v5386 = vadd.f32 0.0, %v5385
        %v5387 = vpop.f32.mrf.mxu0
        %v5388 = vadd.f32 0.0, %v5387
        %5389 = vmatmul.bf16.gmra.mxu0 %v5305
        %v5390 = vpop.f32.mrf.mxu0
        %v5391 = vadd.f32 0.0, %v5390
        %v5392 = vpop.f32.mrf.mxu0
        %v5393 = vadd.f32 0.0, %v5392
        %5394 = vmatmul.bf16.gmra.mxu0 %v5308
        %v5395 = vpop.f32.mrf.mxu0
        %v5396 = vadd.f32 0.0, %v5395
        %v5397 = vpop.f32.mrf.mxu0
        %v5398 = vadd.f32 0.0, %v5397
        %5399 = vmatmul.bf16.gmra.mxu0 %v5311
        %v5400 = vpop.f32.mrf.mxu0
        %v5401 = vadd.f32 0.0, %v5400
        %v5402 = vpop.f32.mrf.mxu0
        %v5403 = vadd.f32 0.0, %v5402
        %5404 = vdwg.mxu0
        %v5406 = vsel %vm503, %v5198, 0
        %v5409 = vsel %vm503, %v5199, 0
        %v5412 = vsel %vm503, %v5200, 0
        %v5415 = vsel %vm503, %v5201, 0
        %v5418 = vsel %vm503, %v5202, 0
        %v5421 = vsel %vm503, %v5203, 0
        %v5424 = vsel %vm503, %v5204, 0
        %v5427 = vsel %vm503, %v5205, 0
        %v5430 = vsel %vm503, %v5206, 0
        %v5433 = vsel %vm503, %v5207, 0
        %v5436 = vsel %vm503, %v5208, 0
        %v5439 = vsel %vm503, %v5209, 0
        %v5442 = vsel %vm503, %v5210, 0
        %v5445 = vsel %vm503, %v5211, 0
        %v5448 = vsel %vm503, %v5212, 0
        %v5451 = vsel %vm503, %v5213, 0
        %v5454 = vsel %vm552, %v5214, 0
        %5456 = vmatpush.bf16.msra.mxu0 0
        %5457 = vmatpush.bf16.msra.mxu0 0
        %5458 = vmatpush.bf16.msra.mxu0 0
        %5459 = vmatpush.bf16.msra.mxu0 0
        %5460 = vmatpush.bf16.msra.mxu0 0
        %5461 = vmatpush.bf16.msra.mxu0 0
        %5462 = vmatpush.bf16.msra.mxu0 0
        %5463 = vmatpush.bf16.msra.mxu0 %v5454
        %5464 = vmatmul.bf16.gmra.mxu0 %v5406
        %v5465 = vpop.f32.mrf.mxu0
        %v5466 = vadd.f32 %v5326, %v5465
        %v5467 = vpop.f32.mrf.mxu0
        %v5468 = vadd.f32 %v5328, %v5467
        %5469 = vmatmul.bf16.gmra.mxu0 %v5409
        %v5470 = vpop.f32.mrf.mxu0
        %v5471 = vadd.f32 %v5331, %v5470
        %v5472 = vpop.f32.mrf.mxu0
        %v5473 = vadd.f32 %v5333, %v5472
        %5474 = vmatmul.bf16.gmra.mxu0 %v5412
        %v5475 = vpop.f32.mrf.mxu0
        %v5476 = vadd.f32 %v5336, %v5475
        %v5477 = vpop.f32.mrf.mxu0
        %v5478 = vadd.f32 %v5338, %v5477
        %5479 = vmatmul.bf16.gmra.mxu0 %v5415
        %v5480 = vpop.f32.mrf.mxu0
        %v5481 = vadd.f32 %v5341, %v5480
        %v5482 = vpop.f32.mrf.mxu0
        %v5483 = vadd.f32 %v5343, %v5482
        %5484 = vmatmul.bf16.gmra.mxu0 %v5418
        %v5485 = vpop.f32.mrf.mxu0
        %v5486 = vadd.f32 %v5346, %v5485
        %v5487 = vpop.f32.mrf.mxu0
        %v5488 = vadd.f32 %v5348, %v5487
        %5489 = vmatmul.bf16.gmra.mxu0 %v5421
        %v5490 = vpop.f32.mrf.mxu0
        %v5491 = vadd.f32 %v5351, %v5490
        %v5492 = vpop.f32.mrf.mxu0
        %v5493 = vadd.f32 %v5353, %v5492
        %5494 = vmatmul.bf16.gmra.mxu0 %v5424
        %v5495 = vpop.f32.mrf.mxu0
        %v5496 = vadd.f32 %v5356, %v5495
        %v5497 = vpop.f32.mrf.mxu0
        %v5498 = vadd.f32 %v5358, %v5497
        %5499 = vmatmul.bf16.gmra.mxu0 %v5427
        %v5500 = vpop.f32.mrf.mxu0
        %v5501 = vadd.f32 %v5361, %v5500
        %v5502 = vpop.f32.mrf.mxu0
        %v5503 = vadd.f32 %v5363, %v5502
        %5504 = vmatmul.bf16.gmra.mxu0 %v5430
        %v5505 = vpop.f32.mrf.mxu0
        %v5506 = vadd.f32 %v5366, %v5505
        %v5507 = vpop.f32.mrf.mxu0
        %v5508 = vadd.f32 %v5368, %v5507
        %5509 = vmatmul.bf16.gmra.mxu0 %v5433
        %v5510 = vpop.f32.mrf.mxu0
        %v5511 = vadd.f32 %v5371, %v5510
        %v5512 = vpop.f32.mrf.mxu0
        %v5513 = vadd.f32 %v5373, %v5512
        %5514 = vmatmul.bf16.gmra.mxu0 %v5436
        %v5515 = vpop.f32.mrf.mxu0
        %v5516 = vadd.f32 %v5376, %v5515
        %v5517 = vpop.f32.mrf.mxu0
        %v5518 = vadd.f32 %v5378, %v5517
        %5519 = vmatmul.bf16.gmra.mxu0 %v5439
        %v5520 = vpop.f32.mrf.mxu0
        %v5521 = vadd.f32 %v5381, %v5520
        %v5522 = vpop.f32.mrf.mxu0
        %v5523 = vadd.f32 %v5383, %v5522
        %5524 = vmatmul.bf16.gmra.mxu0 %v5442
        %v5525 = vpop.f32.mrf.mxu0
        %v5526 = vadd.f32 %v5386, %v5525
        %v5527 = vpop.f32.mrf.mxu0
        %v5528 = vadd.f32 %v5388, %v5527
        %5529 = vmatmul.bf16.gmra.mxu0 %v5445
        %v5530 = vpop.f32.mrf.mxu0
        %v5531 = vadd.f32 %v5391, %v5530
        %v5532 = vpop.f32.mrf.mxu0
        %v5533 = vadd.f32 %v5393, %v5532
        %5534 = vmatmul.bf16.gmra.mxu0 %v5448
        %v5535 = vpop.f32.mrf.mxu0
        %v5536 = vadd.f32 %v5396, %v5535
        %v5537 = vpop.f32.mrf.mxu0
        %v5538 = vadd.f32 %v5398, %v5537
        %5539 = vmatmul.bf16.gmra.mxu0 %v5451
        %v5540 = vpop.f32.mrf.mxu0
        %v5541 = vadd.f32 %v5401, %v5540
        %v5542 = vpop.f32.mrf.mxu0
        %v5543 = vadd.f32 %v5403, %v5542
        %5544 = vdwg.mxu0
        %v5545 = vld [vmem:[#allocation2 + $0x2] sm:$0xff]
        %v5546 = vld [vmem:[#allocation2 + $0xa] sm:$0xff]
        %v5547 = vld [vmem:[#allocation2 + $0x1a] sm:$0xff]
        %v5548 = vld [vmem:[#allocation2 + $0x22] sm:$0xff]
        %v5549 = vld [vmem:[#allocation2 + $0x32] sm:$0xff]
        %v5550 = vld [vmem:[#allocation2 + $0x3a] sm:$0xff]
        %v5551 = vld [vmem:[#allocation2 + $0x4a] sm:$0xff]
        %v5552 = vld [vmem:[#allocation2 + $0x52] sm:$0xff]
        %v5553 = vld [vmem:[#allocation2 + $0x62] sm:$0xff]
        %v5554 = vld [vmem:[#allocation2 + $0x6a] sm:$0xff]
        %v5555 = vld [vmem:[#allocation2 + $0x7a] sm:$0xff]
        %v5556 = vld [vmem:[#allocation2 + $0x82] sm:$0xff]
        %v5557 = vld [vmem:[#allocation2 + $0x92] sm:$0xff]
        %v5558 = vld [vmem:[#allocation2 + $0x9a] sm:$0xff]
        %v5559 = vld [vmem:[#allocation2 + $0xaa] sm:$0xff]
        %v5560 = vld [vmem:[#allocation2 + $0xb2] sm:$0xff]
        %v5561 = vld [vmem:[#allocation2 + $0xc2] sm:$0xff]
        %v5562 = vld [vmem:[#allocation2 + $0xca] sm:$0xff]
        %v5563 = vld [vmem:[#allocation2 + $0xda] sm:$0xff]
        %v5564 = vld [vmem:[#allocation2 + $0xe2] sm:$0xff]
        %v5565 = vld [vmem:[#allocation2 + $0xf2] sm:$0xff]
        %v5566 = vld [vmem:[#allocation2 + $0xfa] sm:$0xff]
        %v5567 = vld [vmem:[#allocation2 + $0x10a] sm:$0xff]
        %v5568 = vld [vmem:[#allocation2 + $0x112] sm:$0xff]
        %v5569 = vld [vmem:[#allocation2 + $0x122] sm:$0xff]
        %v5570 = vld [vmem:[#allocation2 + $0x12a] sm:$0xff]
        %v5571 = vld [vmem:[#allocation2 + $0x13a] sm:$0xff]
        %v5572 = vld [vmem:[#allocation2 + $0x142] sm:$0xff]
        %v5573 = vld [vmem:[#allocation2 + $0x152] sm:$0xff]
        %v5574 = vld [vmem:[#allocation2 + $0x15a] sm:$0xff]
        %v5575 = vld [vmem:[#allocation2 + $0x16a] sm:$0xff]
        %v5576 = vld [vmem:[#allocation2 + $0x172] sm:$0xff]
        %v5577 = vpack.c.bf16 %v5546, %v5545
        %v5578 = vpack.c.bf16 %v5548, %v5547
        %v5579 = vpack.c.bf16 %v5550, %v5549
        %v5580 = vpack.c.bf16 %v5552, %v5551
        %v5581 = vpack.c.bf16 %v5554, %v5553
        %v5582 = vpack.c.bf16 %v5556, %v5555
        %v5583 = vpack.c.bf16 %v5558, %v5557
        %v5584 = vpack.c.bf16 %v5560, %v5559
        %v5585 = vpack.c.bf16 %v5562, %v5561
        %v5586 = vpack.c.bf16 %v5564, %v5563
        %v5587 = vpack.c.bf16 %v5566, %v5565
        %v5588 = vpack.c.bf16 %v5568, %v5567
        %v5589 = vpack.c.bf16 %v5570, %v5569
        %v5590 = vpack.c.bf16 %v5572, %v5571
        %v5591 = vpack.c.bf16 %v5574, %v5573
        %v5592 = vpack.c.bf16 %v5576, %v5575
        %s5593 = scalar_lea.vmem %s7, 8
        %v5594 = vld [vmem:[%s5593] sm:$0xf]
        %v5596 = vsel %vm503, %v5577, 0
        %v5599 = vsel %vm503, %v5578, 0
        %v5602 = vsel %vm503, %v5579, 0
        %v5605 = vsel %vm503, %v5580, 0
        %v5608 = vsel %vm503, %v5581, 0
        %v5611 = vsel %vm503, %v5582, 0
        %v5614 = vsel %vm503, %v5583, 0
        %v5617 = vsel %vm503, %v5584, 0
        %v5620 = vsel %vm503, %v5585, 0
        %v5623 = vsel %vm503, %v5586, 0
        %v5626 = vsel %vm503, %v5587, 0
        %v5629 = vsel %vm503, %v5588, 0
        %v5632 = vsel %vm503, %v5589, 0
        %v5635 = vsel %vm503, %v5590, 0
        %v5638 = vsel %vm503, %v5591, 0
        %v5641 = vsel %vm503, %v5592, 0
        %v5644 = vsel %vm552, %v5594, 0
        %5646 = vmatpush.bf16.msra.mxu0 0
        %5647 = vmatpush.bf16.msra.mxu0 0
        %5648 = vmatpush.bf16.msra.mxu0 0
        %5649 = vmatpush.bf16.msra.mxu0 0
        %5650 = vmatpush.bf16.msra.mxu0 0
        %5651 = vmatpush.bf16.msra.mxu0 0
        %5652 = vmatpush.bf16.msra.mxu0 0
        %5653 = vmatpush.bf16.msra.mxu0 %v5644
        %5654 = vmatmul.bf16.gmra.mxu0 %v5596
        %v5655 = vpop.f32.mrf.mxu0
        %v5656 = vadd.f32 0.0, %v5655
        %v5657 = vpop.f32.mrf.mxu0
        %v5658 = vadd.f32 0.0, %v5657
        %5659 = vmatmul.bf16.gmra.mxu0 %v5599
        %v5660 = vpop.f32.mrf.mxu0
        %v5661 = vadd.f32 0.0, %v5660
        %v5662 = vpop.f32.mrf.mxu0
        %v5663 = vadd.f32 0.0, %v5662
        %5664 = vmatmul.bf16.gmra.mxu0 %v5602
        %v5665 = vpop.f32.mrf.mxu0
        %v5666 = vadd.f32 0.0, %v5665
        %v5667 = vpop.f32.mrf.mxu0
        %v5668 = vadd.f32 0.0, %v5667
        %5669 = vmatmul.bf16.gmra.mxu0 %v5605
        %v5670 = vpop.f32.mrf.mxu0
        %v5671 = vadd.f32 0.0, %v5670
        %v5672 = vpop.f32.mrf.mxu0
        %v5673 = vadd.f32 0.0, %v5672
        %5674 = vmatmul.bf16.gmra.mxu0 %v5608
        %v5675 = vpop.f32.mrf.mxu0
        %v5676 = vadd.f32 0.0, %v5675
        %v5677 = vpop.f32.mrf.mxu0
        %v5678 = vadd.f32 0.0, %v5677
        %5679 = vmatmul.bf16.gmra.mxu0 %v5611
        %v5680 = vpop.f32.mrf.mxu0
        %v5681 = vadd.f32 0.0, %v5680
        %v5682 = vpop.f32.mrf.mxu0
        %v5683 = vadd.f32 0.0, %v5682
        %5684 = vmatmul.bf16.gmra.mxu0 %v5614
        %v5685 = vpop.f32.mrf.mxu0
        %v5686 = vadd.f32 0.0, %v5685
        %v5687 = vpop.f32.mrf.mxu0
        %v5688 = vadd.f32 0.0, %v5687
        %5689 = vmatmul.bf16.gmra.mxu0 %v5617
        %v5690 = vpop.f32.mrf.mxu0
        %v5691 = vadd.f32 0.0, %v5690
        %v5692 = vpop.f32.mrf.mxu0
        %v5693 = vadd.f32 0.0, %v5692
        %5694 = vmatmul.bf16.gmra.mxu0 %v5620
        %v5695 = vpop.f32.mrf.mxu0
        %v5696 = vadd.f32 0.0, %v5695
        %v5697 = vpop.f32.mrf.mxu0
        %v5698 = vadd.f32 0.0, %v5697
        %5699 = vmatmul.bf16.gmra.mxu0 %v5623
        %v5700 = vpop.f32.mrf.mxu0
        %v5701 = vadd.f32 0.0, %v5700
        %v5702 = vpop.f32.mrf.mxu0
        %v5703 = vadd.f32 0.0, %v5702
        %5704 = vmatmul.bf16.gmra.mxu0 %v5626
        %v5705 = vpop.f32.mrf.mxu0
        %v5706 = vadd.f32 0.0, %v5705
        %v5707 = vpop.f32.mrf.mxu0
        %v5708 = vadd.f32 0.0, %v5707
        %5709 = vmatmul.bf16.gmra.mxu0 %v5629
        %v5710 = vpop.f32.mrf.mxu0
        %v5711 = vadd.f32 0.0, %v5710
        %v5712 = vpop.f32.mrf.mxu0
        %v5713 = vadd.f32 0.0, %v5712
        %5714 = vmatmul.bf16.gmra.mxu0 %v5632
        %v5715 = vpop.f32.mrf.mxu0
        %v5716 = vadd.f32 0.0, %v5715
        %v5717 = vpop.f32.mrf.mxu0
        %v5718 = vadd.f32 0.0, %v5717
        %5719 = vmatmul.bf16.gmra.mxu0 %v5635
        %v5720 = vpop.f32.mrf.mxu0
        %v5721 = vadd.f32 0.0, %v5720
        %v5722 = vpop.f32.mrf.mxu0
        %v5723 = vadd.f32 0.0, %v5722
        %5724 = vmatmul.bf16.gmra.mxu0 %v5638
        %v5725 = vpop.f32.mrf.mxu0
        %v5726 = vadd.f32 0.0, %v5725
        %v5727 = vpop.f32.mrf.mxu0
        %v5728 = vadd.f32 0.0, %v5727
        %5729 = vmatmul.bf16.gmra.mxu0 %v5641
        %v5730 = vpop.f32.mrf.mxu0
        %v5731 = vadd.f32 0.0, %v5730
        %v5732 = vpop.f32.mrf.mxu0
        %v5733 = vadd.f32 0.0, %v5732
        %5734 = vdwg.mxu0
        %v5735 = vadd.f32 %v5466, %v5656
        %v5736 = vadd.f32 %v5468, %v5658
        %v5737 = vadd.f32 %v5471, %v5661
        %v5738 = vadd.f32 %v5473, %v5663
        %v5739 = vadd.f32 %v5476, %v5666
        %v5740 = vadd.f32 %v5478, %v5668
        %v5741 = vadd.f32 %v5481, %v5671
        %v5742 = vadd.f32 %v5483, %v5673
        %v5743 = vadd.f32 %v5486, %v5676
        %v5744 = vadd.f32 %v5488, %v5678
        %v5745 = vadd.f32 %v5491, %v5681
        %v5746 = vadd.f32 %v5493, %v5683
        %v5747 = vadd.f32 %v5496, %v5686
        %v5748 = vadd.f32 %v5498, %v5688
        %v5749 = vadd.f32 %v5501, %v5691
        %v5750 = vadd.f32 %v5503, %v5693
        %v5751 = vadd.f32 %v5506, %v5696
        %v5752 = vadd.f32 %v5508, %v5698
        %v5753 = vadd.f32 %v5511, %v5701
        %v5754 = vadd.f32 %v5513, %v5703
        %v5755 = vadd.f32 %v5516, %v5706
        %v5756 = vadd.f32 %v5518, %v5708
        %v5757 = vadd.f32 %v5521, %v5711
        %v5758 = vadd.f32 %v5523, %v5713
        %v5759 = vadd.f32 %v5526, %v5716
        %v5760 = vadd.f32 %v5528, %v5718
        %v5761 = vadd.f32 %v5531, %v5721
        %v5762 = vadd.f32 %v5533, %v5723
        %v5763 = vadd.f32 %v5536, %v5726
        %v5764 = vadd.f32 %v5538, %v5728
        %v5765 = vadd.f32 %v5541, %v5731
        %v5766 = vadd.f32 %v5543, %v5733
        %v5767 = vld [vmem:[%s860] sm:$0xff]
        %v5768 = vld [vmem:[%s860 + $0x8] sm:$0xff]
        %v5769 = vld [vmem:[%s860 + $0x18] sm:$0xff]
        %v5770 = vld [vmem:[%s860 + $0x20] sm:$0xff]
        %v5771 = vld [vmem:[%s860 + $0x30] sm:$0xff]
        %v5772 = vld [vmem:[%s860 + $0x38] sm:$0xff]
        %v5773 = vld [vmem:[%s860 + $0x48] sm:$0xff]
        %v5774 = vld [vmem:[%s860 + $0x50] sm:$0xff]
        %v5775 = vld [vmem:[%s860 + $0x60] sm:$0xff]
        %v5776 = vld [vmem:[%s860 + $0x68] sm:$0xff]
        %v5777 = vld [vmem:[%s860 + $0x78] sm:$0xff]
        %v5778 = vld [vmem:[%s860 + $0x80] sm:$0xff]
        %v5779 = vld [vmem:[%s860 + $0x90] sm:$0xff]
        %v5780 = vld [vmem:[%s860 + $0x98] sm:$0xff]
        %v5781 = vld [vmem:[%s860 + $0xa8] sm:$0xff]
        %v5782 = vld [vmem:[%s860 + $0xb0] sm:$0xff]
        %v5783 = vld [vmem:[%s860 + $0xc0] sm:$0xff]
        %v5784 = vld [vmem:[%s860 + $0xc8] sm:$0xff]
        %v5785 = vld [vmem:[%s860 + $0xd8] sm:$0xff]
        %v5786 = vld [vmem:[%s860 + $0xe0] sm:$0xff]
        %v5787 = vld [vmem:[%s860 + $0xf0] sm:$0xff]
        %v5788 = vld [vmem:[%s860 + $0xf8] sm:$0xff]
        %v5789 = vld [vmem:[%s860 + $0x108] sm:$0xff]
        %v5790 = vld [vmem:[%s860 + $0x110] sm:$0xff]
        %v5791 = vld [vmem:[%s860 + $0x120] sm:$0xff]
        %v5792 = vld [vmem:[%s860 + $0x128] sm:$0xff]
        %v5793 = vld [vmem:[%s860 + $0x138] sm:$0xff]
        %v5794 = vld [vmem:[%s860 + $0x140] sm:$0xff]
        %v5795 = vld [vmem:[%s860 + $0x150] sm:$0xff]
        %v5796 = vld [vmem:[%s860 + $0x158] sm:$0xff]
        %v5797 = vld [vmem:[%s860 + $0x168] sm:$0xff]
        %v5798 = vld [vmem:[%s860 + $0x170] sm:$0xff]
        %v5799 = vpack.c.bf16 %v5768, %v5767
        %v5800 = vpack.c.bf16 %v5770, %v5769
        %v5801 = vpack.c.bf16 %v5772, %v5771
        %v5802 = vpack.c.bf16 %v5774, %v5773
        %v5803 = vpack.c.bf16 %v5776, %v5775
        %v5804 = vpack.c.bf16 %v5778, %v5777
        %v5805 = vpack.c.bf16 %v5780, %v5779
        %v5806 = vpack.c.bf16 %v5782, %v5781
        %v5807 = vpack.c.bf16 %v5784, %v5783
        %v5808 = vpack.c.bf16 %v5786, %v5785
        %v5809 = vpack.c.bf16 %v5788, %v5787
        %v5810 = vpack.c.bf16 %v5790, %v5789
        %v5811 = vpack.c.bf16 %v5792, %v5791
        %v5812 = vpack.c.bf16 %v5794, %v5793
        %v5813 = vpack.c.bf16 %v5796, %v5795
        %v5814 = vpack.c.bf16 %v5798, %v5797
        %s5815 = scalar_lea.vmem %s7, 12
        %v5816 = vld [vmem:[%s5815] sm:$0xf]
        %v5818 = vsel %vm503, %v5799, 0
        %v5821 = vsel %vm503, %v5800, 0
        %v5824 = vsel %vm503, %v5801, 0
        %v5827 = vsel %vm503, %v5802, 0
        %v5830 = vsel %vm503, %v5803, 0
        %v5833 = vsel %vm503, %v5804, 0
        %v5836 = vsel %vm503, %v5805, 0
        %v5839 = vsel %vm503, %v5806, 0
        %v5842 = vsel %vm503, %v5807, 0
        %v5845 = vsel %vm503, %v5808, 0
        %v5848 = vsel %vm503, %v5809, 0
        %v5851 = vsel %vm503, %v5810, 0
        %v5854 = vsel %vm503, %v5811, 0
        %v5857 = vsel %vm503, %v5812, 0
        %v5860 = vsel %vm503, %v5813, 0
        %v5863 = vsel %vm503, %v5814, 0
        %v5866 = vsel %vm552, %v5816, 0
        %5868 = vmatpush.bf16.msra.mxu0 0
        %5869 = vmatpush.bf16.msra.mxu0 0
        %5870 = vmatpush.bf16.msra.mxu0 0
        %5871 = vmatpush.bf16.msra.mxu0 0
        %5872 = vmatpush.bf16.msra.mxu0 0
        %5873 = vmatpush.bf16.msra.mxu0 0
        %5874 = vmatpush.bf16.msra.mxu0 0
        %5875 = vmatpush.bf16.msra.mxu0 %v5866
        %5876 = vmatmul.bf16.gmra.mxu0 %v5818
        %v5877 = vpop.f32.mrf.mxu0
        %v5878 = vadd.f32 0.0, %v5877
        %v5879 = vpop.f32.mrf.mxu0
        %v5880 = vadd.f32 0.0, %v5879
        %5881 = vmatmul.bf16.gmra.mxu0 %v5821
        %v5882 = vpop.f32.mrf.mxu0
        %v5883 = vadd.f32 0.0, %v5882
        %v5884 = vpop.f32.mrf.mxu0
        %v5885 = vadd.f32 0.0, %v5884
        %5886 = vmatmul.bf16.gmra.mxu0 %v5824
        %v5887 = vpop.f32.mrf.mxu0
        %v5888 = vadd.f32 0.0, %v5887
        %v5889 = vpop.f32.mrf.mxu0
        %v5890 = vadd.f32 0.0, %v5889
        %5891 = vmatmul.bf16.gmra.mxu0 %v5827
        %v5892 = vpop.f32.mrf.mxu0
        %v5893 = vadd.f32 0.0, %v5892
        %v5894 = vpop.f32.mrf.mxu0
        %v5895 = vadd.f32 0.0, %v5894
        %5896 = vmatmul.bf16.gmra.mxu0 %v5830
        %v5897 = vpop.f32.mrf.mxu0
        %v5898 = vadd.f32 0.0, %v5897
        %v5899 = vpop.f32.mrf.mxu0
        %v5900 = vadd.f32 0.0, %v5899
        %5901 = vmatmul.bf16.gmra.mxu0 %v5833
        %v5902 = vpop.f32.mrf.mxu0
        %v5903 = vadd.f32 0.0, %v5902
        %v5904 = vpop.f32.mrf.mxu0
        %v5905 = vadd.f32 0.0, %v5904
        %5906 = vmatmul.bf16.gmra.mxu0 %v5836
        %v5907 = vpop.f32.mrf.mxu0
        %v5908 = vadd.f32 0.0, %v5907
        %v5909 = vpop.f32.mrf.mxu0
        %v5910 = vadd.f32 0.0, %v5909
        %5911 = vmatmul.bf16.gmra.mxu0 %v5839
        %v5912 = vpop.f32.mrf.mxu0
        %v5913 = vadd.f32 0.0, %v5912
        %v5914 = vpop.f32.mrf.mxu0
        %v5915 = vadd.f32 0.0, %v5914
        %5916 = vmatmul.bf16.gmra.mxu0 %v5842
        %v5917 = vpop.f32.mrf.mxu0
        %v5918 = vadd.f32 0.0, %v5917
        %v5919 = vpop.f32.mrf.mxu0
        %v5920 = vadd.f32 0.0, %v5919
        %5921 = vmatmul.bf16.gmra.mxu0 %v5845
        %v5922 = vpop.f32.mrf.mxu0
        %v5923 = vadd.f32 0.0, %v5922
        %v5924 = vpop.f32.mrf.mxu0
        %v5925 = vadd.f32 0.0, %v5924
        %5926 = vmatmul.bf16.gmra.mxu0 %v5848
        %v5927 = vpop.f32.mrf.mxu0
        %v5928 = vadd.f32 0.0, %v5927
        %v5929 = vpop.f32.mrf.mxu0
        %v5930 = vadd.f32 0.0, %v5929
        %5931 = vmatmul.bf16.gmra.mxu0 %v5851
        %v5932 = vpop.f32.mrf.mxu0
        %v5933 = vadd.f32 0.0, %v5932
        %v5934 = vpop.f32.mrf.mxu0
        %v5935 = vadd.f32 0.0, %v5934
        %5936 = vmatmul.bf16.gmra.mxu0 %v5854
        %v5937 = vpop.f32.mrf.mxu0
        %v5938 = vadd.f32 0.0, %v5937
        %v5939 = vpop.f32.mrf.mxu0
        %v5940 = vadd.f32 0.0, %v5939
        %5941 = vmatmul.bf16.gmra.mxu0 %v5857
        %v5942 = vpop.f32.mrf.mxu0
        %v5943 = vadd.f32 0.0, %v5942
        %v5944 = vpop.f32.mrf.mxu0
        %v5945 = vadd.f32 0.0, %v5944
        %5946 = vmatmul.bf16.gmra.mxu0 %v5860
        %v5947 = vpop.f32.mrf.mxu0
        %v5948 = vadd.f32 0.0, %v5947
        %v5949 = vpop.f32.mrf.mxu0
        %v5950 = vadd.f32 0.0, %v5949
        %5951 = vmatmul.bf16.gmra.mxu0 %v5863
        %v5952 = vpop.f32.mrf.mxu0
        %v5953 = vadd.f32 0.0, %v5952
        %v5954 = vpop.f32.mrf.mxu0
        %v5955 = vadd.f32 0.0, %v5954
        %5956 = vdwg.mxu0
        %v5957 = vadd.f32 %v5735, %v5878
        %v5958 = vadd.f32 %v5736, %v5880
        %v5959 = vadd.f32 %v5737, %v5883
        %v5960 = vadd.f32 %v5738, %v5885
        %v5961 = vadd.f32 %v5739, %v5888
        %v5962 = vadd.f32 %v5740, %v5890
        %v5963 = vadd.f32 %v5741, %v5893
        %v5964 = vadd.f32 %v5742, %v5895
        %v5965 = vadd.f32 %v5743, %v5898
        %v5966 = vadd.f32 %v5744, %v5900
        %v5967 = vadd.f32 %v5745, %v5903
        %v5968 = vadd.f32 %v5746, %v5905
        %v5969 = vadd.f32 %v5747, %v5908
        %v5970 = vadd.f32 %v5748, %v5910
        %v5971 = vadd.f32 %v5749, %v5913
        %v5972 = vadd.f32 %v5750, %v5915
        %v5973 = vadd.f32 %v5751, %v5918
        %v5974 = vadd.f32 %v5752, %v5920
        %v5975 = vadd.f32 %v5753, %v5923
        %v5976 = vadd.f32 %v5754, %v5925
        %v5977 = vadd.f32 %v5755, %v5928
        %v5978 = vadd.f32 %v5756, %v5930
        %v5979 = vadd.f32 %v5757, %v5933
        %v5980 = vadd.f32 %v5758, %v5935
        %v5981 = vadd.f32 %v5759, %v5938
        %v5982 = vadd.f32 %v5760, %v5940
        %v5983 = vadd.f32 %v5761, %v5943
        %v5984 = vadd.f32 %v5762, %v5945
        %v5985 = vadd.f32 %v5763, %v5948
        %v5986 = vadd.f32 %v5764, %v5950
        %v5987 = vadd.f32 %v5765, %v5953
        %v5988 = vadd.f32 %v5766, %v5955
        %v5989 = vld [vmem:[%s860 + $0x1] sm:$0xff]
        %v5990 = vld [vmem:[%s860 + $0x9] sm:$0xff]
        %v5991 = vld [vmem:[%s860 + $0x19] sm:$0xff]
        %v5992 = vld [vmem:[%s860 + $0x21] sm:$0xff]
        %v5993 = vld [vmem:[%s860 + $0x31] sm:$0xff]
        %v5994 = vld [vmem:[%s860 + $0x39] sm:$0xff]
        %v5995 = vld [vmem:[%s860 + $0x49] sm:$0xff]
        %v5996 = vld [vmem:[%s860 + $0x51] sm:$0xff]
        %v5997 = vld [vmem:[%s860 + $0x61] sm:$0xff]
        %v5998 = vld [vmem:[%s860 + $0x69] sm:$0xff]
        %v5999 = vld [vmem:[%s860 + $0x79] sm:$0xff]
        %v6000 = vld [vmem:[%s860 + $0x81] sm:$0xff]
        %v6001 = vld [vmem:[%s860 + $0x91] sm:$0xff]
        %v6002 = vld [vmem:[%s860 + $0x99] sm:$0xff]
        %v6003 = vld [vmem:[%s860 + $0xa9] sm:$0xff]
        %v6004 = vld [vmem:[%s860 + $0xb1] sm:$0xff]
        %v6005 = vld [vmem:[%s860 + $0xc1] sm:$0xff]
        %v6006 = vld [vmem:[%s860 + $0xc9] sm:$0xff]
        %v6007 = vld [vmem:[%s860 + $0xd9] sm:$0xff]
        %v6008 = vld [vmem:[%s860 + $0xe1] sm:$0xff]
        %v6009 = vld [vmem:[%s860 + $0xf1] sm:$0xff]
        %v6010 = vld [vmem:[%s860 + $0xf9] sm:$0xff]
        %v6011 = vld [vmem:[%s860 + $0x109] sm:$0xff]
        %v6012 = vld [vmem:[%s860 + $0x111] sm:$0xff]
        %v6013 = vld [vmem:[%s860 + $0x121] sm:$0xff]
        %v6014 = vld [vmem:[%s860 + $0x129] sm:$0xff]
        %v6015 = vld [vmem:[%s860 + $0x139] sm:$0xff]
        %v6016 = vld [vmem:[%s860 + $0x141] sm:$0xff]
        %v6017 = vld [vmem:[%s860 + $0x151] sm:$0xff]
        %v6018 = vld [vmem:[%s860 + $0x159] sm:$0xff]
        %v6019 = vld [vmem:[%s860 + $0x169] sm:$0xff]
        %v6020 = vld [vmem:[%s860 + $0x171] sm:$0xff]
        %v6021 = vpack.c.bf16 %v5990, %v5989
        %v6022 = vpack.c.bf16 %v5992, %v5991
        %v6023 = vpack.c.bf16 %v5994, %v5993
        %v6024 = vpack.c.bf16 %v5996, %v5995
        %v6025 = vpack.c.bf16 %v5998, %v5997
        %v6026 = vpack.c.bf16 %v6000, %v5999
        %v6027 = vpack.c.bf16 %v6002, %v6001
        %v6028 = vpack.c.bf16 %v6004, %v6003
        %v6029 = vpack.c.bf16 %v6006, %v6005
        %v6030 = vpack.c.bf16 %v6008, %v6007
        %v6031 = vpack.c.bf16 %v6010, %v6009
        %v6032 = vpack.c.bf16 %v6012, %v6011
        %v6033 = vpack.c.bf16 %v6014, %v6013
        %v6034 = vpack.c.bf16 %v6016, %v6015
        %v6035 = vpack.c.bf16 %v6018, %v6017
        %v6036 = vpack.c.bf16 %v6020, %v6019
        %s6037 = scalar_lea.vmem %s7, 16
        %v6038 = vld [vmem:[%s6037] sm:$0xf]
        %v6040 = vsel %vm503, %v6021, 0
        %v6043 = vsel %vm503, %v6022, 0
        %v6046 = vsel %vm503, %v6023, 0
        %v6049 = vsel %vm503, %v6024, 0
        %v6052 = vsel %vm503, %v6025, 0
        %v6055 = vsel %vm503, %v6026, 0
        %v6058 = vsel %vm503, %v6027, 0
        %v6061 = vsel %vm503, %v6028, 0
        %v6064 = vsel %vm503, %v6029, 0
        %v6067 = vsel %vm503, %v6030, 0
        %v6070 = vsel %vm503, %v6031, 0
        %v6073 = vsel %vm503, %v6032, 0
        %v6076 = vsel %vm503, %v6033, 0
        %v6079 = vsel %vm503, %v6034, 0
        %v6082 = vsel %vm503, %v6035, 0
        %v6085 = vsel %vm503, %v6036, 0
        %v6088 = vsel %vm552, %v6038, 0
        %6090 = vmatpush.bf16.msra.mxu0 0
        %6091 = vmatpush.bf16.msra.mxu0 0
        %6092 = vmatpush.bf16.msra.mxu0 0
        %6093 = vmatpush.bf16.msra.mxu0 0
        %6094 = vmatpush.bf16.msra.mxu0 0
        %6095 = vmatpush.bf16.msra.mxu0 0
        %6096 = vmatpush.bf16.msra.mxu0 0
        %6097 = vmatpush.bf16.msra.mxu0 %v6088
        %6098 = vmatmul.bf16.gmra.mxu0 %v6040
        %v6099 = vpop.f32.mrf.mxu0
        %v6100 = vadd.f32 0.0, %v6099
        %v6101 = vpop.f32.mrf.mxu0
        %v6102 = vadd.f32 0.0, %v6101
        %6103 = vmatmul.bf16.gmra.mxu0 %v6043
        %v6104 = vpop.f32.mrf.mxu0
        %v6105 = vadd.f32 0.0, %v6104
        %v6106 = vpop.f32.mrf.mxu0
        %v6107 = vadd.f32 0.0, %v6106
        %6108 = vmatmul.bf16.gmra.mxu0 %v6046
        %v6109 = vpop.f32.mrf.mxu0
        %v6110 = vadd.f32 0.0, %v6109
        %v6111 = vpop.f32.mrf.mxu0
        %v6112 = vadd.f32 0.0, %v6111
        %6113 = vmatmul.bf16.gmra.mxu0 %v6049
        %v6114 = vpop.f32.mrf.mxu0
        %v6115 = vadd.f32 0.0, %v6114
        %v6116 = vpop.f32.mrf.mxu0
        %v6117 = vadd.f32 0.0, %v6116
        %6118 = vmatmul.bf16.gmra.mxu0 %v6052
        %v6119 = vpop.f32.mrf.mxu0
        %v6120 = vadd.f32 0.0, %v6119
        %v6121 = vpop.f32.mrf.mxu0
        %v6122 = vadd.f32 0.0, %v6121
        %6123 = vmatmul.bf16.gmra.mxu0 %v6055
        %v6124 = vpop.f32.mrf.mxu0
        %v6125 = vadd.f32 0.0, %v6124
        %v6126 = vpop.f32.mrf.mxu0
        %v6127 = vadd.f32 0.0, %v6126
        %6128 = vmatmul.bf16.gmra.mxu0 %v6058
        %v6129 = vpop.f32.mrf.mxu0
        %v6130 = vadd.f32 0.0, %v6129
        %v6131 = vpop.f32.mrf.mxu0
        %v6132 = vadd.f32 0.0, %v6131
        %6133 = vmatmul.bf16.gmra.mxu0 %v6061
        %v6134 = vpop.f32.mrf.mxu0
        %v6135 = vadd.f32 0.0, %v6134
        %v6136 = vpop.f32.mrf.mxu0
        %v6137 = vadd.f32 0.0, %v6136
        %6138 = vmatmul.bf16.gmra.mxu0 %v6064
        %v6139 = vpop.f32.mrf.mxu0
        %v6140 = vadd.f32 0.0, %v6139
        %v6141 = vpop.f32.mrf.mxu0
        %v6142 = vadd.f32 0.0, %v6141
        %6143 = vmatmul.bf16.gmra.mxu0 %v6067
        %v6144 = vpop.f32.mrf.mxu0
        %v6145 = vadd.f32 0.0, %v6144
        %v6146 = vpop.f32.mrf.mxu0
        %v6147 = vadd.f32 0.0, %v6146
        %6148 = vmatmul.bf16.gmra.mxu0 %v6070
        %v6149 = vpop.f32.mrf.mxu0
        %v6150 = vadd.f32 0.0, %v6149
        %v6151 = vpop.f32.mrf.mxu0
        %v6152 = vadd.f32 0.0, %v6151
        %6153 = vmatmul.bf16.gmra.mxu0 %v6073
        %v6154 = vpop.f32.mrf.mxu0
        %v6155 = vadd.f32 0.0, %v6154
        %v6156 = vpop.f32.mrf.mxu0
        %v6157 = vadd.f32 0.0, %v6156
        %6158 = vmatmul.bf16.gmra.mxu0 %v6076
        %v6159 = vpop.f32.mrf.mxu0
        %v6160 = vadd.f32 0.0, %v6159
        %v6161 = vpop.f32.mrf.mxu0
        %v6162 = vadd.f32 0.0, %v6161
        %6163 = vmatmul.bf16.gmra.mxu0 %v6079
        %v6164 = vpop.f32.mrf.mxu0
        %v6165 = vadd.f32 0.0, %v6164
        %v6166 = vpop.f32.mrf.mxu0
        %v6167 = vadd.f32 0.0, %v6166
        %6168 = vmatmul.bf16.gmra.mxu0 %v6082
        %v6169 = vpop.f32.mrf.mxu0
        %v6170 = vadd.f32 0.0, %v6169
        %v6171 = vpop.f32.mrf.mxu0
        %v6172 = vadd.f32 0.0, %v6171
        %6173 = vmatmul.bf16.gmra.mxu0 %v6085
        %v6174 = vpop.f32.mrf.mxu0
        %v6175 = vadd.f32 0.0, %v6174
        %v6176 = vpop.f32.mrf.mxu0
        %v6177 = vadd.f32 0.0, %v6176
        %6178 = vdwg.mxu0
        %v6179 = vadd.f32 %v5957, %v6100
        %v6180 = vadd.f32 %v5958, %v6102
        %v6181 = vadd.f32 %v5959, %v6105
        %v6182 = vadd.f32 %v5960, %v6107
        %v6183 = vadd.f32 %v5961, %v6110
        %v6184 = vadd.f32 %v5962, %v6112
        %v6185 = vadd.f32 %v5963, %v6115
        %v6186 = vadd.f32 %v5964, %v6117
        %v6187 = vadd.f32 %v5965, %v6120
        %v6188 = vadd.f32 %v5966, %v6122
        %v6189 = vadd.f32 %v5967, %v6125
        %v6190 = vadd.f32 %v5968, %v6127
        %v6191 = vadd.f32 %v5969, %v6130
        %v6192 = vadd.f32 %v5970, %v6132
        %v6193 = vadd.f32 %v5971, %v6135
        %v6194 = vadd.f32 %v5972, %v6137
        %v6195 = vadd.f32 %v5973, %v6140
        %v6196 = vadd.f32 %v5974, %v6142
        %v6197 = vadd.f32 %v5975, %v6145
        %v6198 = vadd.f32 %v5976, %v6147
        %v6199 = vadd.f32 %v5977, %v6150
        %v6200 = vadd.f32 %v5978, %v6152
        %v6201 = vadd.f32 %v5979, %v6155
        %v6202 = vadd.f32 %v5980, %v6157
        %v6203 = vadd.f32 %v5981, %v6160
        %v6204 = vadd.f32 %v5982, %v6162
        %v6205 = vadd.f32 %v5983, %v6165
        %v6206 = vadd.f32 %v5984, %v6167
        %v6207 = vadd.f32 %v5985, %v6170
        %v6208 = vadd.f32 %v5986, %v6172
        %v6209 = vadd.f32 %v5987, %v6175
        %v6210 = vadd.f32 %v5988, %v6177
        %v6211 = vld [vmem:[%s860 + $0x2] sm:$0xff]
        %v6212 = vld [vmem:[%s860 + $0xa] sm:$0xff]
        %v6213 = vld [vmem:[%s860 + $0x1a] sm:$0xff]
        %v6214 = vld [vmem:[%s860 + $0x22] sm:$0xff]
        %v6215 = vld [vmem:[%s860 + $0x32] sm:$0xff]
        %v6216 = vld [vmem:[%s860 + $0x3a] sm:$0xff]
        %v6217 = vld [vmem:[%s860 + $0x4a] sm:$0xff]
        %v6218 = vld [vmem:[%s860 + $0x52] sm:$0xff]
        %v6219 = vld [vmem:[%s860 + $0x62] sm:$0xff]
        %v6220 = vld [vmem:[%s860 + $0x6a] sm:$0xff]
        %v6221 = vld [vmem:[%s860 + $0x7a] sm:$0xff]
        %v6222 = vld [vmem:[%s860 + $0x82] sm:$0xff]
        %v6223 = vld [vmem:[%s860 + $0x92] sm:$0xff]
        %v6224 = vld [vmem:[%s860 + $0x9a] sm:$0xff]
        %v6225 = vld [vmem:[%s860 + $0xaa] sm:$0xff]
        %v6226 = vld [vmem:[%s860 + $0xb2] sm:$0xff]
        %v6227 = vld [vmem:[%s860 + $0xc2] sm:$0xff]
        %v6228 = vld [vmem:[%s860 + $0xca] sm:$0xff]
        %v6229 = vld [vmem:[%s860 + $0xda] sm:$0xff]
        %v6230 = vld [vmem:[%s860 + $0xe2] sm:$0xff]
        %v6231 = vld [vmem:[%s860 + $0xf2] sm:$0xff]
        %v6232 = vld [vmem:[%s860 + $0xfa] sm:$0xff]
        %v6233 = vld [vmem:[%s860 + $0x10a] sm:$0xff]
        %v6234 = vld [vmem:[%s860 + $0x112] sm:$0xff]
        %v6235 = vld [vmem:[%s860 + $0x122] sm:$0xff]
        %v6236 = vld [vmem:[%s860 + $0x12a] sm:$0xff]
        %v6237 = vld [vmem:[%s860 + $0x13a] sm:$0xff]
        %v6238 = vld [vmem:[%s860 + $0x142] sm:$0xff]
        %v6239 = vld [vmem:[%s860 + $0x152] sm:$0xff]
        %v6240 = vld [vmem:[%s860 + $0x15a] sm:$0xff]
        %v6241 = vld [vmem:[%s860 + $0x16a] sm:$0xff]
        %v6242 = vld [vmem:[%s860 + $0x172] sm:$0xff]
        %v6243 = vpack.c.bf16 %v6212, %v6211
        %v6244 = vpack.c.bf16 %v6214, %v6213
        %v6245 = vpack.c.bf16 %v6216, %v6215
        %v6246 = vpack.c.bf16 %v6218, %v6217
        %v6247 = vpack.c.bf16 %v6220, %v6219
        %v6248 = vpack.c.bf16 %v6222, %v6221
        %v6249 = vpack.c.bf16 %v6224, %v6223
        %v6250 = vpack.c.bf16 %v6226, %v6225
        %v6251 = vpack.c.bf16 %v6228, %v6227
        %v6252 = vpack.c.bf16 %v6230, %v6229
        %v6253 = vpack.c.bf16 %v6232, %v6231
        %v6254 = vpack.c.bf16 %v6234, %v6233
        %v6255 = vpack.c.bf16 %v6236, %v6235
        %v6256 = vpack.c.bf16 %v6238, %v6237
        %v6257 = vpack.c.bf16 %v6240, %v6239
        %v6258 = vpack.c.bf16 %v6242, %v6241
        %s6259 = scalar_lea.vmem %s7, 20
        %v6260 = vld [vmem:[%s6259] sm:$0xf]
        %v6262 = vsel %vm503, %v6243, 0
        %v6265 = vsel %vm503, %v6244, 0
        %v6268 = vsel %vm503, %v6245, 0
        %v6271 = vsel %vm503, %v6246, 0
        %v6274 = vsel %vm503, %v6247, 0
        %v6277 = vsel %vm503, %v6248, 0
        %v6280 = vsel %vm503, %v6249, 0
        %v6283 = vsel %vm503, %v6250, 0
        %v6286 = vsel %vm503, %v6251, 0
        %v6289 = vsel %vm503, %v6252, 0
        %v6292 = vsel %vm503, %v6253, 0
        %v6295 = vsel %vm503, %v6254, 0
        %v6298 = vsel %vm503, %v6255, 0
        %v6301 = vsel %vm503, %v6256, 0
        %v6304 = vsel %vm503, %v6257, 0
        %v6307 = vsel %vm503, %v6258, 0
        %v6310 = vsel %vm552, %v6260, 0
        %6312 = vmatpush.bf16.msra.mxu0 0
        %6313 = vmatpush.bf16.msra.mxu0 0
        %6314 = vmatpush.bf16.msra.mxu0 0
        %6315 = vmatpush.bf16.msra.mxu0 0
        %6316 = vmatpush.bf16.msra.mxu0 0
        %6317 = vmatpush.bf16.msra.mxu0 0
        %6318 = vmatpush.bf16.msra.mxu0 0
        %6319 = vmatpush.bf16.msra.mxu0 %v6310
        %6320 = vmatmul.bf16.gmra.mxu0 %v6262
        %v6321 = vpop.f32.mrf.mxu0
        %v6322 = vadd.f32 0.0, %v6321
        %v6323 = vpop.f32.mrf.mxu0
        %v6324 = vadd.f32 0.0, %v6323
        %6325 = vmatmul.bf16.gmra.mxu0 %v6265
        %v6326 = vpop.f32.mrf.mxu0
        %v6327 = vadd.f32 0.0, %v6326
        %v6328 = vpop.f32.mrf.mxu0
        %v6329 = vadd.f32 0.0, %v6328
        %6330 = vmatmul.bf16.gmra.mxu0 %v6268
        %v6331 = vpop.f32.mrf.mxu0
        %v6332 = vadd.f32 0.0, %v6331
        %v6333 = vpop.f32.mrf.mxu0
        %v6334 = vadd.f32 0.0, %v6333
        %6335 = vmatmul.bf16.gmra.mxu0 %v6271
        %v6336 = vpop.f32.mrf.mxu0
        %v6337 = vadd.f32 0.0, %v6336
        %v6338 = vpop.f32.mrf.mxu0
        %v6339 = vadd.f32 0.0, %v6338
        %6340 = vmatmul.bf16.gmra.mxu0 %v6274
        %v6341 = vpop.f32.mrf.mxu0
        %v6342 = vadd.f32 0.0, %v6341
        %v6343 = vpop.f32.mrf.mxu0
        %v6344 = vadd.f32 0.0, %v6343
        %6345 = vmatmul.bf16.gmra.mxu0 %v6277
        %v6346 = vpop.f32.mrf.mxu0
        %v6347 = vadd.f32 0.0, %v6346
        %v6348 = vpop.f32.mrf.mxu0
        %v6349 = vadd.f32 0.0, %v6348
        %6350 = vmatmul.bf16.gmra.mxu0 %v6280
        %v6351 = vpop.f32.mrf.mxu0
        %v6352 = vadd.f32 0.0, %v6351
        %v6353 = vpop.f32.mrf.mxu0
        %v6354 = vadd.f32 0.0, %v6353
        %6355 = vmatmul.bf16.gmra.mxu0 %v6283
        %v6356 = vpop.f32.mrf.mxu0
        %v6357 = vadd.f32 0.0, %v6356
        %v6358 = vpop.f32.mrf.mxu0
        %v6359 = vadd.f32 0.0, %v6358
        %6360 = vmatmul.bf16.gmra.mxu0 %v6286
        %v6361 = vpop.f32.mrf.mxu0
        %v6362 = vadd.f32 0.0, %v6361
        %v6363 = vpop.f32.mrf.mxu0
        %v6364 = vadd.f32 0.0, %v6363
        %6365 = vmatmul.bf16.gmra.mxu0 %v6289
        %v6366 = vpop.f32.mrf.mxu0
        %v6367 = vadd.f32 0.0, %v6366
        %v6368 = vpop.f32.mrf.mxu0
        %v6369 = vadd.f32 0.0, %v6368
        %6370 = vmatmul.bf16.gmra.mxu0 %v6292
        %v6371 = vpop.f32.mrf.mxu0
        %v6372 = vadd.f32 0.0, %v6371
        %v6373 = vpop.f32.mrf.mxu0
        %v6374 = vadd.f32 0.0, %v6373
        %6375 = vmatmul.bf16.gmra.mxu0 %v6295
        %v6376 = vpop.f32.mrf.mxu0
        %v6377 = vadd.f32 0.0, %v6376
        %v6378 = vpop.f32.mrf.mxu0
        %v6379 = vadd.f32 0.0, %v6378
        %6380 = vmatmul.bf16.gmra.mxu0 %v6298
        %v6381 = vpop.f32.mrf.mxu0
        %v6382 = vadd.f32 0.0, %v6381
        %v6383 = vpop.f32.mrf.mxu0
        %v6384 = vadd.f32 0.0, %v6383
        %6385 = vmatmul.bf16.gmra.mxu0 %v6301
        %v6386 = vpop.f32.mrf.mxu0
        %v6387 = vadd.f32 0.0, %v6386
        %v6388 = vpop.f32.mrf.mxu0
        %v6389 = vadd.f32 0.0, %v6388
        %6390 = vmatmul.bf16.gmra.mxu0 %v6304
        %v6391 = vpop.f32.mrf.mxu0
        %v6392 = vadd.f32 0.0, %v6391
        %v6393 = vpop.f32.mrf.mxu0
        %v6394 = vadd.f32 0.0, %v6393
        %6395 = vmatmul.bf16.gmra.mxu0 %v6307
        %v6396 = vpop.f32.mrf.mxu0
        %v6397 = vadd.f32 0.0, %v6396
        %v6398 = vpop.f32.mrf.mxu0
        %v6399 = vadd.f32 0.0, %v6398
        %6400 = vdwg.mxu0
        %v6401 = vadd.f32 %v6179, %v6322
        %v6402 = vadd.f32 %v6180, %v6324
        %v6403 = vadd.f32 %v6181, %v6327
        %v6404 = vadd.f32 %v6182, %v6329
        %v6405 = vadd.f32 %v6183, %v6332
        %v6406 = vadd.f32 %v6184, %v6334
        %v6407 = vadd.f32 %v6185, %v6337
        %v6408 = vadd.f32 %v6186, %v6339
        %v6409 = vadd.f32 %v6187, %v6342
        %v6410 = vadd.f32 %v6188, %v6344
        %v6411 = vadd.f32 %v6189, %v6347
        %v6412 = vadd.f32 %v6190, %v6349
        %v6413 = vadd.f32 %v6191, %v6352
        %v6414 = vadd.f32 %v6192, %v6354
        %v6415 = vadd.f32 %v6193, %v6357
        %v6416 = vadd.f32 %v6194, %v6359
        %v6417 = vadd.f32 %v6195, %v6362
        %v6418 = vadd.f32 %v6196, %v6364
        %v6419 = vadd.f32 %v6197, %v6367
        %v6420 = vadd.f32 %v6198, %v6369
        %v6421 = vadd.f32 %v6199, %v6372
        %v6422 = vadd.f32 %v6200, %v6374
        %v6423 = vadd.f32 %v6201, %v6377
        %v6424 = vadd.f32 %v6202, %v6379
        %v6425 = vadd.f32 %v6203, %v6382
        %v6426 = vadd.f32 %v6204, %v6384
        %v6427 = vadd.f32 %v6205, %v6387
        %v6428 = vadd.f32 %v6206, %v6389
        %v6429 = vadd.f32 %v6207, %v6392
        %v6430 = vadd.f32 %v6208, %v6394
        %v6431 = vadd.f32 %v6209, %v6397
        %v6432 = vadd.f32 %v6210, %v6399
        %v6433 = vld [vmem:[%s2160] sm:$0xff]
        %v6434 = vld [vmem:[%s2160 + $0x8] sm:$0xff]
        %v6435 = vld [vmem:[%s2160 + $0x18] sm:$0xff]
        %v6436 = vld [vmem:[%s2160 + $0x20] sm:$0xff]
        %v6437 = vld [vmem:[%s2160 + $0x30] sm:$0xff]
        %v6438 = vld [vmem:[%s2160 + $0x38] sm:$0xff]
        %v6439 = vld [vmem:[%s2160 + $0x48] sm:$0xff]
        %v6440 = vld [vmem:[%s2160 + $0x50] sm:$0xff]
        %v6441 = vld [vmem:[%s2160 + $0x60] sm:$0xff]
        %v6442 = vld [vmem:[%s2160 + $0x68] sm:$0xff]
        %v6443 = vld [vmem:[%s2160 + $0x78] sm:$0xff]
        %v6444 = vld [vmem:[%s2160 + $0x80] sm:$0xff]
        %v6445 = vld [vmem:[%s2160 + $0x90] sm:$0xff]
        %v6446 = vld [vmem:[%s2160 + $0x98] sm:$0xff]
        %v6447 = vld [vmem:[%s2160 + $0xa8] sm:$0xff]
        %v6448 = vld [vmem:[%s2160 + $0xb0] sm:$0xff]
        %v6449 = vld [vmem:[%s2160 + $0xc0] sm:$0xff]
        %v6450 = vld [vmem:[%s2160 + $0xc8] sm:$0xff]
        %v6451 = vld [vmem:[%s2160 + $0xd8] sm:$0xff]
        %v6452 = vld [vmem:[%s2160 + $0xe0] sm:$0xff]
        %v6453 = vld [vmem:[%s2160 + $0xf0] sm:$0xff]
        %v6454 = vld [vmem:[%s2160 + $0xf8] sm:$0xff]
        %v6455 = vld [vmem:[%s2160 + $0x108] sm:$0xff]
        %v6456 = vld [vmem:[%s2160 + $0x110] sm:$0xff]
        %v6457 = vld [vmem:[%s2160 + $0x120] sm:$0xff]
        %v6458 = vld [vmem:[%s2160 + $0x128] sm:$0xff]
        %v6459 = vld [vmem:[%s2160 + $0x138] sm:$0xff]
        %v6460 = vld [vmem:[%s2160 + $0x140] sm:$0xff]
        %v6461 = vld [vmem:[%s2160 + $0x150] sm:$0xff]
        %v6462 = vld [vmem:[%s2160 + $0x158] sm:$0xff]
        %v6463 = vld [vmem:[%s2160 + $0x168] sm:$0xff]
        %v6464 = vld [vmem:[%s2160 + $0x170] sm:$0xff]
        %v6465 = vpack.c.bf16 %v6434, %v6433
        %v6466 = vpack.c.bf16 %v6436, %v6435
        %v6467 = vpack.c.bf16 %v6438, %v6437
        %v6468 = vpack.c.bf16 %v6440, %v6439
        %v6469 = vpack.c.bf16 %v6442, %v6441
        %v6470 = vpack.c.bf16 %v6444, %v6443
        %v6471 = vpack.c.bf16 %v6446, %v6445
        %v6472 = vpack.c.bf16 %v6448, %v6447
        %v6473 = vpack.c.bf16 %v6450, %v6449
        %v6474 = vpack.c.bf16 %v6452, %v6451
        %v6475 = vpack.c.bf16 %v6454, %v6453
        %v6476 = vpack.c.bf16 %v6456, %v6455
        %v6477 = vpack.c.bf16 %v6458, %v6457
        %v6478 = vpack.c.bf16 %v6460, %v6459
        %v6479 = vpack.c.bf16 %v6462, %v6461
        %v6480 = vpack.c.bf16 %v6464, %v6463
        %s6481 = scalar_lea.vmem %s7, 24
        %v6482 = vld [vmem:[%s6481] sm:$0xf]
        %v6484 = vsel %vm503, %v6465, 0
        %v6487 = vsel %vm503, %v6466, 0
        %v6490 = vsel %vm503, %v6467, 0
        %v6493 = vsel %vm503, %v6468, 0
        %v6496 = vsel %vm503, %v6469, 0
        %v6499 = vsel %vm503, %v6470, 0
        %v6502 = vsel %vm503, %v6471, 0
        %v6505 = vsel %vm503, %v6472, 0
        %v6508 = vsel %vm503, %v6473, 0
        %v6511 = vsel %vm503, %v6474, 0
        %v6514 = vsel %vm503, %v6475, 0
        %v6517 = vsel %vm503, %v6476, 0
        %v6520 = vsel %vm503, %v6477, 0
        %v6523 = vsel %vm503, %v6478, 0
        %v6526 = vsel %vm503, %v6479, 0
        %v6529 = vsel %vm503, %v6480, 0
        %v6532 = vsel %vm552, %v6482, 0
        %6534 = vmatpush.bf16.msra.mxu0 0
        %6535 = vmatpush.bf16.msra.mxu0 0
        %6536 = vmatpush.bf16.msra.mxu0 0
        %6537 = vmatpush.bf16.msra.mxu0 0
        %6538 = vmatpush.bf16.msra.mxu0 0
        %6539 = vmatpush.bf16.msra.mxu0 0
        %6540 = vmatpush.bf16.msra.mxu0 0
        %6541 = vmatpush.bf16.msra.mxu0 %v6532
        %6542 = vmatmul.bf16.gmra.mxu0 %v6484
        %v6543 = vpop.f32.mrf.mxu0
        %v6544 = vadd.f32 0.0, %v6543
        %v6545 = vpop.f32.mrf.mxu0
        %v6546 = vadd.f32 0.0, %v6545
        %6547 = vmatmul.bf16.gmra.mxu0 %v6487
        %v6548 = vpop.f32.mrf.mxu0
        %v6549 = vadd.f32 0.0, %v6548
        %v6550 = vpop.f32.mrf.mxu0
        %v6551 = vadd.f32 0.0, %v6550
        %6552 = vmatmul.bf16.gmra.mxu0 %v6490
        %v6553 = vpop.f32.mrf.mxu0
        %v6554 = vadd.f32 0.0, %v6553
        %v6555 = vpop.f32.mrf.mxu0
        %v6556 = vadd.f32 0.0, %v6555
        %6557 = vmatmul.bf16.gmra.mxu0 %v6493
        %v6558 = vpop.f32.mrf.mxu0
        %v6559 = vadd.f32 0.0, %v6558
        %v6560 = vpop.f32.mrf.mxu0
        %v6561 = vadd.f32 0.0, %v6560
        %6562 = vmatmul.bf16.gmra.mxu0 %v6496
        %v6563 = vpop.f32.mrf.mxu0
        %v6564 = vadd.f32 0.0, %v6563
        %v6565 = vpop.f32.mrf.mxu0
        %v6566 = vadd.f32 0.0, %v6565
        %6567 = vmatmul.bf16.gmra.mxu0 %v6499
        %v6568 = vpop.f32.mrf.mxu0
        %v6569 = vadd.f32 0.0, %v6568
        %v6570 = vpop.f32.mrf.mxu0
        %v6571 = vadd.f32 0.0, %v6570
        %6572 = vmatmul.bf16.gmra.mxu0 %v6502
        %v6573 = vpop.f32.mrf.mxu0
        %v6574 = vadd.f32 0.0, %v6573
        %v6575 = vpop.f32.mrf.mxu0
        %v6576 = vadd.f32 0.0, %v6575
        %6577 = vmatmul.bf16.gmra.mxu0 %v6505
        %v6578 = vpop.f32.mrf.mxu0
        %v6579 = vadd.f32 0.0, %v6578
        %v6580 = vpop.f32.mrf.mxu0
        %v6581 = vadd.f32 0.0, %v6580
        %6582 = vmatmul.bf16.gmra.mxu0 %v6508
        %v6583 = vpop.f32.mrf.mxu0
        %v6584 = vadd.f32 0.0, %v6583
        %v6585 = vpop.f32.mrf.mxu0
        %v6586 = vadd.f32 0.0, %v6585
        %6587 = vmatmul.bf16.gmra.mxu0 %v6511
        %v6588 = vpop.f32.mrf.mxu0
        %v6589 = vadd.f32 0.0, %v6588
        %v6590 = vpop.f32.mrf.mxu0
        %v6591 = vadd.f32 0.0, %v6590
        %6592 = vmatmul.bf16.gmra.mxu0 %v6514
        %v6593 = vpop.f32.mrf.mxu0
        %v6594 = vadd.f32 0.0, %v6593
        %v6595 = vpop.f32.mrf.mxu0
        %v6596 = vadd.f32 0.0, %v6595
        %6597 = vmatmul.bf16.gmra.mxu0 %v6517
        %v6598 = vpop.f32.mrf.mxu0
        %v6599 = vadd.f32 0.0, %v6598
        %v6600 = vpop.f32.mrf.mxu0
        %v6601 = vadd.f32 0.0, %v6600
        %6602 = vmatmul.bf16.gmra.mxu0 %v6520
        %v6603 = vpop.f32.mrf.mxu0
        %v6604 = vadd.f32 0.0, %v6603
        %v6605 = vpop.f32.mrf.mxu0
        %v6606 = vadd.f32 0.0, %v6605
        %6607 = vmatmul.bf16.gmra.mxu0 %v6523
        %v6608 = vpop.f32.mrf.mxu0
        %v6609 = vadd.f32 0.0, %v6608
        %v6610 = vpop.f32.mrf.mxu0
        %v6611 = vadd.f32 0.0, %v6610
        %6612 = vmatmul.bf16.gmra.mxu0 %v6526
        %v6613 = vpop.f32.mrf.mxu0
        %v6614 = vadd.f32 0.0, %v6613
        %v6615 = vpop.f32.mrf.mxu0
        %v6616 = vadd.f32 0.0, %v6615
        %6617 = vmatmul.bf16.gmra.mxu0 %v6529
        %v6618 = vpop.f32.mrf.mxu0
        %v6619 = vadd.f32 0.0, %v6618
        %v6620 = vpop.f32.mrf.mxu0
        %v6621 = vadd.f32 0.0, %v6620
        %6622 = vdwg.mxu0
        %v6623 = vadd.f32 %v6401, %v6544
        %v6624 = vadd.f32 %v6402, %v6546
        %v6625 = vadd.f32 %v6403, %v6549
        %v6626 = vadd.f32 %v6404, %v6551
        %v6627 = vadd.f32 %v6405, %v6554
        %v6628 = vadd.f32 %v6406, %v6556
        %v6629 = vadd.f32 %v6407, %v6559
        %v6630 = vadd.f32 %v6408, %v6561
        %v6631 = vadd.f32 %v6409, %v6564
        %v6632 = vadd.f32 %v6410, %v6566
        %v6633 = vadd.f32 %v6411, %v6569
        %v6634 = vadd.f32 %v6412, %v6571
        %v6635 = vadd.f32 %v6413, %v6574
        %v6636 = vadd.f32 %v6414, %v6576
        %v6637 = vadd.f32 %v6415, %v6579
        %v6638 = vadd.f32 %v6416, %v6581
        %v6639 = vadd.f32 %v6417, %v6584
        %v6640 = vadd.f32 %v6418, %v6586
        %v6641 = vadd.f32 %v6419, %v6589
        %v6642 = vadd.f32 %v6420, %v6591
        %v6643 = vadd.f32 %v6421, %v6594
        %v6644 = vadd.f32 %v6422, %v6596
        %v6645 = vadd.f32 %v6423, %v6599
        %v6646 = vadd.f32 %v6424, %v6601
        %v6647 = vadd.f32 %v6425, %v6604
        %v6648 = vadd.f32 %v6426, %v6606
        %v6649 = vadd.f32 %v6427, %v6609
        %v6650 = vadd.f32 %v6428, %v6611
        %v6651 = vadd.f32 %v6429, %v6614
        %v6652 = vadd.f32 %v6430, %v6616
        %v6653 = vadd.f32 %v6431, %v6619
        %v6654 = vadd.f32 %v6432, %v6621
        %v6655 = vld [vmem:[%s2160 + $0x1] sm:$0xff]
        %v6656 = vld [vmem:[%s2160 + $0x9] sm:$0xff]
        %v6657 = vld [vmem:[%s2160 + $0x19] sm:$0xff]
        %v6658 = vld [vmem:[%s2160 + $0x21] sm:$0xff]
        %v6659 = vld [vmem:[%s2160 + $0x31] sm:$0xff]
        %v6660 = vld [vmem:[%s2160 + $0x39] sm:$0xff]
        %v6661 = vld [vmem:[%s2160 + $0x49] sm:$0xff]
        %v6662 = vld [vmem:[%s2160 + $0x51] sm:$0xff]
        %v6663 = vld [vmem:[%s2160 + $0x61] sm:$0xff]
        %v6664 = vld [vmem:[%s2160 + $0x69] sm:$0xff]
        %v6665 = vld [vmem:[%s2160 + $0x79] sm:$0xff]
        %v6666 = vld [vmem:[%s2160 + $0x81] sm:$0xff]
        %v6667 = vld [vmem:[%s2160 + $0x91] sm:$0xff]
        %v6668 = vld [vmem:[%s2160 + $0x99] sm:$0xff]
        %v6669 = vld [vmem:[%s2160 + $0xa9] sm:$0xff]
        %v6670 = vld [vmem:[%s2160 + $0xb1] sm:$0xff]
        %v6671 = vld [vmem:[%s2160 + $0xc1] sm:$0xff]
        %v6672 = vld [vmem:[%s2160 + $0xc9] sm:$0xff]
        %v6673 = vld [vmem:[%s2160 + $0xd9] sm:$0xff]
        %v6674 = vld [vmem:[%s2160 + $0xe1] sm:$0xff]
        %v6675 = vld [vmem:[%s2160 + $0xf1] sm:$0xff]
        %v6676 = vld [vmem:[%s2160 + $0xf9] sm:$0xff]
        %v6677 = vld [vmem:[%s2160 + $0x109] sm:$0xff]
        %v6678 = vld [vmem:[%s2160 + $0x111] sm:$0xff]
        %v6679 = vld [vmem:[%s2160 + $0x121] sm:$0xff]
        %v6680 = vld [vmem:[%s2160 + $0x129] sm:$0xff]
        %v6681 = vld [vmem:[%s2160 + $0x139] sm:$0xff]
        %v6682 = vld [vmem:[%s2160 + $0x141] sm:$0xff]
        %v6683 = vld [vmem:[%s2160 + $0x151] sm:$0xff]
        %v6684 = vld [vmem:[%s2160 + $0x159] sm:$0xff]
        %v6685 = vld [vmem:[%s2160 + $0x169] sm:$0xff]
        %v6686 = vld [vmem:[%s2160 + $0x171] sm:$0xff]
        %v6687 = vpack.c.bf16 %v6656, %v6655
        %v6688 = vpack.c.bf16 %v6658, %v6657
        %v6689 = vpack.c.bf16 %v6660, %v6659
        %v6690 = vpack.c.bf16 %v6662, %v6661
        %v6691 = vpack.c.bf16 %v6664, %v6663
        %v6692 = vpack.c.bf16 %v6666, %v6665
        %v6693 = vpack.c.bf16 %v6668, %v6667
        %v6694 = vpack.c.bf16 %v6670, %v6669
        %v6695 = vpack.c.bf16 %v6672, %v6671
        %v6696 = vpack.c.bf16 %v6674, %v6673
        %v6697 = vpack.c.bf16 %v6676, %v6675
        %v6698 = vpack.c.bf16 %v6678, %v6677
        %v6699 = vpack.c.bf16 %v6680, %v6679
        %v6700 = vpack.c.bf16 %v6682, %v6681
        %v6701 = vpack.c.bf16 %v6684, %v6683
        %v6702 = vpack.c.bf16 %v6686, %v6685
        %s6703 = scalar_lea.vmem %s7, 28
        %v6704 = vld [vmem:[%s6703] sm:$0xf]
        %v6706 = vsel %vm503, %v6687, 0
        %v6709 = vsel %vm503, %v6688, 0
        %v6712 = vsel %vm503, %v6689, 0
        %v6715 = vsel %vm503, %v6690, 0
        %v6718 = vsel %vm503, %v6691, 0
        %v6721 = vsel %vm503, %v6692, 0
        %v6724 = vsel %vm503, %v6693, 0
        %v6727 = vsel %vm503, %v6694, 0
        %v6730 = vsel %vm503, %v6695, 0
        %v6733 = vsel %vm503, %v6696, 0
        %v6736 = vsel %vm503, %v6697, 0
        %v6739 = vsel %vm503, %v6698, 0
        %v6742 = vsel %vm503, %v6699, 0
        %v6745 = vsel %vm503, %v6700, 0
        %v6748 = vsel %vm503, %v6701, 0
        %v6751 = vsel %vm503, %v6702, 0
        %v6754 = vsel %vm552, %v6704, 0
        %6756 = vmatpush.bf16.msra.mxu0 0
        %6757 = vmatpush.bf16.msra.mxu0 0
        %6758 = vmatpush.bf16.msra.mxu0 0
        %6759 = vmatpush.bf16.msra.mxu0 0
        %6760 = vmatpush.bf16.msra.mxu0 0
        %6761 = vmatpush.bf16.msra.mxu0 0
        %6762 = vmatpush.bf16.msra.mxu0 0
        %6763 = vmatpush.bf16.msra.mxu0 %v6754
        %6764 = vmatmul.bf16.gmra.mxu0 %v6706
        %v6765 = vpop.f32.mrf.mxu0
        %v6766 = vadd.f32 0.0, %v6765
        %v6767 = vpop.f32.mrf.mxu0
        %v6768 = vadd.f32 0.0, %v6767
        %6769 = vmatmul.bf16.gmra.mxu0 %v6709
        %v6770 = vpop.f32.mrf.mxu0
        %v6771 = vadd.f32 0.0, %v6770
        %v6772 = vpop.f32.mrf.mxu0
        %v6773 = vadd.f32 0.0, %v6772
        %6774 = vmatmul.bf16.gmra.mxu0 %v6712
        %v6775 = vpop.f32.mrf.mxu0
        %v6776 = vadd.f32 0.0, %v6775
        %v6777 = vpop.f32.mrf.mxu0
        %v6778 = vadd.f32 0.0, %v6777
        %6779 = vmatmul.bf16.gmra.mxu0 %v6715
        %v6780 = vpop.f32.mrf.mxu0
        %v6781 = vadd.f32 0.0, %v6780
        %v6782 = vpop.f32.mrf.mxu0
        %v6783 = vadd.f32 0.0, %v6782
        %6784 = vmatmul.bf16.gmra.mxu0 %v6718
        %v6785 = vpop.f32.mrf.mxu0
        %v6786 = vadd.f32 0.0, %v6785
        %v6787 = vpop.f32.mrf.mxu0
        %v6788 = vadd.f32 0.0, %v6787
        %6789 = vmatmul.bf16.gmra.mxu0 %v6721
        %v6790 = vpop.f32.mrf.mxu0
        %v6791 = vadd.f32 0.0, %v6790
        %v6792 = vpop.f32.mrf.mxu0
        %v6793 = vadd.f32 0.0, %v6792
        %6794 = vmatmul.bf16.gmra.mxu0 %v6724
        %v6795 = vpop.f32.mrf.mxu0
        %v6796 = vadd.f32 0.0, %v6795
        %v6797 = vpop.f32.mrf.mxu0
        %v6798 = vadd.f32 0.0, %v6797
        %6799 = vmatmul.bf16.gmra.mxu0 %v6727
        %v6800 = vpop.f32.mrf.mxu0
        %v6801 = vadd.f32 0.0, %v6800
        %v6802 = vpop.f32.mrf.mxu0
        %v6803 = vadd.f32 0.0, %v6802
        %6804 = vmatmul.bf16.gmra.mxu0 %v6730
        %v6805 = vpop.f32.mrf.mxu0
        %v6806 = vadd.f32 0.0, %v6805
        %v6807 = vpop.f32.mrf.mxu0
        %v6808 = vadd.f32 0.0, %v6807
        %6809 = vmatmul.bf16.gmra.mxu0 %v6733
        %v6810 = vpop.f32.mrf.mxu0
        %v6811 = vadd.f32 0.0, %v6810
        %v6812 = vpop.f32.mrf.mxu0
        %v6813 = vadd.f32 0.0, %v6812
        %6814 = vmatmul.bf16.gmra.mxu0 %v6736
        %v6815 = vpop.f32.mrf.mxu0
        %v6816 = vadd.f32 0.0, %v6815
        %v6817 = vpop.f32.mrf.mxu0
        %v6818 = vadd.f32 0.0, %v6817
        %6819 = vmatmul.bf16.gmra.mxu0 %v6739
        %v6820 = vpop.f32.mrf.mxu0
        %v6821 = vadd.f32 0.0, %v6820
        %v6822 = vpop.f32.mrf.mxu0
        %v6823 = vadd.f32 0.0, %v6822
        %6824 = vmatmul.bf16.gmra.mxu0 %v6742
        %v6825 = vpop.f32.mrf.mxu0
        %v6826 = vadd.f32 0.0, %v6825
        %v6827 = vpop.f32.mrf.mxu0
        %v6828 = vadd.f32 0.0, %v6827
        %6829 = vmatmul.bf16.gmra.mxu0 %v6745
        %v6830 = vpop.f32.mrf.mxu0
        %v6831 = vadd.f32 0.0, %v6830
        %v6832 = vpop.f32.mrf.mxu0
        %v6833 = vadd.f32 0.0, %v6832
        %6834 = vmatmul.bf16.gmra.mxu0 %v6748
        %v6835 = vpop.f32.mrf.mxu0
        %v6836 = vadd.f32 0.0, %v6835
        %v6837 = vpop.f32.mrf.mxu0
        %v6838 = vadd.f32 0.0, %v6837
        %6839 = vmatmul.bf16.gmra.mxu0 %v6751
        %v6840 = vpop.f32.mrf.mxu0
        %v6841 = vadd.f32 0.0, %v6840
        %v6842 = vpop.f32.mrf.mxu0
        %v6843 = vadd.f32 0.0, %v6842
        %6844 = vdwg.mxu0
        %v6845 = vadd.f32 %v6623, %v6766
        %v6846 = vadd.f32 %v6624, %v6768
        %v6847 = vadd.f32 %v6625, %v6771
        %v6848 = vadd.f32 %v6626, %v6773
        %v6849 = vadd.f32 %v6627, %v6776
        %v6850 = vadd.f32 %v6628, %v6778
        %v6851 = vadd.f32 %v6629, %v6781
        %v6852 = vadd.f32 %v6630, %v6783
        %v6853 = vadd.f32 %v6631, %v6786
        %v6854 = vadd.f32 %v6632, %v6788
        %v6855 = vadd.f32 %v6633, %v6791
        %v6856 = vadd.f32 %v6634, %v6793
        %v6857 = vadd.f32 %v6635, %v6796
        %v6858 = vadd.f32 %v6636, %v6798
        %v6859 = vadd.f32 %v6637, %v6801
        %v6860 = vadd.f32 %v6638, %v6803
        %v6861 = vadd.f32 %v6639, %v6806
        %v6862 = vadd.f32 %v6640, %v6808
        %v6863 = vadd.f32 %v6641, %v6811
        %v6864 = vadd.f32 %v6642, %v6813
        %v6865 = vadd.f32 %v6643, %v6816
        %v6866 = vadd.f32 %v6644, %v6818
        %v6867 = vadd.f32 %v6645, %v6821
        %v6868 = vadd.f32 %v6646, %v6823
        %v6869 = vadd.f32 %v6647, %v6826
        %v6870 = vadd.f32 %v6648, %v6828
        %v6871 = vadd.f32 %v6649, %v6831
        %v6872 = vadd.f32 %v6650, %v6833
        %v6873 = vadd.f32 %v6651, %v6836
        %v6874 = vadd.f32 %v6652, %v6838
        %v6875 = vadd.f32 %v6653, %v6841
        %v6876 = vadd.f32 %v6654, %v6843
        %v6877 = vld [vmem:[%s2160 + $0x2] sm:$0xff]
        %v6878 = vld [vmem:[%s2160 + $0xa] sm:$0xff]
        %v6879 = vld [vmem:[%s2160 + $0x1a] sm:$0xff]
        %v6880 = vld [vmem:[%s2160 + $0x22] sm:$0xff]
        %v6881 = vld [vmem:[%s2160 + $0x32] sm:$0xff]
        %v6882 = vld [vmem:[%s2160 + $0x3a] sm:$0xff]
        %v6883 = vld [vmem:[%s2160 + $0x4a] sm:$0xff]
        %v6884 = vld [vmem:[%s2160 + $0x52] sm:$0xff]
        %v6885 = vld [vmem:[%s2160 + $0x62] sm:$0xff]
        %v6886 = vld [vmem:[%s2160 + $0x6a] sm:$0xff]
        %v6887 = vld [vmem:[%s2160 + $0x7a] sm:$0xff]
        %v6888 = vld [vmem:[%s2160 + $0x82] sm:$0xff]
        %v6889 = vld [vmem:[%s2160 + $0x92] sm:$0xff]
        %v6890 = vld [vmem:[%s2160 + $0x9a] sm:$0xff]
        %v6891 = vld [vmem:[%s2160 + $0xaa] sm:$0xff]
        %v6892 = vld [vmem:[%s2160 + $0xb2] sm:$0xff]
        %v6893 = vld [vmem:[%s2160 + $0xc2] sm:$0xff]
        %v6894 = vld [vmem:[%s2160 + $0xca] sm:$0xff]
        %v6895 = vld [vmem:[%s2160 + $0xda] sm:$0xff]
        %v6896 = vld [vmem:[%s2160 + $0xe2] sm:$0xff]
        %v6897 = vld [vmem:[%s2160 + $0xf2] sm:$0xff]
        %v6898 = vld [vmem:[%s2160 + $0xfa] sm:$0xff]
        %v6899 = vld [vmem:[%s2160 + $0x10a] sm:$0xff]
        %v6900 = vld [vmem:[%s2160 + $0x112] sm:$0xff]
        %v6901 = vld [vmem:[%s2160 + $0x122] sm:$0xff]
        %v6902 = vld [vmem:[%s2160 + $0x12a] sm:$0xff]
        %v6903 = vld [vmem:[%s2160 + $0x13a] sm:$0xff]
        %v6904 = vld [vmem:[%s2160 + $0x142] sm:$0xff]
        %v6905 = vld [vmem:[%s2160 + $0x152] sm:$0xff]
        %v6906 = vld [vmem:[%s2160 + $0x15a] sm:$0xff]
        %v6907 = vld [vmem:[%s2160 + $0x16a] sm:$0xff]
        %v6908 = vld [vmem:[%s2160 + $0x172] sm:$0xff]
        %v6909 = vpack.c.bf16 %v6878, %v6877
        %v6910 = vpack.c.bf16 %v6880, %v6879
        %v6911 = vpack.c.bf16 %v6882, %v6881
        %v6912 = vpack.c.bf16 %v6884, %v6883
        %v6913 = vpack.c.bf16 %v6886, %v6885
        %v6914 = vpack.c.bf16 %v6888, %v6887
        %v6915 = vpack.c.bf16 %v6890, %v6889
        %v6916 = vpack.c.bf16 %v6892, %v6891
        %v6917 = vpack.c.bf16 %v6894, %v6893
        %v6918 = vpack.c.bf16 %v6896, %v6895
        %v6919 = vpack.c.bf16 %v6898, %v6897
        %v6920 = vpack.c.bf16 %v6900, %v6899
        %v6921 = vpack.c.bf16 %v6902, %v6901
        %v6922 = vpack.c.bf16 %v6904, %v6903
        %v6923 = vpack.c.bf16 %v6906, %v6905
        %v6924 = vpack.c.bf16 %v6908, %v6907
        %s6925 = scalar_lea.vmem %s7, 32
        %v6926 = vld [vmem:[%s6925] sm:$0xf]
        %v6928 = vsel %vm503, %v6909, 0
        %v6931 = vsel %vm503, %v6910, 0
        %v6934 = vsel %vm503, %v6911, 0
        %v6937 = vsel %vm503, %v6912, 0
        %v6940 = vsel %vm503, %v6913, 0
        %v6943 = vsel %vm503, %v6914, 0
        %v6946 = vsel %vm503, %v6915, 0
        %v6949 = vsel %vm503, %v6916, 0
        %v6952 = vsel %vm503, %v6917, 0
        %v6955 = vsel %vm503, %v6918, 0
        %v6958 = vsel %vm503, %v6919, 0
        %v6961 = vsel %vm503, %v6920, 0
        %v6964 = vsel %vm503, %v6921, 0
        %v6967 = vsel %vm503, %v6922, 0
        %v6970 = vsel %vm503, %v6923, 0
        %v6973 = vsel %vm503, %v6924, 0
        %v6976 = vsel %vm552, %v6926, 0
        %6978 = vmatpush.bf16.msra.mxu0 0
        %6979 = vmatpush.bf16.msra.mxu0 0
        %6980 = vmatpush.bf16.msra.mxu0 0
        %6981 = vmatpush.bf16.msra.mxu0 0
        %6982 = vmatpush.bf16.msra.mxu0 0
        %6983 = vmatpush.bf16.msra.mxu0 0
        %6984 = vmatpush.bf16.msra.mxu0 0
        %6985 = vmatpush.bf16.msra.mxu0 %v6976
        %6986 = vmatmul.bf16.gmra.mxu0 %v6928
        %v6987 = vpop.f32.mrf.mxu0
        %v6988 = vadd.f32 0.0, %v6987
        %v6989 = vpop.f32.mrf.mxu0
        %v6990 = vadd.f32 0.0, %v6989
        %6991 = vmatmul.bf16.gmra.mxu0 %v6931
        %v6992 = vpop.f32.mrf.mxu0
        %v6993 = vadd.f32 0.0, %v6992
        %v6994 = vpop.f32.mrf.mxu0
        %v6995 = vadd.f32 0.0, %v6994
        %6996 = vmatmul.bf16.gmra.mxu0 %v6934
        %v6997 = vpop.f32.mrf.mxu0
        %v6998 = vadd.f32 0.0, %v6997
        %v6999 = vpop.f32.mrf.mxu0
        %v7000 = vadd.f32 0.0, %v6999
        %7001 = vmatmul.bf16.gmra.mxu0 %v6937
        %v7002 = vpop.f32.mrf.mxu0
        %v7003 = vadd.f32 0.0, %v7002
        %v7004 = vpop.f32.mrf.mxu0
        %v7005 = vadd.f32 0.0, %v7004
        %7006 = vmatmul.bf16.gmra.mxu0 %v6940
        %v7007 = vpop.f32.mrf.mxu0
        %v7008 = vadd.f32 0.0, %v7007
        %v7009 = vpop.f32.mrf.mxu0
        %v7010 = vadd.f32 0.0, %v7009
        %7011 = vmatmul.bf16.gmra.mxu0 %v6943
        %v7012 = vpop.f32.mrf.mxu0
        %v7013 = vadd.f32 0.0, %v7012
        %v7014 = vpop.f32.mrf.mxu0
        %v7015 = vadd.f32 0.0, %v7014
        %7016 = vmatmul.bf16.gmra.mxu0 %v6946
        %v7017 = vpop.f32.mrf.mxu0
        %v7018 = vadd.f32 0.0, %v7017
        %v7019 = vpop.f32.mrf.mxu0
        %v7020 = vadd.f32 0.0, %v7019
        %7021 = vmatmul.bf16.gmra.mxu0 %v6949
        %v7022 = vpop.f32.mrf.mxu0
        %v7023 = vadd.f32 0.0, %v7022
        %v7024 = vpop.f32.mrf.mxu0
        %v7025 = vadd.f32 0.0, %v7024
        %7026 = vmatmul.bf16.gmra.mxu0 %v6952
        %v7027 = vpop.f32.mrf.mxu0
        %v7028 = vadd.f32 0.0, %v7027
        %v7029 = vpop.f32.mrf.mxu0
        %v7030 = vadd.f32 0.0, %v7029
        %7031 = vmatmul.bf16.gmra.mxu0 %v6955
        %v7032 = vpop.f32.mrf.mxu0
        %v7033 = vadd.f32 0.0, %v7032
        %v7034 = vpop.f32.mrf.mxu0
        %v7035 = vadd.f32 0.0, %v7034
        %7036 = vmatmul.bf16.gmra.mxu0 %v6958
        %v7037 = vpop.f32.mrf.mxu0
        %v7038 = vadd.f32 0.0, %v7037
        %v7039 = vpop.f32.mrf.mxu0
        %v7040 = vadd.f32 0.0, %v7039
        %7041 = vmatmul.bf16.gmra.mxu0 %v6961
        %v7042 = vpop.f32.mrf.mxu0
        %v7043 = vadd.f32 0.0, %v7042
        %v7044 = vpop.f32.mrf.mxu0
        %v7045 = vadd.f32 0.0, %v7044
        %7046 = vmatmul.bf16.gmra.mxu0 %v6964
        %v7047 = vpop.f32.mrf.mxu0
        %v7048 = vadd.f32 0.0, %v7047
        %v7049 = vpop.f32.mrf.mxu0
        %v7050 = vadd.f32 0.0, %v7049
        %7051 = vmatmul.bf16.gmra.mxu0 %v6967
        %v7052 = vpop.f32.mrf.mxu0
        %v7053 = vadd.f32 0.0, %v7052
        %v7054 = vpop.f32.mrf.mxu0
        %v7055 = vadd.f32 0.0, %v7054
        %7056 = vmatmul.bf16.gmra.mxu0 %v6970
        %v7057 = vpop.f32.mrf.mxu0
        %v7058 = vadd.f32 0.0, %v7057
        %v7059 = vpop.f32.mrf.mxu0
        %v7060 = vadd.f32 0.0, %v7059
        %7061 = vmatmul.bf16.gmra.mxu0 %v6973
        %v7062 = vpop.f32.mrf.mxu0
        %v7063 = vadd.f32 0.0, %v7062
        %v7064 = vpop.f32.mrf.mxu0
        %v7065 = vadd.f32 0.0, %v7064
        %7066 = vdwg.mxu0
        %v7067 = vadd.f32 %v6845, %v6988
        %v7068 = vadd.f32 %v6846, %v6990
        %v7069 = vadd.f32 %v6847, %v6993
        %v7070 = vadd.f32 %v6848, %v6995
        %v7071 = vadd.f32 %v6849, %v6998
        %v7072 = vadd.f32 %v6850, %v7000
        %v7073 = vadd.f32 %v6851, %v7003
        %v7074 = vadd.f32 %v6852, %v7005
        %v7075 = vadd.f32 %v6853, %v7008
        %v7076 = vadd.f32 %v6854, %v7010
        %v7077 = vadd.f32 %v6855, %v7013
        %v7078 = vadd.f32 %v6856, %v7015
        %v7079 = vadd.f32 %v6857, %v7018
        %v7080 = vadd.f32 %v6858, %v7020
        %v7081 = vadd.f32 %v6859, %v7023
        %v7082 = vadd.f32 %v6860, %v7025
        %v7083 = vadd.f32 %v6861, %v7028
        %v7084 = vadd.f32 %v6862, %v7030
        %v7085 = vadd.f32 %v6863, %v7033
        %v7086 = vadd.f32 %v6864, %v7035
        %v7087 = vadd.f32 %v6865, %v7038
        %v7088 = vadd.f32 %v6866, %v7040
        %v7089 = vadd.f32 %v6867, %v7043
        %v7090 = vadd.f32 %v6868, %v7045
        %v7091 = vadd.f32 %v6869, %v7048
        %v7092 = vadd.f32 %v6870, %v7050
        %v7093 = vadd.f32 %v6871, %v7053
        %v7094 = vadd.f32 %v6872, %v7055
        %v7095 = vadd.f32 %v6873, %v7058
        %v7096 = vadd.f32 %v6874, %v7060
        %v7097 = vadd.f32 %v6875, %v7063
        %v7098 = vadd.f32 %v6876, %v7065
        %v7099 = vld [vmem:[%s8] sm:$0x1]
        %v7101 = vperm.slane %v7099, 0
        %v7103 = vadd.f32 %v7067, %v7101
        %v7104 = vadd.f32 %v7068, %v7101
        %v7105 = vadd.f32 %v7069, %v7101
        %v7106 = vadd.f32 %v7070, %v7101
        %v7107 = vadd.f32 %v7071, %v7101
        %v7108 = vadd.f32 %v7072, %v7101
        %v7109 = vadd.f32 %v7073, %v7101
        %v7110 = vadd.f32 %v7074, %v7101
        %v7111 = vadd.f32 %v7075, %v7101
        %v7112 = vadd.f32 %v7076, %v7101
        %v7113 = vadd.f32 %v7077, %v7101
        %v7114 = vadd.f32 %v7078, %v7101
        %v7115 = vadd.f32 %v7079, %v7101
        %v7116 = vadd.f32 %v7080, %v7101
        %v7117 = vadd.f32 %v7081, %v7101
        %v7118 = vadd.f32 %v7082, %v7101
        %v7119 = vadd.f32 %v7083, %v7101
        %v7120 = vadd.f32 %v7084, %v7101
        %v7121 = vadd.f32 %v7085, %v7101
        %v7122 = vadd.f32 %v7086, %v7101
        %v7123 = vadd.f32 %v7087, %v7101
        %v7124 = vadd.f32 %v7088, %v7101
        %v7125 = vadd.f32 %v7089, %v7101
        %v7126 = vadd.f32 %v7090, %v7101
        %v7127 = vadd.f32 %v7091, %v7101
        %v7128 = vadd.f32 %v7092, %v7101
        %v7129 = vadd.f32 %v7093, %v7101
        %v7130 = vadd.f32 %v7094, %v7101
        %v7131 = vadd.f32 %v7095, %v7101
        %v7132 = vadd.f32 %v7096, %v7101
        %v7133 = vadd.f32 %v7097, %v7101
        %v7134 = vadd.f32 %v7098, %v7101
        %v7135 = vmax.f32 %v7103, 0.0
        %v7136 = vmax.f32 %v7104, 0.0
        %v7137 = vmax.f32 %v7105, 0.0
        %v7138 = vmax.f32 %v7106, 0.0
        %v7139 = vmax.f32 %v7107, 0.0
        %v7140 = vmax.f32 %v7108, 0.0
        %v7141 = vmax.f32 %v7109, 0.0
        %v7142 = vmax.f32 %v7110, 0.0
        %v7143 = vmax.f32 %v7111, 0.0
        %v7144 = vmax.f32 %v7112, 0.0
        %v7145 = vmax.f32 %v7113, 0.0
        %v7146 = vmax.f32 %v7114, 0.0
        %v7147 = vmax.f32 %v7115, 0.0
        %v7148 = vmax.f32 %v7116, 0.0
        %v7149 = vmax.f32 %v7117, 0.0
        %v7150 = vmax.f32 %v7118, 0.0
        %v7151 = vmax.f32 %v7119, 0.0
        %v7152 = vmax.f32 %v7120, 0.0
        %v7153 = vmax.f32 %v7121, 0.0
        %v7154 = vmax.f32 %v7122, 0.0
        %v7155 = vmax.f32 %v7123, 0.0
        %v7156 = vmax.f32 %v7124, 0.0
        %v7157 = vmax.f32 %v7125, 0.0
        %v7158 = vmax.f32 %v7126, 0.0
        %v7159 = vmax.f32 %v7127, 0.0
        %v7160 = vmax.f32 %v7128, 0.0
        %v7161 = vmax.f32 %v7129, 0.0
        %v7162 = vmax.f32 %v7130, 0.0
        %v7163 = vmax.f32 %v7131, 0.0
        %v7164 = vmax.f32 %v7132, 0.0
        %v7165 = vmax.f32 %v7133, 0.0
        %v7166 = vmax.f32 %v7134, 0.0
        %7167 = vst.msk [vmem:[#allocation2] sm:$0xff] %vm503, -inf
        %7168 = vst.msk [vmem:[#allocation2 + $0x8] sm:$0xff] %vm503, -inf
        %7169 = vst.msk [vmem:[#allocation2 + $0x10] sm:$0x3] %vm679, -inf
        %7170 = vst.msk [vmem:[#allocation2 + $0x18] sm:$0xff] %vm503, -inf
        %7171 = vst.msk [vmem:[#allocation2 + $0x20] sm:$0xff] %vm503, -inf
        %7172 = vst.msk [vmem:[#allocation2 + $0x28] sm:$0x3] %vm679, -inf
        %7173 = vst.msk [vmem:[#allocation2 + $0x30] sm:$0xff] %vm503, -inf
        %7174 = vst.msk [vmem:[#allocation2 + $0x38] sm:$0xff] %vm503, -inf
        %7175 = vst.msk [vmem:[#allocation2 + $0x40] sm:$0x3] %vm679, -inf
        %7176 = vst.msk [vmem:[#allocation2 + $0x48] sm:$0xff] %vm503, -inf
        %7177 = vst.msk [vmem:[#allocation2 + $0x50] sm:$0xff] %vm503, -inf
        %7178 = vst.msk [vmem:[#allocation2 + $0x58] sm:$0x3] %vm679, -inf
        %7179 = vst.msk [vmem:[#allocation2 + $0x60] sm:$0xff] %vm503, -inf
        %7180 = vst.msk [vmem:[#allocation2 + $0x68] sm:$0xff] %vm503, -inf
        %7181 = vst.msk [vmem:[#allocation2 + $0x70] sm:$0x3] %vm679, -inf
        %7182 = vst.msk [vmem:[#allocation2 + $0x78] sm:$0xff] %vm503, -inf
        %7183 = vst.msk [vmem:[#allocation2 + $0x80] sm:$0xff] %vm503, -inf
        %7184 = vst.msk [vmem:[#allocation2 + $0x88] sm:$0x3] %vm679, -inf
        %7185 = vst.msk [vmem:[#allocation2 + $0x90] sm:$0xff] %vm503, -inf
        %7186 = vst.msk [vmem:[#allocation2 + $0x98] sm:$0xff] %vm503, -inf
        %7187 = vst.msk [vmem:[#allocation2 + $0xa0] sm:$0x3] %vm679, -inf
        %7188 = vst.msk [vmem:[#allocation2 + $0xa8] sm:$0xff] %vm503, -inf
        %7189 = vst.msk [vmem:[#allocation2 + $0xb0] sm:$0xff] %vm503, -inf
        %7190 = vst.msk [vmem:[#allocation2 + $0xb8] sm:$0x3] %vm679, -inf
        %7191 = vst.msk [vmem:[#allocation2 + $0xc0] sm:$0xff] %vm503, -inf
        %7192 = vst.msk [vmem:[#allocation2 + $0xc8] sm:$0xff] %vm503, -inf
        %7193 = vst.msk [vmem:[#allocation2 + $0xd0] sm:$0x3] %vm679, -inf
        %7194 = vst.msk [vmem:[#allocation2 + $0xd8] sm:$0xff] %vm503, -inf
        %7195 = vst.msk [vmem:[#allocation2 + $0xe0] sm:$0xff] %vm503, -inf
        %7196 = vst.msk [vmem:[#allocation2 + $0xe8] sm:$0x3] %vm679, -inf
        %7197 = vst.msk [vmem:[#allocation2 + $0xf0] sm:$0xff] %vm503, -inf
        %7198 = vst.msk [vmem:[#allocation2 + $0xf8] sm:$0xff] %vm503, -inf
        %7199 = vst.msk [vmem:[#allocation2 + $0x100] sm:$0x3] %vm679, -inf
        %7200 = vst.msk [vmem:[#allocation2 + $0x108] sm:$0xff] %vm503, -inf
        %7201 = vst.msk [vmem:[#allocation2 + $0x110] sm:$0xff] %vm503, -inf
        %7202 = vst.msk [vmem:[#allocation2 + $0x118] sm:$0x3] %vm679, -inf
        %7203 = vst.msk [vmem:[#allocation2 + $0x120] sm:$0xff] %vm503, -inf
        %7204 = vst.msk [vmem:[#allocation2 + $0x128] sm:$0xff] %vm503, -inf
        %7205 = vst.msk [vmem:[#allocation2 + $0x130] sm:$0x3] %vm679, -inf
        %7206 = vst.msk [vmem:[#allocation2 + $0x138] sm:$0xff] %vm503, -inf
        %7207 = vst.msk [vmem:[#allocation2 + $0x140] sm:$0xff] %vm503, -inf
        %7208 = vst.msk [vmem:[#allocation2 + $0x148] sm:$0x3] %vm679, -inf
        %7209 = vst.msk [vmem:[#allocation2 + $0x150] sm:$0xff] %vm503, -inf
        %7210 = vst.msk [vmem:[#allocation2 + $0x158] sm:$0xff] %vm503, -inf
        %7211 = vst.msk [vmem:[#allocation2 + $0x160] sm:$0x3] %vm679, -inf
        %7212 = vst.msk [vmem:[#allocation2 + $0x168] sm:$0xff] %vm503, -inf
        %7213 = vst.msk [vmem:[#allocation2 + $0x170] sm:$0xff] %vm503, -inf
        %7214 = vst.msk [vmem:[#allocation2 + $0x178] sm:$0x3] %vm679, -inf
        %7215 = vst.msk [vmem:[#allocation2 + $0x180] sm:$0xff] %vm503, -inf
        %7216 = vst.msk [vmem:[#allocation2 + $0x188] sm:$0xff] %vm503, -inf
        %7217 = vst.msk [vmem:[#allocation2 + $0x190] sm:$0x3] %vm679, -inf
        %7218 = vst.msk [vmem:[#allocation2 + $0x198] sm:$0xff] %vm503, -inf
        %7219 = vst.msk [vmem:[#allocation2 + $0x1a0] sm:$0xff] %vm503, -inf
        %7220 = vst.msk [vmem:[#allocation2 + $0x1a8] sm:$0x3] %vm679, -inf
        %v7221 = vunpack.c.l.bf16 %v386
        %v7222 = vunpack.c.l.bf16 %v387
        %v7223 = vunpack.c.l.bf16 %v388
        %v7224 = vunpack.c.l.bf16 %v389
        %v7225 = vunpack.c.l.bf16 %v390
        %v7226 = vunpack.c.l.bf16 %v391
        %v7227 = vunpack.c.l.bf16 %v392
        %v7228 = vunpack.c.l.bf16 %v393
        %v7229 = vunpack.c.l.bf16 %v394
        %v7230 = vunpack.c.l.bf16 %v395
        %v7231 = vunpack.c.l.bf16 %v396
        %v7232 = vunpack.c.l.bf16 %v397
        %v7233 = vunpack.c.l.bf16 %v398
        %v7234 = vunpack.c.l.bf16 %v399
        %v7235 = vunpack.c.l.bf16 %v400
        %v7236 = vunpack.c.l.bf16 %v401
        %v7237 = vunpack.c.l.bf16 %v402
        %v7238 = vunpack.c.l.bf16 %v403
        %v7239 = vunpack.c.l.bf16 %v404
        %v7240 = vunpack.c.l.bf16 %v405
        %v7241 = vunpack.c.l.bf16 %v406
        %v7242 = vunpack.c.l.bf16 %v407
        %v7243 = vunpack.c.l.bf16 %v408
        %v7244 = vunpack.c.l.bf16 %v409
        %v7245 = vunpack.c.l.bf16 %v410
        %v7246 = vunpack.c.l.bf16 %v411
        %v7247 = vunpack.c.l.bf16 %v412
        %v7248 = vunpack.c.l.bf16 %v413
        %v7249 = vunpack.c.l.bf16 %v414
        %v7250 = vunpack.c.l.bf16 %v415
        %v7251 = vunpack.c.l.bf16 %v416
        %v7252 = vunpack.c.l.bf16 %v417
        %7253 = vst.msk [vmem:[%s860 + $0x1] sm:$0xff] %vm503, %v7221
        %7254 = vst.msk [vmem:[%s860 + $0x9] sm:$0xff] %vm503, %v7222
        %7255 = vst.msk [vmem:[%s860 + $0x19] sm:$0xff] %vm503, %v7223
        %7256 = vst.msk [vmem:[%s860 + $0x21] sm:$0xff] %vm503, %v7224
        %7257 = vst.msk [vmem:[%s860 + $0x31] sm:$0xff] %vm503, %v7225
        %7258 = vst.msk [vmem:[%s860 + $0x39] sm:$0xff] %vm503, %v7226
        %7259 = vst.msk [vmem:[%s860 + $0x49] sm:$0xff] %vm503, %v7227
        %7260 = vst.msk [vmem:[%s860 + $0x51] sm:$0xff] %vm503, %v7228
        %7261 = vst.msk [vmem:[%s860 + $0x61] sm:$0xff] %vm503, %v7229
        %7262 = vst.msk [vmem:[%s860 + $0x69] sm:$0xff] %vm503, %v7230
        %7263 = vst.msk [vmem:[%s860 + $0x79] sm:$0xff] %vm503, %v7231
        %7264 = vst.msk [vmem:[%s860 + $0x81] sm:$0xff] %vm503, %v7232
        %7265 = vst.msk [vmem:[%s860 + $0x91] sm:$0xff] %vm503, %v7233
        %7266 = vst.msk [vmem:[%s860 + $0x99] sm:$0xff] %vm503, %v7234
        %7267 = vst.msk [vmem:[%s860 + $0xa9] sm:$0xff] %vm503, %v7235
        %7268 = vst.msk [vmem:[%s860 + $0xb1] sm:$0xff] %vm503, %v7236
        %7269 = vst.msk [vmem:[%s860 + $0xc1] sm:$0xff] %vm503, %v7237
        %7270 = vst.msk [vmem:[%s860 + $0xc9] sm:$0xff] %vm503, %v7238
        %7271 = vst.msk [vmem:[%s860 + $0xd9] sm:$0xff] %vm503, %v7239
        %7272 = vst.msk [vmem:[%s860 + $0xe1] sm:$0xff] %vm503, %v7240
        %7273 = vst.msk [vmem:[%s860 + $0xf1] sm:$0xff] %vm503, %v7241
        %7274 = vst.msk [vmem:[%s860 + $0xf9] sm:$0xff] %vm503, %v7242
        %7275 = vst.msk [vmem:[%s860 + $0x109] sm:$0xff] %vm503, %v7243
        %7276 = vst.msk [vmem:[%s860 + $0x111] sm:$0xff] %vm503, %v7244
        %7277 = vst.msk [vmem:[%s860 + $0x121] sm:$0xff] %vm503, %v7245
        %7278 = vst.msk [vmem:[%s860 + $0x129] sm:$0xff] %vm503, %v7246
        %7279 = vst.msk [vmem:[%s860 + $0x139] sm:$0xff] %vm503, %v7247
        %7280 = vst.msk [vmem:[%s860 + $0x141] sm:$0xff] %vm503, %v7248
        %7281 = vst.msk [vmem:[%s860 + $0x151] sm:$0xff] %vm503, %v7249
        %7282 = vst.msk [vmem:[%s860 + $0x159] sm:$0xff] %vm503, %v7250
        %7283 = vst.msk [vmem:[%s860 + $0x169] sm:$0xff] %vm503, %v7251
        %7284 = vst.msk [vmem:[%s860 + $0x171] sm:$0xff] %vm503, %v7252
        %v7285 = vld [vmem:[#allocation2] sm:$0xff]
        %v7286 = vld [vmem:[#allocation2 + $0x8] sm:$0xff]
        %v7287 = vld [vmem:[#allocation2 + $0x18] sm:$0xff]
        %v7288 = vld [vmem:[#allocation2 + $0x20] sm:$0xff]
        %v7289 = vld [vmem:[#allocation2 + $0x30] sm:$0xff]
        %v7290 = vld [vmem:[#allocation2 + $0x38] sm:$0xff]
        %v7291 = vld [vmem:[#allocation2 + $0x48] sm:$0xff]
        %v7292 = vld [vmem:[#allocation2 + $0x50] sm:$0xff]
        %v7293 = vld [vmem:[#allocation2 + $0x60] sm:$0xff]
        %v7294 = vld [vmem:[#allocation2 + $0x68] sm:$0xff]
        %v7295 = vld [vmem:[#allocation2 + $0x78] sm:$0xff]
        %v7296 = vld [vmem:[#allocation2 + $0x80] sm:$0xff]
        %v7297 = vld [vmem:[#allocation2 + $0x90] sm:$0xff]
        %v7298 = vld [vmem:[#allocation2 + $0x98] sm:$0xff]
        %v7299 = vld [vmem:[#allocation2 + $0xa8] sm:$0xff]
        %v7300 = vld [vmem:[#allocation2 + $0xb0] sm:$0xff]
        %v7301 = vld [vmem:[#allocation2 + $0xc0] sm:$0xff]
        %v7302 = vld [vmem:[#allocation2 + $0xc8] sm:$0xff]
        %v7303 = vld [vmem:[#allocation2 + $0xd8] sm:$0xff]
        %v7304 = vld [vmem:[#allocation2 + $0xe0] sm:$0xff]
        %v7305 = vld [vmem:[#allocation2 + $0xf0] sm:$0xff]
        %v7306 = vld [vmem:[#allocation2 + $0xf8] sm:$0xff]
        %v7307 = vld [vmem:[#allocation2 + $0x108] sm:$0xff]
        %v7308 = vld [vmem:[#allocation2 + $0x110] sm:$0xff]
        %v7309 = vld [vmem:[#allocation2 + $0x120] sm:$0xff]
        %v7310 = vld [vmem:[#allocation2 + $0x128] sm:$0xff]
        %v7311 = vld [vmem:[#allocation2 + $0x138] sm:$0xff]
        %v7312 = vld [vmem:[#allocation2 + $0x140] sm:$0xff]
        %v7313 = vld [vmem:[#allocation2 + $0x150] sm:$0xff]
        %v7314 = vld [vmem:[#allocation2 + $0x158] sm:$0xff]
        %v7315 = vld [vmem:[#allocation2 + $0x168] sm:$0xff]
        %v7316 = vld [vmem:[#allocation2 + $0x170] sm:$0xff]
        %v7317 = vld [vmem:[#allocation2 + $0x1] sm:$0xff]
        %v7318 = vld [vmem:[#allocation2 + $0x9] sm:$0xff]
        %v7319 = vld [vmem:[#allocation2 + $0x19] sm:$0xff]
        %v7320 = vld [vmem:[#allocation2 + $0x21] sm:$0xff]
        %v7321 = vld [vmem:[#allocation2 + $0x31] sm:$0xff]
        %v7322 = vld [vmem:[#allocation2 + $0x39] sm:$0xff]
        %v7323 = vld [vmem:[#allocation2 + $0x49] sm:$0xff]
        %v7324 = vld [vmem:[#allocation2 + $0x51] sm:$0xff]
        %v7325 = vld [vmem:[#allocation2 + $0x61] sm:$0xff]
        %v7326 = vld [vmem:[#allocation2 + $0x69] sm:$0xff]
        %v7327 = vld [vmem:[#allocation2 + $0x79] sm:$0xff]
        %v7328 = vld [vmem:[#allocation2 + $0x81] sm:$0xff]
        %v7329 = vld [vmem:[#allocation2 + $0x91] sm:$0xff]
        %v7330 = vld [vmem:[#allocation2 + $0x99] sm:$0xff]
        %v7331 = vld [vmem:[#allocation2 + $0xa9] sm:$0xff]
        %v7332 = vld [vmem:[#allocation2 + $0xb1] sm:$0xff]
        %v7333 = vld [vmem:[#allocation2 + $0xc1] sm:$0xff]
        %v7334 = vld [vmem:[#allocation2 + $0xc9] sm:$0xff]
        %v7335 = vld [vmem:[#allocation2 + $0xd9] sm:$0xff]
        %v7336 = vld [vmem:[#allocation2 + $0xe1] sm:$0xff]
        %v7337 = vld [vmem:[#allocation2 + $0xf1] sm:$0xff]
        %v7338 = vld [vmem:[#allocation2 + $0xf9] sm:$0xff]
        %v7339 = vld [vmem:[#allocation2 + $0x109] sm:$0xff]
        %v7340 = vld [vmem:[#allocation2 + $0x111] sm:$0xff]
        %v7341 = vld [vmem:[#allocation2 + $0x121] sm:$0xff]
        %v7342 = vld [vmem:[#allocation2 + $0x129] sm:$0xff]
        %v7343 = vld [vmem:[#allocation2 + $0x139] sm:$0xff]
        %v7344 = vld [vmem:[#allocation2 + $0x141] sm:$0xff]
        %v7345 = vld [vmem:[#allocation2 + $0x151] sm:$0xff]
        %v7346 = vld [vmem:[#allocation2 + $0x159] sm:$0xff]
        %v7347 = vld [vmem:[#allocation2 + $0x169] sm:$0xff]
        %v7348 = vld [vmem:[#allocation2 + $0x171] sm:$0xff]
        %v7349 = vmax.f32 %v7285, %v7317
        %v7350 = vmax.f32 %v7286, %v7318
        %v7351 = vmax.f32 %v7287, %v7319
        %v7352 = vmax.f32 %v7288, %v7320
        %v7353 = vmax.f32 %v7289, %v7321
        %v7354 = vmax.f32 %v7290, %v7322
        %v7355 = vmax.f32 %v7291, %v7323
        %v7356 = vmax.f32 %v7292, %v7324
        %v7357 = vmax.f32 %v7293, %v7325
        %v7358 = vmax.f32 %v7294, %v7326
        %v7359 = vmax.f32 %v7295, %v7327
        %v7360 = vmax.f32 %v7296, %v7328
        %v7361 = vmax.f32 %v7297, %v7329
        %v7362 = vmax.f32 %v7298, %v7330
        %v7363 = vmax.f32 %v7299, %v7331
        %v7364 = vmax.f32 %v7300, %v7332
        %v7365 = vmax.f32 %v7301, %v7333
        %v7366 = vmax.f32 %v7302, %v7334
        %v7367 = vmax.f32 %v7303, %v7335
        %v7368 = vmax.f32 %v7304, %v7336
        %v7369 = vmax.f32 %v7305, %v7337
        %v7370 = vmax.f32 %v7306, %v7338
        %v7371 = vmax.f32 %v7307, %v7339
        %v7372 = vmax.f32 %v7308, %v7340
        %v7373 = vmax.f32 %v7309, %v7341
        %v7374 = vmax.f32 %v7310, %v7342
        %v7375 = vmax.f32 %v7311, %v7343
        %v7376 = vmax.f32 %v7312, %v7344
        %v7377 = vmax.f32 %v7313, %v7345
        %v7378 = vmax.f32 %v7314, %v7346
        %v7379 = vmax.f32 %v7315, %v7347
        %v7380 = vmax.f32 %v7316, %v7348
        %v7381 = vld [vmem:[#allocation2 + $0x2] sm:$0xff]
        %v7382 = vld [vmem:[#allocation2 + $0xa] sm:$0xff]
        %v7383 = vld [vmem:[#allocation2 + $0x1a] sm:$0xff]
        %v7384 = vld [vmem:[#allocation2 + $0x22] sm:$0xff]
        %v7385 = vld [vmem:[#allocation2 + $0x32] sm:$0xff]
        %v7386 = vld [vmem:[#allocation2 + $0x3a] sm:$0xff]
        %v7387 = vld [vmem:[#allocation2 + $0x4a] sm:$0xff]
        %v7388 = vld [vmem:[#allocation2 + $0x52] sm:$0xff]
        %v7389 = vld [vmem:[#allocation2 + $0x62] sm:$0xff]
        %v7390 = vld [vmem:[#allocation2 + $0x6a] sm:$0xff]
        %v7391 = vld [vmem:[#allocation2 + $0x7a] sm:$0xff]
        %v7392 = vld [vmem:[#allocation2 + $0x82] sm:$0xff]
        %v7393 = vld [vmem:[#allocation2 + $0x92] sm:$0xff]
        %v7394 = vld [vmem:[#allocation2 + $0x9a] sm:$0xff]
        %v7395 = vld [vmem:[#allocation2 + $0xaa] sm:$0xff]
        %v7396 = vld [vmem:[#allocation2 + $0xb2] sm:$0xff]
        %v7397 = vld [vmem:[#allocation2 + $0xc2] sm:$0xff]
        %v7398 = vld [vmem:[#allocation2 + $0xca] sm:$0xff]
        %v7399 = vld [vmem:[#allocation2 + $0xda] sm:$0xff]
        %v7400 = vld [vmem:[#allocation2 + $0xe2] sm:$0xff]
        %v7401 = vld [vmem:[#allocation2 + $0xf2] sm:$0xff]
        %v7402 = vld [vmem:[#allocation2 + $0xfa] sm:$0xff]
        %v7403 = vld [vmem:[#allocation2 + $0x10a] sm:$0xff]
        %v7404 = vld [vmem:[#allocation2 + $0x112] sm:$0xff]
        %v7405 = vld [vmem:[#allocation2 + $0x122] sm:$0xff]
        %v7406 = vld [vmem:[#allocation2 + $0x12a] sm:$0xff]
        %v7407 = vld [vmem:[#allocation2 + $0x13a] sm:$0xff]
        %v7408 = vld [vmem:[#allocation2 + $0x142] sm:$0xff]
        %v7409 = vld [vmem:[#allocation2 + $0x152] sm:$0xff]
        %v7410 = vld [vmem:[#allocation2 + $0x15a] sm:$0xff]
        %v7411 = vld [vmem:[#allocation2 + $0x16a] sm:$0xff]
        %v7412 = vld [vmem:[#allocation2 + $0x172] sm:$0xff]
        %v7413 = vmax.f32 %v7349, %v7381
        %v7414 = vmax.f32 %v7350, %v7382
        %v7415 = vmax.f32 %v7351, %v7383
        %v7416 = vmax.f32 %v7352, %v7384
        %v7417 = vmax.f32 %v7353, %v7385
        %v7418 = vmax.f32 %v7354, %v7386
        %v7419 = vmax.f32 %v7355, %v7387
        %v7420 = vmax.f32 %v7356, %v7388
        %v7421 = vmax.f32 %v7357, %v7389
        %v7422 = vmax.f32 %v7358, %v7390
        %v7423 = vmax.f32 %v7359, %v7391
        %v7424 = vmax.f32 %v7360, %v7392
        %v7425 = vmax.f32 %v7361, %v7393
        %v7426 = vmax.f32 %v7362, %v7394
        %v7427 = vmax.f32 %v7363, %v7395
        %v7428 = vmax.f32 %v7364, %v7396
        %v7429 = vmax.f32 %v7365, %v7397
        %v7430 = vmax.f32 %v7366, %v7398
        %v7431 = vmax.f32 %v7367, %v7399
        %v7432 = vmax.f32 %v7368, %v7400
        %v7433 = vmax.f32 %v7369, %v7401
        %v7434 = vmax.f32 %v7370, %v7402
        %v7435 = vmax.f32 %v7371, %v7403
        %v7436 = vmax.f32 %v7372, %v7404
        %v7437 = vmax.f32 %v7373, %v7405
        %v7438 = vmax.f32 %v7374, %v7406
        %v7439 = vmax.f32 %v7375, %v7407
        %v7440 = vmax.f32 %v7376, %v7408
        %v7441 = vmax.f32 %v7377, %v7409
        %v7442 = vmax.f32 %v7378, %v7410
        %v7443 = vmax.f32 %v7379, %v7411
        %v7444 = vmax.f32 %v7380, %v7412
        %v7445 = vld [vmem:[%s860] sm:$0xff]
        %v7446 = vld [vmem:[%s860 + $0x8] sm:$0xff]
        %v7447 = vld [vmem:[%s860 + $0x18] sm:$0xff]
        %v7448 = vld [vmem:[%s860 + $0x20] sm:$0xff]
        %v7449 = vld [vmem:[%s860 + $0x30] sm:$0xff]
        %v7450 = vld [vmem:[%s860 + $0x38] sm:$0xff]
        %v7451 = vld [vmem:[%s860 + $0x48] sm:$0xff]
        %v7452 = vld [vmem:[%s860 + $0x50] sm:$0xff]
        %v7453 = vld [vmem:[%s860 + $0x60] sm:$0xff]
        %v7454 = vld [vmem:[%s860 + $0x68] sm:$0xff]
        %v7455 = vld [vmem:[%s860 + $0x78] sm:$0xff]
        %v7456 = vld [vmem:[%s860 + $0x80] sm:$0xff]
        %v7457 = vld [vmem:[%s860 + $0x90] sm:$0xff]
        %v7458 = vld [vmem:[%s860 + $0x98] sm:$0xff]
        %v7459 = vld [vmem:[%s860 + $0xa8] sm:$0xff]
        %v7460 = vld [vmem:[%s860 + $0xb0] sm:$0xff]
        %v7461 = vld [vmem:[%s860 + $0xc0] sm:$0xff]
        %v7462 = vld [vmem:[%s860 + $0xc8] sm:$0xff]
        %v7463 = vld [vmem:[%s860 + $0xd8] sm:$0xff]
        %v7464 = vld [vmem:[%s860 + $0xe0] sm:$0xff]
        %v7465 = vld [vmem:[%s860 + $0xf0] sm:$0xff]
        %v7466 = vld [vmem:[%s860 + $0xf8] sm:$0xff]
        %v7467 = vld [vmem:[%s860 + $0x108] sm:$0xff]
        %v7468 = vld [vmem:[%s860 + $0x110] sm:$0xff]
        %v7469 = vld [vmem:[%s860 + $0x120] sm:$0xff]
        %v7470 = vld [vmem:[%s860 + $0x128] sm:$0xff]
        %v7471 = vld [vmem:[%s860 + $0x138] sm:$0xff]
        %v7472 = vld [vmem:[%s860 + $0x140] sm:$0xff]
        %v7473 = vld [vmem:[%s860 + $0x150] sm:$0xff]
        %v7474 = vld [vmem:[%s860 + $0x158] sm:$0xff]
        %v7475 = vld [vmem:[%s860 + $0x168] sm:$0xff]
        %v7476 = vld [vmem:[%s860 + $0x170] sm:$0xff]
        %v7477 = vmax.f32 %v7413, %v7445
        %v7478 = vmax.f32 %v7414, %v7446
        %v7479 = vmax.f32 %v7415, %v7447
        %v7480 = vmax.f32 %v7416, %v7448
        %v7481 = vmax.f32 %v7417, %v7449
        %v7482 = vmax.f32 %v7418, %v7450
        %v7483 = vmax.f32 %v7419, %v7451
        %v7484 = vmax.f32 %v7420, %v7452
        %v7485 = vmax.f32 %v7421, %v7453
        %v7486 = vmax.f32 %v7422, %v7454
        %v7487 = vmax.f32 %v7423, %v7455
        %v7488 = vmax.f32 %v7424, %v7456
        %v7489 = vmax.f32 %v7425, %v7457
        %v7490 = vmax.f32 %v7426, %v7458
        %v7491 = vmax.f32 %v7427, %v7459
        %v7492 = vmax.f32 %v7428, %v7460
        %v7493 = vmax.f32 %v7429, %v7461
        %v7494 = vmax.f32 %v7430, %v7462
        %v7495 = vmax.f32 %v7431, %v7463
        %v7496 = vmax.f32 %v7432, %v7464
        %v7497 = vmax.f32 %v7433, %v7465
        %v7498 = vmax.f32 %v7434, %v7466
        %v7499 = vmax.f32 %v7435, %v7467
        %v7500 = vmax.f32 %v7436, %v7468
        %v7501 = vmax.f32 %v7437, %v7469
        %v7502 = vmax.f32 %v7438, %v7470
        %v7503 = vmax.f32 %v7439, %v7471
        %v7504 = vmax.f32 %v7440, %v7472
        %v7505 = vmax.f32 %v7441, %v7473
        %v7506 = vmax.f32 %v7442, %v7474
        %v7507 = vmax.f32 %v7443, %v7475
        %v7508 = vmax.f32 %v7444, %v7476
        %v7509 = vld [vmem:[%s860 + $0x1] sm:$0xff]
        %v7510 = vld [vmem:[%s860 + $0x9] sm:$0xff]
        %v7511 = vld [vmem:[%s860 + $0x19] sm:$0xff]
        %v7512 = vld [vmem:[%s860 + $0x21] sm:$0xff]
        %v7513 = vld [vmem:[%s860 + $0x31] sm:$0xff]
        %v7514 = vld [vmem:[%s860 + $0x39] sm:$0xff]
        %v7515 = vld [vmem:[%s860 + $0x49] sm:$0xff]
        %v7516 = vld [vmem:[%s860 + $0x51] sm:$0xff]
        %v7517 = vld [vmem:[%s860 + $0x61] sm:$0xff]
        %v7518 = vld [vmem:[%s860 + $0x69] sm:$0xff]
        %v7519 = vld [vmem:[%s860 + $0x79] sm:$0xff]
        %v7520 = vld [vmem:[%s860 + $0x81] sm:$0xff]
        %v7521 = vld [vmem:[%s860 + $0x91] sm:$0xff]
        %v7522 = vld [vmem:[%s860 + $0x99] sm:$0xff]
        %v7523 = vld [vmem:[%s860 + $0xa9] sm:$0xff]
        %v7524 = vld [vmem:[%s860 + $0xb1] sm:$0xff]
        %v7525 = vld [vmem:[%s860 + $0xc1] sm:$0xff]
        %v7526 = vld [vmem:[%s860 + $0xc9] sm:$0xff]
        %v7527 = vld [vmem:[%s860 + $0xd9] sm:$0xff]
        %v7528 = vld [vmem:[%s860 + $0xe1] sm:$0xff]
        %v7529 = vld [vmem:[%s860 + $0xf1] sm:$0xff]
        %v7530 = vld [vmem:[%s860 + $0xf9] sm:$0xff]
        %v7531 = vld [vmem:[%s860 + $0x109] sm:$0xff]
        %v7532 = vld [vmem:[%s860 + $0x111] sm:$0xff]
        %v7533 = vld [vmem:[%s860 + $0x121] sm:$0xff]
        %v7534 = vld [vmem:[%s860 + $0x129] sm:$0xff]
        %v7535 = vld [vmem:[%s860 + $0x139] sm:$0xff]
        %v7536 = vld [vmem:[%s860 + $0x141] sm:$0xff]
        %v7537 = vld [vmem:[%s860 + $0x151] sm:$0xff]
        %v7538 = vld [vmem:[%s860 + $0x159] sm:$0xff]
        %v7539 = vld [vmem:[%s860 + $0x169] sm:$0xff]
        %v7540 = vld [vmem:[%s860 + $0x171] sm:$0xff]
        %v7541 = vmax.f32 %v7477, %v7509
        %v7542 = vmax.f32 %v7478, %v7510
        %v7543 = vmax.f32 %v7479, %v7511
        %v7544 = vmax.f32 %v7480, %v7512
        %v7545 = vmax.f32 %v7481, %v7513
        %v7546 = vmax.f32 %v7482, %v7514
        %v7547 = vmax.f32 %v7483, %v7515
        %v7548 = vmax.f32 %v7484, %v7516
        %v7549 = vmax.f32 %v7485, %v7517
        %v7550 = vmax.f32 %v7486, %v7518
        %v7551 = vmax.f32 %v7487, %v7519
        %v7552 = vmax.f32 %v7488, %v7520
        %v7553 = vmax.f32 %v7489, %v7521
        %v7554 = vmax.f32 %v7490, %v7522
        %v7555 = vmax.f32 %v7491, %v7523
        %v7556 = vmax.f32 %v7492, %v7524
        %v7557 = vmax.f32 %v7493, %v7525
        %v7558 = vmax.f32 %v7494, %v7526
        %v7559 = vmax.f32 %v7495, %v7527
        %v7560 = vmax.f32 %v7496, %v7528
        %v7561 = vmax.f32 %v7497, %v7529
        %v7562 = vmax.f32 %v7498, %v7530
        %v7563 = vmax.f32 %v7499, %v7531
        %v7564 = vmax.f32 %v7500, %v7532
        %v7565 = vmax.f32 %v7501, %v7533
        %v7566 = vmax.f32 %v7502, %v7534
        %v7567 = vmax.f32 %v7503, %v7535
        %v7568 = vmax.f32 %v7504, %v7536
        %v7569 = vmax.f32 %v7505, %v7537
        %v7570 = vmax.f32 %v7506, %v7538
        %v7571 = vmax.f32 %v7507, %v7539
        %v7572 = vmax.f32 %v7508, %v7540
        %v7573 = vld [vmem:[%s860 + $0x2] sm:$0xff]
        %v7574 = vld [vmem:[%s860 + $0xa] sm:$0xff]
        %v7575 = vld [vmem:[%s860 + $0x1a] sm:$0xff]
        %v7576 = vld [vmem:[%s860 + $0x22] sm:$0xff]
        %v7577 = vld [vmem:[%s860 + $0x32] sm:$0xff]
        %v7578 = vld [vmem:[%s860 + $0x3a] sm:$0xff]
        %v7579 = vld [vmem:[%s860 + $0x4a] sm:$0xff]
        %v7580 = vld [vmem:[%s860 + $0x52] sm:$0xff]
        %v7581 = vld [vmem:[%s860 + $0x62] sm:$0xff]
        %v7582 = vld [vmem:[%s860 + $0x6a] sm:$0xff]
        %v7583 = vld [vmem:[%s860 + $0x7a] sm:$0xff]
        %v7584 = vld [vmem:[%s860 + $0x82] sm:$0xff]
        %v7585 = vld [vmem:[%s860 + $0x92] sm:$0xff]
        %v7586 = vld [vmem:[%s860 + $0x9a] sm:$0xff]
        %v7587 = vld [vmem:[%s860 + $0xaa] sm:$0xff]
        %v7588 = vld [vmem:[%s860 + $0xb2] sm:$0xff]
        %v7589 = vld [vmem:[%s860 + $0xc2] sm:$0xff]
        %v7590 = vld [vmem:[%s860 + $0xca] sm:$0xff]
        %v7591 = vld [vmem:[%s860 + $0xda] sm:$0xff]
        %v7592 = vld [vmem:[%s860 + $0xe2] sm:$0xff]
        %v7593 = vld [vmem:[%s860 + $0xf2] sm:$0xff]
        %v7594 = vld [vmem:[%s860 + $0xfa] sm:$0xff]
        %v7595 = vld [vmem:[%s860 + $0x10a] sm:$0xff]
        %v7596 = vld [vmem:[%s860 + $0x112] sm:$0xff]
        %v7597 = vld [vmem:[%s860 + $0x122] sm:$0xff]
        %v7598 = vld [vmem:[%s860 + $0x12a] sm:$0xff]
        %v7599 = vld [vmem:[%s860 + $0x13a] sm:$0xff]
        %v7600 = vld [vmem:[%s860 + $0x142] sm:$0xff]
        %v7601 = vld [vmem:[%s860 + $0x152] sm:$0xff]
        %v7602 = vld [vmem:[%s860 + $0x15a] sm:$0xff]
        %v7603 = vld [vmem:[%s860 + $0x16a] sm:$0xff]
        %v7604 = vld [vmem:[%s860 + $0x172] sm:$0xff]
        %v7605 = vmax.f32 %v7541, %v7573
        %v7606 = vmax.f32 %v7542, %v7574
        %v7607 = vmax.f32 %v7543, %v7575
        %v7608 = vmax.f32 %v7544, %v7576
        %v7609 = vmax.f32 %v7545, %v7577
        %v7610 = vmax.f32 %v7546, %v7578
        %v7611 = vmax.f32 %v7547, %v7579
        %v7612 = vmax.f32 %v7548, %v7580
        %v7613 = vmax.f32 %v7549, %v7581
        %v7614 = vmax.f32 %v7550, %v7582
        %v7615 = vmax.f32 %v7551, %v7583
        %v7616 = vmax.f32 %v7552, %v7584
        %v7617 = vmax.f32 %v7553, %v7585
        %v7618 = vmax.f32 %v7554, %v7586
        %v7619 = vmax.f32 %v7555, %v7587
        %v7620 = vmax.f32 %v7556, %v7588
        %v7621 = vmax.f32 %v7557, %v7589
        %v7622 = vmax.f32 %v7558, %v7590
        %v7623 = vmax.f32 %v7559, %v7591
        %v7624 = vmax.f32 %v7560, %v7592
        %v7625 = vmax.f32 %v7561, %v7593
        %v7626 = vmax.f32 %v7562, %v7594
        %v7627 = vmax.f32 %v7563, %v7595
        %v7628 = vmax.f32 %v7564, %v7596
        %v7629 = vmax.f32 %v7565, %v7597
        %v7630 = vmax.f32 %v7566, %v7598
        %v7631 = vmax.f32 %v7567, %v7599
        %v7632 = vmax.f32 %v7568, %v7600
        %v7633 = vmax.f32 %v7569, %v7601
        %v7634 = vmax.f32 %v7570, %v7602
        %v7635 = vmax.f32 %v7571, %v7603
        %v7636 = vmax.f32 %v7572, %v7604
        %v7637 = vld [vmem:[%s2160] sm:$0xff]
        %v7638 = vld [vmem:[%s2160 + $0x8] sm:$0xff]
        %v7639 = vld [vmem:[%s2160 + $0x18] sm:$0xff]
        %v7640 = vld [vmem:[%s2160 + $0x20] sm:$0xff]
        %v7641 = vld [vmem:[%s2160 + $0x30] sm:$0xff]
        %v7642 = vld [vmem:[%s2160 + $0x38] sm:$0xff]
        %v7643 = vld [vmem:[%s2160 + $0x48] sm:$0xff]
        %v7644 = vld [vmem:[%s2160 + $0x50] sm:$0xff]
        %v7645 = vld [vmem:[%s2160 + $0x60] sm:$0xff]
        %v7646 = vld [vmem:[%s2160 + $0x68] sm:$0xff]
        %v7647 = vld [vmem:[%s2160 + $0x78] sm:$0xff]
        %v7648 = vld [vmem:[%s2160 + $0x80] sm:$0xff]
        %v7649 = vld [vmem:[%s2160 + $0x90] sm:$0xff]
        %v7650 = vld [vmem:[%s2160 + $0x98] sm:$0xff]
        %v7651 = vld [vmem:[%s2160 + $0xa8] sm:$0xff]
        %v7652 = vld [vmem:[%s2160 + $0xb0] sm:$0xff]
        %v7653 = vld [vmem:[%s2160 + $0xc0] sm:$0xff]
        %v7654 = vld [vmem:[%s2160 + $0xc8] sm:$0xff]
        %v7655 = vld [vmem:[%s2160 + $0xd8] sm:$0xff]
        %v7656 = vld [vmem:[%s2160 + $0xe0] sm:$0xff]
        %v7657 = vld [vmem:[%s2160 + $0xf0] sm:$0xff]
        %v7658 = vld [vmem:[%s2160 + $0xf8] sm:$0xff]
        %v7659 = vld [vmem:[%s2160 + $0x108] sm:$0xff]
        %v7660 = vld [vmem:[%s2160 + $0x110] sm:$0xff]
        %v7661 = vld [vmem:[%s2160 + $0x120] sm:$0xff]
        %v7662 = vld [vmem:[%s2160 + $0x128] sm:$0xff]
        %v7663 = vld [vmem:[%s2160 + $0x138] sm:$0xff]
        %v7664 = vld [vmem:[%s2160 + $0x140] sm:$0xff]
        %v7665 = vld [vmem:[%s2160 + $0x150] sm:$0xff]
        %v7666 = vld [vmem:[%s2160 + $0x158] sm:$0xff]
        %v7667 = vld [vmem:[%s2160 + $0x168] sm:$0xff]
        %v7668 = vld [vmem:[%s2160 + $0x170] sm:$0xff]
        %v7669 = vmax.f32 %v7605, %v7637
        %v7670 = vmax.f32 %v7606, %v7638
        %v7671 = vmax.f32 %v7607, %v7639
        %v7672 = vmax.f32 %v7608, %v7640
        %v7673 = vmax.f32 %v7609, %v7641
        %v7674 = vmax.f32 %v7610, %v7642
        %v7675 = vmax.f32 %v7611, %v7643
        %v7676 = vmax.f32 %v7612, %v7644
        %v7677 = vmax.f32 %v7613, %v7645
        %v7678 = vmax.f32 %v7614, %v7646
        %v7679 = vmax.f32 %v7615, %v7647
        %v7680 = vmax.f32 %v7616, %v7648
        %v7681 = vmax.f32 %v7617, %v7649
        %v7682 = vmax.f32 %v7618, %v7650
        %v7683 = vmax.f32 %v7619, %v7651
        %v7684 = vmax.f32 %v7620, %v7652
        %v7685 = vmax.f32 %v7621, %v7653
        %v7686 = vmax.f32 %v7622, %v7654
        %v7687 = vmax.f32 %v7623, %v7655
        %v7688 = vmax.f32 %v7624, %v7656
        %v7689 = vmax.f32 %v7625, %v7657
        %v7690 = vmax.f32 %v7626, %v7658
        %v7691 = vmax.f32 %v7627, %v7659
        %v7692 = vmax.f32 %v7628, %v7660
        %v7693 = vmax.f32 %v7629, %v7661
        %v7694 = vmax.f32 %v7630, %v7662
        %v7695 = vmax.f32 %v7631, %v7663
        %v7696 = vmax.f32 %v7632, %v7664
        %v7697 = vmax.f32 %v7633, %v7665
        %v7698 = vmax.f32 %v7634, %v7666
        %v7699 = vmax.f32 %v7635, %v7667
        %v7700 = vmax.f32 %v7636, %v7668
        %v7701 = vld [vmem:[%s2160 + $0x1] sm:$0xff]
        %v7702 = vld [vmem:[%s2160 + $0x9] sm:$0xff]
        %v7703 = vld [vmem:[%s2160 + $0x19] sm:$0xff]
        %v7704 = vld [vmem:[%s2160 + $0x21] sm:$0xff]
        %v7705 = vld [vmem:[%s2160 + $0x31] sm:$0xff]
        %v7706 = vld [vmem:[%s2160 + $0x39] sm:$0xff]
        %v7707 = vld [vmem:[%s2160 + $0x49] sm:$0xff]
        %v7708 = vld [vmem:[%s2160 + $0x51] sm:$0xff]
        %v7709 = vld [vmem:[%s2160 + $0x61] sm:$0xff]
        %v7710 = vld [vmem:[%s2160 + $0x69] sm:$0xff]
        %v7711 = vld [vmem:[%s2160 + $0x79] sm:$0xff]
        %v7712 = vld [vmem:[%s2160 + $0x81] sm:$0xff]
        %v7713 = vld [vmem:[%s2160 + $0x91] sm:$0xff]
        %v7714 = vld [vmem:[%s2160 + $0x99] sm:$0xff]
        %v7715 = vld [vmem:[%s2160 + $0xa9] sm:$0xff]
        %v7716 = vld [vmem:[%s2160 + $0xb1] sm:$0xff]
        %v7717 = vld [vmem:[%s2160 + $0xc1] sm:$0xff]
        %v7718 = vld [vmem:[%s2160 + $0xc9] sm:$0xff]
        %v7719 = vld [vmem:[%s2160 + $0xd9] sm:$0xff]
        %v7720 = vld [vmem:[%s2160 + $0xe1] sm:$0xff]
        %v7721 = vld [vmem:[%s2160 + $0xf1] sm:$0xff]
        %v7722 = vld [vmem:[%s2160 + $0xf9] sm:$0xff]
        %v7723 = vld [vmem:[%s2160 + $0x109] sm:$0xff]
        %v7724 = vld [vmem:[%s2160 + $0x111] sm:$0xff]
        %v7725 = vld [vmem:[%s2160 + $0x121] sm:$0xff]
        %v7726 = vld [vmem:[%s2160 + $0x129] sm:$0xff]
        %v7727 = vld [vmem:[%s2160 + $0x139] sm:$0xff]
        %v7728 = vld [vmem:[%s2160 + $0x141] sm:$0xff]
        %v7729 = vld [vmem:[%s2160 + $0x151] sm:$0xff]
        %v7730 = vld [vmem:[%s2160 + $0x159] sm:$0xff]
        %v7731 = vld [vmem:[%s2160 + $0x169] sm:$0xff]
        %v7732 = vld [vmem:[%s2160 + $0x171] sm:$0xff]
        %v7733 = vmax.f32 %v7669, %v7701
        %v7734 = vmax.f32 %v7670, %v7702
        %v7735 = vmax.f32 %v7671, %v7703
        %v7736 = vmax.f32 %v7672, %v7704
        %v7737 = vmax.f32 %v7673, %v7705
        %v7738 = vmax.f32 %v7674, %v7706
        %v7739 = vmax.f32 %v7675, %v7707
        %v7740 = vmax.f32 %v7676, %v7708
        %v7741 = vmax.f32 %v7677, %v7709
        %v7742 = vmax.f32 %v7678, %v7710
        %v7743 = vmax.f32 %v7679, %v7711
        %v7744 = vmax.f32 %v7680, %v7712
        %v7745 = vmax.f32 %v7681, %v7713
        %v7746 = vmax.f32 %v7682, %v7714
        %v7747 = vmax.f32 %v7683, %v7715
        %v7748 = vmax.f32 %v7684, %v7716
        %v7749 = vmax.f32 %v7685, %v7717
        %v7750 = vmax.f32 %v7686, %v7718
        %v7751 = vmax.f32 %v7687, %v7719
        %v7752 = vmax.f32 %v7688, %v7720
        %v7753 = vmax.f32 %v7689, %v7721
        %v7754 = vmax.f32 %v7690, %v7722
        %v7755 = vmax.f32 %v7691, %v7723
        %v7756 = vmax.f32 %v7692, %v7724
        %v7757 = vmax.f32 %v7693, %v7725
        %v7758 = vmax.f32 %v7694, %v7726
        %v7759 = vmax.f32 %v7695, %v7727
        %v7760 = vmax.f32 %v7696, %v7728
        %v7761 = vmax.f32 %v7697, %v7729
        %v7762 = vmax.f32 %v7698, %v7730
        %v7763 = vmax.f32 %v7699, %v7731
        %v7764 = vmax.f32 %v7700, %v7732
        %v7765 = vld [vmem:[%s2160 + $0x2] sm:$0xff]
        %v7766 = vld [vmem:[%s2160 + $0xa] sm:$0xff]
        %v7767 = vld [vmem:[%s2160 + $0x1a] sm:$0xff]
        %v7768 = vld [vmem:[%s2160 + $0x22] sm:$0xff]
        %v7769 = vld [vmem:[%s2160 + $0x32] sm:$0xff]
        %v7770 = vld [vmem:[%s2160 + $0x3a] sm:$0xff]
        %v7771 = vld [vmem:[%s2160 + $0x4a] sm:$0xff]
        %v7772 = vld [vmem:[%s2160 + $0x52] sm:$0xff]
        %v7773 = vld [vmem:[%s2160 + $0x62] sm:$0xff]
        %v7774 = vld [vmem:[%s2160 + $0x6a] sm:$0xff]
        %v7775 = vld [vmem:[%s2160 + $0x7a] sm:$0xff]
        %v7776 = vld [vmem:[%s2160 + $0x82] sm:$0xff]
        %v7777 = vld [vmem:[%s2160 + $0x92] sm:$0xff]
        %v7778 = vld [vmem:[%s2160 + $0x9a] sm:$0xff]
        %v7779 = vld [vmem:[%s2160 + $0xaa] sm:$0xff]
        %v7780 = vld [vmem:[%s2160 + $0xb2] sm:$0xff]
        %v7781 = vld [vmem:[%s2160 + $0xc2] sm:$0xff]
        %v7782 = vld [vmem:[%s2160 + $0xca] sm:$0xff]
        %v7783 = vld [vmem:[%s2160 + $0xda] sm:$0xff]
        %v7784 = vld [vmem:[%s2160 + $0xe2] sm:$0xff]
        %v7785 = vld [vmem:[%s2160 + $0xf2] sm:$0xff]
        %v7786 = vld [vmem:[%s2160 + $0xfa] sm:$0xff]
        %v7787 = vld [vmem:[%s2160 + $0x10a] sm:$0xff]
        %v7788 = vld [vmem:[%s2160 + $0x112] sm:$0xff]
        %v7789 = vld [vmem:[%s2160 + $0x122] sm:$0xff]
        %v7790 = vld [vmem:[%s2160 + $0x12a] sm:$0xff]
        %v7791 = vld [vmem:[%s2160 + $0x13a] sm:$0xff]
        %v7792 = vld [vmem:[%s2160 + $0x142] sm:$0xff]
        %v7793 = vld [vmem:[%s2160 + $0x152] sm:$0xff]
        %v7794 = vld [vmem:[%s2160 + $0x15a] sm:$0xff]
        %v7795 = vld [vmem:[%s2160 + $0x16a] sm:$0xff]
        %v7796 = vld [vmem:[%s2160 + $0x172] sm:$0xff]
        %v7797 = vmax.f32 %v7733, %v7765
        %v7798 = vmax.f32 %v7734, %v7766
        %v7799 = vmax.f32 %v7735, %v7767
        %v7800 = vmax.f32 %v7736, %v7768
        %v7801 = vmax.f32 %v7737, %v7769
        %v7802 = vmax.f32 %v7738, %v7770
        %v7803 = vmax.f32 %v7739, %v7771
        %v7804 = vmax.f32 %v7740, %v7772
        %v7805 = vmax.f32 %v7741, %v7773
        %v7806 = vmax.f32 %v7742, %v7774
        %v7807 = vmax.f32 %v7743, %v7775
        %v7808 = vmax.f32 %v7744, %v7776
        %v7809 = vmax.f32 %v7745, %v7777
        %v7810 = vmax.f32 %v7746, %v7778
        %v7811 = vmax.f32 %v7747, %v7779
        %v7812 = vmax.f32 %v7748, %v7780
        %v7813 = vmax.f32 %v7749, %v7781
        %v7814 = vmax.f32 %v7750, %v7782
        %v7815 = vmax.f32 %v7751, %v7783
        %v7816 = vmax.f32 %v7752, %v7784
        %v7817 = vmax.f32 %v7753, %v7785
        %v7818 = vmax.f32 %v7754, %v7786
        %v7819 = vmax.f32 %v7755, %v7787
        %v7820 = vmax.f32 %v7756, %v7788
        %v7821 = vmax.f32 %v7757, %v7789
        %v7822 = vmax.f32 %v7758, %v7790
        %v7823 = vmax.f32 %v7759, %v7791
        %v7824 = vmax.f32 %v7760, %v7792
        %v7825 = vmax.f32 %v7761, %v7793
        %v7826 = vmax.f32 %v7762, %v7794
        %v7827 = vmax.f32 %v7763, %v7795
        %v7828 = vmax.f32 %v7764, %v7796
        %v7829 = vpack.c.bf16 %v7798, %v7797
        %v7830 = vpack.c.bf16 %v7800, %v7799
        %v7831 = vpack.c.bf16 %v7802, %v7801
        %v7832 = vpack.c.bf16 %v7804, %v7803
        %v7833 = vpack.c.bf16 %v7806, %v7805
        %v7834 = vpack.c.bf16 %v7808, %v7807
        %v7835 = vpack.c.bf16 %v7810, %v7809
        %v7836 = vpack.c.bf16 %v7812, %v7811
        %v7837 = vpack.c.bf16 %v7814, %v7813
        %v7838 = vpack.c.bf16 %v7816, %v7815
        %v7839 = vpack.c.bf16 %v7818, %v7817
        %v7840 = vpack.c.bf16 %v7820, %v7819
        %v7841 = vpack.c.bf16 %v7822, %v7821
        %v7842 = vpack.c.bf16 %v7824, %v7823
        %v7843 = vpack.c.bf16 %v7826, %v7825
        %v7844 = vpack.c.bf16 %v7828, %v7827
        %v7845 = vld [vmem:[%s9] sm:$0xf]
        %v7846 = vld [vmem:[%s10] sm:$0x1]
        %v7848 = vperm.slane %v7846, 0
        %v7851 = vsel %vm503, %v7829, 0
        %v7854 = vsel %vm503, %v7830, 0
        %v7857 = vsel %vm503, %v7831, 0
        %v7860 = vsel %vm503, %v7832, 0
        %v7863 = vsel %vm503, %v7833, 0
        %v7866 = vsel %vm503, %v7834, 0
        %v7869 = vsel %vm503, %v7835, 0
        %v7872 = vsel %vm503, %v7836, 0
        %v7875 = vsel %vm503, %v7837, 0
        %v7878 = vsel %vm503, %v7838, 0
        %v7881 = vsel %vm503, %v7839, 0
        %v7884 = vsel %vm503, %v7840, 0
        %v7887 = vsel %vm503, %v7841, 0
        %v7890 = vsel %vm503, %v7842, 0
        %v7893 = vsel %vm503, %v7843, 0
        %v7896 = vsel %vm503, %v7844, 0
        %v7899 = vsel %vm552, %v7845, 0
        %7901 = vmatpush.bf16.msra.mxu0 0
        %7902 = vmatpush.bf16.msra.mxu0 0
        %7903 = vmatpush.bf16.msra.mxu0 0
        %7904 = vmatpush.bf16.msra.mxu0 0
        %7905 = vmatpush.bf16.msra.mxu0 0
        %7906 = vmatpush.bf16.msra.mxu0 0
        %7907 = vmatpush.bf16.msra.mxu0 0
        %7908 = vmatpush.bf16.msra.mxu0 %v7899
        %7909 = vmatmul.bf16.gmra.mxu0 %v7851
        %v7910 = vpop.f32.mrf.mxu0
        %v7911 = vadd.f32 %v7848, %v7910
        %v7912 = vpop.f32.mrf.mxu0
        %v7913 = vadd.f32 %v7848, %v7912
        %7914 = vmatmul.bf16.gmra.mxu0 %v7854
        %v7915 = vpop.f32.mrf.mxu0
        %v7916 = vadd.f32 %v7848, %v7915
        %v7917 = vpop.f32.mrf.mxu0
        %v7918 = vadd.f32 %v7848, %v7917
        %7919 = vmatmul.bf16.gmra.mxu0 %v7857
        %v7920 = vpop.f32.mrf.mxu0
        %v7921 = vadd.f32 %v7848, %v7920
        %v7922 = vpop.f32.mrf.mxu0
        %v7923 = vadd.f32 %v7848, %v7922
        %7924 = vmatmul.bf16.gmra.mxu0 %v7860
        %v7925 = vpop.f32.mrf.mxu0
        %v7926 = vadd.f32 %v7848, %v7925
        %v7927 = vpop.f32.mrf.mxu0
        %v7928 = vadd.f32 %v7848, %v7927
        %7929 = vmatmul.bf16.gmra.mxu0 %v7863
        %v7930 = vpop.f32.mrf.mxu0
        %v7931 = vadd.f32 %v7848, %v7930
        %v7932 = vpop.f32.mrf.mxu0
        %v7933 = vadd.f32 %v7848, %v7932
        %7934 = vmatmul.bf16.gmra.mxu0 %v7866
        %v7935 = vpop.f32.mrf.mxu0
        %v7936 = vadd.f32 %v7848, %v7935
        %v7937 = vpop.f32.mrf.mxu0
        %v7938 = vadd.f32 %v7848, %v7937
        %7939 = vmatmul.bf16.gmra.mxu0 %v7869
        %v7940 = vpop.f32.mrf.mxu0
        %v7941 = vadd.f32 %v7848, %v7940
        %v7942 = vpop.f32.mrf.mxu0
        %v7943 = vadd.f32 %v7848, %v7942
        %7944 = vmatmul.bf16.gmra.mxu0 %v7872
        %v7945 = vpop.f32.mrf.mxu0
        %v7946 = vadd.f32 %v7848, %v7945
        %v7947 = vpop.f32.mrf.mxu0
        %v7948 = vadd.f32 %v7848, %v7947
        %7949 = vmatmul.bf16.gmra.mxu0 %v7875
        %v7950 = vpop.f32.mrf.mxu0
        %v7951 = vadd.f32 %v7848, %v7950
        %v7952 = vpop.f32.mrf.mxu0
        %v7953 = vadd.f32 %v7848, %v7952
        %7954 = vmatmul.bf16.gmra.mxu0 %v7878
        %v7955 = vpop.f32.mrf.mxu0
        %v7956 = vadd.f32 %v7848, %v7955
        %v7957 = vpop.f32.mrf.mxu0
        %v7958 = vadd.f32 %v7848, %v7957
        %7959 = vmatmul.bf16.gmra.mxu0 %v7881
        %v7960 = vpop.f32.mrf.mxu0
        %v7961 = vadd.f32 %v7848, %v7960
        %v7962 = vpop.f32.mrf.mxu0
        %v7963 = vadd.f32 %v7848, %v7962
        %7964 = vmatmul.bf16.gmra.mxu0 %v7884
        %v7965 = vpop.f32.mrf.mxu0
        %v7966 = vadd.f32 %v7848, %v7965
        %v7967 = vpop.f32.mrf.mxu0
        %v7968 = vadd.f32 %v7848, %v7967
        %7969 = vmatmul.bf16.gmra.mxu0 %v7887
        %v7970 = vpop.f32.mrf.mxu0
        %v7971 = vadd.f32 %v7848, %v7970
        %v7972 = vpop.f32.mrf.mxu0
        %v7973 = vadd.f32 %v7848, %v7972
        %7974 = vmatmul.bf16.gmra.mxu0 %v7890
        %v7975 = vpop.f32.mrf.mxu0
        %v7976 = vadd.f32 %v7848, %v7975
        %v7977 = vpop.f32.mrf.mxu0
        %v7978 = vadd.f32 %v7848, %v7977
        %7979 = vmatmul.bf16.gmra.mxu0 %v7893
        %v7980 = vpop.f32.mrf.mxu0
        %v7981 = vadd.f32 %v7848, %v7980
        %v7982 = vpop.f32.mrf.mxu0
        %v7983 = vadd.f32 %v7848, %v7982
        %7984 = vmatmul.bf16.gmra.mxu0 %v7896
        %v7985 = vpop.f32.mrf.mxu0
        %v7986 = vadd.f32 %v7848, %v7985
        %v7987 = vpop.f32.mrf.mxu0
        %v7988 = vadd.f32 %v7848, %v7987
        %7989 = vdwg.mxu0
        %v7990 = vmax.f32 %v7911, 0.0
        %v7991 = vmax.f32 %v7913, 0.0
        %v7992 = vmax.f32 %v7916, 0.0
        %v7993 = vmax.f32 %v7918, 0.0
        %v7994 = vmax.f32 %v7921, 0.0
        %v7995 = vmax.f32 %v7923, 0.0
        %v7996 = vmax.f32 %v7926, 0.0
        %v7997 = vmax.f32 %v7928, 0.0
        %v7998 = vmax.f32 %v7931, 0.0
        %v7999 = vmax.f32 %v7933, 0.0
        %v8000 = vmax.f32 %v7936, 0.0
        %v8001 = vmax.f32 %v7938, 0.0
        %v8002 = vmax.f32 %v7941, 0.0
        %v8003 = vmax.f32 %v7943, 0.0
        %v8004 = vmax.f32 %v7946, 0.0
        %v8005 = vmax.f32 %v7948, 0.0
        %v8006 = vmax.f32 %v7951, 0.0
        %v8007 = vmax.f32 %v7953, 0.0
        %v8008 = vmax.f32 %v7956, 0.0
        %v8009 = vmax.f32 %v7958, 0.0
        %v8010 = vmax.f32 %v7961, 0.0
        %v8011 = vmax.f32 %v7963, 0.0
        %v8012 = vmax.f32 %v7966, 0.0
        %v8013 = vmax.f32 %v7968, 0.0
        %v8014 = vmax.f32 %v7971, 0.0
        %v8015 = vmax.f32 %v7973, 0.0
        %v8016 = vmax.f32 %v7976, 0.0
        %v8017 = vmax.f32 %v7978, 0.0
        %v8018 = vmax.f32 %v7981, 0.0
        %v8019 = vmax.f32 %v7983, 0.0
        %v8020 = vmax.f32 %v7986, 0.0
        %v8021 = vmax.f32 %v7988, 0.0
        %8022 = vst.msk [vmem:[%s379] sm:$0xff] %vm503, %v645
        %8023 = vst.msk [vmem:[%s379 + $0x8] sm:$0xff] %vm503, %v646
        %8024 = vst.msk [vmem:[%s379 + $0x10] sm:$0xff] %vm503, %v647
        %8025 = vst.msk [vmem:[%s379 + $0x18] sm:$0xff] %vm503, %v648
        %8026 = vst.msk [vmem:[%s379 + $0x20] sm:$0xff] %vm503, %v649
        %8027 = vst.msk [vmem:[%s379 + $0x28] sm:$0xff] %vm503, %v650
        %8028 = vst.msk [vmem:[%s379 + $0x30] sm:$0xff] %vm503, %v651
        %8029 = vst.msk [vmem:[%s379 + $0x38] sm:$0xff] %vm503, %v652
        %8030 = vst.msk [vmem:[%s379 + $0x40] sm:$0xff] %vm503, %v653
        %8031 = vst.msk [vmem:[%s379 + $0x48] sm:$0xff] %vm503, %v654
        %8032 = vst.msk [vmem:[%s379 + $0x50] sm:$0xff] %vm503, %v655
        %8033 = vst.msk [vmem:[%s379 + $0x58] sm:$0xff] %vm503, %v656
        %8034 = vst.msk [vmem:[%s379 + $0x60] sm:$0xff] %vm503, %v657
        %8035 = vst.msk [vmem:[%s379 + $0x68] sm:$0xff] %vm503, %v658
        %8036 = vst.msk [vmem:[%s379 + $0x70] sm:$0xff] %vm503, %v659
        %8037 = vst.msk [vmem:[%s379 + $0x78] sm:$0xff] %vm503, %v660
        %8038 = vst.msk [vmem:[%s379 + $0x80] sm:$0xff] %vm503, %v661
        %8039 = vst.msk [vmem:[%s379 + $0x88] sm:$0xff] %vm503, %v662
        %8040 = vst.msk [vmem:[%s379 + $0x90] sm:$0xff] %vm503, %v663
        %8041 = vst.msk [vmem:[%s379 + $0x98] sm:$0xff] %vm503, %v664
        %8042 = vst.msk [vmem:[%s379 + $0xa0] sm:$0xff] %vm503, %v665
        %8043 = vst.msk [vmem:[%s379 + $0xa8] sm:$0xff] %vm503, %v666
        %8044 = vst.msk [vmem:[%s379 + $0xb0] sm:$0xff] %vm503, %v667
        %8045 = vst.msk [vmem:[%s379 + $0xb8] sm:$0xff] %vm503, %v668
        %8046 = vst.msk [vmem:[%s379 + $0xc0] sm:$0xff] %vm503, %v669
        %8047 = vst.msk [vmem:[%s379 + $0xc8] sm:$0xff] %vm503, %v670
        %8048 = vst.msk [vmem:[%s379 + $0xd0] sm:$0xff] %vm503, %v671
        %8049 = vst.msk [vmem:[%s379 + $0xd8] sm:$0xff] %vm503, %v672
        %8050 = vst.msk [vmem:[%s379 + $0xe0] sm:$0xff] %vm503, %v673
        %8051 = vst.msk [vmem:[%s379 + $0xe8] sm:$0xff] %vm503, %v674
        %8052 = vst.msk [vmem:[%s379 + $0xf0] sm:$0xff] %vm503, %v675
        %8053 = vst.msk [vmem:[%s379 + $0xf8] sm:$0xff] %vm503, %v676
        %8086 = vrot.lane.b32.xlu0 %v2863, 8
        %v8087 = vpop.permute.xlu0 %8086
        %8088 = vrot.lane.b32.xlu0 %v2864, 8
        %v8089 = vpop.permute.xlu0 %8088
        %8090 = vrot.lane.b32.xlu0 %v2865, 8
        %v8091 = vpop.permute.xlu0 %8090
        %8092 = vrot.lane.b32.xlu0 %v2866, 8
        %v8093 = vpop.permute.xlu0 %8092
        %8094 = vrot.lane.b32.xlu0 %v2867, 8
        %v8095 = vpop.permute.xlu0 %8094
        %8096 = vrot.lane.b32.xlu0 %v2868, 8
        %v8097 = vpop.permute.xlu0 %8096
        %8098 = vrot.lane.b32.xlu0 %v2869, 8
        %v8099 = vpop.permute.xlu0 %8098
        %8100 = vrot.lane.b32.xlu0 %v2870, 8
        %v8101 = vpop.permute.xlu0 %8100
        %8102 = vrot.lane.b32.xlu0 %v2871, 8
        %v8103 = vpop.permute.xlu0 %8102
        %8104 = vrot.lane.b32.xlu0 %v2872, 8
        %v8105 = vpop.permute.xlu0 %8104
        %8106 = vrot.lane.b32.xlu0 %v2873, 8
        %v8107 = vpop.permute.xlu0 %8106
        %8108 = vrot.lane.b32.xlu0 %v2874, 8
        %v8109 = vpop.permute.xlu0 %8108
        %8110 = vrot.lane.b32.xlu0 %v2875, 8
        %v8111 = vpop.permute.xlu0 %8110
        %8112 = vrot.lane.b32.xlu0 %v2876, 8
        %v8113 = vpop.permute.xlu0 %8112
        %8114 = vrot.lane.b32.xlu0 %v2877, 8
        %v8115 = vpop.permute.xlu0 %8114
        %8116 = vrot.lane.b32.xlu0 %v2878, 8
        %v8117 = vpop.permute.xlu0 %8116
        %8118 = vrot.lane.b32.xlu0 %v2879, 8
        %v8119 = vpop.permute.xlu0 %8118
        %8120 = vrot.lane.b32.xlu0 %v2880, 8
        %v8121 = vpop.permute.xlu0 %8120
        %8122 = vrot.lane.b32.xlu0 %v2881, 8
        %v8123 = vpop.permute.xlu0 %8122
        %8124 = vrot.lane.b32.xlu0 %v2882, 8
        %v8125 = vpop.permute.xlu0 %8124
        %8126 = vrot.lane.b32.xlu0 %v2883, 8
        %v8127 = vpop.permute.xlu0 %8126
        %8128 = vrot.lane.b32.xlu0 %v2884, 8
        %v8129 = vpop.permute.xlu0 %8128
        %8130 = vrot.lane.b32.xlu0 %v2885, 8
        %v8131 = vpop.permute.xlu0 %8130
        %8132 = vrot.lane.b32.xlu0 %v2886, 8
        %v8133 = vpop.permute.xlu0 %8132
        %8134 = vrot.lane.b32.xlu0 %v2887, 8
        %v8135 = vpop.permute.xlu0 %8134
        %8136 = vrot.lane.b32.xlu0 %v2888, 8
        %v8137 = vpop.permute.xlu0 %8136
        %8138 = vrot.lane.b32.xlu0 %v2889, 8
        %v8139 = vpop.permute.xlu0 %8138
        %8140 = vrot.lane.b32.xlu0 %v2890, 8
        %v8141 = vpop.permute.xlu0 %8140
        %8142 = vrot.lane.b32.xlu0 %v2891, 8
        %v8143 = vpop.permute.xlu0 %8142
        %8144 = vrot.lane.b32.xlu0 %v2892, 8
        %v8145 = vpop.permute.xlu0 %8144
        %8146 = vrot.lane.b32.xlu0 %v2893, 8
        %v8147 = vpop.permute.xlu0 %8146
        %8148 = vrot.lane.b32.xlu0 %v2894, 8
        %v8149 = vpop.permute.xlu0 %8148
        %vm8182 = vcmask 195648
        %8183 = vst.msk [vmem:[%s379] sm:$0xff] %vm8182, %v8087
        %8184 = vst.msk [vmem:[%s379 + $0x8] sm:$0xff] %vm8182, %v8089
        %8185 = vst.msk [vmem:[%s379 + $0x10] sm:$0xff] %vm8182, %v8091
        %8186 = vst.msk [vmem:[%s379 + $0x18] sm:$0xff] %vm8182, %v8093
        %8187 = vst.msk [vmem:[%s379 + $0x20] sm:$0xff] %vm8182, %v8095
        %8188 = vst.msk [vmem:[%s379 + $0x28] sm:$0xff] %vm8182, %v8097
        %8189 = vst.msk [vmem:[%s379 + $0x30] sm:$0xff] %vm8182, %v8099
        %8190 = vst.msk [vmem:[%s379 + $0x38] sm:$0xff] %vm8182, %v8101
        %8191 = vst.msk [vmem:[%s379 + $0x40] sm:$0xff] %vm8182, %v8103
        %8192 = vst.msk [vmem:[%s379 + $0x48] sm:$0xff] %vm8182, %v8105
        %8193 = vst.msk [vmem:[%s379 + $0x50] sm:$0xff] %vm8182, %v8107
        %8194 = vst.msk [vmem:[%s379 + $0x58] sm:$0xff] %vm8182, %v8109
        %8195 = vst.msk [vmem:[%s379 + $0x60] sm:$0xff] %vm8182, %v8111
        %8196 = vst.msk [vmem:[%s379 + $0x68] sm:$0xff] %vm8182, %v8113
        %8197 = vst.msk [vmem:[%s379 + $0x70] sm:$0xff] %vm8182, %v8115
        %8198 = vst.msk [vmem:[%s379 + $0x78] sm:$0xff] %vm8182, %v8117
        %8199 = vst.msk [vmem:[%s379 + $0x80] sm:$0xff] %vm8182, %v8119
        %8200 = vst.msk [vmem:[%s379 + $0x88] sm:$0xff] %vm8182, %v8121
        %8201 = vst.msk [vmem:[%s379 + $0x90] sm:$0xff] %vm8182, %v8123
        %8202 = vst.msk [vmem:[%s379 + $0x98] sm:$0xff] %vm8182, %v8125
        %8203 = vst.msk [vmem:[%s379 + $0xa0] sm:$0xff] %vm8182, %v8127
        %8204 = vst.msk [vmem:[%s379 + $0xa8] sm:$0xff] %vm8182, %v8129
        %8205 = vst.msk [vmem:[%s379 + $0xb0] sm:$0xff] %vm8182, %v8131
        %8206 = vst.msk [vmem:[%s379 + $0xb8] sm:$0xff] %vm8182, %v8133
        %8207 = vst.msk [vmem:[%s379 + $0xc0] sm:$0xff] %vm8182, %v8135
        %8208 = vst.msk [vmem:[%s379 + $0xc8] sm:$0xff] %vm8182, %v8137
        %8209 = vst.msk [vmem:[%s379 + $0xd0] sm:$0xff] %vm8182, %v8139
        %8210 = vst.msk [vmem:[%s379 + $0xd8] sm:$0xff] %vm8182, %v8141
        %8211 = vst.msk [vmem:[%s379 + $0xe0] sm:$0xff] %vm8182, %v8143
        %8212 = vst.msk [vmem:[%s379 + $0xe8] sm:$0xff] %vm8182, %v8145
        %8213 = vst.msk [vmem:[%s379 + $0xf0] sm:$0xff] %vm8182, %v8147
        %8214 = vst.msk [vmem:[%s379 + $0xf8] sm:$0xff] %vm8182, %v8149
        %8247 = vrot.lane.b32.xlu0 %v7135, 24
        %v8248 = vpop.permute.xlu0 %8247
        %8249 = vrot.lane.b32.xlu0 %v7136, 24
        %v8250 = vpop.permute.xlu0 %8249
        %8251 = vrot.lane.b32.xlu0 %v7137, 24
        %v8252 = vpop.permute.xlu0 %8251
        %8253 = vrot.lane.b32.xlu0 %v7138, 24
        %v8254 = vpop.permute.xlu0 %8253
        %8255 = vrot.lane.b32.xlu0 %v7139, 24
        %v8256 = vpop.permute.xlu0 %8255
        %8257 = vrot.lane.b32.xlu0 %v7140, 24
        %v8258 = vpop.permute.xlu0 %8257
        %8259 = vrot.lane.b32.xlu0 %v7141, 24
        %v8260 = vpop.permute.xlu0 %8259
        %8261 = vrot.lane.b32.xlu0 %v7142, 24
        %v8262 = vpop.permute.xlu0 %8261
        %8263 = vrot.lane.b32.xlu0 %v7143, 24
        %v8264 = vpop.permute.xlu0 %8263
        %8265 = vrot.lane.b32.xlu0 %v7144, 24
        %v8266 = vpop.permute.xlu0 %8265
        %8267 = vrot.lane.b32.xlu0 %v7145, 24
        %v8268 = vpop.permute.xlu0 %8267
        %8269 = vrot.lane.b32.xlu0 %v7146, 24
        %v8270 = vpop.permute.xlu0 %8269
        %8271 = vrot.lane.b32.xlu0 %v7147, 24
        %v8272 = vpop.permute.xlu0 %8271
        %8273 = vrot.lane.b32.xlu0 %v7148, 24
        %v8274 = vpop.permute.xlu0 %8273
        %8275 = vrot.lane.b32.xlu0 %v7149, 24
        %v8276 = vpop.permute.xlu0 %8275
        %8277 = vrot.lane.b32.xlu0 %v7150, 24
        %v8278 = vpop.permute.xlu0 %8277
        %8279 = vrot.lane.b32.xlu0 %v7151, 24
        %v8280 = vpop.permute.xlu0 %8279
        %8281 = vrot.lane.b32.xlu0 %v7152, 24
        %v8282 = vpop.permute.xlu0 %8281
        %8283 = vrot.lane.b32.xlu0 %v7153, 24
        %v8284 = vpop.permute.xlu0 %8283
        %8285 = vrot.lane.b32.xlu0 %v7154, 24
        %v8286 = vpop.permute.xlu0 %8285
        %8287 = vrot.lane.b32.xlu0 %v7155, 24
        %v8288 = vpop.permute.xlu0 %8287
        %8289 = vrot.lane.b32.xlu0 %v7156, 24
        %v8290 = vpop.permute.xlu0 %8289
        %8291 = vrot.lane.b32.xlu0 %v7157, 24
        %v8292 = vpop.permute.xlu0 %8291
        %8293 = vrot.lane.b32.xlu0 %v7158, 24
        %v8294 = vpop.permute.xlu0 %8293
        %8295 = vrot.lane.b32.xlu0 %v7159, 24
        %v8296 = vpop.permute.xlu0 %8295
        %8297 = vrot.lane.b32.xlu0 %v7160, 24
        %v8298 = vpop.permute.xlu0 %8297
        %8299 = vrot.lane.b32.xlu0 %v7161, 24
        %v8300 = vpop.permute.xlu0 %8299
        %8301 = vrot.lane.b32.xlu0 %v7162, 24
        %v8302 = vpop.permute.xlu0 %8301
        %8303 = vrot.lane.b32.xlu0 %v7163, 24
        %v8304 = vpop.permute.xlu0 %8303
        %8305 = vrot.lane.b32.xlu0 %v7164, 24
        %v8306 = vpop.permute.xlu0 %8305
        %8307 = vrot.lane.b32.xlu0 %v7165, 24
        %v8308 = vpop.permute.xlu0 %8307
        %8309 = vrot.lane.b32.xlu0 %v7166, 24
        %v8310 = vpop.permute.xlu0 %8309
        %vm8343 = vcmask 261312
        %8344 = vst.msk [vmem:[%s379] sm:$0xff] %vm8343, %v8248
        %8345 = vst.msk [vmem:[%s379 + $0x8] sm:$0xff] %vm8343, %v8250
        %8346 = vst.msk [vmem:[%s379 + $0x10] sm:$0xff] %vm8343, %v8252
        %8347 = vst.msk [vmem:[%s379 + $0x18] sm:$0xff] %vm8343, %v8254
        %8348 = vst.msk [vmem:[%s379 + $0x20] sm:$0xff] %vm8343, %v8256
        %8349 = vst.msk [vmem:[%s379 + $0x28] sm:$0xff] %vm8343, %v8258
        %8350 = vst.msk [vmem:[%s379 + $0x30] sm:$0xff] %vm8343, %v8260
        %8351 = vst.msk [vmem:[%s379 + $0x38] sm:$0xff] %vm8343, %v8262
        %8352 = vst.msk [vmem:[%s379 + $0x40] sm:$0xff] %vm8343, %v8264
        %8353 = vst.msk [vmem:[%s379 + $0x48] sm:$0xff] %vm8343, %v8266
        %8354 = vst.msk [vmem:[%s379 + $0x50] sm:$0xff] %vm8343, %v8268
        %8355 = vst.msk [vmem:[%s379 + $0x58] sm:$0xff] %vm8343, %v8270
        %8356 = vst.msk [vmem:[%s379 + $0x60] sm:$0xff] %vm8343, %v8272
        %8357 = vst.msk [vmem:[%s379 + $0x68] sm:$0xff] %vm8343, %v8274
        %8358 = vst.msk [vmem:[%s379 + $0x70] sm:$0xff] %vm8343, %v8276
        %8359 = vst.msk [vmem:[%s379 + $0x78] sm:$0xff] %vm8343, %v8278
        %8360 = vst.msk [vmem:[%s379 + $0x80] sm:$0xff] %vm8343, %v8280
        %8361 = vst.msk [vmem:[%s379 + $0x88] sm:$0xff] %vm8343, %v8282
        %8362 = vst.msk [vmem:[%s379 + $0x90] sm:$0xff] %vm8343, %v8284
        %8363 = vst.msk [vmem:[%s379 + $0x98] sm:$0xff] %vm8343, %v8286
        %8364 = vst.msk [vmem:[%s379 + $0xa0] sm:$0xff] %vm8343, %v8288
        %8365 = vst.msk [vmem:[%s379 + $0xa8] sm:$0xff] %vm8343, %v8290
        %8366 = vst.msk [vmem:[%s379 + $0xb0] sm:$0xff] %vm8343, %v8292
        %8367 = vst.msk [vmem:[%s379 + $0xb8] sm:$0xff] %vm8343, %v8294
        %8368 = vst.msk [vmem:[%s379 + $0xc0] sm:$0xff] %vm8343, %v8296
        %8369 = vst.msk [vmem:[%s379 + $0xc8] sm:$0xff] %vm8343, %v8298
        %8370 = vst.msk [vmem:[%s379 + $0xd0] sm:$0xff] %vm8343, %v8300
        %8371 = vst.msk [vmem:[%s379 + $0xd8] sm:$0xff] %vm8343, %v8302
        %8372 = vst.msk [vmem:[%s379 + $0xe0] sm:$0xff] %vm8343, %v8304
        %8373 = vst.msk [vmem:[%s379 + $0xe8] sm:$0xff] %vm8343, %v8306
        %8374 = vst.msk [vmem:[%s379 + $0xf0] sm:$0xff] %vm8343, %v8308
        %8375 = vst.msk [vmem:[%s379 + $0xf8] sm:$0xff] %vm8343, %v8310
        %8408 = vrot.lane.b32.xlu0 %v7990, 32
        %v8409 = vpop.permute.xlu0 %8408
        %8410 = vrot.lane.b32.xlu0 %v7991, 32
        %v8411 = vpop.permute.xlu0 %8410
        %8412 = vrot.lane.b32.xlu0 %v7992, 32
        %v8413 = vpop.permute.xlu0 %8412
        %8414 = vrot.lane.b32.xlu0 %v7993, 32
        %v8415 = vpop.permute.xlu0 %8414
        %8416 = vrot.lane.b32.xlu0 %v7994, 32
        %v8417 = vpop.permute.xlu0 %8416
        %8418 = vrot.lane.b32.xlu0 %v7995, 32
        %v8419 = vpop.permute.xlu0 %8418
        %8420 = vrot.lane.b32.xlu0 %v7996, 32
        %v8421 = vpop.permute.xlu0 %8420
        %8422 = vrot.lane.b32.xlu0 %v7997, 32
        %v8423 = vpop.permute.xlu0 %8422
        %8424 = vrot.lane.b32.xlu0 %v7998, 32
        %v8425 = vpop.permute.xlu0 %8424
        %8426 = vrot.lane.b32.xlu0 %v7999, 32
        %v8427 = vpop.permute.xlu0 %8426
        %8428 = vrot.lane.b32.xlu0 %v8000, 32
        %v8429 = vpop.permute.xlu0 %8428
        %8430 = vrot.lane.b32.xlu0 %v8001, 32
        %v8431 = vpop.permute.xlu0 %8430
        %8432 = vrot.lane.b32.xlu0 %v8002, 32
        %v8433 = vpop.permute.xlu0 %8432
        %8434 = vrot.lane.b32.xlu0 %v8003, 32
        %v8435 = vpop.permute.xlu0 %8434
        %8436 = vrot.lane.b32.xlu0 %v8004, 32
        %v8437 = vpop.permute.xlu0 %8436
        %8438 = vrot.lane.b32.xlu0 %v8005, 32
        %v8439 = vpop.permute.xlu0 %8438
        %8440 = vrot.lane.b32.xlu0 %v8006, 32
        %v8441 = vpop.permute.xlu0 %8440
        %8442 = vrot.lane.b32.xlu0 %v8007, 32
        %v8443 = vpop.permute.xlu0 %8442
        %8444 = vrot.lane.b32.xlu0 %v8008, 32
        %v8445 = vpop.permute.xlu0 %8444
        %8446 = vrot.lane.b32.xlu0 %v8009, 32
        %v8447 = vpop.permute.xlu0 %8446
        %8448 = vrot.lane.b32.xlu0 %v8010, 32
        %v8449 = vpop.permute.xlu0 %8448
        %8450 = vrot.lane.b32.xlu0 %v8011, 32
        %v8451 = vpop.permute.xlu0 %8450
        %8452 = vrot.lane.b32.xlu0 %v8012, 32
        %v8453 = vpop.permute.xlu0 %8452
        %8454 = vrot.lane.b32.xlu0 %v8013, 32
        %v8455 = vpop.permute.xlu0 %8454
        %8456 = vrot.lane.b32.xlu0 %v8014, 32
        %v8457 = vpop.permute.xlu0 %8456
        %8458 = vrot.lane.b32.xlu0 %v8015, 32
        %v8459 = vpop.permute.xlu0 %8458
        %8460 = vrot.lane.b32.xlu0 %v8016, 32
        %v8461 = vpop.permute.xlu0 %8460
        %8462 = vrot.lane.b32.xlu0 %v8017, 32
        %v8463 = vpop.permute.xlu0 %8462
        %8464 = vrot.lane.b32.xlu0 %v8018, 32
        %v8465 = vpop.permute.xlu0 %8464
        %8466 = vrot.lane.b32.xlu0 %v8019, 32
        %v8467 = vpop.permute.xlu0 %8466
        %8468 = vrot.lane.b32.xlu0 %v8020, 32
        %v8469 = vpop.permute.xlu0 %8468
        %8470 = vrot.lane.b32.xlu0 %v8021, 32
        %v8471 = vpop.permute.xlu0 %8470
        %vm8504 = vcmask 326912
        %8505 = vst.msk [vmem:[%s379] sm:$0xff] %vm8504, %v8409
        %8506 = vst.msk [vmem:[%s379 + $0x8] sm:$0xff] %vm8504, %v8411
        %8507 = vst.msk [vmem:[%s379 + $0x10] sm:$0xff] %vm8504, %v8413
        %8508 = vst.msk [vmem:[%s379 + $0x18] sm:$0xff] %vm8504, %v8415
        %8509 = vst.msk [vmem:[%s379 + $0x20] sm:$0xff] %vm8504, %v8417
        %8510 = vst.msk [vmem:[%s379 + $0x28] sm:$0xff] %vm8504, %v8419
        %8511 = vst.msk [vmem:[%s379 + $0x30] sm:$0xff] %vm8504, %v8421
        %8512 = vst.msk [vmem:[%s379 + $0x38] sm:$0xff] %vm8504, %v8423
        %8513 = vst.msk [vmem:[%s379 + $0x40] sm:$0xff] %vm8504, %v8425
        %8514 = vst.msk [vmem:[%s379 + $0x48] sm:$0xff] %vm8504, %v8427
        %8515 = vst.msk [vmem:[%s379 + $0x50] sm:$0xff] %vm8504, %v8429
        %8516 = vst.msk [vmem:[%s379 + $0x58] sm:$0xff] %vm8504, %v8431
        %8517 = vst.msk [vmem:[%s379 + $0x60] sm:$0xff] %vm8504, %v8433
        %8518 = vst.msk [vmem:[%s379 + $0x68] sm:$0xff] %vm8504, %v8435
        %8519 = vst.msk [vmem:[%s379 + $0x70] sm:$0xff] %vm8504, %v8437
        %8520 = vst.msk [vmem:[%s379 + $0x78] sm:$0xff] %vm8504, %v8439
        %8521 = vst.msk [vmem:[%s379 + $0x80] sm:$0xff] %vm8504, %v8441
        %8522 = vst.msk [vmem:[%s379 + $0x88] sm:$0xff] %vm8504, %v8443
        %8523 = vst.msk [vmem:[%s379 + $0x90] sm:$0xff] %vm8504, %v8445
        %8524 = vst.msk [vmem:[%s379 + $0x98] sm:$0xff] %vm8504, %v8447
        %8525 = vst.msk [vmem:[%s379 + $0xa0] sm:$0xff] %vm8504, %v8449
        %8526 = vst.msk [vmem:[%s379 + $0xa8] sm:$0xff] %vm8504, %v8451
        %8527 = vst.msk [vmem:[%s379 + $0xb0] sm:$0xff] %vm8504, %v8453
        %8528 = vst.msk [vmem:[%s379 + $0xb8] sm:$0xff] %vm8504, %v8455
        %8529 = vst.msk [vmem:[%s379 + $0xc0] sm:$0xff] %vm8504, %v8457
        %8530 = vst.msk [vmem:[%s379 + $0xc8] sm:$0xff] %vm8504, %v8459
        %8531 = vst.msk [vmem:[%s379 + $0xd0] sm:$0xff] %vm8504, %v8461
        %8532 = vst.msk [vmem:[%s379 + $0xd8] sm:$0xff] %vm8504, %v8463
        %8533 = vst.msk [vmem:[%s379 + $0xe0] sm:$0xff] %vm8504, %v8465
        %8534 = vst.msk [vmem:[%s379 + $0xe8] sm:$0xff] %vm8504, %v8467
        %8535 = vst.msk [vmem:[%s379 + $0xf0] sm:$0xff] %vm8504, %v8469
        %8536 = vst.msk [vmem:[%s379 + $0xf8] sm:$0xff] %vm8504, %v8471
        %s8537 = sand.u32 %s269, 1
        %s8538 = scalar_lea.sflag [#allocation4], %s8537
        %s8539 = sand.u32 %s269, 1
        %s8540 = smul.addr %s8539, 256
        %s8541 = scalar_lea.vmem [#allocation3], %s8540
        // Predicated region
        $region65: #{construction_forward.1} parent=63 // pred_check
          %p8542 = pneg %p279
        $region66: #{construction_forward.1} parent=63 // pred_check_branch
          %8544 = sbr.rel (%p8542) target = $region68
        $region67: #{construction_forward.1} parent=63 // pred_region
          %8546 = vsyncadd %s8538, 0
          %s8547 = smul.addr %s25, 32
          %s8548 = smul.addr %s8547, 8
          %s8549 = scalar_lea.hbm %s11, %s8548
          %s8550 = sshll.u32 %s8541, 4
          %s8551 = int_to_ptr.vmem [resolvable:$true] %s8550
          %s8552 = sshll.u32 %s8549, 4
          %s8553 = int_to_ptr.hbm [resolvable:$true] %s8552
          %8558 = dma.vmem_to_hbm [thread:$0]  %s8551, 4096, %s8553, %s8538, 128, 128, 8
        $region68: #{construction_forward.1} parent=63 // pred_fallthru
          _
      $region64: #{construction_forward.1} parent=5 // pred_fallthru
        _
      %p8559 = scmp.le.s32.totalorder 2, %s20
      // Predicated region
      $region69: #{construction_forward.1} parent=5 // pred_check
        %p8560 = pneg %p8559
      $region70: #{construction_forward.1} parent=5 // pred_check_branch
        %8562 = sbr.rel (%p8560) target = $region72
      $region71: #{construction_forward.1} parent=5 // pred_region
        %s8563 = ssub.s32 %s20, 2
        // Predicated region
        $region73: #{construction_forward.1} parent=71 // pred_check
          %p8564 = pneg %p285
        $region74: #{construction_forward.1} parent=71 // pred_check_branch
          %8566 = sbr.rel (%p8564) target = $region76
        $region75: #{construction_forward.1} parent=71 // pred_region
          %s8567 = sand.u32 %s270, 1
          %s8568 = scalar_lea.sflag [#allocation4], %s8567
          %s8569 = sand.u32 %s270, 1
          %s8570 = smul.addr %s8569, 256
          %s8571 = scalar_lea.vmem [#allocation3], %s8570
          %8573 = dma.done %s8568, 4096
        $region76: #{construction_forward.1} parent=71 // pred_fallthru
          _
      $region72: #{construction_forward.1} parent=5 // pred_fallthru
        _
    $region6: #{construction_forward.1} parent=1 // loop_footer
      %s24 = sadd.s32 1, %s20
    $region7: #{construction_forward.1} parent=1 // loop_footer_branch
      %19 = sbr.rel target = $region3
    $region8: #{construction_forward.1} parent=1 // loop_exit
      _
    %8574 = vsyncpa [#allocation4], 1
    %s8575 = scalar_lea.sflag [#allocation4], 1
    %8576 = vsyncpa %s8575, 1

</llo_original>
